<compile_context>
chip_gen: v7x
topology: tpu7x:2x2x1
jax: 0.10.0
libtpu: 0.0.40
codegen_flags: <defaults>
</compile_context>

<pallas_src>
import numpy as np

import jax
import jax.numpy as jnp
from jax.experimental import pallas as pl
from jax.experimental.pallas import tpu as pltpu

LEAKY_SLOPE = 0.2
BN_EPS = 1e-5
N_NETS = 2  # T1, T2


# ----------------------------------------------------------------------------
# Host-side constant spatial operators (0/1 matrices, exactly representable in bf16).
# ----------------------------------------------------------------------------
def _conv_taps_T(h_in, w_in, k, stride, pad):
    """Per-tap shift/stride/zero-pad operators, transposed: (k*k, HWi, HWo).

    For tap t = (di, dj): (A @ G_t)[c, (ho, wo)] == x_zero_padded[c, ho*s + di, wo*s + dj],
    i.e. exactly the im2col column for that tap; out-of-bounds taps contribute 0.
    """
    h_out = (h_in + 2 * pad - k) // stride + 1
    w_out = (w_in + 2 * pad - k) // stride + 1
    g = np.zeros((k * k, h_in * w_in, h_out * w_out), np.float32)
    for di in range(k):
        for dj in range(k):
            t = di * k + dj
            for ho in range(h_out):
                hi = ho * stride + di - pad
                if hi < 0 or hi >= h_in:
                    continue
                for wo in range(w_out):
                    wi = wo * stride + dj - pad
                    if 0 <= wi < w_in:
                        g[t, hi * w_in + wi, ho * w_out + wo] = 1.0
    return g


def _upsample_T(h_in, w_in, h_out, w_out):
    """nn.Upsample(mode='nearest') as a right-multiplied (HWi, HWo) 0/1 matrix."""
    u = np.zeros((h_in * w_in, h_out * w_out), np.float32)
    for ho in range(h_out):
        hi = (ho * h_in) // h_out
        for wo in range(w_out):
            wi = (wo * w_in) // w_out
            u[hi * w_in + wi, ho * w_out + wo] = 1.0
    return u


def make_spatial_operators(in_size):
    H, W = in_size
    H1, W1 = H // 2, W // 2
    H2, W2 = H1 // 2, W1 // 2
    bf = jnp.bfloat16
    return dict(
        gt_down0=jnp.asarray(_conv_taps_T(H, W, 3, 2, 1), bf),    # 16x16 -> 8x8 (stride 2)
        gt_same1=jnp.asarray(_conv_taps_T(H1, W1, 3, 1, 1), bf),  # 8x8  -> 8x8
        gt_down1=jnp.asarray(_conv_taps_T(H1, W1, 3, 2, 1), bf),  # 8x8  -> 4x4 (stride 2)
        gt_same2=jnp.asarray(_conv_taps_T(H2, W2, 3, 1, 1), bf),  # 4x4  -> 4x4
        gt_same0=jnp.asarray(_conv_taps_T(H, W, 3, 1, 1), bf),    # 16x16 -> 16x16
        ut_2to1=jnp.asarray(_upsample_T(H2, W2, H1, W1), bf),     # 4x4  -> 8x8  nearest
        ut_1to0=jnp.asarray(_upsample_T(H1, W1, H, W), bf),       # 8x8  -> 16x16 nearest
    )


# ----------------------------------------------------------------------------
# Fused kernel: whole forward of both nets, one invocation, everything in VMEM.
# Activation layout: (n_batch * N_NETS * C, HW), rows ordered (batch, net, channel).
# ----------------------------------------------------------------------------
def _make_kernel(n_batch):
    def _batch_sum(v):
        # v: (n_batch*M, 1) column of per-row lane sums; replace each row by the sum
        # over the batch rows sharing its (net, channel).  M = N_NETS*C is a multiple
        # of 8, so the sublane slices are aligned.
        m = v.shape[0] // n_batch
        tot = v[0:m]
        for n in range(1, n_batch):
            tot = tot + v[n * m:(n + 1) * m]
        return jnp.concatenate([tot] * n_batch, axis=0)

    def kernel(x_ref,
               gt_down0, gt_same1, gt_down1, gt_same2, gt_same0,
               ut_2to1, ut_1to0,
               w_d0c1, w_d0c2, w_s1, w_d1c1, w_d1c2,
               w_l1c1, w_l1c2, w_l0c1, w_l0c2, w_out,
               bn_ref, out_ref):

        def conv3(a, w_ref, gt_ref):
            """3x3 conv: 9 shift matmuls vs 0/1 operators + ONE im2col weight matmul."""
            a16 = a.astype(jnp.bfloat16)
            parts = [jnp.dot(a16, gt_ref[t], preferred_element_type=jnp.float32)
                     for t in range(9)]
            s = jnp.concatenate(parts, axis=0)                  # (9*Rin, HWo)
            return jnp.dot(w_ref[...], s, preferred_element_type=jnp.float32)

        def conv1(a, w_ref):
            return jnp.dot(w_ref[...], a, preferred_element_type=jnp.float32)

        def upsample(a, ut_ref):
            return jnp.dot(a.astype(jnp.bfloat16), ut_ref[...],
                           preferred_element_type=jnp.float32)

        def bn_act(a, layer, act=True):
            """Training-mode BN (batch stats, biased var), one pass, + optional LeakyReLU."""
            rows, hw_cur = a.shape
            inv_count = 1.0 / float(n_batch * hw_cur)
            sm = _batch_sum(jnp.sum(a, axis=1, keepdims=True))
            sq = _batch_sum(jnp.sum(a * a, axis=1, keepdims=True))
            mean = sm * inv_count
            var = jnp.maximum(sq * inv_count - mean * mean, 0.0)
            gamma = bn_ref[layer, 0:rows, 0:1]
            beta = bn_ref[layer, 0:rows, 1:2]
            scale = gamma * jax.lax.rsqrt(var + BN_EPS)
            shift = beta - mean * scale
            y = a * scale + shift
            if act:  # LeakyReLU(0.2)
                y = jnp.where(y >= 0, y, y * LEAKY_SLOPE)
            return y

        x = x_ref[...]                                          # (N*2*Cin, 256)

        # ---- scale-0 deeper branch: stride-2 3x3 + BN/act, 3x3 + BN/act ----
        d0 = bn_act(conv3(x, w_d0c1, gt_down0), 0)              # (N*2*dim, 64)
        d0 = bn_act(conv3(d0, w_d0c2, gt_same1), 1)

        # ---- scale-1 skip branch: 1x1 conv + BN/act ----
        s1 = bn_act(conv1(d0, w_s1), 2)                         # (N*2*skip, 64)

        # ---- scale-1 deeper branch: down, convs, nearest-upsample ----
        d1 = bn_act(conv3(d0, w_d1c1, gt_down1), 3)             # (N*2*dim, 16)
        d1 = bn_act(conv3(d1, w_d1c2, gt_same2), 4)
        d1 = upsample(d1, ut_2to1)                              # (N*2*dim, 64)

        # ---- Concat(skip, deeper) + BN(cat) (per-channel -> BN parts, then concat) ----
        cat = jnp.concatenate([bn_act(s1, 5, act=False),
                               bn_act(d1, 6, act=False)], axis=0)   # (N*2*(skip+dim), 64)
        l1 = bn_act(conv3(cat, w_l1c1, gt_same1), 7)            # (N*2*dim, 64)
        l1 = bn_act(conv1(l1, w_l1c2), 8)

        # ---- back to scale 0: nearest-upsample, BN, up-convs ----
        t0 = upsample(l1, ut_1to0)                              # (N*2*dim, 256)
        t0 = bn_act(t0, 9, act=False)
        t0 = bn_act(conv3(t0, w_l0c1, gt_same0), 10)
        t0 = bn_act(conv1(t0, w_l0c2), 11)

        # ---- final 1x1 conv + bias + sigmoid; single dense lane-major store ----
        r_out = w_out.shape[0]
        bias = bn_ref[12, 0:r_out, 0:1]
        y = jnp.dot(w_out[...], t0, preferred_element_type=jnp.float32) + bias
        out_ref[...] = jax.nn.sigmoid(y)

    return kernel


# ----------------------------------------------------------------------------
# Host-side parameter packing (tiny, done once inside the jit).
# ----------------------------------------------------------------------------
def uninet_forward(params_t1, params_t2, x, spatial_ops):
    """UniNet forward: two independent skip() nets fused into one Pallas call."""
    n_batch, in_ch, h, w = x.shape
    hw = h * w
    G = N_NETS
    nets = (params_t1, params_t2)

    dim = params_t1["d0_conv1_w"].shape[3]
    skip = params_t1["s1_conv_w"].shape[3]
    out_ch = params_t1["out_conv_w"].shape[3]
    max_rows = n_batch * G * max(dim, skip, out_ch)

    # Combined-row maps: row index = n*(G*C) + g*C + c  (batch-major, then net, channel).
    def rmap(C):
        n = np.repeat(np.arange(n_batch), G * C)
        g = np.tile(np.repeat(np.arange(G), C), n_batch)
        c = np.tile(np.arange(C), n_batch * G)
        return n, g, c

    m_in, m_dim, m_skip, m_out = rmap(in_ch), rmap(dim), rmap(skip), rmap(out_ch)
    sn, sg, sc = rmap(skip)
    dn, dg, dc = rmap(dim)
    # Input rows of l1_conv1 = [skip block ; deeper block], each (batch, net, channel).
    m_cat = (np.concatenate([sn, dn]), np.concatenate([sg, dg]),
             np.concatenate([sc, dc + skip]))

    def block_mask(out_map, in_map):
        on, og, _ = out_map
        inn, ing, _ = in_map
        keep = (on[:, None] == inn[None, :]) & (og[:, None] == ing[None, :])
        return jnp.asarray(keep.astype(np.float32))

    def pack3(name, out_map, in_map):
        # Block-diagonal im2col weight: (Rout, 9*Rin); column = tap*Rin + combined_in_row.
        mats = []
        for p in nets:
            wi = p[name + "_w"]                                  # (3,3,Cin,Cout) HWIO
            mats.append(jnp.transpose(wi.reshape(9, wi.shape[2], wi.shape[3]), (0, 2, 1)))
        wgt = jnp.stack(mats, axis=0)                            # (G, 9, Cout, Cin)
        _, og, oc = out_map
        _, _, ic = in_map
        v = wgt[og, :, oc, :][:, :, ic]                          # (Rout, 9, Rin)
        v = v * block_mask(out_map, in_map)[:, None, :]
        return v.reshape(v.shape[0], -1)

    def pack1(name, out_map, in_map):
        wgt = jnp.stack([jnp.transpose(p[name + "_w"][0, 0], (1, 0)) for p in nets], 0)
        _, og, oc = out_map
        _, _, ic = in_map
        v = wgt[og, oc, :][:, ic]                                # (Rout, Rin)
        return v * block_mask(out_map, in_map)

    def bn_rows(name, sl=None):
        gs, bs = [], []
        for p in nets:
            gma, bta = p[name + "_g"], p[name + "_b"]
            if sl is not None:
                gma, bta = gma[sl], bta[sl]
            gs.append(gma)
            bs.append(bta)
        gamma = jnp.tile(jnp.concatenate(gs), n_batch)           # per combined row
        beta = jnp.tile(jnp.concatenate(bs), n_batch)
        row = jnp.stack([gamma, beta], axis=-1)
        if row.shape[0] < max_rows:
            row = jnp.pad(row, ((0, max_rows - row.shape[0]), (0, 0)))
        return row

    # Pre-BN conv biases (need_bias=True in the torch module) are exactly cancelled by
    # training-mode BatchNorm's mean subtraction, so only out_conv's bias is used.
    bias_comb = jnp.tile(jnp.concatenate([p["out_conv_b"] for p in nets]), n_batch)
    bias_row = jnp.stack([bias_comb, jnp.zeros_like(bias_comb)], axis=-1)
    if bias_row.shape[0] < max_rows:
        bias_row = jnp.pad(bias_row, ((0, max_rows - bias_row.shape[0]), (0, 0)))

    bn_pack = jnp.stack([
        bn_rows("d0_bn1"), bn_rows("d0_bn2"), bn_rows("s1_bn"),
        bn_rows("d1_bn1"), bn_rows("d1_bn2"),
        bn_rows("l1_bn_cat", slice(0, skip)),
        bn_rows("l1_bn_cat", slice(skip, skip + dim)),
        bn_rows("l1_bn1"), bn_rows("l1_bn2"),
        bn_rows("l0_bn_top"), bn_rows("l0_bn1"), bn_rows("l0_bn2"),
        bias_row,
    ], axis=0)                                                   # (13, max_rows, 2)

    weights = [
        pack3("d0_conv1", m_dim, m_in), pack3("d0_conv2", m_dim, m_dim),
        pack1("s1_conv", m_skip, m_dim),
        pack3("d1_conv1", m_dim, m_dim), pack3("d1_conv2", m_dim, m_dim),
        pack3("l1_conv1", m_dim, m_cat), pack1("l1_conv2", m_dim, m_dim),
        pack3("l0_conv1", m_dim, m_dim), pack1("l0_conv2", m_dim, m_dim),
        pack1("out_conv", m_out, m_dim),
    ]

    # Both nets see the same input x: rows (batch, net, channel), HW dense on lanes.
    x_flat = x.reshape(n_batch, in_ch, hw).astype(jnp.float32)
    x_comb = jnp.broadcast_to(
        x_flat[:, None], (n_batch, G, in_ch, hw)).reshape(n_batch * G * in_ch, hw)

    operands = [
        x_comb,
        spatial_ops["gt_down0"], spatial_ops["gt_same1"], spatial_ops["gt_down1"],
        spatial_ops["gt_same2"], spatial_ops["gt_same0"],
        spatial_ops["ut_2to1"], spatial_ops["ut_1to0"],
        *weights, bn_pack,
    ]

    vmem_spec = pl.BlockSpec(memory_space=pltpu.MemorySpace.VMEM)
    out = pl.pallas_call(
        _make_kernel(n_batch),
        out_shape=jax.ShapeDtypeStruct((n_batch * G * out_ch, hw), jnp.float32),
        in_specs=[vmem_spec] * len(operands),
        out_specs=vmem_spec,
    )(*operands)

    # rows (n, net, out_ch) -> (N, 2*out_ch, H, W) == torch.cat([T1(x), T2(x)], dim=1)
    out = out.reshape(n_batch, G * out_ch, h, w)
    factor = None  # args.learned_scaling == False
    return out, factor


# ----------------------------------------------------------------------------
# Deterministic parameter init (mirrors the torch module's parameterization).
# ----------------------------------------------------------------------------
def init_skip_params(key, in_ch=2, out_ch=1, dim=8, skip_ch=4):
    conv_shapes = {
        "d0_conv1": (3, 3, in_ch, dim),
        "d0_conv2": (3, 3, dim, dim),
        "s1_conv": (1, 1, dim, skip_ch),
        "d1_conv1": (3, 3, dim, dim),
        "d1_conv2": (3, 3, dim, dim),
        "l1_conv1": (3, 3, skip_ch + dim, dim),
        "l1_conv2": (1, 1, dim, dim),
        "l0_conv1": (3, 3, dim, dim),
        "l0_conv2": (1, 1, dim, dim),
        "out_conv": (1, 1, dim, out_ch),
    }
    bn_channels = {
        "d0_bn1": dim, "d0_bn2": dim,
        "s1_bn": skip_ch,
        "d1_bn1": dim, "d1_bn2": dim,
        "l1_bn_cat": skip_ch + dim, "l1_bn1": dim, "l1_bn2": dim,
        "l0_bn_top": dim, "l0_bn1": dim, "l0_bn2": dim,
    }
    params = {}
    keys = jax.random.split(key, 2 * len(conv_shapes))
    for idx, (name, shp) in enumerate(sorted(conv_shapes.items())):
        fan_in = shp[0] * shp[1] * shp[2]
        params[name + "_w"] = (
            jax.random.normal(keys[2 * idx], shp, jnp.float32) / jnp.sqrt(fan_in)
        )
        # Biases exist in the torch module (need_bias=True); every one except
        # out_conv_b feeds a training-mode BN and is mathematically cancelled.
        params[name + "_b"] = (
            jax.random.normal(keys[2 * idx + 1], (shp[3],), jnp.float32) * 0.01
        )
    for name, c in sorted(bn_channels.items()):
        params[name + "_g"] = jnp.ones((c,), jnp.float32)
        params[name + "_b"] = jnp.zeros((c,), jnp.float32)
    return params


# ----------------------------------------------------------------------------
if __name__ == "__main__":
    key = jax.random.PRNGKey(0)
    k_x, k_t1, k_t2 = jax.random.split(key, 3)

    N, IN_CH, H, W = 2, 2, 16, 16
    DIM, SKIP, OUT_CH = 8, 4, 1

    x = jax.random.normal(k_x, (N, IN_CH, H, W), jnp.float32)
    params_t1 = init_skip_params(k_t1, in_ch=IN_CH, out_ch=OUT_CH, dim=DIM, skip_ch=SKIP)
    params_t2 = init_skip_params(k_t2, in_ch=IN_CH, out_ch=OUT_CH, dim=DIM, skip_ch=SKIP)
    spatial = make_spatial_operators((H, W))

    fwd = jax.jit(uninet_forward)
    out, factor = fwd(params_t1, params_t2, x, spatial)
    out = jax.block_until_ready(out)

    assert out.shape == (N, 2 * OUT_CH, H, W), out.shape
    assert bool(jnp.all(jnp.isfinite(out)))
    assert bool(jnp.all((out >= 0.0) & (out <= 1.0)))  # sigmoid output range
    assert factor is None
    print("KERNEL_OK")
</pallas_src>

<mosaic_0001>
module attributes {stable_mosaic.version = 11 : i64} {
  func.func @kernel(%arg0: memref<8x256xf32, #tpu.memory_space<vmem>>, %arg1: memref<9x256x64xbf16, #tpu.memory_space<vmem>>, %arg2: memref<9x64x64xbf16, #tpu.memory_space<vmem>>, %arg3: memref<9x64x16xbf16, #tpu.memory_space<vmem>>, %arg4: memref<9x16x16xbf16, #tpu.memory_space<vmem>>, %arg5: memref<9x256x256xbf16, #tpu.memory_space<vmem>>, %arg6: memref<16x64xbf16, #tpu.memory_space<vmem>>, %arg7: memref<64x256xbf16, #tpu.memory_space<vmem>>, %arg8: memref<32x72xf32, #tpu.memory_space<vmem>>, %arg9: memref<32x288xf32, #tpu.memory_space<vmem>>, %arg10: memref<16x32xf32, #tpu.memory_space<vmem>>, %arg11: memref<32x288xf32, #tpu.memory_space<vmem>>, %arg12: memref<32x288xf32, #tpu.memory_space<vmem>>, %arg13: memref<32x432xf32, #tpu.memory_space<vmem>>, %arg14: memref<32x32xf32, #tpu.memory_space<vmem>>, %arg15: memref<32x288xf32, #tpu.memory_space<vmem>>, %arg16: memref<32x32xf32, #tpu.memory_space<vmem>>, %arg17: memref<4x32xf32, #tpu.memory_space<vmem>>, %arg18: memref<13x32x2xf32, #tpu.memory_space<vmem>>, %arg19: memref<4x256xf32, #tpu.memory_space<vmem>>) attributes {dimension_semantics = [], scalar_prefetch = 0 : i64, scratch_operands = 0 : i64, tpu.core_type = #tpu.core_type<tc>} {
    %c0 = arith.constant 0 : index
    %c0_0 = arith.constant 0 : index
    %0 = vector.load %arg0[%c0, %c0_0] : memref<8x256xf32, #tpu.memory_space<vmem>>, vector<8x256xf32>
    %1 = arith.truncf %0 : vector<8x256xf32> to vector<8x256xbf16>
    %c0_1 = arith.constant 0 : index
    %c0_2 = arith.constant 0 : index
    %c0_3 = arith.constant 0 : index
    %2 = vector.load %arg1[%c0_1, %c0_2, %c0_3] : memref<9x256x64xbf16, #tpu.memory_space<vmem>>, vector<1x256x64xbf16>
    %3 = vector.shape_cast %2 : vector<1x256x64xbf16> to vector<256x64xbf16>
    %cst = arith.constant dense<0.000000e+00> : vector<8x64xf32>
    %4 = tpu.matmul %1, %3, %cst {dimension_numbers = #tpu.dot_dimension_numbers<[1], [0], [0], [1], [0, 0, 1, 1], [], []>} : vector<8x256xbf16>, vector<256x64xbf16>, vector<8x64xf32> -> vector<8x64xf32>
    %c1 = arith.constant 1 : index
    %c0_4 = arith.constant 0 : index
    %c0_5 = arith.constant 0 : index
    %5 = vector.load %arg1[%c1, %c0_4, %c0_5] : memref<9x256x64xbf16, #tpu.memory_space<vmem>>, vector<1x256x64xbf16>
    %6 = vector.shape_cast %5 : vector<1x256x64xbf16> to vector<256x64xbf16>
    %cst_6 = arith.constant dense<0.000000e+00> : vector<8x64xf32>
    %7 = tpu.matmul %1, %6, %cst_6 {dimension_numbers = #tpu.dot_dimension_numbers<[1], [0], [0], [1], [0, 0, 1, 1], [], []>} : vector<8x256xbf16>, vector<256x64xbf16>, vector<8x64xf32> -> vector<8x64xf32>
    %c2 = arith.constant 2 : index
    %c0_7 = arith.constant 0 : index
    %c0_8 = arith.constant 0 : index
    %8 = vector.load %arg1[%c2, %c0_7, %c0_8] : memref<9x256x64xbf16, #tpu.memory_space<vmem>>, vector<1x256x64xbf16>
    %9 = vector.shape_cast %8 : vector<1x256x64xbf16> to vector<256x64xbf16>
    %cst_9 = arith.constant dense<0.000000e+00> : vector<8x64xf32>
    %10 = tpu.matmul %1, %9, %cst_9 {dimension_numbers = #tpu.dot_dimension_numbers<[1], [0], [0], [1], [0, 0, 1, 1], [], []>} : vector<8x256xbf16>, vector<256x64xbf16>, vector<8x64xf32> -> vector<8x64xf32>
    %c3 = arith.constant 3 : index
    %c0_10 = arith.constant 0 : index
    %c0_11 = arith.constant 0 : index
    %11 = vector.load %arg1[%c3, %c0_10, %c0_11] : memref<9x256x64xbf16, #tpu.memory_space<vmem>>, vector<1x256x64xbf16>
    %12 = vector.shape_cast %11 : vector<1x256x64xbf16> to vector<256x64xbf16>
    %cst_12 = arith.constant dense<0.000000e+00> : vector<8x64xf32>
    %13 = tpu.matmul %1, %12, %cst_12 {dimension_numbers = #tpu.dot_dimension_numbers<[1], [0], [0], [1], [0, 0, 1, 1], [], []>} : vector<8x256xbf16>, vector<256x64xbf16>, vector<8x64xf32> -> vector<8x64xf32>
    %c4 = arith.constant 4 : index
    %c0_13 = arith.constant 0 : index
    %c0_14 = arith.constant 0 : index
    %14 = vector.load %arg1[%c4, %c0_13, %c0_14] : memref<9x256x64xbf16, #tpu.memory_space<vmem>>, vector<1x256x64xbf16>
    %15 = vector.shape_cast %14 : vector<1x256x64xbf16> to vector<256x64xbf16>
    %cst_15 = arith.constant dense<0.000000e+00> : vector<8x64xf32>
    %16 = tpu.matmul %1, %15, %cst_15 {dimension_numbers = #tpu.dot_dimension_numbers<[1], [0], [0], [1], [0, 0, 1, 1], [], []>} : vector<8x256xbf16>, vector<256x64xbf16>, vector<8x64xf32> -> vector<8x64xf32>
    %c5 = arith.constant 5 : index
    %c0_16 = arith.constant 0 : index
    %c0_17 = arith.constant 0 : index
    %17 = vector.load %arg1[%c5, %c0_16, %c0_17] : memref<9x256x64xbf16, #tpu.memory_space<vmem>>, vector<1x256x64xbf16>
    %18 = vector.shape_cast %17 : vector<1x256x64xbf16> to vector<256x64xbf16>
    %cst_18 = arith.constant dense<0.000000e+00> : vector<8x64xf32>
    %19 = tpu.matmul %1, %18, %cst_18 {dimension_numbers = #tpu.dot_dimension_numbers<[1], [0], [0], [1], [0, 0, 1, 1], [], []>} : vector<8x256xbf16>, vector<256x64xbf16>, vector<8x64xf32> -> vector<8x64xf32>
    %c6 = arith.constant 6 : index
    %c0_19 = arith.constant 0 : index
    %c0_20 = arith.constant 0 : index
    %20 = vector.load %arg1[%c6, %c0_19, %c0_20] : memref<9x256x64xbf16, #tpu.memory_space<vmem>>, vector<1x256x64xbf16>
    %21 = vector.shape_cast %20 : vector<1x256x64xbf16> to vector<256x64xbf16>
    %cst_21 = arith.constant dense<0.000000e+00> : vector<8x64xf32>
    %22 = tpu.matmul %1, %21, %cst_21 {dimension_numbers = #tpu.dot_dimension_numbers<[1], [0], [0], [1], [0, 0, 1, 1], [], []>} : vector<8x256xbf16>, vector<256x64xbf16>, vector<8x64xf32> -> vector<8x64xf32>
    %c7 = arith.constant 7 : index
    %c0_22 = arith.constant 0 : index
    %c0_23 = arith.constant 0 : index
    %23 = vector.load %arg1[%c7, %c0_22, %c0_23] : memref<9x256x64xbf16, #tpu.memory_space<vmem>>, vector<1x256x64xbf16>
    %24 = vector.shape_cast %23 : vector<1x256x64xbf16> to vector<256x64xbf16>
    %cst_24 = arith.constant dense<0.000000e+00> : vector<8x64xf32>
    %25 = tpu.matmul %1, %24, %cst_24 {dimension_numbers = #tpu.dot_dimension_numbers<[1], [0], [0], [1], [0, 0, 1, 1], [], []>} : vector<8x256xbf16>, vector<256x64xbf16>, vector<8x64xf32> -> vector<8x64xf32>
    %c8 = arith.constant 8 : index
    %c0_25 = arith.constant 0 : index
    %c0_26 = arith.constant 0 : index
    %26 = vector.load %arg1[%c8, %c0_25, %c0_26] : memref<9x256x64xbf16, #tpu.memory_space<vmem>>, vector<1x256x64xbf16>
    %27 = vector.shape_cast %26 : vector<1x256x64xbf16> to vector<256x64xbf16>
    %cst_27 = arith.constant dense<0.000000e+00> : vector<8x64xf32>
    %28 = tpu.matmul %1, %27, %cst_27 {dimension_numbers = #tpu.dot_dimension_numbers<[1], [0], [0], [1], [0, 0, 1, 1], [], []>} : vector<8x256xbf16>, vector<256x64xbf16>, vector<8x64xf32> -> vector<8x64xf32>
    %29 = tpu.concatenate %4, %7, %10, %13, %16, %19, %22, %25, %28 in 0 : vector<8x64xf32>, vector<8x64xf32>, vector<8x64xf32>, vector<8x64xf32>, vector<8x64xf32>, vector<8x64xf32>, vector<8x64xf32>, vector<8x64xf32>, vector<8x64xf32> -> vector<72x64xf32>
    %c0_28 = arith.constant 0 : index
    %c0_29 = arith.constant 0 : index
    %30 = vector.load %arg8[%c0_28, %c0_29] : memref<32x72xf32, #tpu.memory_space<vmem>>, vector<32x72xf32>
    %cst_30 = arith.constant dense<0.000000e+00> : vector<32x64xf32>
    %31 = tpu.matmul %30, %29, %cst_30 {dimension_numbers = #tpu.dot_dimension_numbers<[1], [0], [0], [1], [0, 0, 1, 1], [], []>} : vector<32x72xf32>, vector<72x64xf32>, vector<32x64xf32> -> vector<32x64xf32>
    %cst_31 = arith.constant dense<0.000000e+00> : vector<32xf32>
    %32 = vector.multi_reduction <add>, %31, %cst_31 [1] : vector<32x64xf32> to vector<32xf32>
    %33 = vector.shape_cast %32 : vector<32xf32> to vector<32x1xf32>
    %34 = vector.extract_strided_slice %33 {offsets = [0, 0], sizes = [16, 1], strides = [1, 1]} : vector<32x1xf32> to vector<16x1xf32>
    %35 = vector.extract_strided_slice %33 {offsets = [16, 0], sizes = [16, 1], strides = [1, 1]} : vector<32x1xf32> to vector<16x1xf32>
    %36 = arith.addf %34, %35 : vector<16x1xf32>
    %37 = tpu.concatenate %36, %36 in 0 : vector<16x1xf32>, vector<16x1xf32> -> vector<32x1xf32>
    %38 = arith.mulf %31, %31 : vector<32x64xf32>
    %cst_32 = arith.constant dense<0.000000e+00> : vector<32xf32>
    %39 = vector.multi_reduction <add>, %38, %cst_32 [1] : vector<32x64xf32> to vector<32xf32>
    %40 = vector.shape_cast %39 : vector<32xf32> to vector<32x1xf32>
    %41 = vector.extract_strided_slice %40 {offsets = [0, 0], sizes = [16, 1], strides = [1, 1]} : vector<32x1xf32> to vector<16x1xf32>
    %42 = vector.extract_strided_slice %40 {offsets = [16, 0], sizes = [16, 1], strides = [1, 1]} : vector<32x1xf32> to vector<16x1xf32>
    %43 = arith.addf %41, %42 : vector<16x1xf32>
    %44 = tpu.concatenate %43, %43 in 0 : vector<16x1xf32>, vector<16x1xf32> -> vector<32x1xf32>
    %cst_33 = arith.constant 7.812500e-03 : f32
    %45 = vector.broadcast %cst_33 : f32 to vector<32x1xf32>
    %46 = arith.mulf %37, %45 : vector<32x1xf32>
    %cst_34 = arith.constant 7.812500e-03 : f32
    %47 = vector.broadcast %cst_34 : f32 to vector<32x1xf32>
    %48 = arith.mulf %44, %47 : vector<32x1xf32>
    %49 = arith.mulf %46, %46 : vector<32x1xf32>
    %50 = arith.subf %48, %49 : vector<32x1xf32>
    %cst_35 = arith.constant 0.000000e+00 : f32
    %51 = vector.broadcast %cst_35 : f32 to vector<32x1xf32>
    %52 = arith.maximumf %50, %51 : vector<32x1xf32>
    %c0_36 = arith.constant 0 : index
    %c0_37 = arith.constant 0 : index
    %c0_38 = arith.constant 0 : index
    %53 = vector.load %arg18[%c0_36, %c0_37, %c0_38] : memref<13x32x2xf32, #tpu.memory_space<vmem>>, vector<1x32x1xf32>
    %54 = vector.shape_cast %53 : vector<1x32x1xf32> to vector<32x1xf32>
    %c0_39 = arith.constant 0 : index
    %c0_40 = arith.constant 0 : index
    %c1_41 = arith.constant 1 : index
    %55 = vector.load %arg18[%c0_39, %c0_40, %c1_41] : memref<13x32x2xf32, #tpu.memory_space<vmem>>, vector<1x32x1xf32>
    %56 = vector.shape_cast %55 : vector<1x32x1xf32> to vector<32x1xf32>
    %cst_42 = arith.constant 9.99999974E-6 : f32
    %57 = vector.broadcast %cst_42 : f32 to vector<32x1xf32>
    %58 = arith.addf %52, %57 : vector<32x1xf32>
    %59 = math.rsqrt %58 : vector<32x1xf32>
    %60 = arith.mulf %54, %59 : vector<32x1xf32>
    %61 = arith.mulf %46, %60 : vector<32x1xf32>
    %62 = arith.subf %56, %61 : vector<32x1xf32>
    %63 = vector.broadcast %60 : vector<32x1xf32> to vector<32x64xf32>
    %64 = arith.mulf %31, %63 : vector<32x64xf32>
    %65 = vector.broadcast %62 : vector<32x1xf32> to vector<32x64xf32>
    %66 = arith.addf %64, %65 : vector<32x64xf32>
    %cst_43 = arith.constant 0.000000e+00 : f32
    %67 = vector.broadcast %cst_43 : f32 to vector<32x64xf32>
    %68 = arith.cmpf oge, %66, %67 : vector<32x64xf32>
    %cst_44 = arith.constant 2.000000e-01 : f32
    %69 = vector.broadcast %cst_44 : f32 to vector<32x64xf32>
    %70 = arith.mulf %66, %69 : vector<32x64xf32>
    %71 = arith.select %68, %66, %70 : vector<32x64xi1>, vector<32x64xf32>
    %72 = arith.truncf %71 : vector<32x64xf32> to vector<32x64xbf16>
    %c0_45 = arith.constant 0 : index
    %c0_46 = arith.constant 0 : index
    %c0_47 = arith.constant 0 : index
    %73 = vector.load %arg2[%c0_45, %c0_46, %c0_47] : memref<9x64x64xbf16, #tpu.memory_space<vmem>>, vector<1x64x64xbf16>
    %74 = vector.shape_cast %73 : vector<1x64x64xbf16> to vector<64x64xbf16>
    %cst_48 = arith.constant dense<0.000000e+00> : vector<32x64xf32>
    %75 = tpu.matmul %72, %74, %cst_48 {dimension_numbers = #tpu.dot_dimension_numbers<[1], [0], [0], [1], [0, 0, 1, 1], [], []>} : vector<32x64xbf16>, vector<64x64xbf16>, vector<32x64xf32> -> vector<32x64xf32>
    %c1_49 = arith.constant 1 : index
    %c0_50 = arith.constant 0 : index
    %c0_51 = arith.constant 0 : index
    %76 = vector.load %arg2[%c1_49, %c0_50, %c0_51] : memref<9x64x64xbf16, #tpu.memory_space<vmem>>, vector<1x64x64xbf16>
    %77 = vector.shape_cast %76 : vector<1x64x64xbf16> to vector<64x64xbf16>
    %cst_52 = arith.constant dense<0.000000e+00> : vector<32x64xf32>
    %78 = tpu.matmul %72, %77, %cst_52 {dimension_numbers = #tpu.dot_dimension_numbers<[1], [0], [0], [1], [0, 0, 1, 1], [], []>} : vector<32x64xbf16>, vector<64x64xbf16>, vector<32x64xf32> -> vector<32x64xf32>
    %c2_53 = arith.constant 2 : index
    %c0_54 = arith.constant 0 : index
    %c0_55 = arith.constant 0 : index
    %79 = vector.load %arg2[%c2_53, %c0_54, %c0_55] : memref<9x64x64xbf16, #tpu.memory_space<vmem>>, vector<1x64x64xbf16>
    %80 = vector.shape_cast %79 : vector<1x64x64xbf16> to vector<64x64xbf16>
    %cst_56 = arith.constant dense<0.000000e+00> : vector<32x64xf32>
    %81 = tpu.matmul %72, %80, %cst_56 {dimension_numbers = #tpu.dot_dimension_numbers<[1], [0], [0], [1], [0, 0, 1, 1], [], []>} : vector<32x64xbf16>, vector<64x64xbf16>, vector<32x64xf32> -> vector<32x64xf32>
    %c3_57 = arith.constant 3 : index
    %c0_58 = arith.constant 0 : index
    %c0_59 = arith.constant 0 : index
    %82 = vector.load %arg2[%c3_57, %c0_58, %c0_59] : memref<9x64x64xbf16, #tpu.memory_space<vmem>>, vector<1x64x64xbf16>
    %83 = vector.shape_cast %82 : vector<1x64x64xbf16> to vector<64x64xbf16>
    %cst_60 = arith.constant dense<0.000000e+00> : vector<32x64xf32>
    %84 = tpu.matmul %72, %83, %cst_60 {dimension_numbers = #tpu.dot_dimension_numbers<[1], [0], [0], [1], [0, 0, 1, 1], [], []>} : vector<32x64xbf16>, vector<64x64xbf16>, vector<32x64xf32> -> vector<32x64xf32>
    %c4_61 = arith.constant 4 : index
    %c0_62 = arith.constant 0 : index
    %c0_63 = arith.constant 0 : index
    %85 = vector.load %arg2[%c4_61, %c0_62, %c0_63] : memref<9x64x64xbf16, #tpu.memory_space<vmem>>, vector<1x64x64xbf16>
    %86 = vector.shape_cast %85 : vector<1x64x64xbf16> to vector<64x64xbf16>
    %cst_64 = arith.constant dense<0.000000e+00> : vector<32x64xf32>
    %87 = tpu.matmul %72, %86, %cst_64 {dimension_numbers = #tpu.dot_dimension_numbers<[1], [0], [0], [1], [0, 0, 1, 1], [], []>} : vector<32x64xbf16>, vector<64x64xbf16>, vector<32x64xf32> -> vector<32x64xf32>
    %c5_65 = arith.constant 5 : index
    %c0_66 = arith.constant 0 : index
    %c0_67 = arith.constant 0 : index
    %88 = vector.load %arg2[%c5_65, %c0_66, %c0_67] : memref<9x64x64xbf16, #tpu.memory_space<vmem>>, vector<1x64x64xbf16>
    %89 = vector.shape_cast %88 : vector<1x64x64xbf16> to vector<64x64xbf16>
    %cst_68 = arith.constant dense<0.000000e+00> : vector<32x64xf32>
    %90 = tpu.matmul %72, %89, %cst_68 {dimension_numbers = #tpu.dot_dimension_numbers<[1], [0], [0], [1], [0, 0, 1, 1], [], []>} : vector<32x64xbf16>, vector<64x64xbf16>, vector<32x64xf32> -> vector<32x64xf32>
    %c6_69 = arith.constant 6 : index
    %c0_70 = arith.constant 0 : index
    %c0_71 = arith.constant 0 : index
    %91 = vector.load %arg2[%c6_69, %c0_70, %c0_71] : memref<9x64x64xbf16, #tpu.memory_space<vmem>>, vector<1x64x64xbf16>
    %92 = vector.shape_cast %91 : vector<1x64x64xbf16> to vector<64x64xbf16>
    %cst_72 = arith.constant dense<0.000000e+00> : vector<32x64xf32>
    %93 = tpu.matmul %72, %92, %cst_72 {dimension_numbers = #tpu.dot_dimension_numbers<[1], [0], [0], [1], [0, 0, 1, 1], [], []>} : vector<32x64xbf16>, vector<64x64xbf16>, vector<32x64xf32> -> vector<32x64xf32>
    %c7_73 = arith.constant 7 : index
    %c0_74 = arith.constant 0 : index
    %c0_75 = arith.constant 0 : index
    %94 = vector.load %arg2[%c7_73, %c0_74, %c0_75] : memref<9x64x64xbf16, #tpu.memory_space<vmem>>, vector<1x64x64xbf16>
    %95 = vector.shape_cast %94 : vector<1x64x64xbf16> to vector<64x64xbf16>
    %cst_76 = arith.constant dense<0.000000e+00> : vector<32x64xf32>
    %96 = tpu.matmul %72, %95, %cst_76 {dimension_numbers = #tpu.dot_dimension_numbers<[1], [0], [0], [1], [0, 0, 1, 1], [], []>} : vector<32x64xbf16>, vector<64x64xbf16>, vector<32x64xf32> -> vector<32x64xf32>
    %c8_77 = arith.constant 8 : index
    %c0_78 = arith.constant 0 : index
    %c0_79 = arith.constant 0 : index
    %97 = vector.load %arg2[%c8_77, %c0_78, %c0_79] : memref<9x64x64xbf16, #tpu.memory_space<vmem>>, vector<1x64x64xbf16>
    %98 = vector.shape_cast %97 : vector<1x64x64xbf16> to vector<64x64xbf16>
    %cst_80 = arith.constant dense<0.000000e+00> : vector<32x64xf32>
    %99 = tpu.matmul %72, %98, %cst_80 {dimension_numbers = #tpu.dot_dimension_numbers<[1], [0], [0], [1], [0, 0, 1, 1], [], []>} : vector<32x64xbf16>, vector<64x64xbf16>, vector<32x64xf32> -> vector<32x64xf32>
    %100 = tpu.concatenate %75, %78, %81, %84, %87, %90, %93, %96, %99 in 0 : vector<32x64xf32>, vector<32x64xf32>, vector<32x64xf32>, vector<32x64xf32>, vector<32x64xf32>, vector<32x64xf32>, vector<32x64xf32>, vector<32x64xf32>, vector<32x64xf32> -> vector<288x64xf32>
    %c0_81 = arith.constant 0 : index
    %c0_82 = arith.constant 0 : index
    %101 = vector.load %arg9[%c0_81, %c0_82] : memref<32x288xf32, #tpu.memory_space<vmem>>, vector<32x288xf32>
    %cst_83 = arith.constant dense<0.000000e+00> : vector<32x64xf32>
    %102 = tpu.matmul %101, %100, %cst_83 {dimension_numbers = #tpu.dot_dimension_numbers<[1], [0], [0], [1], [0, 0, 1, 1], [], []>} : vector<32x288xf32>, vector<288x64xf32>, vector<32x64xf32> -> vector<32x64xf32>
    %cst_84 = arith.constant dense<0.000000e+00> : vector<32xf32>
    %103 = vector.multi_reduction <add>, %102, %cst_84 [1] : vector<32x64xf32> to vector<32xf32>
    %104 = vector.shape_cast %103 : vector<32xf32> to vector<32x1xf32>
    %105 = vector.extract_strided_slice %104 {offsets = [0, 0], sizes = [16, 1], strides = [1, 1]} : vector<32x1xf32> to vector<16x1xf32>
    %106 = vector.extract_strided_slice %104 {offsets = [16, 0], sizes = [16, 1], strides = [1, 1]} : vector<32x1xf32> to vector<16x1xf32>
    %107 = arith.addf %105, %106 : vector<16x1xf32>
    %108 = tpu.concatenate %107, %107 in 0 : vector<16x1xf32>, vector<16x1xf32> -> vector<32x1xf32>
    %109 = arith.mulf %102, %102 : vector<32x64xf32>
    %cst_85 = arith.constant dense<0.000000e+00> : vector<32xf32>
    %110 = vector.multi_reduction <add>, %109, %cst_85 [1] : vector<32x64xf32> to vector<32xf32>
    %111 = vector.shape_cast %110 : vector<32xf32> to vector<32x1xf32>
    %112 = vector.extract_strided_slice %111 {offsets = [0, 0], sizes = [16, 1], strides = [1, 1]} : vector<32x1xf32> to vector<16x1xf32>
    %113 = vector.extract_strided_slice %111 {offsets = [16, 0], sizes = [16, 1], strides = [1, 1]} : vector<32x1xf32> to vector<16x1xf32>
    %114 = arith.addf %112, %113 : vector<16x1xf32>
    %115 = tpu.concatenate %114, %114 in 0 : vector<16x1xf32>, vector<16x1xf32> -> vector<32x1xf32>
    %cst_86 = arith.constant 7.812500e-03 : f32
    %116 = vector.broadcast %cst_86 : f32 to vector<32x1xf32>
    %117 = arith.mulf %108, %116 : vector<32x1xf32>
    %cst_87 = arith.constant 7.812500e-03 : f32
    %118 = vector.broadcast %cst_87 : f32 to vector<32x1xf32>
    %119 = arith.mulf %115, %118 : vector<32x1xf32>
    %120 = arith.mulf %117, %117 : vector<32x1xf32>
    %121 = arith.subf %119, %120 : vector<32x1xf32>
    %cst_88 = arith.constant 0.000000e+00 : f32
    %122 = vector.broadcast %cst_88 : f32 to vector<32x1xf32>
    %123 = arith.maximumf %121, %122 : vector<32x1xf32>
    %c1_89 = arith.constant 1 : index
    %c0_90 = arith.constant 0 : index
    %c0_91 = arith.constant 0 : index
    %124 = vector.load %arg18[%c1_89, %c0_90, %c0_91] : memref<13x32x2xf32, #tpu.memory_space<vmem>>, vector<1x32x1xf32>
    %125 = vector.shape_cast %124 : vector<1x32x1xf32> to vector<32x1xf32>
    %c1_92 = arith.constant 1 : index
    %c0_93 = arith.constant 0 : index
    %c1_94 = arith.constant 1 : index
    %126 = vector.load %arg18[%c1_92, %c0_93, %c1_94] : memref<13x32x2xf32, #tpu.memory_space<vmem>>, vector<1x32x1xf32>
    %127 = vector.shape_cast %126 : vector<1x32x1xf32> to vector<32x1xf32>
    %cst_95 = arith.constant 9.99999974E-6 : f32
    %128 = vector.broadcast %cst_95 : f32 to vector<32x1xf32>
    %129 = arith.addf %123, %128 : vector<32x1xf32>
    %130 = math.rsqrt %129 : vector<32x1xf32>
    %131 = arith.mulf %125, %130 : vector<32x1xf32>
    %132 = arith.mulf %117, %131 : vector<32x1xf32>
    %133 = arith.subf %127, %132 : vector<32x1xf32>
    %134 = vector.broadcast %131 : vector<32x1xf32> to vector<32x64xf32>
    %135 = arith.mulf %102, %134 : vector<32x64xf32>
    %136 = vector.broadcast %133 : vector<32x1xf32> to vector<32x64xf32>
    %137 = arith.addf %135, %136 : vector<32x64xf32>
    %cst_96 = arith.constant 0.000000e+00 : f32
    %138 = vector.broadcast %cst_96 : f32 to vector<32x64xf32>
    %139 = arith.cmpf oge, %137, %138 : vector<32x64xf32>
    %cst_97 = arith.constant 2.000000e-01 : f32
    %140 = vector.broadcast %cst_97 : f32 to vector<32x64xf32>
    %141 = arith.mulf %137, %140 : vector<32x64xf32>
    %142 = arith.select %139, %137, %141 : vector<32x64xi1>, vector<32x64xf32>
    %c0_98 = arith.constant 0 : index
    %c0_99 = arith.constant 0 : index
    %143 = vector.load %arg10[%c0_98, %c0_99] : memref<16x32xf32, #tpu.memory_space<vmem>>, vector<16x32xf32>
    %cst_100 = arith.constant dense<0.000000e+00> : vector<16x64xf32>
    %144 = tpu.matmul %143, %142, %cst_100 {dimension_numbers = #tpu.dot_dimension_numbers<[1], [0], [0], [1], [0, 0, 1, 1], [], []>} : vector<16x32xf32>, vector<32x64xf32>, vector<16x64xf32> -> vector<16x64xf32>
    %cst_101 = arith.constant dense<0.000000e+00> : vector<16xf32>
    %145 = vector.multi_reduction <add>, %144, %cst_101 [1] : vector<16x64xf32> to vector<16xf32>
    %146 = vector.shape_cast %145 : vector<16xf32> to vector<16x1xf32>
    %147 = vector.extract_strided_slice %146 {offsets = [0, 0], sizes = [8, 1], strides = [1, 1]} : vector<16x1xf32> to vector<8x1xf32>
    %148 = vector.extract_strided_slice %146 {offsets = [8, 0], sizes = [8, 1], strides = [1, 1]} : vector<16x1xf32> to vector<8x1xf32>
    %149 = arith.addf %147, %148 : vector<8x1xf32>
    %150 = tpu.concatenate %149, %149 in 0 : vector<8x1xf32>, vector<8x1xf32> -> vector<16x1xf32>
    %151 = arith.mulf %144, %144 : vector<16x64xf32>
    %cst_102 = arith.constant dense<0.000000e+00> : vector<16xf32>
    %152 = vector.multi_reduction <add>, %151, %cst_102 [1] : vector<16x64xf32> to vector<16xf32>
    %153 = vector.shape_cast %152 : vector<16xf32> to vector<16x1xf32>
    %154 = vector.extract_strided_slice %153 {offsets = [0, 0], sizes = [8, 1], strides = [1, 1]} : vector<16x1xf32> to vector<8x1xf32>
    %155 = vector.extract_strided_slice %153 {offsets = [8, 0], sizes = [8, 1], strides = [1, 1]} : vector<16x1xf32> to vector<8x1xf32>
    %156 = arith.addf %154, %155 : vector<8x1xf32>
    %157 = tpu.concatenate %156, %156 in 0 : vector<8x1xf32>, vector<8x1xf32> -> vector<16x1xf32>
    %cst_103 = arith.constant 7.812500e-03 : f32
    %158 = vector.broadcast %cst_103 : f32 to vector<16x1xf32>
    %159 = arith.mulf %150, %158 : vector<16x1xf32>
    %cst_104 = arith.constant 7.812500e-03 : f32
    %160 = vector.broadcast %cst_104 : f32 to vector<16x1xf32>
    %161 = arith.mulf %157, %160 : vector<16x1xf32>
    %162 = arith.mulf %159, %159 : vector<16x1xf32>
    %163 = arith.subf %161, %162 : vector<16x1xf32>
    %cst_105 = arith.constant 0.000000e+00 : f32
    %164 = vector.broadcast %cst_105 : f32 to vector<16x1xf32>
    %165 = arith.maximumf %163, %164 : vector<16x1xf32>
    %c2_106 = arith.constant 2 : index
    %c0_107 = arith.constant 0 : index
    %c0_108 = arith.constant 0 : index
    %166 = vector.load %arg18[%c2_106, %c0_107, %c0_108] : memref<13x32x2xf32, #tpu.memory_space<vmem>>, vector<1x16x1xf32>
    %167 = vector.shape_cast %166 : vector<1x16x1xf32> to vector<16x1xf32>
    %c2_109 = arith.constant 2 : index
    %c0_110 = arith.constant 0 : index
    %c1_111 = arith.constant 1 : index
    %168 = vector.load %arg18[%c2_109, %c0_110, %c1_111] : memref<13x32x2xf32, #tpu.memory_space<vmem>>, vector<1x16x1xf32>
    %169 = vector.shape_cast %168 : vector<1x16x1xf32> to vector<16x1xf32>
    %cst_112 = arith.constant 9.99999974E-6 : f32
    %170 = vector.broadcast %cst_112 : f32 to vector<16x1xf32>
    %171 = arith.addf %165, %170 : vector<16x1xf32>
    %172 = math.rsqrt %171 : vector<16x1xf32>
    %173 = arith.mulf %167, %172 : vector<16x1xf32>
    %174 = arith.mulf %159, %173 : vector<16x1xf32>
    %175 = arith.subf %169, %174 : vector<16x1xf32>
    %176 = vector.broadcast %173 : vector<16x1xf32> to vector<16x64xf32>
    %177 = arith.mulf %144, %176 : vector<16x64xf32>
    %178 = vector.broadcast %175 : vector<16x1xf32> to vector<16x64xf32>
    %179 = arith.addf %177, %178 : vector<16x64xf32>
    %cst_113 = arith.constant 0.000000e+00 : f32
    %180 = vector.broadcast %cst_113 : f32 to vector<16x64xf32>
    %181 = arith.cmpf oge, %179, %180 : vector<16x64xf32>
    %cst_114 = arith.constant 2.000000e-01 : f32
    %182 = vector.broadcast %cst_114 : f32 to vector<16x64xf32>
    %183 = arith.mulf %179, %182 : vector<16x64xf32>
    %184 = arith.select %181, %179, %183 : vector<16x64xi1>, vector<16x64xf32>
    %185 = arith.truncf %142 : vector<32x64xf32> to vector<32x64xbf16>
    %c0_115 = arith.constant 0 : index
    %c0_116 = arith.constant 0 : index
    %c0_117 = arith.constant 0 : index
    %186 = vector.load %arg3[%c0_115, %c0_116, %c0_117] : memref<9x64x16xbf16, #tpu.memory_space<vmem>>, vector<1x64x16xbf16>
    %187 = vector.shape_cast %186 : vector<1x64x16xbf16> to vector<64x16xbf16>
    %cst_118 = arith.constant dense<0.000000e+00> : vector<32x16xf32>
    %188 = tpu.matmul %185, %187, %cst_118 {dimension_numbers = #tpu.dot_dimension_numbers<[1], [0], [0], [1], [0, 0, 1, 1], [], []>} : vector<32x64xbf16>, vector<64x16xbf16>, vector<32x16xf32> -> vector<32x16xf32>
    %c1_119 = arith.constant 1 : index
    %c0_120 = arith.constant 0 : index
    %c0_121 = arith.constant 0 : index
    %189 = vector.load %arg3[%c1_119, %c0_120, %c0_121] : memref<9x64x16xbf16, #tpu.memory_space<vmem>>, vector<1x64x16xbf16>
    %190 = vector.shape_cast %189 : vector<1x64x16xbf16> to vector<64x16xbf16>
    %cst_122 = arith.constant dense<0.000000e+00> : vector<32x16xf32>
    %191 = tpu.matmul %185, %190, %cst_122 {dimension_numbers = #tpu.dot_dimension_numbers<[1], [0], [0], [1], [0, 0, 1, 1], [], []>} : vector<32x64xbf16>, vector<64x16xbf16>, vector<32x16xf32> -> vector<32x16xf32>
    %c2_123 = arith.constant 2 : index
    %c0_124 = arith.constant 0 : index
    %c0_125 = arith.constant 0 : index
    %192 = vector.load %arg3[%c2_123, %c0_124, %c0_125] : memref<9x64x16xbf16, #tpu.memory_space<vmem>>, vector<1x64x16xbf16>
    %193 = vector.shape_cast %192 : vector<1x64x16xbf16> to vector<64x16xbf16>
    %cst_126 = arith.constant dense<0.000000e+00> : vector<32x16xf32>
    %194 = tpu.matmul %185, %193, %cst_126 {dimension_numbers = #tpu.dot_dimension_numbers<[1], [0], [0], [1], [0, 0, 1, 1], [], []>} : vector<32x64xbf16>, vector<64x16xbf16>, vector<32x16xf32> -> vector<32x16xf32>
    %c3_127 = arith.constant 3 : index
    %c0_128 = arith.constant 0 : index
    %c0_129 = arith.constant 0 : index
    %195 = vector.load %arg3[%c3_127, %c0_128, %c0_129] : memref<9x64x16xbf16, #tpu.memory_space<vmem>>, vector<1x64x16xbf16>
    %196 = vector.shape_cast %195 : vector<1x64x16xbf16> to vector<64x16xbf16>
    %cst_130 = arith.constant dense<0.000000e+00> : vector<32x16xf32>
    %197 = tpu.matmul %185, %196, %cst_130 {dimension_numbers = #tpu.dot_dimension_numbers<[1], [0], [0], [1], [0, 0, 1, 1], [], []>} : vector<32x64xbf16>, vector<64x16xbf16>, vector<32x16xf32> -> vector<32x16xf32>
    %c4_131 = arith.constant 4 : index
    %c0_132 = arith.constant 0 : index
    %c0_133 = arith.constant 0 : index
    %198 = vector.load %arg3[%c4_131, %c0_132, %c0_133] : memref<9x64x16xbf16, #tpu.memory_space<vmem>>, vector<1x64x16xbf16>
    %199 = vector.shape_cast %198 : vector<1x64x16xbf16> to vector<64x16xbf16>
    %cst_134 = arith.constant dense<0.000000e+00> : vector<32x16xf32>
    %200 = tpu.matmul %185, %199, %cst_134 {dimension_numbers = #tpu.dot_dimension_numbers<[1], [0], [0], [1], [0, 0, 1, 1], [], []>} : vector<32x64xbf16>, vector<64x16xbf16>, vector<32x16xf32> -> vector<32x16xf32>
    %c5_135 = arith.constant 5 : index
    %c0_136 = arith.constant 0 : index
    %c0_137 = arith.constant 0 : index
    %201 = vector.load %arg3[%c5_135, %c0_136, %c0_137] : memref<9x64x16xbf16, #tpu.memory_space<vmem>>, vector<1x64x16xbf16>
    %202 = vector.shape_cast %201 : vector<1x64x16xbf16> to vector<64x16xbf16>
    %cst_138 = arith.constant dense<0.000000e+00> : vector<32x16xf32>
    %203 = tpu.matmul %185, %202, %cst_138 {dimension_numbers = #tpu.dot_dimension_numbers<[1], [0], [0], [1], [0, 0, 1, 1], [], []>} : vector<32x64xbf16>, vector<64x16xbf16>, vector<32x16xf32> -> vector<32x16xf32>
    %c6_139 = arith.constant 6 : index
    %c0_140 = arith.constant 0 : index
    %c0_141 = arith.constant 0 : index
    %204 = vector.load %arg3[%c6_139, %c0_140, %c0_141] : memref<9x64x16xbf16, #tpu.memory_space<vmem>>, vector<1x64x16xbf16>
    %205 = vector.shape_cast %204 : vector<1x64x16xbf16> to vector<64x16xbf16>
    %cst_142 = arith.constant dense<0.000000e+00> : vector<32x16xf32>
    %206 = tpu.matmul %185, %205, %cst_142 {dimension_numbers = #tpu.dot_dimension_numbers<[1], [0], [0], [1], [0, 0, 1, 1], [], []>} : vector<32x64xbf16>, vector<64x16xbf16>, vector<32x16xf32> -> vector<32x16xf32>
    %c7_143 = arith.constant 7 : index
    %c0_144 = arith.constant 0 : index
    %c0_145 = arith.constant 0 : index
    %207 = vector.load %arg3[%c7_143, %c0_144, %c0_145] : memref<9x64x16xbf16, #tpu.memory_space<vmem>>, vector<1x64x16xbf16>
    %208 = vector.shape_cast %207 : vector<1x64x16xbf16> to vector<64x16xbf16>
    %cst_146 = arith.constant dense<0.000000e+00> : vector<32x16xf32>
    %209 = tpu.matmul %185, %208, %cst_146 {dimension_numbers = #tpu.dot_dimension_numbers<[1], [0], [0], [1], [0, 0, 1, 1], [], []>} : vector<32x64xbf16>, vector<64x16xbf16>, vector<32x16xf32> -> vector<32x16xf32>
    %c8_147 = arith.constant 8 : index
    %c0_148 = arith.constant 0 : index
    %c0_149 = arith.constant 0 : index
    %210 = vector.load %arg3[%c8_147, %c0_148, %c0_149] : memref<9x64x16xbf16, #tpu.memory_space<vmem>>, vector<1x64x16xbf16>
    %211 = vector.shape_cast %210 : vector<1x64x16xbf16> to vector<64x16xbf16>
    %cst_150 = arith.constant dense<0.000000e+00> : vector<32x16xf32>
    %212 = tpu.matmul %185, %211, %cst_150 {dimension_numbers = #tpu.dot_dimension_numbers<[1], [0], [0], [1], [0, 0, 1, 1], [], []>} : vector<32x64xbf16>, vector<64x16xbf16>, vector<32x16xf32> -> vector<32x16xf32>
    %213 = tpu.concatenate %188, %191, %194, %197, %200, %203, %206, %209, %212 in 0 : vector<32x16xf32>, vector<32x16xf32>, vector<32x16xf32>, vector<32x16xf32>, vector<32x16xf32>, vector<32x16xf32>, vector<32x16xf32>, vector<32x16xf32>, vector<32x16xf32> -> vector<288x16xf32>
    %c0_151 = arith.constant 0 : index
    %c0_152 = arith.constant 0 : index
    %214 = vector.load %arg11[%c0_151, %c0_152] : memref<32x288xf32, #tpu.memory_space<vmem>>, vector<32x288xf32>
    %cst_153 = arith.constant dense<0.000000e+00> : vector<32x16xf32>
    %215 = tpu.matmul %214, %213, %cst_153 {dimension_numbers = #tpu.dot_dimension_numbers<[1], [0], [0], [1], [0, 0, 1, 1], [], []>} : vector<32x288xf32>, vector<288x16xf32>, vector<32x16xf32> -> vector<32x16xf32>
    %cst_154 = arith.constant dense<0.000000e+00> : vector<32xf32>
    %216 = vector.multi_reduction <add>, %215, %cst_154 [1] : vector<32x16xf32> to vector<32xf32>
    %217 = vector.shape_cast %216 : vector<32xf32> to vector<32x1xf32>
    %218 = vector.extract_strided_slice %217 {offsets = [0, 0], sizes = [16, 1], strides = [1, 1]} : vector<32x1xf32> to vector<16x1xf32>
    %219 = vector.extract_strided_slice %217 {offsets = [16, 0], sizes = [16, 1], strides = [1, 1]} : vector<32x1xf32> to vector<16x1xf32>
    %220 = arith.addf %218, %219 : vector<16x1xf32>
    %221 = tpu.concatenate %220, %220 in 0 : vector<16x1xf32>, vector<16x1xf32> -> vector<32x1xf32>
    %222 = arith.mulf %215, %215 : vector<32x16xf32>
    %cst_155 = arith.constant dense<0.000000e+00> : vector<32xf32>
    %223 = vector.multi_reduction <add>, %222, %cst_155 [1] : vector<32x16xf32> to vector<32xf32>
    %224 = vector.shape_cast %223 : vector<32xf32> to vector<32x1xf32>
    %225 = vector.extract_strided_slice %224 {offsets = [0, 0], sizes = [16, 1], strides = [1, 1]} : vector<32x1xf32> to vector<16x1xf32>
    %226 = vector.extract_strided_slice %224 {offsets = [16, 0], sizes = [16, 1], strides = [1, 1]} : vector<32x1xf32> to vector<16x1xf32>
    %227 = arith.addf %225, %226 : vector<16x1xf32>
    %228 = tpu.concatenate %227, %227 in 0 : vector<16x1xf32>, vector<16x1xf32> -> vector<32x1xf32>
    %cst_156 = arith.constant 3.125000e-02 : f32
    %229 = vector.broadcast %cst_156 : f32 to vector<32x1xf32>
    %230 = arith.mulf %221, %229 : vector<32x1xf32>
    %cst_157 = arith.constant 3.125000e-02 : f32
    %231 = vector.broadcast %cst_157 : f32 to vector<32x1xf32>
    %232 = arith.mulf %228, %231 : vector<32x1xf32>
    %233 = arith.mulf %230, %230 : vector<32x1xf32>
    %234 = arith.subf %232, %233 : vector<32x1xf32>
    %cst_158 = arith.constant 0.000000e+00 : f32
    %235 = vector.broadcast %cst_158 : f32 to vector<32x1xf32>
    %236 = arith.maximumf %234, %235 : vector<32x1xf32>
    %c3_159 = arith.constant 3 : index
    %c0_160 = arith.constant 0 : index
    %c0_161 = arith.constant 0 : index
    %237 = vector.load %arg18[%c3_159, %c0_160, %c0_161] : memref<13x32x2xf32, #tpu.memory_space<vmem>>, vector<1x32x1xf32>
    %238 = vector.shape_cast %237 : vector<1x32x1xf32> to vector<32x1xf32>
    %c3_162 = arith.constant 3 : index
    %c0_163 = arith.constant 0 : index
    %c1_164 = arith.constant 1 : index
    %239 = vector.load %arg18[%c3_162, %c0_163, %c1_164] : memref<13x32x2xf32, #tpu.memory_space<vmem>>, vector<1x32x1xf32>
    %240 = vector.shape_cast %239 : vector<1x32x1xf32> to vector<32x1xf32>
    %cst_165 = arith.constant 9.99999974E-6 : f32
    %241 = vector.broadcast %cst_165 : f32 to vector<32x1xf32>
    %242 = arith.addf %236, %241 : vector<32x1xf32>
    %243 = math.rsqrt %242 : vector<32x1xf32>
    %244 = arith.mulf %238, %243 : vector<32x1xf32>
    %245 = arith.mulf %230, %244 : vector<32x1xf32>
    %246 = arith.subf %240, %245 : vector<32x1xf32>
    %247 = vector.broadcast %244 : vector<32x1xf32> to vector<32x16xf32>
    %248 = arith.mulf %215, %247 : vector<32x16xf32>
    %249 = vector.broadcast %246 : vector<32x1xf32> to vector<32x16xf32>
    %250 = arith.addf %248, %249 : vector<32x16xf32>
    %cst_166 = arith.constant 0.000000e+00 : f32
    %251 = vector.broadcast %cst_166 : f32 to vector<32x16xf32>
    %252 = arith.cmpf oge, %250, %251 : vector<32x16xf32>
    %cst_167 = arith.constant 2.000000e-01 : f32
    %253 = vector.broadcast %cst_167 : f32 to vector<32x16xf32>
    %254 = arith.mulf %250, %253 : vector<32x16xf32>
    %255 = arith.select %252, %250, %254 : vector<32x16xi1>, vector<32x16xf32>
    %256 = arith.truncf %255 : vector<32x16xf32> to vector<32x16xbf16>
    %c0_168 = arith.constant 0 : index
    %c0_169 = arith.constant 0 : index
    %c0_170 = arith.constant 0 : index
    %257 = vector.load %arg4[%c0_168, %c0_169, %c0_170] : memref<9x16x16xbf16, #tpu.memory_space<vmem>>, vector<1x16x16xbf16>
    %258 = vector.shape_cast %257 : vector<1x16x16xbf16> to vector<16x16xbf16>
    %cst_171 = arith.constant dense<0.000000e+00> : vector<32x16xf32>
    %259 = tpu.matmul %256, %258, %cst_171 {dimension_numbers = #tpu.dot_dimension_numbers<[1], [0], [0], [1], [0, 0, 1, 1], [], []>} : vector<32x16xbf16>, vector<16x16xbf16>, vector<32x16xf32> -> vector<32x16xf32>
    %c1_172 = arith.constant 1 : index
    %c0_173 = arith.constant 0 : index
    %c0_174 = arith.constant 0 : index
    %260 = vector.load %arg4[%c1_172, %c0_173, %c0_174] : memref<9x16x16xbf16, #tpu.memory_space<vmem>>, vector<1x16x16xbf16>
    %261 = vector.shape_cast %260 : vector<1x16x16xbf16> to vector<16x16xbf16>
    %cst_175 = arith.constant dense<0.000000e+00> : vector<32x16xf32>
    %262 = tpu.matmul %256, %261, %cst_175 {dimension_numbers = #tpu.dot_dimension_numbers<[1], [0], [0], [1], [0, 0, 1, 1], [], []>} : vector<32x16xbf16>, vector<16x16xbf16>, vector<32x16xf32> -> vector<32x16xf32>
    %c2_176 = arith.constant 2 : index
    %c0_177 = arith.constant 0 : index
    %c0_178 = arith.constant 0 : index
    %263 = vector.load %arg4[%c2_176, %c0_177, %c0_178] : memref<9x16x16xbf16, #tpu.memory_space<vmem>>, vector<1x16x16xbf16>
    %264 = vector.shape_cast %263 : vector<1x16x16xbf16> to vector<16x16xbf16>
    %cst_179 = arith.constant dense<0.000000e+00> : vector<32x16xf32>
    %265 = tpu.matmul %256, %264, %cst_179 {dimension_numbers = #tpu.dot_dimension_numbers<[1], [0], [0], [1], [0, 0, 1, 1], [], []>} : vector<32x16xbf16>, vector<16x16xbf16>, vector<32x16xf32> -> vector<32x16xf32>
    %c3_180 = arith.constant 3 : index
    %c0_181 = arith.constant 0 : index
    %c0_182 = arith.constant 0 : index
    %266 = vector.load %arg4[%c3_180, %c0_181, %c0_182] : memref<9x16x16xbf16, #tpu.memory_space<vmem>>, vector<1x16x16xbf16>
    %267 = vector.shape_cast %266 : vector<1x16x16xbf16> to vector<16x16xbf16>
    %cst_183 = arith.constant dense<0.000000e+00> : vector<32x16xf32>
    %268 = tpu.matmul %256, %267, %cst_183 {dimension_numbers = #tpu.dot_dimension_numbers<[1], [0], [0], [1], [0, 0, 1, 1], [], []>} : vector<32x16xbf16>, vector<16x16xbf16>, vector<32x16xf32> -> vector<32x16xf32>
    %c4_184 = arith.constant 4 : index
    %c0_185 = arith.constant 0 : index
    %c0_186 = arith.constant 0 : index
    %269 = vector.load %arg4[%c4_184, %c0_185, %c0_186] : memref<9x16x16xbf16, #tpu.memory_space<vmem>>, vector<1x16x16xbf16>
    %270 = vector.shape_cast %269 : vector<1x16x16xbf16> to vector<16x16xbf16>
    %cst_187 = arith.constant dense<0.000000e+00> : vector<32x16xf32>
    %271 = tpu.matmul %256, %270, %cst_187 {dimension_numbers = #tpu.dot_dimension_numbers<[1], [0], [0], [1], [0, 0, 1, 1], [], []>} : vector<32x16xbf16>, vector<16x16xbf16>, vector<32x16xf32> -> vector<32x16xf32>
    %c5_188 = arith.constant 5 : index
    %c0_189 = arith.constant 0 : index
    %c0_190 = arith.constant 0 : index
    %272 = vector.load %arg4[%c5_188, %c0_189, %c0_190] : memref<9x16x16xbf16, #tpu.memory_space<vmem>>, vector<1x16x16xbf16>
    %273 = vector.shape_cast %272 : vector<1x16x16xbf16> to vector<16x16xbf16>
    %cst_191 = arith.constant dense<0.000000e+00> : vector<32x16xf32>
    %274 = tpu.matmul %256, %273, %cst_191 {dimension_numbers = #tpu.dot_dimension_numbers<[1], [0], [0], [1], [0, 0, 1, 1], [], []>} : vector<32x16xbf16>, vector<16x16xbf16>, vector<32x16xf32> -> vector<32x16xf32>
    %c6_192 = arith.constant 6 : index
    %c0_193 = arith.constant 0 : index
    %c0_194 = arith.constant 0 : index
    %275 = vector.load %arg4[%c6_192, %c0_193, %c0_194] : memref<9x16x16xbf16, #tpu.memory_space<vmem>>, vector<1x16x16xbf16>
    %276 = vector.shape_cast %275 : vector<1x16x16xbf16> to vector<16x16xbf16>
    %cst_195 = arith.constant dense<0.000000e+00> : vector<32x16xf32>
    %277 = tpu.matmul %256, %276, %cst_195 {dimension_numbers = #tpu.dot_dimension_numbers<[1], [0], [0], [1], [0, 0, 1, 1], [], []>} : vector<32x16xbf16>, vector<16x16xbf16>, vector<32x16xf32> -> vector<32x16xf32>
    %c7_196 = arith.constant 7 : index
    %c0_197 = arith.constant 0 : index
    %c0_198 = arith.constant 0 : index
    %278 = vector.load %arg4[%c7_196, %c0_197, %c0_198] : memref<9x16x16xbf16, #tpu.memory_space<vmem>>, vector<1x16x16xbf16>
    %279 = vector.shape_cast %278 : vector<1x16x16xbf16> to vector<16x16xbf16>
    %cst_199 = arith.constant dense<0.000000e+00> : vector<32x16xf32>
    %280 = tpu.matmul %256, %279, %cst_199 {dimension_numbers = #tpu.dot_dimension_numbers<[1], [0], [0], [1], [0, 0, 1, 1], [], []>} : vector<32x16xbf16>, vector<16x16xbf16>, vector<32x16xf32> -> vector<32x16xf32>
    %c8_200 = arith.constant 8 : index
    %c0_201 = arith.constant 0 : index
    %c0_202 = arith.constant 0 : index
    %281 = vector.load %arg4[%c8_200, %c0_201, %c0_202] : memref<9x16x16xbf16, #tpu.memory_space<vmem>>, vector<1x16x16xbf16>
    %282 = vector.shape_cast %281 : vector<1x16x16xbf16> to vector<16x16xbf16>
    %cst_203 = arith.constant dense<0.000000e+00> : vector<32x16xf32>
    %283 = tpu.matmul %256, %282, %cst_203 {dimension_numbers = #tpu.dot_dimension_numbers<[1], [0], [0], [1], [0, 0, 1, 1], [], []>} : vector<32x16xbf16>, vector<16x16xbf16>, vector<32x16xf32> -> vector<32x16xf32>
    %284 = tpu.concatenate %259, %262, %265, %268, %271, %274, %277, %280, %283 in 0 : vector<32x16xf32>, vector<32x16xf32>, vector<32x16xf32>, vector<32x16xf32>, vector<32x16xf32>, vector<32x16xf32>, vector<32x16xf32>, vector<32x16xf32>, vector<32x16xf32> -> vector<288x16xf32>
    %c0_204 = arith.constant 0 : index
    %c0_205 = arith.constant 0 : index
    %285 = vector.load %arg12[%c0_204, %c0_205] : memref<32x288xf32, #tpu.memory_space<vmem>>, vector<32x288xf32>
    %cst_206 = arith.constant dense<0.000000e+00> : vector<32x16xf32>
    %286 = tpu.matmul %285, %284, %cst_206 {dimension_numbers = #tpu.dot_dimension_numbers<[1], [0], [0], [1], [0, 0, 1, 1], [], []>} : vector<32x288xf32>, vector<288x16xf32>, vector<32x16xf32> -> vector<32x16xf32>
    %cst_207 = arith.constant dense<0.000000e+00> : vector<32xf32>
    %287 = vector.multi_reduction <add>, %286, %cst_207 [1] : vector<32x16xf32> to vector<32xf32>
    %288 = vector.shape_cast %287 : vector<32xf32> to vector<32x1xf32>
    %289 = vector.extract_strided_slice %288 {offsets = [0, 0], sizes = [16, 1], strides = [1, 1]} : vector<32x1xf32> to vector<16x1xf32>
    %290 = vector.extract_strided_slice %288 {offsets = [16, 0], sizes = [16, 1], strides = [1, 1]} : vector<32x1xf32> to vector<16x1xf32>
    %291 = arith.addf %289, %290 : vector<16x1xf32>
    %292 = tpu.concatenate %291, %291 in 0 : vector<16x1xf32>, vector<16x1xf32> -> vector<32x1xf32>
    %293 = arith.mulf %286, %286 : vector<32x16xf32>
    %cst_208 = arith.constant dense<0.000000e+00> : vector<32xf32>
    %294 = vector.multi_reduction <add>, %293, %cst_208 [1] : vector<32x16xf32> to vector<32xf32>
    %295 = vector.shape_cast %294 : vector<32xf32> to vector<32x1xf32>
    %296 = vector.extract_strided_slice %295 {offsets = [0, 0], sizes = [16, 1], strides = [1, 1]} : vector<32x1xf32> to vector<16x1xf32>
    %297 = vector.extract_strided_slice %295 {offsets = [16, 0], sizes = [16, 1], strides = [1, 1]} : vector<32x1xf32> to vector<16x1xf32>
    %298 = arith.addf %296, %297 : vector<16x1xf32>
    %299 = tpu.concatenate %298, %298 in 0 : vector<16x1xf32>, vector<16x1xf32> -> vector<32x1xf32>
    %cst_209 = arith.constant 3.125000e-02 : f32
    %300 = vector.broadcast %cst_209 : f32 to vector<32x1xf32>
    %301 = arith.mulf %292, %300 : vector<32x1xf32>
    %cst_210 = arith.constant 3.125000e-02 : f32
    %302 = vector.broadcast %cst_210 : f32 to vector<32x1xf32>
    %303 = arith.mulf %299, %302 : vector<32x1xf32>
    %304 = arith.mulf %301, %301 : vector<32x1xf32>
    %305 = arith.subf %303, %304 : vector<32x1xf32>
    %cst_211 = arith.constant 0.000000e+00 : f32
    %306 = vector.broadcast %cst_211 : f32 to vector<32x1xf32>
    %307 = arith.maximumf %305, %306 : vector<32x1xf32>
    %c4_212 = arith.constant 4 : index
    %c0_213 = arith.constant 0 : index
    %c0_214 = arith.constant 0 : index
    %308 = vector.load %arg18[%c4_212, %c0_213, %c0_214] : memref<13x32x2xf32, #tpu.memory_space<vmem>>, vector<1x32x1xf32>
    %309 = vector.shape_cast %308 : vector<1x32x1xf32> to vector<32x1xf32>
    %c4_215 = arith.constant 4 : index
    %c0_216 = arith.constant 0 : index
    %c1_217 = arith.constant 1 : index
    %310 = vector.load %arg18[%c4_215, %c0_216, %c1_217] : memref<13x32x2xf32, #tpu.memory_space<vmem>>, vector<1x32x1xf32>
    %311 = vector.shape_cast %310 : vector<1x32x1xf32> to vector<32x1xf32>
    %cst_218 = arith.constant 9.99999974E-6 : f32
    %312 = vector.broadcast %cst_218 : f32 to vector<32x1xf32>
    %313 = arith.addf %307, %312 : vector<32x1xf32>
    %314 = math.rsqrt %313 : vector<32x1xf32>
    %315 = arith.mulf %309, %314 : vector<32x1xf32>
    %316 = arith.mulf %301, %315 : vector<32x1xf32>
    %317 = arith.subf %311, %316 : vector<32x1xf32>
    %318 = vector.broadcast %315 : vector<32x1xf32> to vector<32x16xf32>
    %319 = arith.mulf %286, %318 : vector<32x16xf32>
    %320 = vector.broadcast %317 : vector<32x1xf32> to vector<32x16xf32>
    %321 = arith.addf %319, %320 : vector<32x16xf32>
    %cst_219 = arith.constant 0.000000e+00 : f32
    %322 = vector.broadcast %cst_219 : f32 to vector<32x16xf32>
    %323 = arith.cmpf oge, %321, %322 : vector<32x16xf32>
    %cst_220 = arith.constant 2.000000e-01 : f32
    %324 = vector.broadcast %cst_220 : f32 to vector<32x16xf32>
    %325 = arith.mulf %321, %324 : vector<32x16xf32>
    %326 = arith.select %323, %321, %325 : vector<32x16xi1>, vector<32x16xf32>
    %327 = arith.truncf %326 : vector<32x16xf32> to vector<32x16xbf16>
    %c0_221 = arith.constant 0 : index
    %c0_222 = arith.constant 0 : index
    %328 = vector.load %arg6[%c0_221, %c0_222] : memref<16x64xbf16, #tpu.memory_space<vmem>>, vector<16x64xbf16>
    %cst_223 = arith.constant dense<0.000000e+00> : vector<32x64xf32>
    %329 = tpu.matmul %327, %328, %cst_223 {dimension_numbers = #tpu.dot_dimension_numbers<[1], [0], [0], [1], [0, 0, 1, 1], [], []>} : vector<32x16xbf16>, vector<16x64xbf16>, vector<32x64xf32> -> vector<32x64xf32>
    %cst_224 = arith.constant dense<0.000000e+00> : vector<16xf32>
    %330 = vector.multi_reduction <add>, %184, %cst_224 [1] : vector<16x64xf32> to vector<16xf32>
    %331 = vector.shape_cast %330 : vector<16xf32> to vector<16x1xf32>
    %332 = vector.extract_strided_slice %331 {offsets = [0, 0], sizes = [8, 1], strides = [1, 1]} : vector<16x1xf32> to vector<8x1xf32>
    %333 = vector.extract_strided_slice %331 {offsets = [8, 0], sizes = [8, 1], strides = [1, 1]} : vector<16x1xf32> to vector<8x1xf32>
    %334 = arith.addf %332, %333 : vector<8x1xf32>
    %335 = tpu.concatenate %334, %334 in 0 : vector<8x1xf32>, vector<8x1xf32> -> vector<16x1xf32>
    %336 = arith.mulf %184, %184 : vector<16x64xf32>
    %cst_225 = arith.constant dense<0.000000e+00> : vector<16xf32>
    %337 = vector.multi_reduction <add>, %336, %cst_225 [1] : vector<16x64xf32> to vector<16xf32>
    %338 = vector.shape_cast %337 : vector<16xf32> to vector<16x1xf32>
    %339 = vector.extract_strided_slice %338 {offsets = [0, 0], sizes = [8, 1], strides = [1, 1]} : vector<16x1xf32> to vector<8x1xf32>
    %340 = vector.extract_strided_slice %338 {offsets = [8, 0], sizes = [8, 1], strides = [1, 1]} : vector<16x1xf32> to vector<8x1xf32>
    %341 = arith.addf %339, %340 : vector<8x1xf32>
    %342 = tpu.concatenate %341, %341 in 0 : vector<8x1xf32>, vector<8x1xf32> -> vector<16x1xf32>
    %cst_226 = arith.constant 7.812500e-03 : f32
    %343 = vector.broadcast %cst_226 : f32 to vector<16x1xf32>
    %344 = arith.mulf %335, %343 : vector<16x1xf32>
    %cst_227 = arith.constant 7.812500e-03 : f32
    %345 = vector.broadcast %cst_227 : f32 to vector<16x1xf32>
    %346 = arith.mulf %342, %345 : vector<16x1xf32>
    %347 = arith.mulf %344, %344 : vector<16x1xf32>
    %348 = arith.subf %346, %347 : vector<16x1xf32>
    %cst_228 = arith.constant 0.000000e+00 : f32
    %349 = vector.broadcast %cst_228 : f32 to vector<16x1xf32>
    %350 = arith.maximumf %348, %349 : vector<16x1xf32>
    %c5_229 = arith.constant 5 : index
    %c0_230 = arith.constant 0 : index
    %c0_231 = arith.constant 0 : index
    %351 = vector.load %arg18[%c5_229, %c0_230, %c0_231] : memref<13x32x2xf32, #tpu.memory_space<vmem>>, vector<1x16x1xf32>
    %352 = vector.shape_cast %351 : vector<1x16x1xf32> to vector<16x1xf32>
    %c5_232 = arith.constant 5 : index
    %c0_233 = arith.constant 0 : index
    %c1_234 = arith.constant 1 : index
    %353 = vector.load %arg18[%c5_232, %c0_233, %c1_234] : memref<13x32x2xf32, #tpu.memory_space<vmem>>, vector<1x16x1xf32>
    %354 = vector.shape_cast %353 : vector<1x16x1xf32> to vector<16x1xf32>
    %cst_235 = arith.constant 9.99999974E-6 : f32
    %355 = vector.broadcast %cst_235 : f32 to vector<16x1xf32>
    %356 = arith.addf %350, %355 : vector<16x1xf32>
    %357 = math.rsqrt %356 : vector<16x1xf32>
    %358 = arith.mulf %352, %357 : vector<16x1xf32>
    %359 = arith.mulf %344, %358 : vector<16x1xf32>
    %360 = arith.subf %354, %359 : vector<16x1xf32>
    %361 = vector.broadcast %358 : vector<16x1xf32> to vector<16x64xf32>
    %362 = arith.mulf %184, %361 : vector<16x64xf32>
    %363 = vector.broadcast %360 : vector<16x1xf32> to vector<16x64xf32>
    %364 = arith.addf %362, %363 : vector<16x64xf32>
    %cst_236 = arith.constant dense<0.000000e+00> : vector<32xf32>
    %365 = vector.multi_reduction <add>, %329, %cst_236 [1] : vector<32x64xf32> to vector<32xf32>
    %366 = vector.shape_cast %365 : vector<32xf32> to vector<32x1xf32>
    %367 = vector.extract_strided_slice %366 {offsets = [0, 0], sizes = [16, 1], strides = [1, 1]} : vector<32x1xf32> to vector<16x1xf32>
    %368 = vector.extract_strided_slice %366 {offsets = [16, 0], sizes = [16, 1], strides = [1, 1]} : vector<32x1xf32> to vector<16x1xf32>
    %369 = arith.addf %367, %368 : vector<16x1xf32>
    %370 = tpu.concatenate %369, %369 in 0 : vector<16x1xf32>, vector<16x1xf32> -> vector<32x1xf32>
    %371 = arith.mulf %329, %329 : vector<32x64xf32>
    %cst_237 = arith.constant dense<0.000000e+00> : vector<32xf32>
    %372 = vector.multi_reduction <add>, %371, %cst_237 [1] : vector<32x64xf32> to vector<32xf32>
    %373 = vector.shape_cast %372 : vector<32xf32> to vector<32x1xf32>
    %374 = vector.extract_strided_slice %373 {offsets = [0, 0], sizes = [16, 1], strides = [1, 1]} : vector<32x1xf32> to vector<16x1xf32>
    %375 = vector.extract_strided_slice %373 {offsets = [16, 0], sizes = [16, 1], strides = [1, 1]} : vector<32x1xf32> to vector<16x1xf32>
    %376 = arith.addf %374, %375 : vector<16x1xf32>
    %377 = tpu.concatenate %376, %376 in 0 : vector<16x1xf32>, vector<16x1xf32> -> vector<32x1xf32>
    %cst_238 = arith.constant 7.812500e-03 : f32
    %378 = vector.broadcast %cst_238 : f32 to vector<32x1xf32>
    %379 = arith.mulf %370, %378 : vector<32x1xf32>
    %cst_239 = arith.constant 7.812500e-03 : f32
    %380 = vector.broadcast %cst_239 : f32 to vector<32x1xf32>
    %381 = arith.mulf %377, %380 : vector<32x1xf32>
    %382 = arith.mulf %379, %379 : vector<32x1xf32>
    %383 = arith.subf %381, %382 : vector<32x1xf32>
    %cst_240 = arith.constant 0.000000e+00 : f32
    %384 = vector.broadcast %cst_240 : f32 to vector<32x1xf32>
    %385 = arith.maximumf %383, %384 : vector<32x1xf32>
    %c6_241 = arith.constant 6 : index
    %c0_242 = arith.constant 0 : index
    %c0_243 = arith.constant 0 : index
    %386 = vector.load %arg18[%c6_241, %c0_242, %c0_243] : memref<13x32x2xf32, #tpu.memory_space<vmem>>, vector<1x32x1xf32>
    %387 = vector.shape_cast %386 : vector<1x32x1xf32> to vector<32x1xf32>
    %c6_244 = arith.constant 6 : index
    %c0_245 = arith.constant 0 : index
    %c1_246 = arith.constant 1 : index
    %388 = vector.load %arg18[%c6_244, %c0_245, %c1_246] : memref<13x32x2xf32, #tpu.memory_space<vmem>>, vector<1x32x1xf32>
    %389 = vector.shape_cast %388 : vector<1x32x1xf32> to vector<32x1xf32>
    %cst_247 = arith.constant 9.99999974E-6 : f32
    %390 = vector.broadcast %cst_247 : f32 to vector<32x1xf32>
    %391 = arith.addf %385, %390 : vector<32x1xf32>
    %392 = math.rsqrt %391 : vector<32x1xf32>
    %393 = arith.mulf %387, %392 : vector<32x1xf32>
    %394 = arith.mulf %379, %393 : vector<32x1xf32>
    %395 = arith.subf %389, %394 : vector<32x1xf32>
    %396 = vector.broadcast %393 : vector<32x1xf32> to vector<32x64xf32>
    %397 = arith.mulf %329, %396 : vector<32x64xf32>
    %398 = vector.broadcast %395 : vector<32x1xf32> to vector<32x64xf32>
    %399 = arith.addf %397, %398 : vector<32x64xf32>
    %400 = tpu.concatenate %364, %399 in 0 : vector<16x64xf32>, vector<32x64xf32> -> vector<48x64xf32>
    %401 = arith.truncf %400 : vector<48x64xf32> to vector<48x64xbf16>
    %c0_248 = arith.constant 0 : index
    %c0_249 = arith.constant 0 : index
    %c0_250 = arith.constant 0 : index
    %402 = vector.load %arg2[%c0_248, %c0_249, %c0_250] : memref<9x64x64xbf16, #tpu.memory_space<vmem>>, vector<1x64x64xbf16>
    %403 = vector.shape_cast %402 : vector<1x64x64xbf16> to vector<64x64xbf16>
    %cst_251 = arith.constant dense<0.000000e+00> : vector<48x64xf32>
    %404 = tpu.matmul %401, %403, %cst_251 {dimension_numbers = #tpu.dot_dimension_numbers<[1], [0], [0], [1], [0, 0, 1, 1], [], []>} : vector<48x64xbf16>, vector<64x64xbf16>, vector<48x64xf32> -> vector<48x64xf32>
    %c1_252 = arith.constant 1 : index
    %c0_253 = arith.constant 0 : index
    %c0_254 = arith.constant 0 : index
    %405 = vector.load %arg2[%c1_252, %c0_253, %c0_254] : memref<9x64x64xbf16, #tpu.memory_space<vmem>>, vector<1x64x64xbf16>
    %406 = vector.shape_cast %405 : vector<1x64x64xbf16> to vector<64x64xbf16>
    %cst_255 = arith.constant dense<0.000000e+00> : vector<48x64xf32>
    %407 = tpu.matmul %401, %406, %cst_255 {dimension_numbers = #tpu.dot_dimension_numbers<[1], [0], [0], [1], [0, 0, 1, 1], [], []>} : vector<48x64xbf16>, vector<64x64xbf16>, vector<48x64xf32> -> vector<48x64xf32>
    %c2_256 = arith.constant 2 : index
    %c0_257 = arith.constant 0 : index
    %c0_258 = arith.constant 0 : index
    %408 = vector.load %arg2[%c2_256, %c0_257, %c0_258] : memref<9x64x64xbf16, #tpu.memory_space<vmem>>, vector<1x64x64xbf16>
    %409 = vector.shape_cast %408 : vector<1x64x64xbf16> to vector<64x64xbf16>
    %cst_259 = arith.constant dense<0.000000e+00> : vector<48x64xf32>
    %410 = tpu.matmul %401, %409, %cst_259 {dimension_numbers = #tpu.dot_dimension_numbers<[1], [0], [0], [1], [0, 0, 1, 1], [], []>} : vector<48x64xbf16>, vector<64x64xbf16>, vector<48x64xf32> -> vector<48x64xf32>
    %c3_260 = arith.constant 3 : index
    %c0_261 = arith.constant 0 : index
    %c0_262 = arith.constant 0 : index
    %411 = vector.load %arg2[%c3_260, %c0_261, %c0_262] : memref<9x64x64xbf16, #tpu.memory_space<vmem>>, vector<1x64x64xbf16>
    %412 = vector.shape_cast %411 : vector<1x64x64xbf16> to vector<64x64xbf16>
    %cst_263 = arith.constant dense<0.000000e+00> : vector<48x64xf32>
    %413 = tpu.matmul %401, %412, %cst_263 {dimension_numbers = #tpu.dot_dimension_numbers<[1], [0], [0], [1], [0, 0, 1, 1], [], []>} : vector<48x64xbf16>, vector<64x64xbf16>, vector<48x64xf32> -> vector<48x64xf32>
    %c4_264 = arith.constant 4 : index
    %c0_265 = arith.constant 0 : index
    %c0_266 = arith.constant 0 : index
    %414 = vector.load %arg2[%c4_264, %c0_265, %c0_266] : memref<9x64x64xbf16, #tpu.memory_space<vmem>>, vector<1x64x64xbf16>
    %415 = vector.shape_cast %414 : vector<1x64x64xbf16> to vector<64x64xbf16>
    %cst_267 = arith.constant dense<0.000000e+00> : vector<48x64xf32>
    %416 = tpu.matmul %401, %415, %cst_267 {dimension_numbers = #tpu.dot_dimension_numbers<[1], [0], [0], [1], [0, 0, 1, 1], [], []>} : vector<48x64xbf16>, vector<64x64xbf16>, vector<48x64xf32> -> vector<48x64xf32>
    %c5_268 = arith.constant 5 : index
    %c0_269 = arith.constant 0 : index
    %c0_270 = arith.constant 0 : index
    %417 = vector.load %arg2[%c5_268, %c0_269, %c0_270] : memref<9x64x64xbf16, #tpu.memory_space<vmem>>, vector<1x64x64xbf16>
    %418 = vector.shape_cast %417 : vector<1x64x64xbf16> to vector<64x64xbf16>
    %cst_271 = arith.constant dense<0.000000e+00> : vector<48x64xf32>
    %419 = tpu.matmul %401, %418, %cst_271 {dimension_numbers = #tpu.dot_dimension_numbers<[1], [0], [0], [1], [0, 0, 1, 1], [], []>} : vector<48x64xbf16>, vector<64x64xbf16>, vector<48x64xf32> -> vector<48x64xf32>
    %c6_272 = arith.constant 6 : index
    %c0_273 = arith.constant 0 : index
    %c0_274 = arith.constant 0 : index
    %420 = vector.load %arg2[%c6_272, %c0_273, %c0_274] : memref<9x64x64xbf16, #tpu.memory_space<vmem>>, vector<1x64x64xbf16>
    %421 = vector.shape_cast %420 : vector<1x64x64xbf16> to vector<64x64xbf16>
    %cst_275 = arith.constant dense<0.000000e+00> : vector<48x64xf32>
    %422 = tpu.matmul %401, %421, %cst_275 {dimension_numbers = #tpu.dot_dimension_numbers<[1], [0], [0], [1], [0, 0, 1, 1], [], []>} : vector<48x64xbf16>, vector<64x64xbf16>, vector<48x64xf32> -> vector<48x64xf32>
    %c7_276 = arith.constant 7 : index
    %c0_277 = arith.constant 0 : index
    %c0_278 = arith.constant 0 : index
    %423 = vector.load %arg2[%c7_276, %c0_277, %c0_278] : memref<9x64x64xbf16, #tpu.memory_space<vmem>>, vector<1x64x64xbf16>
    %424 = vector.shape_cast %423 : vector<1x64x64xbf16> to vector<64x64xbf16>
    %cst_279 = arith.constant dense<0.000000e+00> : vector<48x64xf32>
    %425 = tpu.matmul %401, %424, %cst_279 {dimension_numbers = #tpu.dot_dimension_numbers<[1], [0], [0], [1], [0, 0, 1, 1], [], []>} : vector<48x64xbf16>, vector<64x64xbf16>, vector<48x64xf32> -> vector<48x64xf32>
    %c8_280 = arith.constant 8 : index
    %c0_281 = arith.constant 0 : index
    %c0_282 = arith.constant 0 : index
    %426 = vector.load %arg2[%c8_280, %c0_281, %c0_282] : memref<9x64x64xbf16, #tpu.memory_space<vmem>>, vector<1x64x64xbf16>
    %427 = vector.shape_cast %426 : vector<1x64x64xbf16> to vector<64x64xbf16>
    %cst_283 = arith.constant dense<0.000000e+00> : vector<48x64xf32>
    %428 = tpu.matmul %401, %427, %cst_283 {dimension_numbers = #tpu.dot_dimension_numbers<[1], [0], [0], [1], [0, 0, 1, 1], [], []>} : vector<48x64xbf16>, vector<64x64xbf16>, vector<48x64xf32> -> vector<48x64xf32>
    %429 = tpu.concatenate %404, %407, %410, %413, %416, %419, %422, %425, %428 in 0 : vector<48x64xf32>, vector<48x64xf32>, vector<48x64xf32>, vector<48x64xf32>, vector<48x64xf32>, vector<48x64xf32>, vector<48x64xf32>, vector<48x64xf32>, vector<48x64xf32> -> vector<432x64xf32>
    %c0_284 = arith.constant 0 : index
    %c0_285 = arith.constant 0 : index
    %430 = vector.load %arg13[%c0_284, %c0_285] : memref<32x432xf32, #tpu.memory_space<vmem>>, vector<32x432xf32>
    %cst_286 = arith.constant dense<0.000000e+00> : vector<32x64xf32>
    %431 = tpu.matmul %430, %429, %cst_286 {dimension_numbers = #tpu.dot_dimension_numbers<[1], [0], [0], [1], [0, 0, 1, 1], [], []>} : vector<32x432xf32>, vector<432x64xf32>, vector<32x64xf32> -> vector<32x64xf32>
    %cst_287 = arith.constant dense<0.000000e+00> : vector<32xf32>
    %432 = vector.multi_reduction <add>, %431, %cst_287 [1] : vector<32x64xf32> to vector<32xf32>
    %433 = vector.shape_cast %432 : vector<32xf32> to vector<32x1xf32>
    %434 = vector.extract_strided_slice %433 {offsets = [0, 0], sizes = [16, 1], strides = [1, 1]} : vector<32x1xf32> to vector<16x1xf32>
    %435 = vector.extract_strided_slice %433 {offsets = [16, 0], sizes = [16, 1], strides = [1, 1]} : vector<32x1xf32> to vector<16x1xf32>
    %436 = arith.addf %434, %435 : vector<16x1xf32>
    %437 = tpu.concatenate %436, %436 in 0 : vector<16x1xf32>, vector<16x1xf32> -> vector<32x1xf32>
    %438 = arith.mulf %431, %431 : vector<32x64xf32>
    %cst_288 = arith.constant dense<0.000000e+00> : vector<32xf32>
    %439 = vector.multi_reduction <add>, %438, %cst_288 [1] : vector<32x64xf32> to vector<32xf32>
    %440 = vector.shape_cast %439 : vector<32xf32> to vector<32x1xf32>
    %441 = vector.extract_strided_slice %440 {offsets = [0, 0], sizes = [16, 1], strides = [1, 1]} : vector<32x1xf32> to vector<16x1xf32>
    %442 = vector.extract_strided_slice %440 {offsets = [16, 0], sizes = [16, 1], strides = [1, 1]} : vector<32x1xf32> to vector<16x1xf32>
    %443 = arith.addf %441, %442 : vector<16x1xf32>
    %444 = tpu.concatenate %443, %443 in 0 : vector<16x1xf32>, vector<16x1xf32> -> vector<32x1xf32>
    %cst_289 = arith.constant 7.812500e-03 : f32
    %445 = vector.broadcast %cst_289 : f32 to vector<32x1xf32>
    %446 = arith.mulf %437, %445 : vector<32x1xf32>
    %cst_290 = arith.constant 7.812500e-03 : f32
    %447 = vector.broadcast %cst_290 : f32 to vector<32x1xf32>
    %448 = arith.mulf %444, %447 : vector<32x1xf32>
    %449 = arith.mulf %446, %446 : vector<32x1xf32>
    %450 = arith.subf %448, %449 : vector<32x1xf32>
    %cst_291 = arith.constant 0.000000e+00 : f32
    %451 = vector.broadcast %cst_291 : f32 to vector<32x1xf32>
    %452 = arith.maximumf %450, %451 : vector<32x1xf32>
    %c7_292 = arith.constant 7 : index
    %c0_293 = arith.constant 0 : index
    %c0_294 = arith.constant 0 : index
    %453 = vector.load %arg18[%c7_292, %c0_293, %c0_294] : memref<13x32x2xf32, #tpu.memory_space<vmem>>, vector<1x32x1xf32>
    %454 = vector.shape_cast %453 : vector<1x32x1xf32> to vector<32x1xf32>
    %c7_295 = arith.constant 7 : index
    %c0_296 = arith.constant 0 : index
    %c1_297 = arith.constant 1 : index
    %455 = vector.load %arg18[%c7_295, %c0_296, %c1_297] : memref<13x32x2xf32, #tpu.memory_space<vmem>>, vector<1x32x1xf32>
    %456 = vector.shape_cast %455 : vector<1x32x1xf32> to vector<32x1xf32>
    %cst_298 = arith.constant 9.99999974E-6 : f32
    %457 = vector.broadcast %cst_298 : f32 to vector<32x1xf32>
    %458 = arith.addf %452, %457 : vector<32x1xf32>
    %459 = math.rsqrt %458 : vector<32x1xf32>
    %460 = arith.mulf %454, %459 : vector<32x1xf32>
    %461 = arith.mulf %446, %460 : vector<32x1xf32>
    %462 = arith.subf %456, %461 : vector<32x1xf32>
    %463 = vector.broadcast %460 : vector<32x1xf32> to vector<32x64xf32>
    %464 = arith.mulf %431, %463 : vector<32x64xf32>
    %465 = vector.broadcast %462 : vector<32x1xf32> to vector<32x64xf32>
    %466 = arith.addf %464, %465 : vector<32x64xf32>
    %cst_299 = arith.constant 0.000000e+00 : f32
    %467 = vector.broadcast %cst_299 : f32 to vector<32x64xf32>
    %468 = arith.cmpf oge, %466, %467 : vector<32x64xf32>
    %cst_300 = arith.constant 2.000000e-01 : f32
    %469 = vector.broadcast %cst_300 : f32 to vector<32x64xf32>
    %470 = arith.mulf %466, %469 : vector<32x64xf32>
    %471 = arith.select %468, %466, %470 : vector<32x64xi1>, vector<32x64xf32>
    %c0_301 = arith.constant 0 : index
    %c0_302 = arith.constant 0 : index
    %472 = vector.load %arg14[%c0_301, %c0_302] : memref<32x32xf32, #tpu.memory_space<vmem>>, vector<32x32xf32>
    %cst_303 = arith.constant dense<0.000000e+00> : vector<32x64xf32>
    %473 = tpu.matmul %472, %471, %cst_303 {dimension_numbers = #tpu.dot_dimension_numbers<[1], [0], [0], [1], [0, 0, 1, 1], [], []>} : vector<32x32xf32>, vector<32x64xf32>, vector<32x64xf32> -> vector<32x64xf32>
    %cst_304 = arith.constant dense<0.000000e+00> : vector<32xf32>
    %474 = vector.multi_reduction <add>, %473, %cst_304 [1] : vector<32x64xf32> to vector<32xf32>
    %475 = vector.shape_cast %474 : vector<32xf32> to vector<32x1xf32>
    %476 = vector.extract_strided_slice %475 {offsets = [0, 0], sizes = [16, 1], strides = [1, 1]} : vector<32x1xf32> to vector<16x1xf32>
    %477 = vector.extract_strided_slice %475 {offsets = [16, 0], sizes = [16, 1], strides = [1, 1]} : vector<32x1xf32> to vector<16x1xf32>
    %478 = arith.addf %476, %477 : vector<16x1xf32>
    %479 = tpu.concatenate %478, %478 in 0 : vector<16x1xf32>, vector<16x1xf32> -> vector<32x1xf32>
    %480 = arith.mulf %473, %473 : vector<32x64xf32>
    %cst_305 = arith.constant dense<0.000000e+00> : vector<32xf32>
    %481 = vector.multi_reduction <add>, %480, %cst_305 [1] : vector<32x64xf32> to vector<32xf32>
    %482 = vector.shape_cast %481 : vector<32xf32> to vector<32x1xf32>
    %483 = vector.extract_strided_slice %482 {offsets = [0, 0], sizes = [16, 1], strides = [1, 1]} : vector<32x1xf32> to vector<16x1xf32>
    %484 = vector.extract_strided_slice %482 {offsets = [16, 0], sizes = [16, 1], strides = [1, 1]} : vector<32x1xf32> to vector<16x1xf32>
    %485 = arith.addf %483, %484 : vector<16x1xf32>
    %486 = tpu.concatenate %485, %485 in 0 : vector<16x1xf32>, vector<16x1xf32> -> vector<32x1xf32>
    %cst_306 = arith.constant 7.812500e-03 : f32
    %487 = vector.broadcast %cst_306 : f32 to vector<32x1xf32>
    %488 = arith.mulf %479, %487 : vector<32x1xf32>
    %cst_307 = arith.constant 7.812500e-03 : f32
    %489 = vector.broadcast %cst_307 : f32 to vector<32x1xf32>
    %490 = arith.mulf %486, %489 : vector<32x1xf32>
    %491 = arith.mulf %488, %488 : vector<32x1xf32>
    %492 = arith.subf %490, %491 : vector<32x1xf32>
    %cst_308 = arith.constant 0.000000e+00 : f32
    %493 = vector.broadcast %cst_308 : f32 to vector<32x1xf32>
    %494 = arith.maximumf %492, %493 : vector<32x1xf32>
    %c8_309 = arith.constant 8 : index
    %c0_310 = arith.constant 0 : index
    %c0_311 = arith.constant 0 : index
    %495 = vector.load %arg18[%c8_309, %c0_310, %c0_311] : memref<13x32x2xf32, #tpu.memory_space<vmem>>, vector<1x32x1xf32>
    %496 = vector.shape_cast %495 : vector<1x32x1xf32> to vector<32x1xf32>
    %c8_312 = arith.constant 8 : index
    %c0_313 = arith.constant 0 : index
    %c1_314 = arith.constant 1 : index
    %497 = vector.load %arg18[%c8_312, %c0_313, %c1_314] : memref<13x32x2xf32, #tpu.memory_space<vmem>>, vector<1x32x1xf32>
    %498 = vector.shape_cast %497 : vector<1x32x1xf32> to vector<32x1xf32>
    %cst_315 = arith.constant 9.99999974E-6 : f32
    %499 = vector.broadcast %cst_315 : f32 to vector<32x1xf32>
    %500 = arith.addf %494, %499 : vector<32x1xf32>
    %501 = math.rsqrt %500 : vector<32x1xf32>
    %502 = arith.mulf %496, %501 : vector<32x1xf32>
    %503 = arith.mulf %488, %502 : vector<32x1xf32>
    %504 = arith.subf %498, %503 : vector<32x1xf32>
    %505 = vector.broadcast %502 : vector<32x1xf32> to vector<32x64xf32>
    %506 = arith.mulf %473, %505 : vector<32x64xf32>
    %507 = vector.broadcast %504 : vector<32x1xf32> to vector<32x64xf32>
    %508 = arith.addf %506, %507 : vector<32x64xf32>
    %cst_316 = arith.constant 0.000000e+00 : f32
    %509 = vector.broadcast %cst_316 : f32 to vector<32x64xf32>
    %510 = arith.cmpf oge, %508, %509 : vector<32x64xf32>
    %cst_317 = arith.constant 2.000000e-01 : f32
    %511 = vector.broadcast %cst_317 : f32 to vector<32x64xf32>
    %512 = arith.mulf %508, %511 : vector<32x64xf32>
    %513 = arith.select %510, %508, %512 : vector<32x64xi1>, vector<32x64xf32>
    %514 = arith.truncf %513 : vector<32x64xf32> to vector<32x64xbf16>
    %c0_318 = arith.constant 0 : index
    %c0_319 = arith.constant 0 : index
    %515 = vector.load %arg7[%c0_318, %c0_319] : memref<64x256xbf16, #tpu.memory_space<vmem>>, vector<64x256xbf16>
    %cst_320 = arith.constant dense<0.000000e+00> : vector<32x256xf32>
    %516 = tpu.matmul %514, %515, %cst_320 {dimension_numbers = #tpu.dot_dimension_numbers<[1], [0], [0], [1], [0, 0, 1, 1], [], []>} : vector<32x64xbf16>, vector<64x256xbf16>, vector<32x256xf32> -> vector<32x256xf32>
    %cst_321 = arith.constant dense<0.000000e+00> : vector<32xf32>
    %517 = vector.multi_reduction <add>, %516, %cst_321 [1] : vector<32x256xf32> to vector<32xf32>
    %518 = vector.shape_cast %517 : vector<32xf32> to vector<32x1xf32>
    %519 = vector.extract_strided_slice %518 {offsets = [0, 0], sizes = [16, 1], strides = [1, 1]} : vector<32x1xf32> to vector<16x1xf32>
    %520 = vector.extract_strided_slice %518 {offsets = [16, 0], sizes = [16, 1], strides = [1, 1]} : vector<32x1xf32> to vector<16x1xf32>
    %521 = arith.addf %519, %520 : vector<16x1xf32>
    %522 = tpu.concatenate %521, %521 in 0 : vector<16x1xf32>, vector<16x1xf32> -> vector<32x1xf32>
    %523 = arith.mulf %516, %516 : vector<32x256xf32>
    %cst_322 = arith.constant dense<0.000000e+00> : vector<32xf32>
    %524 = vector.multi_reduction <add>, %523, %cst_322 [1] : vector<32x256xf32> to vector<32xf32>
    %525 = vector.shape_cast %524 : vector<32xf32> to vector<32x1xf32>
    %526 = vector.extract_strided_slice %525 {offsets = [0, 0], sizes = [16, 1], strides = [1, 1]} : vector<32x1xf32> to vector<16x1xf32>
    %527 = vector.extract_strided_slice %525 {offsets = [16, 0], sizes = [16, 1], strides = [1, 1]} : vector<32x1xf32> to vector<16x1xf32>
    %528 = arith.addf %526, %527 : vector<16x1xf32>
    %529 = tpu.concatenate %528, %528 in 0 : vector<16x1xf32>, vector<16x1xf32> -> vector<32x1xf32>
    %cst_323 = arith.constant 0.001953125 : f32
    %530 = vector.broadcast %cst_323 : f32 to vector<32x1xf32>
    %531 = arith.mulf %522, %530 : vector<32x1xf32>
    %cst_324 = arith.constant 0.001953125 : f32
    %532 = vector.broadcast %cst_324 : f32 to vector<32x1xf32>
    %533 = arith.mulf %529, %532 : vector<32x1xf32>
    %534 = arith.mulf %531, %531 : vector<32x1xf32>
    %535 = arith.subf %533, %534 : vector<32x1xf32>
    %cst_325 = arith.constant 0.000000e+00 : f32
    %536 = vector.broadcast %cst_325 : f32 to vector<32x1xf32>
    %537 = arith.maximumf %535, %536 : vector<32x1xf32>
    %c9 = arith.constant 9 : index
    %c0_326 = arith.constant 0 : index
    %c0_327 = arith.constant 0 : index
    %538 = vector.load %arg18[%c9, %c0_326, %c0_327] : memref<13x32x2xf32, #tpu.memory_space<vmem>>, vector<1x32x1xf32>
    %539 = vector.shape_cast %538 : vector<1x32x1xf32> to vector<32x1xf32>
    %c9_328 = arith.constant 9 : index
    %c0_329 = arith.constant 0 : index
    %c1_330 = arith.constant 1 : index
    %540 = vector.load %arg18[%c9_328, %c0_329, %c1_330] : memref<13x32x2xf32, #tpu.memory_space<vmem>>, vector<1x32x1xf32>
    %541 = vector.shape_cast %540 : vector<1x32x1xf32> to vector<32x1xf32>
    %cst_331 = arith.constant 9.99999974E-6 : f32
    %542 = vector.broadcast %cst_331 : f32 to vector<32x1xf32>
    %543 = arith.addf %537, %542 : vector<32x1xf32>
    %544 = math.rsqrt %543 : vector<32x1xf32>
    %545 = arith.mulf %539, %544 : vector<32x1xf32>
    %546 = arith.mulf %531, %545 : vector<32x1xf32>
    %547 = arith.subf %541, %546 : vector<32x1xf32>
    %548 = vector.broadcast %545 : vector<32x1xf32> to vector<32x256xf32>
    %549 = arith.mulf %516, %548 : vector<32x256xf32>
    %550 = vector.broadcast %547 : vector<32x1xf32> to vector<32x256xf32>
    %551 = arith.addf %549, %550 : vector<32x256xf32>
    %552 = arith.truncf %551 : vector<32x256xf32> to vector<32x256xbf16>
    %c0_332 = arith.constant 0 : index
    %c0_333 = arith.constant 0 : index
    %c0_334 = arith.constant 0 : index
    %553 = vector.load %arg5[%c0_332, %c0_333, %c0_334] : memref<9x256x256xbf16, #tpu.memory_space<vmem>>, vector<1x256x256xbf16>
    %554 = vector.shape_cast %553 : vector<1x256x256xbf16> to vector<256x256xbf16>
    %cst_335 = arith.constant dense<0.000000e+00> : vector<32x256xf32>
    %555 = tpu.matmul %552, %554, %cst_335 {dimension_numbers = #tpu.dot_dimension_numbers<[1], [0], [0], [1], [0, 0, 1, 1], [], []>} : vector<32x256xbf16>, vector<256x256xbf16>, vector<32x256xf32> -> vector<32x256xf32>
    %c1_336 = arith.constant 1 : index
    %c0_337 = arith.constant 0 : index
    %c0_338 = arith.constant 0 : index
    %556 = vector.load %arg5[%c1_336, %c0_337, %c0_338] : memref<9x256x256xbf16, #tpu.memory_space<vmem>>, vector<1x256x256xbf16>
    %557 = vector.shape_cast %556 : vector<1x256x256xbf16> to vector<256x256xbf16>
    %cst_339 = arith.constant dense<0.000000e+00> : vector<32x256xf32>
    %558 = tpu.matmul %552, %557, %cst_339 {dimension_numbers = #tpu.dot_dimension_numbers<[1], [0], [0], [1], [0, 0, 1, 1], [], []>} : vector<32x256xbf16>, vector<256x256xbf16>, vector<32x256xf32> -> vector<32x256xf32>
    %c2_340 = arith.constant 2 : index
    %c0_341 = arith.constant 0 : index
    %c0_342 = arith.constant 0 : index
    %559 = vector.load %arg5[%c2_340, %c0_341, %c0_342] : memref<9x256x256xbf16, #tpu.memory_space<vmem>>, vector<1x256x256xbf16>
    %560 = vector.shape_cast %559 : vector<1x256x256xbf16> to vector<256x256xbf16>
    %cst_343 = arith.constant dense<0.000000e+00> : vector<32x256xf32>
    %561 = tpu.matmul %552, %560, %cst_343 {dimension_numbers = #tpu.dot_dimension_numbers<[1], [0], [0], [1], [0, 0, 1, 1], [], []>} : vector<32x256xbf16>, vector<256x256xbf16>, vector<32x256xf32> -> vector<32x256xf32>
    %c3_344 = arith.constant 3 : index
    %c0_345 = arith.constant 0 : index
    %c0_346 = arith.constant 0 : index
    %562 = vector.load %arg5[%c3_344, %c0_345, %c0_346] : memref<9x256x256xbf16, #tpu.memory_space<vmem>>, vector<1x256x256xbf16>
    %563 = vector.shape_cast %562 : vector<1x256x256xbf16> to vector<256x256xbf16>
    %cst_347 = arith.constant dense<0.000000e+00> : vector<32x256xf32>
    %564 = tpu.matmul %552, %563, %cst_347 {dimension_numbers = #tpu.dot_dimension_numbers<[1], [0], [0], [1], [0, 0, 1, 1], [], []>} : vector<32x256xbf16>, vector<256x256xbf16>, vector<32x256xf32> -> vector<32x256xf32>
    %c4_348 = arith.constant 4 : index
    %c0_349 = arith.constant 0 : index
    %c0_350 = arith.constant 0 : index
    %565 = vector.load %arg5[%c4_348, %c0_349, %c0_350] : memref<9x256x256xbf16, #tpu.memory_space<vmem>>, vector<1x256x256xbf16>
    %566 = vector.shape_cast %565 : vector<1x256x256xbf16> to vector<256x256xbf16>
    %cst_351 = arith.constant dense<0.000000e+00> : vector<32x256xf32>
    %567 = tpu.matmul %552, %566, %cst_351 {dimension_numbers = #tpu.dot_dimension_numbers<[1], [0], [0], [1], [0, 0, 1, 1], [], []>} : vector<32x256xbf16>, vector<256x256xbf16>, vector<32x256xf32> -> vector<32x256xf32>
    %c5_352 = arith.constant 5 : index
    %c0_353 = arith.constant 0 : index
    %c0_354 = arith.constant 0 : index
    %568 = vector.load %arg5[%c5_352, %c0_353, %c0_354] : memref<9x256x256xbf16, #tpu.memory_space<vmem>>, vector<1x256x256xbf16>
    %569 = vector.shape_cast %568 : vector<1x256x256xbf16> to vector<256x256xbf16>
    %cst_355 = arith.constant dense<0.000000e+00> : vector<32x256xf32>
    %570 = tpu.matmul %552, %569, %cst_355 {dimension_numbers = #tpu.dot_dimension_numbers<[1], [0], [0], [1], [0, 0, 1, 1], [], []>} : vector<32x256xbf16>, vector<256x256xbf16>, vector<32x256xf32> -> vector<32x256xf32>
    %c6_356 = arith.constant 6 : index
    %c0_357 = arith.constant 0 : index
    %c0_358 = arith.constant 0 : index
    %571 = vector.load %arg5[%c6_356, %c0_357, %c0_358] : memref<9x256x256xbf16, #tpu.memory_space<vmem>>, vector<1x256x256xbf16>
    %572 = vector.shape_cast %571 : vector<1x256x256xbf16> to vector<256x256xbf16>
    %cst_359 = arith.constant dense<0.000000e+00> : vector<32x256xf32>
    %573 = tpu.matmul %552, %572, %cst_359 {dimension_numbers = #tpu.dot_dimension_numbers<[1], [0], [0], [1], [0, 0, 1, 1], [], []>} : vector<32x256xbf16>, vector<256x256xbf16>, vector<32x256xf32> -> vector<32x256xf32>
    %c7_360 = arith.constant 7 : index
    %c0_361 = arith.constant 0 : index
    %c0_362 = arith.constant 0 : index
    %574 = vector.load %arg5[%c7_360, %c0_361, %c0_362] : memref<9x256x256xbf16, #tpu.memory_space<vmem>>, vector<1x256x256xbf16>
    %575 = vector.shape_cast %574 : vector<1x256x256xbf16> to vector<256x256xbf16>
    %cst_363 = arith.constant dense<0.000000e+00> : vector<32x256xf32>
    %576 = tpu.matmul %552, %575, %cst_363 {dimension_numbers = #tpu.dot_dimension_numbers<[1], [0], [0], [1], [0, 0, 1, 1], [], []>} : vector<32x256xbf16>, vector<256x256xbf16>, vector<32x256xf32> -> vector<32x256xf32>
    %c8_364 = arith.constant 8 : index
    %c0_365 = arith.constant 0 : index
    %c0_366 = arith.constant 0 : index
    %577 = vector.load %arg5[%c8_364, %c0_365, %c0_366] : memref<9x256x256xbf16, #tpu.memory_space<vmem>>, vector<1x256x256xbf16>
    %578 = vector.shape_cast %577 : vector<1x256x256xbf16> to vector<256x256xbf16>
    %cst_367 = arith.constant dense<0.000000e+00> : vector<32x256xf32>
    %579 = tpu.matmul %552, %578, %cst_367 {dimension_numbers = #tpu.dot_dimension_numbers<[1], [0], [0], [1], [0, 0, 1, 1], [], []>} : vector<32x256xbf16>, vector<256x256xbf16>, vector<32x256xf32> -> vector<32x256xf32>
    %580 = tpu.concatenate %555, %558, %561, %564, %567, %570, %573, %576, %579 in 0 : vector<32x256xf32>, vector<32x256xf32>, vector<32x256xf32>, vector<32x256xf32>, vector<32x256xf32>, vector<32x256xf32>, vector<32x256xf32>, vector<32x256xf32>, vector<32x256xf32> -> vector<288x256xf32>
    %c0_368 = arith.constant 0 : index
    %c0_369 = arith.constant 0 : index
    %581 = vector.load %arg15[%c0_368, %c0_369] : memref<32x288xf32, #tpu.memory_space<vmem>>, vector<32x288xf32>
    %cst_370 = arith.constant dense<0.000000e+00> : vector<32x256xf32>
    %582 = tpu.matmul %581, %580, %cst_370 {dimension_numbers = #tpu.dot_dimension_numbers<[1], [0], [0], [1], [0, 0, 1, 1], [], []>} : vector<32x288xf32>, vector<288x256xf32>, vector<32x256xf32> -> vector<32x256xf32>
    %cst_371 = arith.constant dense<0.000000e+00> : vector<32xf32>
    %583 = vector.multi_reduction <add>, %582, %cst_371 [1] : vector<32x256xf32> to vector<32xf32>
    %584 = vector.shape_cast %583 : vector<32xf32> to vector<32x1xf32>
    %585 = vector.extract_strided_slice %584 {offsets = [0, 0], sizes = [16, 1], strides = [1, 1]} : vector<32x1xf32> to vector<16x1xf32>
    %586 = vector.extract_strided_slice %584 {offsets = [16, 0], sizes = [16, 1], strides = [1, 1]} : vector<32x1xf32> to vector<16x1xf32>
    %587 = arith.addf %585, %586 : vector<16x1xf32>
    %588 = tpu.concatenate %587, %587 in 0 : vector<16x1xf32>, vector<16x1xf32> -> vector<32x1xf32>
    %589 = arith.mulf %582, %582 : vector<32x256xf32>
    %cst_372 = arith.constant dense<0.000000e+00> : vector<32xf32>
    %590 = vector.multi_reduction <add>, %589, %cst_372 [1] : vector<32x256xf32> to vector<32xf32>
    %591 = vector.shape_cast %590 : vector<32xf32> to vector<32x1xf32>
    %592 = vector.extract_strided_slice %591 {offsets = [0, 0], sizes = [16, 1], strides = [1, 1]} : vector<32x1xf32> to vector<16x1xf32>
    %593 = vector.extract_strided_slice %591 {offsets = [16, 0], sizes = [16, 1], strides = [1, 1]} : vector<32x1xf32> to vector<16x1xf32>
    %594 = arith.addf %592, %593 : vector<16x1xf32>
    %595 = tpu.concatenate %594, %594 in 0 : vector<16x1xf32>, vector<16x1xf32> -> vector<32x1xf32>
    %cst_373 = arith.constant 0.001953125 : f32
    %596 = vector.broadcast %cst_373 : f32 to vector<32x1xf32>
    %597 = arith.mulf %588, %596 : vector<32x1xf32>
    %cst_374 = arith.constant 0.001953125 : f32
    %598 = vector.broadcast %cst_374 : f32 to vector<32x1xf32>
    %599 = arith.mulf %595, %598 : vector<32x1xf32>
    %600 = arith.mulf %597, %597 : vector<32x1xf32>
    %601 = arith.subf %599, %600 : vector<32x1xf32>
    %cst_375 = arith.constant 0.000000e+00 : f32
    %602 = vector.broadcast %cst_375 : f32 to vector<32x1xf32>
    %603 = arith.maximumf %601, %602 : vector<32x1xf32>
    %c10 = arith.constant 10 : index
    %c0_376 = arith.constant 0 : index
    %c0_377 = arith.constant 0 : index
    %604 = vector.load %arg18[%c10, %c0_376, %c0_377] : memref<13x32x2xf32, #tpu.memory_space<vmem>>, vector<1x32x1xf32>
    %605 = vector.shape_cast %604 : vector<1x32x1xf32> to vector<32x1xf32>
    %c10_378 = arith.constant 10 : index
    %c0_379 = arith.constant 0 : index
    %c1_380 = arith.constant 1 : index
    %606 = vector.load %arg18[%c10_378, %c0_379, %c1_380] : memref<13x32x2xf32, #tpu.memory_space<vmem>>, vector<1x32x1xf32>
    %607 = vector.shape_cast %606 : vector<1x32x1xf32> to vector<32x1xf32>
    %cst_381 = arith.constant 9.99999974E-6 : f32
    %608 = vector.broadcast %cst_381 : f32 to vector<32x1xf32>
    %609 = arith.addf %603, %608 : vector<32x1xf32>
    %610 = math.rsqrt %609 : vector<32x1xf32>
    %611 = arith.mulf %605, %610 : vector<32x1xf32>
    %612 = arith.mulf %597, %611 : vector<32x1xf32>
    %613 = arith.subf %607, %612 : vector<32x1xf32>
    %614 = vector.broadcast %611 : vector<32x1xf32> to vector<32x256xf32>
    %615 = arith.mulf %582, %614 : vector<32x256xf32>
    %616 = vector.broadcast %613 : vector<32x1xf32> to vector<32x256xf32>
    %617 = arith.addf %615, %616 : vector<32x256xf32>
    %cst_382 = arith.constant 0.000000e+00 : f32
    %618 = vector.broadcast %cst_382 : f32 to vector<32x256xf32>
    %619 = arith.cmpf oge, %617, %618 : vector<32x256xf32>
    %cst_383 = arith.constant 2.000000e-01 : f32
    %620 = vector.broadcast %cst_383 : f32 to vector<32x256xf32>
    %621 = arith.mulf %617, %620 : vector<32x256xf32>
    %622 = arith.select %619, %617, %621 : vector<32x256xi1>, vector<32x256xf32>
    %c0_384 = arith.constant 0 : index
    %c0_385 = arith.constant 0 : index
    %623 = vector.load %arg16[%c0_384, %c0_385] : memref<32x32xf32, #tpu.memory_space<vmem>>, vector<32x32xf32>
    %cst_386 = arith.constant dense<0.000000e+00> : vector<32x256xf32>
    %624 = tpu.matmul %623, %622, %cst_386 {dimension_numbers = #tpu.dot_dimension_numbers<[1], [0], [0], [1], [0, 0, 1, 1], [], []>} : vector<32x32xf32>, vector<32x256xf32>, vector<32x256xf32> -> vector<32x256xf32>
    %cst_387 = arith.constant dense<0.000000e+00> : vector<32xf32>
    %625 = vector.multi_reduction <add>, %624, %cst_387 [1] : vector<32x256xf32> to vector<32xf32>
    %626 = vector.shape_cast %625 : vector<32xf32> to vector<32x1xf32>
    %627 = vector.extract_strided_slice %626 {offsets = [0, 0], sizes = [16, 1], strides = [1, 1]} : vector<32x1xf32> to vector<16x1xf32>
    %628 = vector.extract_strided_slice %626 {offsets = [16, 0], sizes = [16, 1], strides = [1, 1]} : vector<32x1xf32> to vector<16x1xf32>
    %629 = arith.addf %627, %628 : vector<16x1xf32>
    %630 = tpu.concatenate %629, %629 in 0 : vector<16x1xf32>, vector<16x1xf32> -> vector<32x1xf32>
    %631 = arith.mulf %624, %624 : vector<32x256xf32>
    %cst_388 = arith.constant dense<0.000000e+00> : vector<32xf32>
    %632 = vector.multi_reduction <add>, %631, %cst_388 [1] : vector<32x256xf32> to vector<32xf32>
    %633 = vector.shape_cast %632 : vector<32xf32> to vector<32x1xf32>
    %634 = vector.extract_strided_slice %633 {offsets = [0, 0], sizes = [16, 1], strides = [1, 1]} : vector<32x1xf32> to vector<16x1xf32>
    %635 = vector.extract_strided_slice %633 {offsets = [16, 0], sizes = [16, 1], strides = [1, 1]} : vector<32x1xf32> to vector<16x1xf32>
    %636 = arith.addf %634, %635 : vector<16x1xf32>
    %637 = tpu.concatenate %636, %636 in 0 : vector<16x1xf32>, vector<16x1xf32> -> vector<32x1xf32>
    %cst_389 = arith.constant 0.001953125 : f32
    %638 = vector.broadcast %cst_389 : f32 to vector<32x1xf32>
    %639 = arith.mulf %630, %638 : vector<32x1xf32>
    %cst_390 = arith.constant 0.001953125 : f32
    %640 = vector.broadcast %cst_390 : f32 to vector<32x1xf32>
    %641 = arith.mulf %637, %640 : vector<32x1xf32>
    %642 = arith.mulf %639, %639 : vector<32x1xf32>
    %643 = arith.subf %641, %642 : vector<32x1xf32>
    %cst_391 = arith.constant 0.000000e+00 : f32
    %644 = vector.broadcast %cst_391 : f32 to vector<32x1xf32>
    %645 = arith.maximumf %643, %644 : vector<32x1xf32>
    %c11 = arith.constant 11 : index
    %c0_392 = arith.constant 0 : index
    %c0_393 = arith.constant 0 : index
    %646 = vector.load %arg18[%c11, %c0_392, %c0_393] : memref<13x32x2xf32, #tpu.memory_space<vmem>>, vector<1x32x1xf32>
    %647 = vector.shape_cast %646 : vector<1x32x1xf32> to vector<32x1xf32>
    %c11_394 = arith.constant 11 : index
    %c0_395 = arith.constant 0 : index
    %c1_396 = arith.constant 1 : index
    %648 = vector.load %arg18[%c11_394, %c0_395, %c1_396] : memref<13x32x2xf32, #tpu.memory_space<vmem>>, vector<1x32x1xf32>
    %649 = vector.shape_cast %648 : vector<1x32x1xf32> to vector<32x1xf32>
    %cst_397 = arith.constant 9.99999974E-6 : f32
    %650 = vector.broadcast %cst_397 : f32 to vector<32x1xf32>
    %651 = arith.addf %645, %650 : vector<32x1xf32>
    %652 = math.rsqrt %651 : vector<32x1xf32>
    %653 = arith.mulf %647, %652 : vector<32x1xf32>
    %654 = arith.mulf %639, %653 : vector<32x1xf32>
    %655 = arith.subf %649, %654 : vector<32x1xf32>
    %656 = vector.broadcast %653 : vector<32x1xf32> to vector<32x256xf32>
    %657 = arith.mulf %624, %656 : vector<32x256xf32>
    %658 = vector.broadcast %655 : vector<32x1xf32> to vector<32x256xf32>
    %659 = arith.addf %657, %658 : vector<32x256xf32>
    %cst_398 = arith.constant 0.000000e+00 : f32
    %660 = vector.broadcast %cst_398 : f32 to vector<32x256xf32>
    %661 = arith.cmpf oge, %659, %660 : vector<32x256xf32>
    %cst_399 = arith.constant 2.000000e-01 : f32
    %662 = vector.broadcast %cst_399 : f32 to vector<32x256xf32>
    %663 = arith.mulf %659, %662 : vector<32x256xf32>
    %664 = arith.select %661, %659, %663 : vector<32x256xi1>, vector<32x256xf32>
    %c12 = arith.constant 12 : index
    %c0_400 = arith.constant 0 : index
    %c0_401 = arith.constant 0 : index
    %665 = vector.load %arg18[%c12, %c0_400, %c0_401] : memref<13x32x2xf32, #tpu.memory_space<vmem>>, vector<1x4x1xf32>
    %666 = vector.shape_cast %665 : vector<1x4x1xf32> to vector<4x1xf32>
    %c0_402 = arith.constant 0 : index
    %c0_403 = arith.constant 0 : index
    %667 = vector.load %arg17[%c0_402, %c0_403] : memref<4x32xf32, #tpu.memory_space<vmem>>, vector<4x32xf32>
    %cst_404 = arith.constant dense<0.000000e+00> : vector<4x256xf32>
    %668 = tpu.matmul %667, %664, %cst_404 {dimension_numbers = #tpu.dot_dimension_numbers<[1], [0], [0], [1], [0, 0, 1, 1], [], []>} : vector<4x32xf32>, vector<32x256xf32>, vector<4x256xf32> -> vector<4x256xf32>
    %669 = vector.broadcast %666 : vector<4x1xf32> to vector<4x256xf32>
    %670 = arith.addf %668, %669 : vector<4x256xf32>
    %671 = arith.negf %670 : vector<4x256xf32>
    %672 = math.exp %671 : vector<4x256xf32>
    %cst_405 = arith.constant 1.000000e+00 : f32
    %673 = vector.broadcast %cst_405 : f32 to vector<4x256xf32>
    %674 = arith.addf %673, %672 : vector<4x256xf32>
    %675 = arith.divf %673, %674 : vector<4x256xf32>
    %c0_406 = arith.constant 0 : index
    %c0_407 = arith.constant 0 : index
    %676 = vector.load %arg19[%c0_406, %c0_407] : memref<4x256xf32, #tpu.memory_space<vmem>>, vector<4x256xf32>
    tpu.vector_store %arg19[%c0_406, %c0_407], %675 {strides = array<i32>} : memref<4x256xf32, #tpu.memory_space<vmem>>, vector<4x256xf32>,
    return
  }
}

</mosaic_0001>

<llo_original>
// kernel: tile.133
$region0: #{tile.133}
  #allocation0 [shape = 's32[1]{0}', space=sflag, size = 0x4, scoped, tag = 'scoped memory for tile.133']
  %s0 = inlined_call_operand.vmem [shape: f32[16], index: 0, kind: input, shape index: {}]
  %s1 = inlined_call_operand.vmem [shape: f32[2,16], index: 1, kind: output, shape index: {}]
  // Predicated region
  $region2: #{tile.133} parent=0 // pred_check
    _
  $region3: #{tile.133} parent=0 // pred_check_branch
    %3 = sbr.rel (0) target = $region5
  $region4: #{tile.133} parent=0 // pred_region
    _
  $region5: #{tile.133} parent=0 // pred_fallthru
    _
  %v4 = vld [vmem:[%s0] ss:$0 sm:$0xff]
  %5 = vst [vmem:[%s1] sm:$0x3] %v4

// kernel: tile.138
$region0: #{tile.138}
  %s0 = inlined_call_operand.vmem [shape: f32[2,16], index: 0, kind: input, shape index: {}]
  %s1 = inlined_call_operand.vmem [shape: f32[32,1], index: 1, kind: output, shape index: {}]
  $region1: #{tile.138} parent=0
    #allocation0 [shape = 'u8[4096]{0}', space=vmem, size = 0x1000, scoped, tag = 'scoped mem for output reshape']
    #allocation1 [shape = 'u8[4096]{0}', space=vmem, size = 0x1000, scoped, tag = 'scoped mem for input reshape']
    %s3 = sshllo.u32 0, 2
    %v4 = vld [vmem:[%s0] sm:%s3]
    %5 = vst [vmem:[#allocation1] sm:%s3] %v4
    %v6 = vld [vmem:[#allocation1] sm:$0x1]
    %vm7 = vcmask 130048
    %8 = vst.msk [vmem:[#allocation0] sm:$0x1] %vm7, %v6
    %s9 = scalar_lea.vmem [#allocation1], 1
    %v10 = vld [vmem:[%s9] sm:$0x1]
    %11 = vrot.lane.b32.xlu0 %v10, 16
    %v12 = vpop.permute.xlu0 %11
    %vm13 = vcmask 261248
    %14 = vst.msk [vmem:[#allocation0] sm:$0x1] %vm13, %v12
    %s16 = sshllo.u32 0, 1
    %v18 = vld [vmem:[#allocation0] sm:%s16]
    %s19 = sshllo.u32 0, 1
    %20 = vst [vmem:[%s1] sm:%s19] %v18

// kernel: tile.153
$region0: #{tile.153}
  #allocation0 [shape = 's32[1]{0}', space=sflag, size = 0x4, scoped, tag = 'scoped memory for tile.153']
  %s0 = inlined_call_operand.vmem [shape: f32[8], index: 0, kind: input, shape index: {}]
  %s1 = inlined_call_operand.vmem [shape: f32[2,8], index: 1, kind: output, shape index: {}]
  // Predicated region
  $region2: #{tile.153} parent=0 // pred_check
    _
  $region3: #{tile.153} parent=0 // pred_check_branch
    %3 = sbr.rel (0) target = $region5
  $region4: #{tile.153} parent=0 // pred_region
    _
  $region5: #{tile.153} parent=0 // pred_fallthru
    _
  %v4 = vld [vmem:[%s0] ss:$0 sm:$0xff]
  %5 = vst [vmem:[%s1] sm:$0x3] %v4

// kernel: tile.158
$region0: #{tile.158}
  %s0 = inlined_call_operand.vmem [shape: f32[2,8], index: 0, kind: input, shape index: {}]
  %s1 = inlined_call_operand.vmem [shape: f32[16,1], index: 1, kind: output, shape index: {}]
  $region1: #{tile.158} parent=0
    #allocation0 [shape = 'u8[4096]{0}', space=vmem, size = 0x1000, scoped, tag = 'scoped mem for output reshape']
    #allocation1 [shape = 'u8[4096]{0}', space=vmem, size = 0x1000, scoped, tag = 'scoped mem for input reshape']
    %s3 = sshllo.u32 0, 2
    %v4 = vld [vmem:[%s0] sm:%s3]
    %5 = vst [vmem:[#allocation1] sm:%s3] %v4
    %v6 = vld [vmem:[#allocation1] sm:$0x1]
    %vm7 = vcmask 64512
    %8 = vst.msk [vmem:[#allocation0] sm:$0x1] %vm7, %v6
    %s9 = scalar_lea.vmem [#allocation1], 1
    %v10 = vld [vmem:[%s9] sm:$0x1]
    %11 = vrot.lane.b32.xlu0 %v10, 8
    %v12 = vpop.permute.xlu0 %11
    %vm13 = vcmask 130112
    %14 = vst.msk [vmem:[#allocation0] sm:$0x1] %vm13, %v12
    %s16 = sshllo.u32 0, 1
    %v18 = vld [vmem:[#allocation0] sm:%s16]
    %s19 = sshllo.u32 0, 1
    %20 = vst [vmem:[%s1] sm:%s19] %v18

// kernel: tile.128
$region0: #{tile.128}
  #allocation0 [shape = 's32[1]{0}', space=sflag, size = 0x4, scoped, tag = 'scoped memory for tile.128']
  %s0 = inlined_call_operand.vmem [shape: f32[2], index: 0, kind: input, shape index: {}]
  %s1 = inlined_call_operand.vmem [shape: f32[2,2], index: 1, kind: output, shape index: {}]
  // Predicated region
  $region2: #{tile.128} parent=0 // pred_check
    _
  $region3: #{tile.128} parent=0 // pred_check_branch
    %3 = sbr.rel (0) target = $region5
  $region4: #{tile.128} parent=0 // pred_region
    _
  $region5: #{tile.128} parent=0 // pred_fallthru
    _
  %v4 = vld [vmem:[%s0] ss:$0 sm:$0xff]
  %5 = vst [vmem:[%s1] sm:$0x3] %v4

// kernel: tile.129
$region0: #{tile.129}
  %s0 = inlined_call_operand.vmem [shape: f32[2,2], index: 0, kind: input, shape index: {}]
  %s1 = inlined_call_operand.vmem [shape: f32[4,1], index: 1, kind: output, shape index: {}]
  $region1: #{tile.129} parent=0
    #allocation0 [shape = 'u8[4096]{0}', space=vmem, size = 0x1000, scoped, tag = 'scoped mem for output reshape']
    #allocation1 [shape = 'u8[4096]{0}', space=vmem, size = 0x1000, scoped, tag = 'scoped mem for input reshape']
    %s3 = sshllo.u32 0, 2
    %v4 = vld [vmem:[%s0] sm:%s3]
    %5 = vst [vmem:[#allocation1] sm:%s3] %v4
    %v6 = vld [vmem:[#allocation1] sm:$0x1]
    %vm7 = vcmask 15360
    %8 = vst.msk [vmem:[#allocation0] sm:$0x1] %vm7, %v6
    %s9 = scalar_lea.vmem [#allocation1], 1
    %v10 = vld [vmem:[%s9] sm:$0x1]
    %11 = vrot.lane.b32.xlu0 %v10, 2
    %v12 = vpop.permute.xlu0 %11
    %vm13 = vcmask 31760
    %14 = vst.msk [vmem:[#allocation0] sm:$0x1] %vm13, %v12
    %s16 = sshllo.u32 0, 1
    %v18 = vld [vmem:[#allocation0] sm:%s16]
    %s19 = sshllo.u32 0, 1
    %20 = vst [vmem:[%s1] sm:%s19] %v18

// kernel: uninet_forward.1
$region0: #{uninet_forward.1}
  #allocation0 [shape = 'u32[]', space=smem, size = 0x4, offset = 0x4, fixed_abs, tag = 'smem constant byte address 0x4 - core index']
  #allocation1 [shape = 'u32[144,128]{1,0:T(1,128)}', space=vmem, size = 0x12000, scoped, tag = 'internal scratch']
  %s0 = inlined_call_operand.vmem [shape: f32[8,256], index: 0, kind: input, shape index: {}]
  %s1 = inlined_call_operand.vmem [shape: bf16[9,256,64], index: 1, kind: input, shape index: {}]
  %s2 = inlined_call_operand.vmem [shape: bf16[9,64,64], index: 2, kind: input, shape index: {}]
  %s3 = inlined_call_operand.vmem [shape: bf16[9,64,16], index: 3, kind: input, shape index: {}]
  %s4 = inlined_call_operand.vmem [shape: bf16[9,16,16], index: 4, kind: input, shape index: {}]
  %s5 = inlined_call_operand.vmem [shape: bf16[9,256,256], index: 5, kind: input, shape index: {}]
  %s6 = inlined_call_operand.vmem [shape: bf16[16,64], index: 6, kind: input, shape index: {}]
  %s7 = inlined_call_operand.vmem [shape: bf16[64,256], index: 7, kind: input, shape index: {}]
  %s8 = inlined_call_operand.vmem [shape: f32[32,72], index: 8, kind: input, shape index: {}]
  %s9 = inlined_call_operand.vmem [shape: f32[32,288], index: 9, kind: input, shape index: {}]
  %s10 = inlined_call_operand.vmem [shape: f32[16,32], index: 10, kind: input, shape index: {}]
  %s11 = inlined_call_operand.vmem [shape: f32[32,288], index: 11, kind: input, shape index: {}]
  %s12 = inlined_call_operand.vmem [shape: f32[32,288], index: 12, kind: input, shape index: {}]
  %s13 = inlined_call_operand.vmem [shape: f32[32,432], index: 13, kind: input, shape index: {}]
  %s14 = inlined_call_operand.vmem [shape: f32[32,32], index: 14, kind: input, shape index: {}]
  %s15 = inlined_call_operand.vmem [shape: f32[32,288], index: 15, kind: input, shape index: {}]
  %s16 = inlined_call_operand.vmem [shape: f32[32,32], index: 16, kind: input, shape index: {}]
  %s17 = inlined_call_operand.vmem [shape: f32[4,32], index: 17, kind: input, shape index: {}]
  %s18 = inlined_call_operand.vmem [shape: f32[13,32,2], index: 18, kind: input, shape index: {}]
  %s19 = inlined_call_operand.vmem [shape: f32[4,256], index: 19, kind: output, shape index: {}]
  %s20 = sld [smem:[#allocation0]]
  $region86: #{uninet_forward.1} parent=0
    _
  %s22 = ssub.s32 1, %s20
  %s23 = scalar_select 0, %s22, %s20
  // Predicated region
  $region2: #{uninet_forward.1} parent=0 // pred_check
    _
  $region3: #{uninet_forward.1} parent=0 // pred_check_branch
    %25 = sbr.rel (0) target = $region5
  $region4: #{uninet_forward.1} parent=0 // pred_region
    _
  $region5: #{uninet_forward.1} parent=0 // pred_fallthru
    _
  // Predicated region
  $region6: #{uninet_forward.1} parent=0 // pred_check
    _
  $region7: #{uninet_forward.1} parent=0 // pred_check_branch
    %27 = sbr.rel (0) target = $region9
  $region8: #{uninet_forward.1} parent=0 // pred_region
    _
  $region9: #{uninet_forward.1} parent=0 // pred_fallthru
    _
  // Predicated region
  $region10: #{uninet_forward.1} parent=0 // pred_check
    _
  $region11: #{uninet_forward.1} parent=0 // pred_check_branch
    %29 = sbr.rel (0) target = $region13
  $region12: #{uninet_forward.1} parent=0 // pred_region
    _
  $region13: #{uninet_forward.1} parent=0 // pred_fallthru
    _
  // Predicated region
  $region14: #{uninet_forward.1} parent=0 // pred_check
    _
  $region15: #{uninet_forward.1} parent=0 // pred_check_branch
    %31 = sbr.rel (0) target = $region17
  $region16: #{uninet_forward.1} parent=0 // pred_region
    _
  $region17: #{uninet_forward.1} parent=0 // pred_fallthru
    _
  // Predicated region
  $region18: #{uninet_forward.1} parent=0 // pred_check
    _
  $region19: #{uninet_forward.1} parent=0 // pred_check_branch
    %33 = sbr.rel (0) target = $region21
  $region20: #{uninet_forward.1} parent=0 // pred_region
    _
  $region21: #{uninet_forward.1} parent=0 // pred_fallthru
    _
  // Predicated region
  $region22: #{uninet_forward.1} parent=0 // pred_check
    _
  $region23: #{uninet_forward.1} parent=0 // pred_check_branch
    %35 = sbr.rel (0) target = $region25
  $region24: #{uninet_forward.1} parent=0 // pred_region
    _
  $region25: #{uninet_forward.1} parent=0 // pred_fallthru
    _
  // Predicated region
  $region26: #{uninet_forward.1} parent=0 // pred_check
    _
  $region27: #{uninet_forward.1} parent=0 // pred_check_branch
    %37 = sbr.rel (0) target = $region29
  $region28: #{uninet_forward.1} parent=0 // pred_region
    _
  $region29: #{uninet_forward.1} parent=0 // pred_fallthru
    _
  // Predicated region
  $region30: #{uninet_forward.1} parent=0 // pred_check
    _
  $region31: #{uninet_forward.1} parent=0 // pred_check_branch
    %39 = sbr.rel (0) target = $region33
  $region32: #{uninet_forward.1} parent=0 // pred_region
    _
  $region33: #{uninet_forward.1} parent=0 // pred_fallthru
    _
  // Predicated region
  $region34: #{uninet_forward.1} parent=0 // pred_check
    _
  $region35: #{uninet_forward.1} parent=0 // pred_check_branch
    %41 = sbr.rel (0) target = $region37
  $region36: #{uninet_forward.1} parent=0 // pred_region
    _
  $region37: #{uninet_forward.1} parent=0 // pred_fallthru
    _
  // Predicated region
  $region38: #{uninet_forward.1} parent=0 // pred_check
    _
  $region39: #{uninet_forward.1} parent=0 // pred_check_branch
    %43 = sbr.rel (0) target = $region41
  $region40: #{uninet_forward.1} parent=0 // pred_region
    _
  $region41: #{uninet_forward.1} parent=0 // pred_fallthru
    _
  // Predicated region
  $region42: #{uninet_forward.1} parent=0 // pred_check
    _
  $region43: #{uninet_forward.1} parent=0 // pred_check_branch
    %45 = sbr.rel (0) target = $region45
  $region44: #{uninet_forward.1} parent=0 // pred_region
    _
  $region45: #{uninet_forward.1} parent=0 // pred_fallthru
    _
  // Predicated region
  $region46: #{uninet_forward.1} parent=0 // pred_check
    _
  $region47: #{uninet_forward.1} parent=0 // pred_check_branch
    %47 = sbr.rel (0) target = $region49
  $region48: #{uninet_forward.1} parent=0 // pred_region
    _
  $region49: #{uninet_forward.1} parent=0 // pred_fallthru
    _
  // Predicated region
  $region50: #{uninet_forward.1} parent=0 // pred_check
    _
  $region51: #{uninet_forward.1} parent=0 // pred_check_branch
    %49 = sbr.rel (0) target = $region53
  $region52: #{uninet_forward.1} parent=0 // pred_region
    _
  $region53: #{uninet_forward.1} parent=0 // pred_fallthru
    _
  // Predicated region
  $region54: #{uninet_forward.1} parent=0 // pred_check
    _
  $region55: #{uninet_forward.1} parent=0 // pred_check_branch
    %51 = sbr.rel (0) target = $region57
  $region56: #{uninet_forward.1} parent=0 // pred_region
    _
  $region57: #{uninet_forward.1} parent=0 // pred_fallthru
    _
  // Predicated region
  $region58: #{uninet_forward.1} parent=0 // pred_check
    _
  $region59: #{uninet_forward.1} parent=0 // pred_check_branch
    %53 = sbr.rel (0) target = $region61
  $region60: #{uninet_forward.1} parent=0 // pred_region
    _
  $region61: #{uninet_forward.1} parent=0 // pred_fallthru
    _
  // Predicated region
  $region62: #{uninet_forward.1} parent=0 // pred_check
    _
  $region63: #{uninet_forward.1} parent=0 // pred_check_branch
    %55 = sbr.rel (0) target = $region65
  $region64: #{uninet_forward.1} parent=0 // pred_region
    _
  $region65: #{uninet_forward.1} parent=0 // pred_fallthru
    _
  // Predicated region
  $region66: #{uninet_forward.1} parent=0 // pred_check
    _
  $region67: #{uninet_forward.1} parent=0 // pred_check_branch
    %57 = sbr.rel (0) target = $region69
  $region68: #{uninet_forward.1} parent=0 // pred_region
    _
  $region69: #{uninet_forward.1} parent=0 // pred_fallthru
    _
  // Predicated region
  $region70: #{uninet_forward.1} parent=0 // pred_check
    _
  $region71: #{uninet_forward.1} parent=0 // pred_check_branch
    %59 = sbr.rel (0) target = $region73
  $region72: #{uninet_forward.1} parent=0 // pred_region
    _
  $region73: #{uninet_forward.1} parent=0 // pred_fallthru
    _
  // Predicated region
  $region74: #{uninet_forward.1} parent=0 // pred_check
    _
  $region75: #{uninet_forward.1} parent=0 // pred_check_branch
    %61 = sbr.rel (0) target = $region77
  $region76: #{uninet_forward.1} parent=0 // pred_region
    _
  $region77: #{uninet_forward.1} parent=0 // pred_fallthru
    _
  %v63 = vld [vmem:[%s0] sm:$0xff]
  %v64 = vld [vmem:[%s0 + $0x8] sm:$0xff]
  %v65 = vpack.c.bf16 %v63, %v63
  %v66 = vpack.c.bf16 %v64, %v64
  %v67 = vld [vmem:[%s1] sm:$0xf]
  %v68 = vld [vmem:[%s1 + $0x4] sm:$0xf]
  %v69 = vld [vmem:[%s1 + $0x8] sm:$0xf]
  %v70 = vld [vmem:[%s1 + $0xc] sm:$0xf]
  %v71 = vld [vmem:[%s1 + $0x10] sm:$0xf]
  %v72 = vld [vmem:[%s1 + $0x14] sm:$0xf]
  %v73 = vld [vmem:[%s1 + $0x18] sm:$0xf]
  %v74 = vld [vmem:[%s1 + $0x1c] sm:$0xf]
  %v75 = vld [vmem:[%s1 + $0x20] sm:$0xf]
  %v76 = vld [vmem:[%s1 + $0x24] sm:$0xf]
  %v77 = vld [vmem:[%s1 + $0x28] sm:$0xf]
  %v78 = vld [vmem:[%s1 + $0x2c] sm:$0xf]
  %v79 = vld [vmem:[%s1 + $0x30] sm:$0xf]
  %v80 = vld [vmem:[%s1 + $0x34] sm:$0xf]
  %v81 = vld [vmem:[%s1 + $0x38] sm:$0xf]
  %v82 = vld [vmem:[%s1 + $0x3c] sm:$0xf]
  %v83 = vld [vmem:[%s1 + $0x40] sm:$0xf]
  %v84 = vld [vmem:[%s1 + $0x44] sm:$0xf]
  %v85 = vld [vmem:[%s1 + $0x48] sm:$0xf]
  %v86 = vld [vmem:[%s1 + $0x4c] sm:$0xf]
  %v87 = vld [vmem:[%s1 + $0x50] sm:$0xf]
  %v88 = vld [vmem:[%s1 + $0x54] sm:$0xf]
  %v89 = vld [vmem:[%s1 + $0x58] sm:$0xf]
  %v90 = vld [vmem:[%s1 + $0x5c] sm:$0xf]
  %v91 = vld [vmem:[%s1 + $0x60] sm:$0xf]
  %v92 = vld [vmem:[%s1 + $0x64] sm:$0xf]
  %v93 = vld [vmem:[%s1 + $0x68] sm:$0xf]
  %v94 = vld [vmem:[%s1 + $0x6c] sm:$0xf]
  %v95 = vld [vmem:[%s1 + $0x70] sm:$0xf]
  %v96 = vld [vmem:[%s1 + $0x74] sm:$0xf]
  %v97 = vld [vmem:[%s1 + $0x78] sm:$0xf]
  %v98 = vld [vmem:[%s1 + $0x7c] sm:$0xf]
  %v131 = vunpack.c.l.b16 %v67
  %v132 = vunpack.c.l.b16 %v68
  %v133 = vunpack.c.l.b16 %v69
  %v134 = vunpack.c.l.b16 %v70
  %v135 = vunpack.c.l.b16 %v71
  %v136 = vunpack.c.l.b16 %v72
  %v137 = vunpack.c.l.b16 %v73
  %v138 = vunpack.c.l.b16 %v74
  %v139 = vunpack.c.l.b16 %v75
  %v140 = vunpack.c.l.b16 %v76
  %v141 = vunpack.c.l.b16 %v77
  %v142 = vunpack.c.l.b16 %v78
  %v143 = vunpack.c.l.b16 %v79
  %v144 = vunpack.c.l.b16 %v80
  %v145 = vunpack.c.l.b16 %v81
  %v146 = vunpack.c.l.b16 %v82
  %v147 = vunpack.c.l.b16 %v83
  %v148 = vunpack.c.l.b16 %v84
  %v149 = vunpack.c.l.b16 %v85
  %v150 = vunpack.c.l.b16 %v86
  %v151 = vunpack.c.l.b16 %v87
  %v152 = vunpack.c.l.b16 %v88
  %v153 = vunpack.c.l.b16 %v89
  %v154 = vunpack.c.l.b16 %v90
  %v155 = vunpack.c.l.b16 %v91
  %v156 = vunpack.c.l.b16 %v92
  %v157 = vunpack.c.l.b16 %v93
  %v158 = vunpack.c.l.b16 %v94
  %v159 = vunpack.c.l.b16 %v95
  %v160 = vunpack.c.l.b16 %v96
  %v161 = vunpack.c.l.b16 %v97
  %v162 = vunpack.c.l.b16 %v98
  %v163 = vpack.c.b16 %v132, %v131
  %v164 = vpack.c.b16 %v134, %v133
  %v165 = vpack.c.b16 %v136, %v135
  %v166 = vpack.c.b16 %v138, %v137
  %v167 = vpack.c.b16 %v140, %v139
  %v168 = vpack.c.b16 %v142, %v141
  %v169 = vpack.c.b16 %v144, %v143
  %v170 = vpack.c.b16 %v146, %v145
  %v171 = vpack.c.b16 %v148, %v147
  %v172 = vpack.c.b16 %v150, %v149
  %v173 = vpack.c.b16 %v152, %v151
  %v174 = vpack.c.b16 %v154, %v153
  %v175 = vpack.c.b16 %v156, %v155
  %v176 = vpack.c.b16 %v158, %v157
  %v177 = vpack.c.b16 %v160, %v159
  %v178 = vpack.c.b16 %v162, %v161
  %195 = vmatprep.subr.bf16.mxu0 0
  %196 = vmatpush1.bf16.msra.mxu0 %v163
  %197 = vmatprep.subr.bf16.mxu0 0
  %198 = vmatpush1.bf16.msra.mxu0 %v164
  %199 = vmatprep.subr.bf16.mxu0 0
  %200 = vmatpush1.bf16.msra.mxu0 %v165
  %201 = vmatprep.subr.bf16.mxu0 0
  %202 = vmatpush1.bf16.msra.mxu0 %v166
  %203 = vmatprep.subr.bf16.mxu0 0
  %204 = vmatpush1.bf16.msra.mxu0 %v167
  %205 = vmatprep.subr.bf16.mxu0 0
  %206 = vmatpush1.bf16.msra.mxu0 %v168
  %207 = vmatprep.subr.bf16.mxu0 0
  %208 = vmatpush1.bf16.msra.mxu0 %v169
  %209 = vmatprep.subr.bf16.mxu0 0
  %210 = vmatpush1.bf16.msra.mxu0 %v170
  %211 = vmatprep.subr.bf16.mxu0 0
  %212 = vmatpush1.bf16.msra.mxu0 %v171
  %213 = vmatprep.subr.bf16.mxu0 0
  %214 = vmatpush1.bf16.msra.mxu0 %v172
  %215 = vmatprep.subr.bf16.mxu0 0
  %216 = vmatpush1.bf16.msra.mxu0 %v173
  %217 = vmatprep.subr.bf16.mxu0 0
  %218 = vmatpush1.bf16.msra.mxu0 %v174
  %219 = vmatprep.subr.bf16.mxu0 0
  %220 = vmatpush1.bf16.msra.mxu0 %v175
  %221 = vmatprep.subr.bf16.mxu0 0
  %222 = vmatpush1.bf16.msra.mxu0 %v176
  %223 = vmatprep.subr.bf16.mxu0 0
  %224 = vmatpush1.bf16.msra.mxu0 %v177
  %225 = vmatprep.subr.bf16.mxu0 0
  %226 = vmatpush1.bf16.msra.mxu0 %v178
  %227 = vmatprep.mubr.bf16.mxu0 %v66
  %228 = vmatmul.mubr.bf16.gmra.mrb[0].mxu0 %v65
  %v229 = vpop.f32.mrb[0].mxu0
  %v230 = vadd.f32 0.0, %v229
  %v231 = vpop.f32.mrb[0].mxu0
  %v232 = vpop.f32.mrb[0].mxu0
  %v233 = vpop.f32.mrb[0].mxu0
  %234 = vdwg.mxu0
  %s235 = scalar_lea.vmem %s1, 128
  %v236 = vld [vmem:[%s235] sm:$0xf]
  %v237 = vld [vmem:[%s235 + $0x4] sm:$0xf]
  %v238 = vld [vmem:[%s235 + $0x8] sm:$0xf]
  %v239 = vld [vmem:[%s235 + $0xc] sm:$0xf]
  %v240 = vld [vmem:[%s235 + $0x10] sm:$0xf]
  %v241 = vld [vmem:[%s235 + $0x14] sm:$0xf]
  %v242 = vld [vmem:[%s235 + $0x18] sm:$0xf]
  %v243 = vld [vmem:[%s235 + $0x1c] sm:$0xf]
  %v244 = vld [vmem:[%s235 + $0x20] sm:$0xf]
  %v245 = vld [vmem:[%s235 + $0x24] sm:$0xf]
  %v246 = vld [vmem:[%s235 + $0x28] sm:$0xf]
  %v247 = vld [vmem:[%s235 + $0x2c] sm:$0xf]
  %v248 = vld [vmem:[%s235 + $0x30] sm:$0xf]
  %v249 = vld [vmem:[%s235 + $0x34] sm:$0xf]
  %v250 = vld [vmem:[%s235 + $0x38] sm:$0xf]
  %v251 = vld [vmem:[%s235 + $0x3c] sm:$0xf]
  %v252 = vld [vmem:[%s235 + $0x40] sm:$0xf]
  %v253 = vld [vmem:[%s235 + $0x44] sm:$0xf]
  %v254 = vld [vmem:[%s235 + $0x48] sm:$0xf]
  %v255 = vld [vmem:[%s235 + $0x4c] sm:$0xf]
  %v256 = vld [vmem:[%s235 + $0x50] sm:$0xf]
  %v257 = vld [vmem:[%s235 + $0x54] sm:$0xf]
  %v258 = vld [vmem:[%s235 + $0x58] sm:$0xf]
  %v259 = vld [vmem:[%s235 + $0x5c] sm:$0xf]
  %v260 = vld [vmem:[%s235 + $0x60] sm:$0xf]
  %v261 = vld [vmem:[%s235 + $0x64] sm:$0xf]
  %v262 = vld [vmem:[%s235 + $0x68] sm:$0xf]
  %v263 = vld [vmem:[%s235 + $0x6c] sm:$0xf]
  %v264 = vld [vmem:[%s235 + $0x70] sm:$0xf]
  %v265 = vld [vmem:[%s235 + $0x74] sm:$0xf]
  %v266 = vld [vmem:[%s235 + $0x78] sm:$0xf]
  %v267 = vld [vmem:[%s235 + $0x7c] sm:$0xf]
  %v300 = vunpack.c.l.b16 %v236
  %v301 = vunpack.c.l.b16 %v237
  %v302 = vunpack.c.l.b16 %v238
  %v303 = vunpack.c.l.b16 %v239
  %v304 = vunpack.c.l.b16 %v240
  %v305 = vunpack.c.l.b16 %v241
  %v306 = vunpack.c.l.b16 %v242
  %v307 = vunpack.c.l.b16 %v243
  %v308 = vunpack.c.l.b16 %v244
  %v309 = vunpack.c.l.b16 %v245
  %v310 = vunpack.c.l.b16 %v246
  %v311 = vunpack.c.l.b16 %v247
  %v312 = vunpack.c.l.b16 %v248
  %v313 = vunpack.c.l.b16 %v249
  %v314 = vunpack.c.l.b16 %v250
  %v315 = vunpack.c.l.b16 %v251
  %v316 = vunpack.c.l.b16 %v252
  %v317 = vunpack.c.l.b16 %v253
  %v318 = vunpack.c.l.b16 %v254
  %v319 = vunpack.c.l.b16 %v255
  %v320 = vunpack.c.l.b16 %v256
  %v321 = vunpack.c.l.b16 %v257
  %v322 = vunpack.c.l.b16 %v258
  %v323 = vunpack.c.l.b16 %v259
  %v324 = vunpack.c.l.b16 %v260
  %v325 = vunpack.c.l.b16 %v261
  %v326 = vunpack.c.l.b16 %v262
  %v327 = vunpack.c.l.b16 %v263
  %v328 = vunpack.c.l.b16 %v264
  %v329 = vunpack.c.l.b16 %v265
  %v330 = vunpack.c.l.b16 %v266
  %v331 = vunpack.c.l.b16 %v267
  %v332 = vpack.c.b16 %v301, %v300
  %v333 = vpack.c.b16 %v303, %v302
  %v334 = vpack.c.b16 %v305, %v304
  %v335 = vpack.c.b16 %v307, %v306
  %v336 = vpack.c.b16 %v309, %v308
  %v337 = vpack.c.b16 %v311, %v310
  %v338 = vpack.c.b16 %v313, %v312
  %v339 = vpack.c.b16 %v315, %v314
  %v340 = vpack.c.b16 %v317, %v316
  %v341 = vpack.c.b16 %v319, %v318
  %v342 = vpack.c.b16 %v321, %v320
  %v343 = vpack.c.b16 %v323, %v322
  %v344 = vpack.c.b16 %v325, %v324
  %v345 = vpack.c.b16 %v327, %v326
  %v346 = vpack.c.b16 %v329, %v328
  %v347 = vpack.c.b16 %v331, %v330
  %364 = vmatprep.subr.bf16.mxu0 0
  %365 = vmatpush1.bf16.msra.mxu0 %v332
  %366 = vmatprep.subr.bf16.mxu0 0
  %367 = vmatpush1.bf16.msra.mxu0 %v333
  %368 = vmatprep.subr.bf16.mxu0 0
  %369 = vmatpush1.bf16.msra.mxu0 %v334
  %370 = vmatprep.subr.bf16.mxu0 0
  %371 = vmatpush1.bf16.msra.mxu0 %v335
  %372 = vmatprep.subr.bf16.mxu0 0
  %373 = vmatpush1.bf16.msra.mxu0 %v336
  %374 = vmatprep.subr.bf16.mxu0 0
  %375 = vmatpush1.bf16.msra.mxu0 %v337
  %376 = vmatprep.subr.bf16.mxu0 0
  %377 = vmatpush1.bf16.msra.mxu0 %v338
  %378 = vmatprep.subr.bf16.mxu0 0
  %379 = vmatpush1.bf16.msra.mxu0 %v339
  %380 = vmatprep.subr.bf16.mxu0 0
  %381 = vmatpush1.bf16.msra.mxu0 %v340
  %382 = vmatprep.subr.bf16.mxu0 0
  %383 = vmatpush1.bf16.msra.mxu0 %v341
  %384 = vmatprep.subr.bf16.mxu0 0
  %385 = vmatpush1.bf16.msra.mxu0 %v342
  %386 = vmatprep.subr.bf16.mxu0 0
  %387 = vmatpush1.bf16.msra.mxu0 %v343
  %388 = vmatprep.subr.bf16.mxu0 0
  %389 = vmatpush1.bf16.msra.mxu0 %v344
  %390 = vmatprep.subr.bf16.mxu0 0
  %391 = vmatpush1.bf16.msra.mxu0 %v345
  %392 = vmatprep.subr.bf16.mxu0 0
  %393 = vmatpush1.bf16.msra.mxu0 %v346
  %394 = vmatprep.subr.bf16.mxu0 0
  %395 = vmatpush1.bf16.msra.mxu0 %v347
  %396 = vmatprep.mubr.bf16.mxu0 %v66
  %397 = vmatmul.mubr.bf16.gmra.mrb[0].mxu0 %v65
  %v398 = vpop.f32.mrb[0].mxu0
  %v399 = vadd.f32 0.0, %v398
  %v400 = vpop.f32.mrb[0].mxu0
  %v401 = vpop.f32.mrb[0].mxu0
  %v402 = vpop.f32.mrb[0].mxu0
  %403 = vdwg.mxu0
  %s404 = scalar_lea.vmem %s1, 256
  %v405 = vld [vmem:[%s404] sm:$0xf]
  %v406 = vld [vmem:[%s404 + $0x4] sm:$0xf]
  %v407 = vld [vmem:[%s404 + $0x8] sm:$0xf]
  %v408 = vld [vmem:[%s404 + $0xc] sm:$0xf]
  %v409 = vld [vmem:[%s404 + $0x10] sm:$0xf]
  %v410 = vld [vmem:[%s404 + $0x14] sm:$0xf]
  %v411 = vld [vmem:[%s404 + $0x18] sm:$0xf]
  %v412 = vld [vmem:[%s404 + $0x1c] sm:$0xf]
  %v413 = vld [vmem:[%s404 + $0x20] sm:$0xf]
  %v414 = vld [vmem:[%s404 + $0x24] sm:$0xf]
  %v415 = vld [vmem:[%s404 + $0x28] sm:$0xf]
  %v416 = vld [vmem:[%s404 + $0x2c] sm:$0xf]
  %v417 = vld [vmem:[%s404 + $0x30] sm:$0xf]
  %v418 = vld [vmem:[%s404 + $0x34] sm:$0xf]
  %v419 = vld [vmem:[%s404 + $0x38] sm:$0xf]
  %v420 = vld [vmem:[%s404 + $0x3c] sm:$0xf]
  %v421 = vld [vmem:[%s404 + $0x40] sm:$0xf]
  %v422 = vld [vmem:[%s404 + $0x44] sm:$0xf]
  %v423 = vld [vmem:[%s404 + $0x48] sm:$0xf]
  %v424 = vld [vmem:[%s404 + $0x4c] sm:$0xf]
  %v425 = vld [vmem:[%s404 + $0x50] sm:$0xf]
  %v426 = vld [vmem:[%s404 + $0x54] sm:$0xf]
  %v427 = vld [vmem:[%s404 + $0x58] sm:$0xf]
  %v428 = vld [vmem:[%s404 + $0x5c] sm:$0xf]
  %v429 = vld [vmem:[%s404 + $0x60] sm:$0xf]
  %v430 = vld [vmem:[%s404 + $0x64] sm:$0xf]
  %v431 = vld [vmem:[%s404 + $0x68] sm:$0xf]
  %v432 = vld [vmem:[%s404 + $0x6c] sm:$0xf]
  %v433 = vld [vmem:[%s404 + $0x70] sm:$0xf]
  %v434 = vld [vmem:[%s404 + $0x74] sm:$0xf]
  %v435 = vld [vmem:[%s404 + $0x78] sm:$0xf]
  %v436 = vld [vmem:[%s404 + $0x7c] sm:$0xf]
  %v469 = vunpack.c.l.b16 %v405
  %v470 = vunpack.c.l.b16 %v406
  %v471 = vunpack.c.l.b16 %v407
  %v472 = vunpack.c.l.b16 %v408
  %v473 = vunpack.c.l.b16 %v409
  %v474 = vunpack.c.l.b16 %v410
  %v475 = vunpack.c.l.b16 %v411
  %v476 = vunpack.c.l.b16 %v412
  %v477 = vunpack.c.l.b16 %v413
  %v478 = vunpack.c.l.b16 %v414
  %v479 = vunpack.c.l.b16 %v415
  %v480 = vunpack.c.l.b16 %v416
  %v481 = vunpack.c.l.b16 %v417
  %v482 = vunpack.c.l.b16 %v418
  %v483 = vunpack.c.l.b16 %v419
  %v484 = vunpack.c.l.b16 %v420
  %v485 = vunpack.c.l.b16 %v421
  %v486 = vunpack.c.l.b16 %v422
  %v487 = vunpack.c.l.b16 %v423
  %v488 = vunpack.c.l.b16 %v424
  %v489 = vunpack.c.l.b16 %v425
  %v490 = vunpack.c.l.b16 %v426
  %v491 = vunpack.c.l.b16 %v427
  %v492 = vunpack.c.l.b16 %v428
  %v493 = vunpack.c.l.b16 %v429
  %v494 = vunpack.c.l.b16 %v430
  %v495 = vunpack.c.l.b16 %v431
  %v496 = vunpack.c.l.b16 %v432
  %v497 = vunpack.c.l.b16 %v433
  %v498 = vunpack.c.l.b16 %v434
  %v499 = vunpack.c.l.b16 %v435
  %v500 = vunpack.c.l.b16 %v436
  %v501 = vpack.c.b16 %v470, %v469
  %v502 = vpack.c.b16 %v472, %v471
  %v503 = vpack.c.b16 %v474, %v473
  %v504 = vpack.c.b16 %v476, %v475
  %v505 = vpack.c.b16 %v478, %v477
  %v506 = vpack.c.b16 %v480, %v479
  %v507 = vpack.c.b16 %v482, %v481
  %v508 = vpack.c.b16 %v484, %v483
  %v509 = vpack.c.b16 %v486, %v485
  %v510 = vpack.c.b16 %v488, %v487
  %v511 = vpack.c.b16 %v490, %v489
  %v512 = vpack.c.b16 %v492, %v491
  %v513 = vpack.c.b16 %v494, %v493
  %v514 = vpack.c.b16 %v496, %v495
  %v515 = vpack.c.b16 %v498, %v497
  %v516 = vpack.c.b16 %v500, %v499
  %533 = vmatprep.subr.bf16.mxu0 0
  %534 = vmatpush1.bf16.msra.mxu0 %v501
  %535 = vmatprep.subr.bf16.mxu0 0
  %536 = vmatpush1.bf16.msra.mxu0 %v502
  %537 = vmatprep.subr.bf16.mxu0 0
  %538 = vmatpush1.bf16.msra.mxu0 %v503
  %539 = vmatprep.subr.bf16.mxu0 0
  %540 = vmatpush1.bf16.msra.mxu0 %v504
  %541 = vmatprep.subr.bf16.mxu0 0
  %542 = vmatpush1.bf16.msra.mxu0 %v505
  %543 = vmatprep.subr.bf16.mxu0 0
  %544 = vmatpush1.bf16.msra.mxu0 %v506
  %545 = vmatprep.subr.bf16.mxu0 0
  %546 = vmatpush1.bf16.msra.mxu0 %v507
  %547 = vmatprep.subr.bf16.mxu0 0
  %548 = vmatpush1.bf16.msra.mxu0 %v508
  %549 = vmatprep.subr.bf16.mxu0 0
  %550 = vmatpush1.bf16.msra.mxu0 %v509
  %551 = vmatprep.subr.bf16.mxu0 0
  %552 = vmatpush1.bf16.msra.mxu0 %v510
  %553 = vmatprep.subr.bf16.mxu0 0
  %554 = vmatpush1.bf16.msra.mxu0 %v511
  %555 = vmatprep.subr.bf16.mxu0 0
  %556 = vmatpush1.bf16.msra.mxu0 %v512
  %557 = vmatprep.subr.bf16.mxu0 0
  %558 = vmatpush1.bf16.msra.mxu0 %v513
  %559 = vmatprep.subr.bf16.mxu0 0
  %560 = vmatpush1.bf16.msra.mxu0 %v514
  %561 = vmatprep.subr.bf16.mxu0 0
  %562 = vmatpush1.bf16.msra.mxu0 %v515
  %563 = vmatprep.subr.bf16.mxu0 0
  %564 = vmatpush1.bf16.msra.mxu0 %v516
  %565 = vmatprep.mubr.bf16.mxu0 %v66
  %566 = vmatmul.mubr.bf16.gmra.mrb[0].mxu0 %v65
  %v567 = vpop.f32.mrb[0].mxu0
  %v568 = vadd.f32 0.0, %v567
  %v569 = vpop.f32.mrb[0].mxu0
  %v570 = vpop.f32.mrb[0].mxu0
  %v571 = vpop.f32.mrb[0].mxu0
  %572 = vdwg.mxu0
  %s573 = scalar_lea.vmem %s1, 384
  %v574 = vld [vmem:[%s573] sm:$0xf]
  %v575 = vld [vmem:[%s573 + $0x4] sm:$0xf]
  %v576 = vld [vmem:[%s573 + $0x8] sm:$0xf]
  %v577 = vld [vmem:[%s573 + $0xc] sm:$0xf]
  %v578 = vld [vmem:[%s573 + $0x10] sm:$0xf]
  %v579 = vld [vmem:[%s573 + $0x14] sm:$0xf]
  %v580 = vld [vmem:[%s573 + $0x18] sm:$0xf]
  %v581 = vld [vmem:[%s573 + $0x1c] sm:$0xf]
  %v582 = vld [vmem:[%s573 + $0x20] sm:$0xf]
  %v583 = vld [vmem:[%s573 + $0x24] sm:$0xf]
  %v584 = vld [vmem:[%s573 + $0x28] sm:$0xf]
  %v585 = vld [vmem:[%s573 + $0x2c] sm:$0xf]
  %v586 = vld [vmem:[%s573 + $0x30] sm:$0xf]
  %v587 = vld [vmem:[%s573 + $0x34] sm:$0xf]
  %v588 = vld [vmem:[%s573 + $0x38] sm:$0xf]
  %v589 = vld [vmem:[%s573 + $0x3c] sm:$0xf]
  %v590 = vld [vmem:[%s573 + $0x40] sm:$0xf]
  %v591 = vld [vmem:[%s573 + $0x44] sm:$0xf]
  %v592 = vld [vmem:[%s573 + $0x48] sm:$0xf]
  %v593 = vld [vmem:[%s573 + $0x4c] sm:$0xf]
  %v594 = vld [vmem:[%s573 + $0x50] sm:$0xf]
  %v595 = vld [vmem:[%s573 + $0x54] sm:$0xf]
  %v596 = vld [vmem:[%s573 + $0x58] sm:$0xf]
  %v597 = vld [vmem:[%s573 + $0x5c] sm:$0xf]
  %v598 = vld [vmem:[%s573 + $0x60] sm:$0xf]
  %v599 = vld [vmem:[%s573 + $0x64] sm:$0xf]
  %v600 = vld [vmem:[%s573 + $0x68] sm:$0xf]
  %v601 = vld [vmem:[%s573 + $0x6c] sm:$0xf]
  %v602 = vld [vmem:[%s573 + $0x70] sm:$0xf]
  %v603 = vld [vmem:[%s573 + $0x74] sm:$0xf]
  %v604 = vld [vmem:[%s573 + $0x78] sm:$0xf]
  %v605 = vld [vmem:[%s573 + $0x7c] sm:$0xf]
  %v638 = vunpack.c.l.b16 %v574
  %v639 = vunpack.c.l.b16 %v575
  %v640 = vunpack.c.l.b16 %v576
  %v641 = vunpack.c.l.b16 %v577
  %v642 = vunpack.c.l.b16 %v578
  %v643 = vunpack.c.l.b16 %v579
  %v644 = vunpack.c.l.b16 %v580
  %v645 = vunpack.c.l.b16 %v581
  %v646 = vunpack.c.l.b16 %v582
  %v647 = vunpack.c.l.b16 %v583
  %v648 = vunpack.c.l.b16 %v584
  %v649 = vunpack.c.l.b16 %v585
  %v650 = vunpack.c.l.b16 %v586
  %v651 = vunpack.c.l.b16 %v587
  %v652 = vunpack.c.l.b16 %v588
  %v653 = vunpack.c.l.b16 %v589
  %v654 = vunpack.c.l.b16 %v590
  %v655 = vunpack.c.l.b16 %v591
  %v656 = vunpack.c.l.b16 %v592
  %v657 = vunpack.c.l.b16 %v593
  %v658 = vunpack.c.l.b16 %v594
  %v659 = vunpack.c.l.b16 %v595
  %v660 = vunpack.c.l.b16 %v596
  %v661 = vunpack.c.l.b16 %v597
  %v662 = vunpack.c.l.b16 %v598
  %v663 = vunpack.c.l.b16 %v599
  %v664 = vunpack.c.l.b16 %v600
  %v665 = vunpack.c.l.b16 %v601
  %v666 = vunpack.c.l.b16 %v602
  %v667 = vunpack.c.l.b16 %v603
  %v668 = vunpack.c.l.b16 %v604
  %v669 = vunpack.c.l.b16 %v605
  %v670 = vpack.c.b16 %v639, %v638
  %v671 = vpack.c.b16 %v641, %v640
  %v672 = vpack.c.b16 %v643, %v642
  %v673 = vpack.c.b16 %v645, %v644
  %v674 = vpack.c.b16 %v647, %v646
  %v675 = vpack.c.b16 %v649, %v648
  %v676 = vpack.c.b16 %v651, %v650
  %v677 = vpack.c.b16 %v653, %v652
  %v678 = vpack.c.b16 %v655, %v654
  %v679 = vpack.c.b16 %v657, %v656
  %v680 = vpack.c.b16 %v659, %v658
  %v681 = vpack.c.b16 %v661, %v660
  %v682 = vpack.c.b16 %v663, %v662
  %v683 = vpack.c.b16 %v665, %v664
  %v684 = vpack.c.b16 %v667, %v666
  %v685 = vpack.c.b16 %v669, %v668
  %702 = vmatprep.subr.bf16.mxu0 0
  %703 = vmatpush1.bf16.msra.mxu0 %v670
  %704 = vmatprep.subr.bf16.mxu0 0
  %705 = vmatpush1.bf16.msra.mxu0 %v671
  %706 = vmatprep.subr.bf16.mxu0 0
  %707 = vmatpush1.bf16.msra.mxu0 %v672
  %708 = vmatprep.subr.bf16.mxu0 0
  %709 = vmatpush1.bf16.msra.mxu0 %v673
  %710 = vmatprep.subr.bf16.mxu0 0
  %711 = vmatpush1.bf16.msra.mxu0 %v674
  %712 = vmatprep.subr.bf16.mxu0 0
  %713 = vmatpush1.bf16.msra.mxu0 %v675
  %714 = vmatprep.subr.bf16.mxu0 0
  %715 = vmatpush1.bf16.msra.mxu0 %v676
  %716 = vmatprep.subr.bf16.mxu0 0
  %717 = vmatpush1.bf16.msra.mxu0 %v677
  %718 = vmatprep.subr.bf16.mxu0 0
  %719 = vmatpush1.bf16.msra.mxu0 %v678
  %720 = vmatprep.subr.bf16.mxu0 0
  %721 = vmatpush1.bf16.msra.mxu0 %v679
  %722 = vmatprep.subr.bf16.mxu0 0
  %723 = vmatpush1.bf16.msra.mxu0 %v680
  %724 = vmatprep.subr.bf16.mxu0 0
  %725 = vmatpush1.bf16.msra.mxu0 %v681
  %726 = vmatprep.subr.bf16.mxu0 0
  %727 = vmatpush1.bf16.msra.mxu0 %v682
  %728 = vmatprep.subr.bf16.mxu0 0
  %729 = vmatpush1.bf16.msra.mxu0 %v683
  %730 = vmatprep.subr.bf16.mxu0 0
  %731 = vmatpush1.bf16.msra.mxu0 %v684
  %732 = vmatprep.subr.bf16.mxu0 0
  %733 = vmatpush1.bf16.msra.mxu0 %v685
  %734 = vmatprep.mubr.bf16.mxu0 %v66
  %735 = vmatmul.mubr.bf16.gmra.mrb[0].mxu0 %v65
  %v736 = vpop.f32.mrb[0].mxu0
  %v737 = vadd.f32 0.0, %v736
  %v738 = vpop.f32.mrb[0].mxu0
  %v739 = vpop.f32.mrb[0].mxu0
  %v740 = vpop.f32.mrb[0].mxu0
  %741 = vdwg.mxu0
  %s742 = scalar_lea.vmem %s1, 512
  %v743 = vld [vmem:[%s742] sm:$0xf]
  %v744 = vld [vmem:[%s742 + $0x4] sm:$0xf]
  %v745 = vld [vmem:[%s742 + $0x8] sm:$0xf]
  %v746 = vld [vmem:[%s742 + $0xc] sm:$0xf]
  %v747 = vld [vmem:[%s742 + $0x10] sm:$0xf]
  %v748 = vld [vmem:[%s742 + $0x14] sm:$0xf]
  %v749 = vld [vmem:[%s742 + $0x18] sm:$0xf]
  %v750 = vld [vmem:[%s742 + $0x1c] sm:$0xf]
  %v751 = vld [vmem:[%s742 + $0x20] sm:$0xf]
  %v752 = vld [vmem:[%s742 + $0x24] sm:$0xf]
  %v753 = vld [vmem:[%s742 + $0x28] sm:$0xf]
  %v754 = vld [vmem:[%s742 + $0x2c] sm:$0xf]
  %v755 = vld [vmem:[%s742 + $0x30] sm:$0xf]
  %v756 = vld [vmem:[%s742 + $0x34] sm:$0xf]
  %v757 = vld [vmem:[%s742 + $0x38] sm:$0xf]
  %v758 = vld [vmem:[%s742 + $0x3c] sm:$0xf]
  %v759 = vld [vmem:[%s742 + $0x40] sm:$0xf]
  %v760 = vld [vmem:[%s742 + $0x44] sm:$0xf]
  %v761 = vld [vmem:[%s742 + $0x48] sm:$0xf]
  %v762 = vld [vmem:[%s742 + $0x4c] sm:$0xf]
  %v763 = vld [vmem:[%s742 + $0x50] sm:$0xf]
  %v764 = vld [vmem:[%s742 + $0x54] sm:$0xf]
  %v765 = vld [vmem:[%s742 + $0x58] sm:$0xf]
  %v766 = vld [vmem:[%s742 + $0x5c] sm:$0xf]
  %v767 = vld [vmem:[%s742 + $0x60] sm:$0xf]
  %v768 = vld [vmem:[%s742 + $0x64] sm:$0xf]
  %v769 = vld [vmem:[%s742 + $0x68] sm:$0xf]
  %v770 = vld [vmem:[%s742 + $0x6c] sm:$0xf]
  %v771 = vld [vmem:[%s742 + $0x70] sm:$0xf]
  %v772 = vld [vmem:[%s742 + $0x74] sm:$0xf]
  %v773 = vld [vmem:[%s742 + $0x78] sm:$0xf]
  %v774 = vld [vmem:[%s742 + $0x7c] sm:$0xf]
  %v807 = vunpack.c.l.b16 %v743
  %v808 = vunpack.c.l.b16 %v744
  %v809 = vunpack.c.l.b16 %v745
  %v810 = vunpack.c.l.b16 %v746
  %v811 = vunpack.c.l.b16 %v747
  %v812 = vunpack.c.l.b16 %v748
  %v813 = vunpack.c.l.b16 %v749
  %v814 = vunpack.c.l.b16 %v750
  %v815 = vunpack.c.l.b16 %v751
  %v816 = vunpack.c.l.b16 %v752
  %v817 = vunpack.c.l.b16 %v753
  %v818 = vunpack.c.l.b16 %v754
  %v819 = vunpack.c.l.b16 %v755
  %v820 = vunpack.c.l.b16 %v756
  %v821 = vunpack.c.l.b16 %v757
  %v822 = vunpack.c.l.b16 %v758
  %v823 = vunpack.c.l.b16 %v759
  %v824 = vunpack.c.l.b16 %v760
  %v825 = vunpack.c.l.b16 %v761
  %v826 = vunpack.c.l.b16 %v762
  %v827 = vunpack.c.l.b16 %v763
  %v828 = vunpack.c.l.b16 %v764
  %v829 = vunpack.c.l.b16 %v765
  %v830 = vunpack.c.l.b16 %v766
  %v831 = vunpack.c.l.b16 %v767
  %v832 = vunpack.c.l.b16 %v768
  %v833 = vunpack.c.l.b16 %v769
  %v834 = vunpack.c.l.b16 %v770
  %v835 = vunpack.c.l.b16 %v771
  %v836 = vunpack.c.l.b16 %v772
  %v837 = vunpack.c.l.b16 %v773
  %v838 = vunpack.c.l.b16 %v774
  %v839 = vpack.c.b16 %v808, %v807
  %v840 = vpack.c.b16 %v810, %v809
  %v841 = vpack.c.b16 %v812, %v811
  %v842 = vpack.c.b16 %v814, %v813
  %v843 = vpack.c.b16 %v816, %v815
  %v844 = vpack.c.b16 %v818, %v817
  %v845 = vpack.c.b16 %v820, %v819
  %v846 = vpack.c.b16 %v822, %v821
  %v847 = vpack.c.b16 %v824, %v823
  %v848 = vpack.c.b16 %v826, %v825
  %v849 = vpack.c.b16 %v828, %v827
  %v850 = vpack.c.b16 %v830, %v829
  %v851 = vpack.c.b16 %v832, %v831
  %v852 = vpack.c.b16 %v834, %v833
  %v853 = vpack.c.b16 %v836, %v835
  %v854 = vpack.c.b16 %v838, %v837
  %871 = vmatprep.subr.bf16.mxu0 0
  %872 = vmatpush1.bf16.msra.mxu0 %v839
  %873 = vmatprep.subr.bf16.mxu0 0
  %874 = vmatpush1.bf16.msra.mxu0 %v840
  %875 = vmatprep.subr.bf16.mxu0 0
  %876 = vmatpush1.bf16.msra.mxu0 %v841
  %877 = vmatprep.subr.bf16.mxu0 0
  %878 = vmatpush1.bf16.msra.mxu0 %v842
  %879 = vmatprep.subr.bf16.mxu0 0
  %880 = vmatpush1.bf16.msra.mxu0 %v843
  %881 = vmatprep.subr.bf16.mxu0 0
  %882 = vmatpush1.bf16.msra.mxu0 %v844
  %883 = vmatprep.subr.bf16.mxu0 0
  %884 = vmatpush1.bf16.msra.mxu0 %v845
  %885 = vmatprep.subr.bf16.mxu0 0
  %886 = vmatpush1.bf16.msra.mxu0 %v846
  %887 = vmatprep.subr.bf16.mxu0 0
  %888 = vmatpush1.bf16.msra.mxu0 %v847
  %889 = vmatprep.subr.bf16.mxu0 0
  %890 = vmatpush1.bf16.msra.mxu0 %v848
  %891 = vmatprep.subr.bf16.mxu0 0
  %892 = vmatpush1.bf16.msra.mxu0 %v849
  %893 = vmatprep.subr.bf16.mxu0 0
  %894 = vmatpush1.bf16.msra.mxu0 %v850
  %895 = vmatprep.subr.bf16.mxu0 0
  %896 = vmatpush1.bf16.msra.mxu0 %v851
  %897 = vmatprep.subr.bf16.mxu0 0
  %898 = vmatpush1.bf16.msra.mxu0 %v852
  %899 = vmatprep.subr.bf16.mxu0 0
  %900 = vmatpush1.bf16.msra.mxu0 %v853
  %901 = vmatprep.subr.bf16.mxu0 0
  %902 = vmatpush1.bf16.msra.mxu0 %v854
  %903 = vmatprep.mubr.bf16.mxu0 %v66
  %904 = vmatmul.mubr.bf16.gmra.mrb[0].mxu0 %v65
  %v905 = vpop.f32.mrb[0].mxu0
  %v906 = vadd.f32 0.0, %v905
  %v907 = vpop.f32.mrb[0].mxu0
  %v908 = vpop.f32.mrb[0].mxu0
  %v909 = vpop.f32.mrb[0].mxu0
  %910 = vdwg.mxu0
  %s911 = scalar_lea.vmem %s1, 640
  %v912 = vld [vmem:[%s911] sm:$0xf]
  %v913 = vld [vmem:[%s911 + $0x4] sm:$0xf]
  %v914 = vld [vmem:[%s911 + $0x8] sm:$0xf]
  %v915 = vld [vmem:[%s911 + $0xc] sm:$0xf]
  %v916 = vld [vmem:[%s911 + $0x10] sm:$0xf]
  %v917 = vld [vmem:[%s911 + $0x14] sm:$0xf]
  %v918 = vld [vmem:[%s911 + $0x18] sm:$0xf]
  %v919 = vld [vmem:[%s911 + $0x1c] sm:$0xf]
  %v920 = vld [vmem:[%s911 + $0x20] sm:$0xf]
  %v921 = vld [vmem:[%s911 + $0x24] sm:$0xf]
  %v922 = vld [vmem:[%s911 + $0x28] sm:$0xf]
  %v923 = vld [vmem:[%s911 + $0x2c] sm:$0xf]
  %v924 = vld [vmem:[%s911 + $0x30] sm:$0xf]
  %v925 = vld [vmem:[%s911 + $0x34] sm:$0xf]
  %v926 = vld [vmem:[%s911 + $0x38] sm:$0xf]
  %v927 = vld [vmem:[%s911 + $0x3c] sm:$0xf]
  %v928 = vld [vmem:[%s911 + $0x40] sm:$0xf]
  %v929 = vld [vmem:[%s911 + $0x44] sm:$0xf]
  %v930 = vld [vmem:[%s911 + $0x48] sm:$0xf]
  %v931 = vld [vmem:[%s911 + $0x4c] sm:$0xf]
  %v932 = vld [vmem:[%s911 + $0x50] sm:$0xf]
  %v933 = vld [vmem:[%s911 + $0x54] sm:$0xf]
  %v934 = vld [vmem:[%s911 + $0x58] sm:$0xf]
  %v935 = vld [vmem:[%s911 + $0x5c] sm:$0xf]
  %v936 = vld [vmem:[%s911 + $0x60] sm:$0xf]
  %v937 = vld [vmem:[%s911 + $0x64] sm:$0xf]
  %v938 = vld [vmem:[%s911 + $0x68] sm:$0xf]
  %v939 = vld [vmem:[%s911 + $0x6c] sm:$0xf]
  %v940 = vld [vmem:[%s911 + $0x70] sm:$0xf]
  %v941 = vld [vmem:[%s911 + $0x74] sm:$0xf]
  %v942 = vld [vmem:[%s911 + $0x78] sm:$0xf]
  %v943 = vld [vmem:[%s911 + $0x7c] sm:$0xf]
  %v976 = vunpack.c.l.b16 %v912
  %v977 = vunpack.c.l.b16 %v913
  %v978 = vunpack.c.l.b16 %v914
  %v979 = vunpack.c.l.b16 %v915
  %v980 = vunpack.c.l.b16 %v916
  %v981 = vunpack.c.l.b16 %v917
  %v982 = vunpack.c.l.b16 %v918
  %v983 = vunpack.c.l.b16 %v919
  %v984 = vunpack.c.l.b16 %v920
  %v985 = vunpack.c.l.b16 %v921
  %v986 = vunpack.c.l.b16 %v922
  %v987 = vunpack.c.l.b16 %v923
  %v988 = vunpack.c.l.b16 %v924
  %v989 = vunpack.c.l.b16 %v925
  %v990 = vunpack.c.l.b16 %v926
  %v991 = vunpack.c.l.b16 %v927
  %v992 = vunpack.c.l.b16 %v928
  %v993 = vunpack.c.l.b16 %v929
  %v994 = vunpack.c.l.b16 %v930
  %v995 = vunpack.c.l.b16 %v931
  %v996 = vunpack.c.l.b16 %v932
  %v997 = vunpack.c.l.b16 %v933
  %v998 = vunpack.c.l.b16 %v934
  %v999 = vunpack.c.l.b16 %v935
  %v1000 = vunpack.c.l.b16 %v936
  %v1001 = vunpack.c.l.b16 %v937
  %v1002 = vunpack.c.l.b16 %v938
  %v1003 = vunpack.c.l.b16 %v939
  %v1004 = vunpack.c.l.b16 %v940
  %v1005 = vunpack.c.l.b16 %v941
  %v1006 = vunpack.c.l.b16 %v942
  %v1007 = vunpack.c.l.b16 %v943
  %v1008 = vpack.c.b16 %v977, %v976
  %v1009 = vpack.c.b16 %v979, %v978
  %v1010 = vpack.c.b16 %v981, %v980
  %v1011 = vpack.c.b16 %v983, %v982
  %v1012 = vpack.c.b16 %v985, %v984
  %v1013 = vpack.c.b16 %v987, %v986
  %v1014 = vpack.c.b16 %v989, %v988
  %v1015 = vpack.c.b16 %v991, %v990
  %v1016 = vpack.c.b16 %v993, %v992
  %v1017 = vpack.c.b16 %v995, %v994
  %v1018 = vpack.c.b16 %v997, %v996
  %v1019 = vpack.c.b16 %v999, %v998
  %v1020 = vpack.c.b16 %v1001, %v1000
  %v1021 = vpack.c.b16 %v1003, %v1002
  %v1022 = vpack.c.b16 %v1005, %v1004
  %v1023 = vpack.c.b16 %v1007, %v1006
  %1040 = vmatprep.subr.bf16.mxu0 0
  %1041 = vmatpush1.bf16.msra.mxu0 %v1008
  %1042 = vmatprep.subr.bf16.mxu0 0
  %1043 = vmatpush1.bf16.msra.mxu0 %v1009
  %1044 = vmatprep.subr.bf16.mxu0 0
  %1045 = vmatpush1.bf16.msra.mxu0 %v1010
  %1046 = vmatprep.subr.bf16.mxu0 0
  %1047 = vmatpush1.bf16.msra.mxu0 %v1011
  %1048 = vmatprep.subr.bf16.mxu0 0
  %1049 = vmatpush1.bf16.msra.mxu0 %v1012
  %1050 = vmatprep.subr.bf16.mxu0 0
  %1051 = vmatpush1.bf16.msra.mxu0 %v1013
  %1052 = vmatprep.subr.bf16.mxu0 0
  %1053 = vmatpush1.bf16.msra.mxu0 %v1014
  %1054 = vmatprep.subr.bf16.mxu0 0
  %1055 = vmatpush1.bf16.msra.mxu0 %v1015
  %1056 = vmatprep.subr.bf16.mxu0 0
  %1057 = vmatpush1.bf16.msra.mxu0 %v1016
  %1058 = vmatprep.subr.bf16.mxu0 0
  %1059 = vmatpush1.bf16.msra.mxu0 %v1017
  %1060 = vmatprep.subr.bf16.mxu0 0
  %1061 = vmatpush1.bf16.msra.mxu0 %v1018
  %1062 = vmatprep.subr.bf16.mxu0 0
  %1063 = vmatpush1.bf16.msra.mxu0 %v1019
  %1064 = vmatprep.subr.bf16.mxu0 0
  %1065 = vmatpush1.bf16.msra.mxu0 %v1020
  %1066 = vmatprep.subr.bf16.mxu0 0
  %1067 = vmatpush1.bf16.msra.mxu0 %v1021
  %1068 = vmatprep.subr.bf16.mxu0 0
  %1069 = vmatpush1.bf16.msra.mxu0 %v1022
  %1070 = vmatprep.subr.bf16.mxu0 0
  %1071 = vmatpush1.bf16.msra.mxu0 %v1023
  %1072 = vmatprep.mubr.bf16.mxu0 %v66
  %1073 = vmatmul.mubr.bf16.gmra.mrb[0].mxu0 %v65
  %v1074 = vpop.f32.mrb[0].mxu0
  %v1075 = vadd.f32 0.0, %v1074
  %v1076 = vpop.f32.mrb[0].mxu0
  %v1077 = vpop.f32.mrb[0].mxu0
  %v1078 = vpop.f32.mrb[0].mxu0
  %1079 = vdwg.mxu0
  %s1080 = scalar_lea.vmem %s1, 768
  %v1081 = vld [vmem:[%s1080] sm:$0xf]
  %v1082 = vld [vmem:[%s1080 + $0x4] sm:$0xf]
  %v1083 = vld [vmem:[%s1080 + $0x8] sm:$0xf]
  %v1084 = vld [vmem:[%s1080 + $0xc] sm:$0xf]
  %v1085 = vld [vmem:[%s1080 + $0x10] sm:$0xf]
  %v1086 = vld [vmem:[%s1080 + $0x14] sm:$0xf]
  %v1087 = vld [vmem:[%s1080 + $0x18] sm:$0xf]
  %v1088 = vld [vmem:[%s1080 + $0x1c] sm:$0xf]
  %v1089 = vld [vmem:[%s1080 + $0x20] sm:$0xf]
  %v1090 = vld [vmem:[%s1080 + $0x24] sm:$0xf]
  %v1091 = vld [vmem:[%s1080 + $0x28] sm:$0xf]
  %v1092 = vld [vmem:[%s1080 + $0x2c] sm:$0xf]
  %v1093 = vld [vmem:[%s1080 + $0x30] sm:$0xf]
  %v1094 = vld [vmem:[%s1080 + $0x34] sm:$0xf]
  %v1095 = vld [vmem:[%s1080 + $0x38] sm:$0xf]
  %v1096 = vld [vmem:[%s1080 + $0x3c] sm:$0xf]
  %v1097 = vld [vmem:[%s1080 + $0x40] sm:$0xf]
  %v1098 = vld [vmem:[%s1080 + $0x44] sm:$0xf]
  %v1099 = vld [vmem:[%s1080 + $0x48] sm:$0xf]
  %v1100 = vld [vmem:[%s1080 + $0x4c] sm:$0xf]
  %v1101 = vld [vmem:[%s1080 + $0x50] sm:$0xf]
  %v1102 = vld [vmem:[%s1080 + $0x54] sm:$0xf]
  %v1103 = vld [vmem:[%s1080 + $0x58] sm:$0xf]
  %v1104 = vld [vmem:[%s1080 + $0x5c] sm:$0xf]
  %v1105 = vld [vmem:[%s1080 + $0x60] sm:$0xf]
  %v1106 = vld [vmem:[%s1080 + $0x64] sm:$0xf]
  %v1107 = vld [vmem:[%s1080 + $0x68] sm:$0xf]
  %v1108 = vld [vmem:[%s1080 + $0x6c] sm:$0xf]
  %v1109 = vld [vmem:[%s1080 + $0x70] sm:$0xf]
  %v1110 = vld [vmem:[%s1080 + $0x74] sm:$0xf]
  %v1111 = vld [vmem:[%s1080 + $0x78] sm:$0xf]
  %v1112 = vld [vmem:[%s1080 + $0x7c] sm:$0xf]
  %v1145 = vunpack.c.l.b16 %v1081
  %v1146 = vunpack.c.l.b16 %v1082
  %v1147 = vunpack.c.l.b16 %v1083
  %v1148 = vunpack.c.l.b16 %v1084
  %v1149 = vunpack.c.l.b16 %v1085
  %v1150 = vunpack.c.l.b16 %v1086
  %v1151 = vunpack.c.l.b16 %v1087
  %v1152 = vunpack.c.l.b16 %v1088
  %v1153 = vunpack.c.l.b16 %v1089
  %v1154 = vunpack.c.l.b16 %v1090
  %v1155 = vunpack.c.l.b16 %v1091
  %v1156 = vunpack.c.l.b16 %v1092
  %v1157 = vunpack.c.l.b16 %v1093
  %v1158 = vunpack.c.l.b16 %v1094
  %v1159 = vunpack.c.l.b16 %v1095
  %v1160 = vunpack.c.l.b16 %v1096
  %v1161 = vunpack.c.l.b16 %v1097
  %v1162 = vunpack.c.l.b16 %v1098
  %v1163 = vunpack.c.l.b16 %v1099
  %v1164 = vunpack.c.l.b16 %v1100
  %v1165 = vunpack.c.l.b16 %v1101
  %v1166 = vunpack.c.l.b16 %v1102
  %v1167 = vunpack.c.l.b16 %v1103
  %v1168 = vunpack.c.l.b16 %v1104
  %v1169 = vunpack.c.l.b16 %v1105
  %v1170 = vunpack.c.l.b16 %v1106
  %v1171 = vunpack.c.l.b16 %v1107
  %v1172 = vunpack.c.l.b16 %v1108
  %v1173 = vunpack.c.l.b16 %v1109
  %v1174 = vunpack.c.l.b16 %v1110
  %v1175 = vunpack.c.l.b16 %v1111
  %v1176 = vunpack.c.l.b16 %v1112
  %v1177 = vpack.c.b16 %v1146, %v1145
  %v1178 = vpack.c.b16 %v1148, %v1147
  %v1179 = vpack.c.b16 %v1150, %v1149
  %v1180 = vpack.c.b16 %v1152, %v1151
  %v1181 = vpack.c.b16 %v1154, %v1153
  %v1182 = vpack.c.b16 %v1156, %v1155
  %v1183 = vpack.c.b16 %v1158, %v1157
  %v1184 = vpack.c.b16 %v1160, %v1159
  %v1185 = vpack.c.b16 %v1162, %v1161
  %v1186 = vpack.c.b16 %v1164, %v1163
  %v1187 = vpack.c.b16 %v1166, %v1165
  %v1188 = vpack.c.b16 %v1168, %v1167
  %v1189 = vpack.c.b16 %v1170, %v1169
  %v1190 = vpack.c.b16 %v1172, %v1171
  %v1191 = vpack.c.b16 %v1174, %v1173
  %v1192 = vpack.c.b16 %v1176, %v1175
  %1209 = vmatprep.subr.bf16.mxu0 0
  %1210 = vmatpush1.bf16.msra.mxu0 %v1177
  %1211 = vmatprep.subr.bf16.mxu0 0
  %1212 = vmatpush1.bf16.msra.mxu0 %v1178
  %1213 = vmatprep.subr.bf16.mxu0 0
  %1214 = vmatpush1.bf16.msra.mxu0 %v1179
  %1215 = vmatprep.subr.bf16.mxu0 0
  %1216 = vmatpush1.bf16.msra.mxu0 %v1180
  %1217 = vmatprep.subr.bf16.mxu0 0
  %1218 = vmatpush1.bf16.msra.mxu0 %v1181
  %1219 = vmatprep.subr.bf16.mxu0 0
  %1220 = vmatpush1.bf16.msra.mxu0 %v1182
  %1221 = vmatprep.subr.bf16.mxu0 0
  %1222 = vmatpush1.bf16.msra.mxu0 %v1183
  %1223 = vmatprep.subr.bf16.mxu0 0
  %1224 = vmatpush1.bf16.msra.mxu0 %v1184
  %1225 = vmatprep.subr.bf16.mxu0 0
  %1226 = vmatpush1.bf16.msra.mxu0 %v1185
  %1227 = vmatprep.subr.bf16.mxu0 0
  %1228 = vmatpush1.bf16.msra.mxu0 %v1186
  %1229 = vmatprep.subr.bf16.mxu0 0
  %1230 = vmatpush1.bf16.msra.mxu0 %v1187
  %1231 = vmatprep.subr.bf16.mxu0 0
  %1232 = vmatpush1.bf16.msra.mxu0 %v1188
  %1233 = vmatprep.subr.bf16.mxu0 0
  %1234 = vmatpush1.bf16.msra.mxu0 %v1189
  %1235 = vmatprep.subr.bf16.mxu0 0
  %1236 = vmatpush1.bf16.msra.mxu0 %v1190
  %1237 = vmatprep.subr.bf16.mxu0 0
  %1238 = vmatpush1.bf16.msra.mxu0 %v1191
  %1239 = vmatprep.subr.bf16.mxu0 0
  %1240 = vmatpush1.bf16.msra.mxu0 %v1192
  %1241 = vmatprep.mubr.bf16.mxu0 %v66
  %1242 = vmatmul.mubr.bf16.gmra.mrb[0].mxu0 %v65
  %v1243 = vpop.f32.mrb[0].mxu0
  %v1244 = vadd.f32 0.0, %v1243
  %v1245 = vpop.f32.mrb[0].mxu0
  %v1246 = vpop.f32.mrb[0].mxu0
  %v1247 = vpop.f32.mrb[0].mxu0
  %1248 = vdwg.mxu0
  %s1249 = scalar_lea.vmem %s1, 896
  %v1250 = vld [vmem:[%s1249] sm:$0xf]
  %v1251 = vld [vmem:[%s1249 + $0x4] sm:$0xf]
  %v1252 = vld [vmem:[%s1249 + $0x8] sm:$0xf]
  %v1253 = vld [vmem:[%s1249 + $0xc] sm:$0xf]
  %v1254 = vld [vmem:[%s1249 + $0x10] sm:$0xf]
  %v1255 = vld [vmem:[%s1249 + $0x14] sm:$0xf]
  %v1256 = vld [vmem:[%s1249 + $0x18] sm:$0xf]
  %v1257 = vld [vmem:[%s1249 + $0x1c] sm:$0xf]
  %v1258 = vld [vmem:[%s1249 + $0x20] sm:$0xf]
  %v1259 = vld [vmem:[%s1249 + $0x24] sm:$0xf]
  %v1260 = vld [vmem:[%s1249 + $0x28] sm:$0xf]
  %v1261 = vld [vmem:[%s1249 + $0x2c] sm:$0xf]
  %v1262 = vld [vmem:[%s1249 + $0x30] sm:$0xf]
  %v1263 = vld [vmem:[%s1249 + $0x34] sm:$0xf]
  %v1264 = vld [vmem:[%s1249 + $0x38] sm:$0xf]
  %v1265 = vld [vmem:[%s1249 + $0x3c] sm:$0xf]
  %v1266 = vld [vmem:[%s1249 + $0x40] sm:$0xf]
  %v1267 = vld [vmem:[%s1249 + $0x44] sm:$0xf]
  %v1268 = vld [vmem:[%s1249 + $0x48] sm:$0xf]
  %v1269 = vld [vmem:[%s1249 + $0x4c] sm:$0xf]
  %v1270 = vld [vmem:[%s1249 + $0x50] sm:$0xf]
  %v1271 = vld [vmem:[%s1249 + $0x54] sm:$0xf]
  %v1272 = vld [vmem:[%s1249 + $0x58] sm:$0xf]
  %v1273 = vld [vmem:[%s1249 + $0x5c] sm:$0xf]
  %v1274 = vld [vmem:[%s1249 + $0x60] sm:$0xf]
  %v1275 = vld [vmem:[%s1249 + $0x64] sm:$0xf]
  %v1276 = vld [vmem:[%s1249 + $0x68] sm:$0xf]
  %v1277 = vld [vmem:[%s1249 + $0x6c] sm:$0xf]
  %v1278 = vld [vmem:[%s1249 + $0x70] sm:$0xf]
  %v1279 = vld [vmem:[%s1249 + $0x74] sm:$0xf]
  %v1280 = vld [vmem:[%s1249 + $0x78] sm:$0xf]
  %v1281 = vld [vmem:[%s1249 + $0x7c] sm:$0xf]
  %v1314 = vunpack.c.l.b16 %v1250
  %v1315 = vunpack.c.l.b16 %v1251
  %v1316 = vunpack.c.l.b16 %v1252
  %v1317 = vunpack.c.l.b16 %v1253
  %v1318 = vunpack.c.l.b16 %v1254
  %v1319 = vunpack.c.l.b16 %v1255
  %v1320 = vunpack.c.l.b16 %v1256
  %v1321 = vunpack.c.l.b16 %v1257
  %v1322 = vunpack.c.l.b16 %v1258
  %v1323 = vunpack.c.l.b16 %v1259
  %v1324 = vunpack.c.l.b16 %v1260
  %v1325 = vunpack.c.l.b16 %v1261
  %v1326 = vunpack.c.l.b16 %v1262
  %v1327 = vunpack.c.l.b16 %v1263
  %v1328 = vunpack.c.l.b16 %v1264
  %v1329 = vunpack.c.l.b16 %v1265
  %v1330 = vunpack.c.l.b16 %v1266
  %v1331 = vunpack.c.l.b16 %v1267
  %v1332 = vunpack.c.l.b16 %v1268
  %v1333 = vunpack.c.l.b16 %v1269
  %v1334 = vunpack.c.l.b16 %v1270
  %v1335 = vunpack.c.l.b16 %v1271
  %v1336 = vunpack.c.l.b16 %v1272
  %v1337 = vunpack.c.l.b16 %v1273
  %v1338 = vunpack.c.l.b16 %v1274
  %v1339 = vunpack.c.l.b16 %v1275
  %v1340 = vunpack.c.l.b16 %v1276
  %v1341 = vunpack.c.l.b16 %v1277
  %v1342 = vunpack.c.l.b16 %v1278
  %v1343 = vunpack.c.l.b16 %v1279
  %v1344 = vunpack.c.l.b16 %v1280
  %v1345 = vunpack.c.l.b16 %v1281
  %v1346 = vpack.c.b16 %v1315, %v1314
  %v1347 = vpack.c.b16 %v1317, %v1316
  %v1348 = vpack.c.b16 %v1319, %v1318
  %v1349 = vpack.c.b16 %v1321, %v1320
  %v1350 = vpack.c.b16 %v1323, %v1322
  %v1351 = vpack.c.b16 %v1325, %v1324
  %v1352 = vpack.c.b16 %v1327, %v1326
  %v1353 = vpack.c.b16 %v1329, %v1328
  %v1354 = vpack.c.b16 %v1331, %v1330
  %v1355 = vpack.c.b16 %v1333, %v1332
  %v1356 = vpack.c.b16 %v1335, %v1334
  %v1357 = vpack.c.b16 %v1337, %v1336
  %v1358 = vpack.c.b16 %v1339, %v1338
  %v1359 = vpack.c.b16 %v1341, %v1340
  %v1360 = vpack.c.b16 %v1343, %v1342
  %v1361 = vpack.c.b16 %v1345, %v1344
  %1378 = vmatprep.subr.bf16.mxu0 0
  %1379 = vmatpush1.bf16.msra.mxu0 %v1346
  %1380 = vmatprep.subr.bf16.mxu0 0
  %1381 = vmatpush1.bf16.msra.mxu0 %v1347
  %1382 = vmatprep.subr.bf16.mxu0 0
  %1383 = vmatpush1.bf16.msra.mxu0 %v1348
  %1384 = vmatprep.subr.bf16.mxu0 0
  %1385 = vmatpush1.bf16.msra.mxu0 %v1349
  %1386 = vmatprep.subr.bf16.mxu0 0
  %1387 = vmatpush1.bf16.msra.mxu0 %v1350
  %1388 = vmatprep.subr.bf16.mxu0 0
  %1389 = vmatpush1.bf16.msra.mxu0 %v1351
  %1390 = vmatprep.subr.bf16.mxu0 0
  %1391 = vmatpush1.bf16.msra.mxu0 %v1352
  %1392 = vmatprep.subr.bf16.mxu0 0
  %1393 = vmatpush1.bf16.msra.mxu0 %v1353
  %1394 = vmatprep.subr.bf16.mxu0 0
  %1395 = vmatpush1.bf16.msra.mxu0 %v1354
  %1396 = vmatprep.subr.bf16.mxu0 0
  %1397 = vmatpush1.bf16.msra.mxu0 %v1355
  %1398 = vmatprep.subr.bf16.mxu0 0
  %1399 = vmatpush1.bf16.msra.mxu0 %v1356
  %1400 = vmatprep.subr.bf16.mxu0 0
  %1401 = vmatpush1.bf16.msra.mxu0 %v1357
  %1402 = vmatprep.subr.bf16.mxu0 0
  %1403 = vmatpush1.bf16.msra.mxu0 %v1358
  %1404 = vmatprep.subr.bf16.mxu0 0
  %1405 = vmatpush1.bf16.msra.mxu0 %v1359
  %1406 = vmatprep.subr.bf16.mxu0 0
  %1407 = vmatpush1.bf16.msra.mxu0 %v1360
  %1408 = vmatprep.subr.bf16.mxu0 0
  %1409 = vmatpush1.bf16.msra.mxu0 %v1361
  %1410 = vmatprep.mubr.bf16.mxu0 %v66
  %1411 = vmatmul.mubr.bf16.gmra.mrb[0].mxu0 %v65
  %v1412 = vpop.f32.mrb[0].mxu0
  %v1413 = vadd.f32 0.0, %v1412
  %v1414 = vpop.f32.mrb[0].mxu0
  %v1415 = vpop.f32.mrb[0].mxu0
  %v1416 = vpop.f32.mrb[0].mxu0
  %1417 = vdwg.mxu0
  %s1418 = scalar_lea.vmem %s1, 1024
  %v1419 = vld [vmem:[%s1418] sm:$0xf]
  %v1420 = vld [vmem:[%s1418 + $0x4] sm:$0xf]
  %v1421 = vld [vmem:[%s1418 + $0x8] sm:$0xf]
  %v1422 = vld [vmem:[%s1418 + $0xc] sm:$0xf]
  %v1423 = vld [vmem:[%s1418 + $0x10] sm:$0xf]
  %v1424 = vld [vmem:[%s1418 + $0x14] sm:$0xf]
  %v1425 = vld [vmem:[%s1418 + $0x18] sm:$0xf]
  %v1426 = vld [vmem:[%s1418 + $0x1c] sm:$0xf]
  %v1427 = vld [vmem:[%s1418 + $0x20] sm:$0xf]
  %v1428 = vld [vmem:[%s1418 + $0x24] sm:$0xf]
  %v1429 = vld [vmem:[%s1418 + $0x28] sm:$0xf]
  %v1430 = vld [vmem:[%s1418 + $0x2c] sm:$0xf]
  %v1431 = vld [vmem:[%s1418 + $0x30] sm:$0xf]
  %v1432 = vld [vmem:[%s1418 + $0x34] sm:$0xf]
  %v1433 = vld [vmem:[%s1418 + $0x38] sm:$0xf]
  %v1434 = vld [vmem:[%s1418 + $0x3c] sm:$0xf]
  %v1435 = vld [vmem:[%s1418 + $0x40] sm:$0xf]
  %v1436 = vld [vmem:[%s1418 + $0x44] sm:$0xf]
  %v1437 = vld [vmem:[%s1418 + $0x48] sm:$0xf]
  %v1438 = vld [vmem:[%s1418 + $0x4c] sm:$0xf]
  %v1439 = vld [vmem:[%s1418 + $0x50] sm:$0xf]
  %v1440 = vld [vmem:[%s1418 + $0x54] sm:$0xf]
  %v1441 = vld [vmem:[%s1418 + $0x58] sm:$0xf]
  %v1442 = vld [vmem:[%s1418 + $0x5c] sm:$0xf]
  %v1443 = vld [vmem:[%s1418 + $0x60] sm:$0xf]
  %v1444 = vld [vmem:[%s1418 + $0x64] sm:$0xf]
  %v1445 = vld [vmem:[%s1418 + $0x68] sm:$0xf]
  %v1446 = vld [vmem:[%s1418 + $0x6c] sm:$0xf]
  %v1447 = vld [vmem:[%s1418 + $0x70] sm:$0xf]
  %v1448 = vld [vmem:[%s1418 + $0x74] sm:$0xf]
  %v1449 = vld [vmem:[%s1418 + $0x78] sm:$0xf]
  %v1450 = vld [vmem:[%s1418 + $0x7c] sm:$0xf]
  %v1483 = vunpack.c.l.b16 %v1419
  %v1484 = vunpack.c.l.b16 %v1420
  %v1485 = vunpack.c.l.b16 %v1421
  %v1486 = vunpack.c.l.b16 %v1422
  %v1487 = vunpack.c.l.b16 %v1423
  %v1488 = vunpack.c.l.b16 %v1424
  %v1489 = vunpack.c.l.b16 %v1425
  %v1490 = vunpack.c.l.b16 %v1426
  %v1491 = vunpack.c.l.b16 %v1427
  %v1492 = vunpack.c.l.b16 %v1428
  %v1493 = vunpack.c.l.b16 %v1429
  %v1494 = vunpack.c.l.b16 %v1430
  %v1495 = vunpack.c.l.b16 %v1431
  %v1496 = vunpack.c.l.b16 %v1432
  %v1497 = vunpack.c.l.b16 %v1433
  %v1498 = vunpack.c.l.b16 %v1434
  %v1499 = vunpack.c.l.b16 %v1435
  %v1500 = vunpack.c.l.b16 %v1436
  %v1501 = vunpack.c.l.b16 %v1437
  %v1502 = vunpack.c.l.b16 %v1438
  %v1503 = vunpack.c.l.b16 %v1439
  %v1504 = vunpack.c.l.b16 %v1440
  %v1505 = vunpack.c.l.b16 %v1441
  %v1506 = vunpack.c.l.b16 %v1442
  %v1507 = vunpack.c.l.b16 %v1443
  %v1508 = vunpack.c.l.b16 %v1444
  %v1509 = vunpack.c.l.b16 %v1445
  %v1510 = vunpack.c.l.b16 %v1446
  %v1511 = vunpack.c.l.b16 %v1447
  %v1512 = vunpack.c.l.b16 %v1448
  %v1513 = vunpack.c.l.b16 %v1449
  %v1514 = vunpack.c.l.b16 %v1450
  %v1515 = vpack.c.b16 %v1484, %v1483
  %v1516 = vpack.c.b16 %v1486, %v1485
  %v1517 = vpack.c.b16 %v1488, %v1487
  %v1518 = vpack.c.b16 %v1490, %v1489
  %v1519 = vpack.c.b16 %v1492, %v1491
  %v1520 = vpack.c.b16 %v1494, %v1493
  %v1521 = vpack.c.b16 %v1496, %v1495
  %v1522 = vpack.c.b16 %v1498, %v1497
  %v1523 = vpack.c.b16 %v1500, %v1499
  %v1524 = vpack.c.b16 %v1502, %v1501
  %v1525 = vpack.c.b16 %v1504, %v1503
  %v1526 = vpack.c.b16 %v1506, %v1505
  %v1527 = vpack.c.b16 %v1508, %v1507
  %v1528 = vpack.c.b16 %v1510, %v1509
  %v1529 = vpack.c.b16 %v1512, %v1511
  %v1530 = vpack.c.b16 %v1514, %v1513
  %1547 = vmatprep.subr.bf16.mxu0 0
  %1548 = vmatpush1.bf16.msra.mxu0 %v1515
  %1549 = vmatprep.subr.bf16.mxu0 0
  %1550 = vmatpush1.bf16.msra.mxu0 %v1516
  %1551 = vmatprep.subr.bf16.mxu0 0
  %1552 = vmatpush1.bf16.msra.mxu0 %v1517
  %1553 = vmatprep.subr.bf16.mxu0 0
  %1554 = vmatpush1.bf16.msra.mxu0 %v1518
  %1555 = vmatprep.subr.bf16.mxu0 0
  %1556 = vmatpush1.bf16.msra.mxu0 %v1519
  %1557 = vmatprep.subr.bf16.mxu0 0
  %1558 = vmatpush1.bf16.msra.mxu0 %v1520
  %1559 = vmatprep.subr.bf16.mxu0 0
  %1560 = vmatpush1.bf16.msra.mxu0 %v1521
  %1561 = vmatprep.subr.bf16.mxu0 0
  %1562 = vmatpush1.bf16.msra.mxu0 %v1522
  %1563 = vmatprep.subr.bf16.mxu0 0
  %1564 = vmatpush1.bf16.msra.mxu0 %v1523
  %1565 = vmatprep.subr.bf16.mxu0 0
  %1566 = vmatpush1.bf16.msra.mxu0 %v1524
  %1567 = vmatprep.subr.bf16.mxu0 0
  %1568 = vmatpush1.bf16.msra.mxu0 %v1525
  %1569 = vmatprep.subr.bf16.mxu0 0
  %1570 = vmatpush1.bf16.msra.mxu0 %v1526
  %1571 = vmatprep.subr.bf16.mxu0 0
  %1572 = vmatpush1.bf16.msra.mxu0 %v1527
  %1573 = vmatprep.subr.bf16.mxu0 0
  %1574 = vmatpush1.bf16.msra.mxu0 %v1528
  %1575 = vmatprep.subr.bf16.mxu0 0
  %1576 = vmatpush1.bf16.msra.mxu0 %v1529
  %1577 = vmatprep.subr.bf16.mxu0 0
  %1578 = vmatpush1.bf16.msra.mxu0 %v1530
  %1579 = vmatprep.mubr.bf16.mxu0 %v66
  %1580 = vmatmul.mubr.bf16.gmra.mrb[0].mxu0 %v65
  %v1581 = vpop.f32.mrb[0].mxu0
  %v1582 = vadd.f32 0.0, %v1581
  %v1583 = vpop.f32.mrb[0].mxu0
  %v1584 = vpop.f32.mrb[0].mxu0
  %v1585 = vpop.f32.mrb[0].mxu0
  %1586 = vdwg.mxu0
  %v1587 = vld [vmem:[%s8] sm:$0xff]
  %v1588 = vld [vmem:[%s8 + $0x8] sm:$0xff]
  %v1589 = vld [vmem:[%s8 + $0x10] sm:$0xff]
  %v1590 = vld [vmem:[%s8 + $0x18] sm:$0xff]
  %vm1591 = vcmask 588800
  %v1593 = vsel %vm1591, %v1587, 0
  %v1596 = vsel %vm1591, %v1588, 0
  %v1599 = vsel %vm1591, %v1589, 0
  %v1602 = vsel %vm1591, %v1590, 0
  %1604 = vmatprep.subr.mxu0 0.0
  %1605 = vmatpush1.msra.mxu0 %v230
  %1606 = vmatprep.subr.mxu0 0.0
  %1607 = vmatpush1.msra.mxu0 %v399
  %1608 = vmatprep.subr.mxu0 0.0
  %1609 = vmatpush1.msra.mxu0 %v568
  %1610 = vmatprep.subr.mxu0 0.0
  %1611 = vmatpush1.msra.mxu0 %v737
  %1612 = vmatprep.subr.mxu0 0.0
  %1613 = vmatpush1.msra.mxu0 %v906
  %1614 = vmatprep.subr.mxu0 0.0
  %1615 = vmatpush1.msra.mxu0 %v1075
  %1616 = vmatprep.subr.mxu0 0.0
  %1617 = vmatpush1.msra.mxu0 %v1244
  %1618 = vmatprep.subr.mxu0 0.0
  %1619 = vmatpush1.msra.mxu0 %v1413
  %1620 = vmatprep.subr.mxu0 0.0
  %1621 = vmatpush1.msra.mxu0 %v1582
  %1622 = vmatprep.subr.mxu0 0.0
  %1623 = vmatpush1.msra.mxu0 0.0
  %1624 = vmatprep.subr.mxu0 0.0
  %1625 = vmatpush1.msra.mxu0 0.0
  %1626 = vmatprep.subr.mxu0 0.0
  %1627 = vmatpush1.msra.mxu0 0.0
  %1628 = vmatprep.subr.mxu0 0.0
  %1629 = vmatpush1.msra.mxu0 0.0
  %1630 = vmatprep.subr.mxu0 0.0
  %1631 = vmatpush1.msra.mxu0 0.0
  %1632 = vmatprep.subr.mxu0 0.0
  %1633 = vmatpush1.msra.mxu0 0.0
  %1634 = vmatprep.subr.mxu0 0.0
  %1635 = vmatpush1.msra.mxu0 0.0
  %1636 = vmatprep.subr.mxu0 0.0
  %1637 = vmatpush1.msra.mxu0 0.0
  %1638 = vmatprep.subr.mxu0 0.0
  %1639 = vmatpush1.msra.mxu0 0.0
  %1640 = vmatprep.subr.mxu0 0.0
  %1641 = vmatpush1.msra.mxu0 0.0
  %1642 = vmatprep.subr.mxu0 0.0
  %1643 = vmatpush1.msra.mxu0 0.0
  %1644 = vmatprep.subr.mxu0 0.0
  %1645 = vmatpush1.msra.mxu0 0.0
  %1646 = vmatprep.subr.mxu0 0.0
  %1647 = vmatpush1.msra.mxu0 0.0
  %1648 = vmatprep.subr.mxu0 0.0
  %1649 = vmatpush1.msra.mxu0 0.0
  %1650 = vmatprep.subr.mxu0 0.0
  %1651 = vmatpush1.msra.mxu0 0.0
  %1652 = vmatprep.subr.mxu0 0.0
  %1653 = vmatpush1.msra.mxu0 0.0
  %1654 = vmatprep.subr.mxu0 0.0
  %1655 = vmatpush1.msra.mxu0 0.0
  %1656 = vmatprep.subr.mxu0 0.0
  %1657 = vmatpush1.msra.mxu0 0.0
  %1658 = vmatprep.subr.mxu0 0.0
  %1659 = vmatpush1.msra.mxu0 0.0
  %1660 = vmatprep.subr.mxu0 0.0
  %1661 = vmatpush1.msra.mxu0 0.0
  %1662 = vmatprep.subr.mxu0 0.0
  %1663 = vmatpush1.msra.mxu0 0.0
  %1664 = vmatprep.subr.mxu0 0.0
  %1665 = vmatpush1.msra.mxu0 0.0
  %1666 = vmatprep.subr.mxu0 0.0
  %1667 = vmatpush1.msra.mxu0 0.0
  %1668 = vmatprep.mubr.f32.mxu0 0.0
  %1669 = vmatmul.mubr.f32.gmra.mrb[0].mxu0 %v1593
  %v1670 = vpop.f32.mrb[0].mxu0
  %v1671 = vadd.f32 0.0, %v1670
  %v1672 = vpop.f32.mrb[0].mxu0
  %1673 = vmatprep.mubr.f32.mxu0 0.0
  %1674 = vmatmul.mubr.f32.gmra.mrb[0].mxu0 %v1596
  %v1675 = vpop.f32.mrb[0].mxu0
  %v1676 = vadd.f32 0.0, %v1675
  %v1677 = vpop.f32.mrb[0].mxu0
  %1678 = vmatprep.mubr.f32.mxu0 0.0
  %1679 = vmatmul.mubr.f32.gmra.mrb[0].mxu0 %v1599
  %v1680 = vpop.f32.mrb[0].mxu0
  %v1681 = vadd.f32 0.0, %v1680
  %v1682 = vpop.f32.mrb[0].mxu0
  %1683 = vmatprep.mubr.f32.mxu0 0.0
  %1684 = vmatmul.mubr.f32.gmra.mrb[0].mxu0 %v1602
  %v1685 = vpop.f32.mrb[0].mxu0
  %v1686 = vadd.f32 0.0, %v1685
  %v1687 = vpop.f32.mrb[0].mxu0
  %1688 = vdwg.mxu0
  %vm1689 = vcmask 523264
  %v1690 = vsel %vm1689, %v1671, 0.0
  %1691 = vadd.xlane.f32.xlu0 %v1690
  %v1692 = vpop.xlane.xlu0 %1691
  %v1693 = vsel %vm1689, %v1676, 0.0
  %1694 = vadd.xlane.f32.xlu0 %v1693
  %v1695 = vpop.xlane.xlu0 %1694
  %v1696 = vsel %vm1689, %v1681, 0.0
  %1697 = vadd.xlane.f32.xlu0 %v1696
  %v1698 = vpop.xlane.xlu0 %1697
  %v1699 = vsel %vm1689, %v1686, 0.0
  %1700 = vadd.xlane.f32.xlu0 %v1699
  %v1701 = vpop.xlane.xlu0 %1700
  %v1702 = vadd.f32 %v1692, %v1698
  %v1703 = vadd.f32 %v1695, %v1701
  %v1704 = vmul.f32 %v1671, %v1671
  %v1705 = vmul.f32 %v1676, %v1676
  %v1706 = vmul.f32 %v1681, %v1681
  %v1707 = vmul.f32 %v1686, %v1686
  %v1708 = vsel %vm1689, %v1704, 0.0
  %1709 = vadd.xlane.f32.xlu0 %v1708
  %v1710 = vpop.xlane.xlu0 %1709
  %v1711 = vsel %vm1689, %v1705, 0.0
  %1712 = vadd.xlane.f32.xlu0 %v1711
  %v1713 = vpop.xlane.xlu0 %1712
  %v1714 = vsel %vm1689, %v1706, 0.0
  %1715 = vadd.xlane.f32.xlu0 %v1714
  %v1716 = vpop.xlane.xlu0 %1715
  %v1717 = vsel %vm1689, %v1707, 0.0
  %1718 = vadd.xlane.f32.xlu0 %v1717
  %v1719 = vpop.xlane.xlu0 %1718
  %v1720 = vadd.f32 %v1710, %v1716
  %v1721 = vadd.f32 %v1713, %v1719
  %v1722 = vmul.f32 %v1702, 0.0078125
  %v1723 = vmul.f32 %v1703, 0.0078125
  %v1724 = vmul.f32 %v1720, 0.0078125
  %v1725 = vmul.f32 %v1721, 0.0078125
  %v1726 = vmul.f32 %v1722, %v1722
  %v1727 = vmul.f32 %v1723, %v1723
  %v1728 = vsub.f32 %v1724, %v1726
  %v1729 = vsub.f32 %v1725, %v1727
  %v1730 = vmax.f32 %v1728, 0.0
  %v1731 = vmax.f32 %v1729, 0.0
  %v1732 = vld [vmem:[%s18] sm:$0xff]
  %v1733 = vld [vmem:[%s18 + $0x8] sm:$0xff]
  %v1734 = vld [vmem:[%s18 + $0x10] sm:$0xff]
  %v1735 = vld [vmem:[%s18 + $0x18] sm:$0xff]
  %v1736 = vadd.f32 %v1730, 1e-05
  %v1737 = vadd.f32 %v1731, 1e-05
  %v1738 = vrsqrt.pop %v1736
  %v1739 = vrsqrt.pop %v1737
  %v1740 = vmul.f32 %v1732, %v1738
  %v1741 = vmul.f32 %v1733, %v1739
  %v1742 = vmul.f32 %v1734, %v1738
  %v1743 = vmul.f32 %v1735, %v1739
  %v1744 = vmul.f32 %v1722, %v1740
  %v1745 = vmul.f32 %v1723, %v1741
  %v1746 = vmul.f32 %v1722, %v1742
  %v1747 = vmul.f32 %v1723, %v1743
  %1752 = vrot.lane.b32.xlu0 %v1744, 1
  %v1753 = vpop.permute.xlu0 %1752
  %1754 = vrot.lane.b32.xlu0 %v1745, 1
  %v1755 = vpop.permute.xlu0 %1754
  %1756 = vrot.lane.b32.xlu0 %v1746, 1
  %v1757 = vpop.permute.xlu0 %1756
  %1758 = vrot.lane.b32.xlu0 %v1747, 1
  %v1759 = vpop.permute.xlu0 %1758
  %v1764 = vsub.f32 %v1732, %v1753
  %v1765 = vsub.f32 %v1733, %v1755
  %v1766 = vsub.f32 %v1734, %v1757
  %v1767 = vsub.f32 %v1735, %v1759
  %1769 = vset.pattern.permute.xlu0 0
  %1770 = vperm.xlu0 %1769, %v1740
  %v1771 = vpop.permute.xlu0 %1770
  %1774 = vset.pattern.permute.xlu0 0
  %1775 = vperm.xlu0 %1774, %v1741
  %v1776 = vpop.permute.xlu0 %1775
  %1779 = vset.pattern.permute.xlu0 0
  %1780 = vperm.xlu0 %1779, %v1742
  %v1781 = vpop.permute.xlu0 %1780
  %1784 = vset.pattern.permute.xlu0 0
  %1785 = vperm.xlu0 %1784, %v1743
  %v1786 = vpop.permute.xlu0 %1785
  %v1788 = vmul.f32 %v1671, %v1771
  %v1789 = vmul.f32 %v1676, %v1776
  %v1790 = vmul.f32 %v1681, %v1781
  %v1791 = vmul.f32 %v1686, %v1786
  %1793 = vset.pattern.permute.xlu0 1
  %1794 = vperm.xlu0 %1793, %v1764
  %v1795 = vpop.permute.xlu0 %1794
  %1798 = vset.pattern.permute.xlu0 1
  %1799 = vperm.xlu0 %1798, %v1765
  %v1800 = vpop.permute.xlu0 %1799
  %1803 = vset.pattern.permute.xlu0 1
  %1804 = vperm.xlu0 %1803, %v1766
  %v1805 = vpop.permute.xlu0 %1804
  %1808 = vset.pattern.permute.xlu0 1
  %1809 = vperm.xlu0 %1808, %v1767
  %v1810 = vpop.permute.xlu0 %1809
  %v1812 = vadd.f32 %v1788, %v1795
  %v1813 = vadd.f32 %v1789, %v1800
  %v1814 = vadd.f32 %v1790, %v1805
  %v1815 = vadd.f32 %v1791, %v1810
  %vm1816 = vcmp.ge.f32.partialorder %v1812, 0.0
  %vm1817 = vcmp.ge.f32.partialorder %v1813, 0.0
  %vm1818 = vcmp.ge.f32.partialorder %v1814, 0.0
  %vm1819 = vcmp.ge.f32.partialorder %v1815, 0.0
  %v1820 = vmul.f32 %v1812, 0.2
  %v1821 = vmul.f32 %v1813, 0.2
  %v1822 = vmul.f32 %v1814, 0.2
  %v1823 = vmul.f32 %v1815, 0.2
  %v1824 = vsel %vm1816, %v1812, %v1820
  %v1825 = vsel %vm1817, %v1813, %v1821
  %v1826 = vsel %vm1818, %v1814, %v1822
  %v1827 = vsel %vm1819, %v1815, %v1823
  %v1828 = vpack.c.bf16 %v1825, %v1824
  %v1829 = vpack.c.bf16 %v1827, %v1826
  %v1830 = vld [vmem:[%s2] sm:$0xf]
  %v1831 = vld [vmem:[%s2 + $0x4] sm:$0xf]
  %v1832 = vld [vmem:[%s2 + $0x8] sm:$0xf]
  %v1833 = vld [vmem:[%s2 + $0xc] sm:$0xf]
  %v1834 = vld [vmem:[%s2 + $0x10] sm:$0xf]
  %v1835 = vld [vmem:[%s2 + $0x14] sm:$0xf]
  %v1836 = vld [vmem:[%s2 + $0x18] sm:$0xf]
  %v1837 = vld [vmem:[%s2 + $0x1c] sm:$0xf]
  %v1846 = vunpack.c.l.b16 %v1830
  %v1847 = vunpack.c.l.b16 %v1831
  %v1848 = vunpack.c.l.b16 %v1832
  %v1849 = vunpack.c.l.b16 %v1833
  %v1850 = vunpack.c.l.b16 %v1834
  %v1851 = vunpack.c.l.b16 %v1835
  %v1852 = vunpack.c.l.b16 %v1836
  %v1853 = vunpack.c.l.b16 %v1837
  %v1854 = vpack.c.b16 %v1847, %v1846
  %v1855 = vpack.c.b16 %v1849, %v1848
  %v1856 = vpack.c.b16 %v1851, %v1850
  %v1857 = vpack.c.b16 %v1853, %v1852
  %v1863 = vsel %vm1689, %v1828, 0
  %v1866 = vsel %vm1689, %v1829, 0
  %1868 = vmatprep.subr.bf16.mxu0 0
  %1869 = vmatpush1.bf16.msra.mxu0 %v1854
  %1870 = vmatprep.subr.bf16.mxu0 0
  %1871 = vmatpush1.bf16.msra.mxu0 %v1855
  %1872 = vmatprep.subr.bf16.mxu0 0
  %1873 = vmatpush1.bf16.msra.mxu0 %v1856
  %1874 = vmatprep.subr.bf16.mxu0 0
  %1875 = vmatpush1.bf16.msra.mxu0 %v1857
  %1876 = vmatprep.subr.bf16.mxu0 0
  %1877 = vmatpush1.bf16.msra.mxu0 0
  %1878 = vmatprep.subr.bf16.mxu0 0
  %1879 = vmatpush1.bf16.msra.mxu0 0
  %1880 = vmatprep.subr.bf16.mxu0 0
  %1881 = vmatpush1.bf16.msra.mxu0 0
  %1882 = vmatprep.subr.bf16.mxu0 0
  %1883 = vmatpush1.bf16.msra.mxu0 0
  %1884 = vmatprep.subr.bf16.mxu0 0
  %1885 = vmatpush1.bf16.msra.mxu0 0
  %1886 = vmatprep.subr.bf16.mxu0 0
  %1887 = vmatpush1.bf16.msra.mxu0 0
  %1888 = vmatprep.subr.bf16.mxu0 0
  %1889 = vmatpush1.bf16.msra.mxu0 0
  %1890 = vmatprep.subr.bf16.mxu0 0
  %1891 = vmatpush1.bf16.msra.mxu0 0
  %1892 = vmatprep.subr.bf16.mxu0 0
  %1893 = vmatpush1.bf16.msra.mxu0 0
  %1894 = vmatprep.subr.bf16.mxu0 0
  %1895 = vmatpush1.bf16.msra.mxu0 0
  %1896 = vmatprep.subr.bf16.mxu0 0
  %1897 = vmatpush1.bf16.msra.mxu0 0
  %1898 = vmatprep.subr.bf16.mxu0 0
  %1899 = vmatpush1.bf16.msra.mxu0 0
  %1900 = vmatprep.mubr.bf16.mxu0 0
  %1901 = vmatmul.mubr.bf16.gmra.mrb[0].mxu0 %v1863
  %v1902 = vpop.f32.mrb[0].mxu0
  %v1903 = vadd.f32 0.0, %v1902
  %v1904 = vpop.f32.mrb[0].mxu0
  %v1905 = vpop.f32.mrb[0].mxu0
  %v1906 = vadd.f32 0.0, %v1905
  %v1907 = vpop.f32.mrb[0].mxu0
  %1908 = vmatprep.mubr.bf16.mxu0 0
  %1909 = vmatmul.mubr.bf16.gmra.mrb[0].mxu0 %v1866
  %v1910 = vpop.f32.mrb[0].mxu0
  %v1911 = vadd.f32 0.0, %v1910
  %v1912 = vpop.f32.mrb[0].mxu0
  %v1913 = vpop.f32.mrb[0].mxu0
  %v1914 = vadd.f32 0.0, %v1913
  %v1915 = vpop.f32.mrb[0].mxu0
  %1916 = vdwg.mxu0
  %s1917 = scalar_lea.vmem %s2, 32
  %v1918 = vld [vmem:[%s1917] sm:$0xf]
  %v1919 = vld [vmem:[%s1917 + $0x4] sm:$0xf]
  %v1920 = vld [vmem:[%s1917 + $0x8] sm:$0xf]
  %v1921 = vld [vmem:[%s1917 + $0xc] sm:$0xf]
  %v1922 = vld [vmem:[%s1917 + $0x10] sm:$0xf]
  %v1923 = vld [vmem:[%s1917 + $0x14] sm:$0xf]
  %v1924 = vld [vmem:[%s1917 + $0x18] sm:$0xf]
  %v1925 = vld [vmem:[%s1917 + $0x1c] sm:$0xf]
  %v1934 = vunpack.c.l.b16 %v1918
  %v1935 = vunpack.c.l.b16 %v1919
  %v1936 = vunpack.c.l.b16 %v1920
  %v1937 = vunpack.c.l.b16 %v1921
  %v1938 = vunpack.c.l.b16 %v1922
  %v1939 = vunpack.c.l.b16 %v1923
  %v1940 = vunpack.c.l.b16 %v1924
  %v1941 = vunpack.c.l.b16 %v1925
  %v1942 = vpack.c.b16 %v1935, %v1934
  %v1943 = vpack.c.b16 %v1937, %v1936
  %v1944 = vpack.c.b16 %v1939, %v1938
  %v1945 = vpack.c.b16 %v1941, %v1940
  %1950 = vmatprep.subr.bf16.mxu0 0
  %1951 = vmatpush1.bf16.msra.mxu0 %v1942
  %1952 = vmatprep.subr.bf16.mxu0 0
  %1953 = vmatpush1.bf16.msra.mxu0 %v1943
  %1954 = vmatprep.subr.bf16.mxu0 0
  %1955 = vmatpush1.bf16.msra.mxu0 %v1944
  %1956 = vmatprep.subr.bf16.mxu0 0
  %1957 = vmatpush1.bf16.msra.mxu0 %v1945
  %1958 = vmatprep.subr.bf16.mxu0 0
  %1959 = vmatpush1.bf16.msra.mxu0 0
  %1960 = vmatprep.subr.bf16.mxu0 0
  %1961 = vmatpush1.bf16.msra.mxu0 0
  %1962 = vmatprep.subr.bf16.mxu0 0
  %1963 = vmatpush1.bf16.msra.mxu0 0
  %1964 = vmatprep.subr.bf16.mxu0 0
  %1965 = vmatpush1.bf16.msra.mxu0 0
  %1966 = vmatprep.subr.bf16.mxu0 0
  %1967 = vmatpush1.bf16.msra.mxu0 0
  %1968 = vmatprep.subr.bf16.mxu0 0
  %1969 = vmatpush1.bf16.msra.mxu0 0
  %1970 = vmatprep.subr.bf16.mxu0 0
  %1971 = vmatpush1.bf16.msra.mxu0 0
  %1972 = vmatprep.subr.bf16.mxu0 0
  %1973 = vmatpush1.bf16.msra.mxu0 0
  %1974 = vmatprep.subr.bf16.mxu0 0
  %1975 = vmatpush1.bf16.msra.mxu0 0
  %1976 = vmatprep.subr.bf16.mxu0 0
  %1977 = vmatpush1.bf16.msra.mxu0 0
  %1978 = vmatprep.subr.bf16.mxu0 0
  %1979 = vmatpush1.bf16.msra.mxu0 0
  %1980 = vmatprep.subr.bf16.mxu0 0
  %1981 = vmatpush1.bf16.msra.mxu0 0
  %1982 = vmatprep.mubr.bf16.mxu0 0
  %1983 = vmatmul.mubr.bf16.gmra.mrb[0].mxu0 %v1863
  %v1984 = vpop.f32.mrb[0].mxu0
  %v1985 = vadd.f32 0.0, %v1984
  %v1986 = vpop.f32.mrb[0].mxu0
  %v1987 = vpop.f32.mrb[0].mxu0
  %v1988 = vadd.f32 0.0, %v1987
  %v1989 = vpop.f32.mrb[0].mxu0
  %1990 = vmatprep.mubr.bf16.mxu0 0
  %1991 = vmatmul.mubr.bf16.gmra.mrb[0].mxu0 %v1866
  %v1992 = vpop.f32.mrb[0].mxu0
  %v1993 = vadd.f32 0.0, %v1992
  %v1994 = vpop.f32.mrb[0].mxu0
  %v1995 = vpop.f32.mrb[0].mxu0
  %v1996 = vadd.f32 0.0, %v1995
  %v1997 = vpop.f32.mrb[0].mxu0
  %1998 = vdwg.mxu0
  %s1999 = scalar_lea.vmem %s2, 64
  %v2000 = vld [vmem:[%s1999] sm:$0xf]
  %v2001 = vld [vmem:[%s1999 + $0x4] sm:$0xf]
  %v2002 = vld [vmem:[%s1999 + $0x8] sm:$0xf]
  %v2003 = vld [vmem:[%s1999 + $0xc] sm:$0xf]
  %v2004 = vld [vmem:[%s1999 + $0x10] sm:$0xf]
  %v2005 = vld [vmem:[%s1999 + $0x14] sm:$0xf]
  %v2006 = vld [vmem:[%s1999 + $0x18] sm:$0xf]
  %v2007 = vld [vmem:[%s1999 + $0x1c] sm:$0xf]
  %v2016 = vunpack.c.l.b16 %v2000
  %v2017 = vunpack.c.l.b16 %v2001
  %v2018 = vunpack.c.l.b16 %v2002
  %v2019 = vunpack.c.l.b16 %v2003
  %v2020 = vunpack.c.l.b16 %v2004
  %v2021 = vunpack.c.l.b16 %v2005
  %v2022 = vunpack.c.l.b16 %v2006
  %v2023 = vunpack.c.l.b16 %v2007
  %v2024 = vpack.c.b16 %v2017, %v2016
  %v2025 = vpack.c.b16 %v2019, %v2018
  %v2026 = vpack.c.b16 %v2021, %v2020
  %v2027 = vpack.c.b16 %v2023, %v2022
  %2032 = vmatprep.subr.bf16.mxu0 0
  %2033 = vmatpush1.bf16.msra.mxu0 %v2024
  %2034 = vmatprep.subr.bf16.mxu0 0
  %2035 = vmatpush1.bf16.msra.mxu0 %v2025
  %2036 = vmatprep.subr.bf16.mxu0 0
  %2037 = vmatpush1.bf16.msra.mxu0 %v2026
  %2038 = vmatprep.subr.bf16.mxu0 0
  %2039 = vmatpush1.bf16.msra.mxu0 %v2027
  %2040 = vmatprep.subr.bf16.mxu0 0
  %2041 = vmatpush1.bf16.msra.mxu0 0
  %2042 = vmatprep.subr.bf16.mxu0 0
  %2043 = vmatpush1.bf16.msra.mxu0 0
  %2044 = vmatprep.subr.bf16.mxu0 0
  %2045 = vmatpush1.bf16.msra.mxu0 0
  %2046 = vmatprep.subr.bf16.mxu0 0
  %2047 = vmatpush1.bf16.msra.mxu0 0
  %2048 = vmatprep.subr.bf16.mxu0 0
  %2049 = vmatpush1.bf16.msra.mxu0 0
  %2050 = vmatprep.subr.bf16.mxu0 0
  %2051 = vmatpush1.bf16.msra.mxu0 0
  %2052 = vmatprep.subr.bf16.mxu0 0
  %2053 = vmatpush1.bf16.msra.mxu0 0
  %2054 = vmatprep.subr.bf16.mxu0 0
  %2055 = vmatpush1.bf16.msra.mxu0 0
  %2056 = vmatprep.subr.bf16.mxu0 0
  %2057 = vmatpush1.bf16.msra.mxu0 0
  %2058 = vmatprep.subr.bf16.mxu0 0
  %2059 = vmatpush1.bf16.msra.mxu0 0
  %2060 = vmatprep.subr.bf16.mxu0 0
  %2061 = vmatpush1.bf16.msra.mxu0 0
  %2062 = vmatprep.subr.bf16.mxu0 0
  %2063 = vmatpush1.bf16.msra.mxu0 0
  %2064 = vmatprep.mubr.bf16.mxu0 0
  %2065 = vmatmul.mubr.bf16.gmra.mrb[0].mxu0 %v1863
  %v2066 = vpop.f32.mrb[0].mxu0
  %v2067 = vadd.f32 0.0, %v2066
  %v2068 = vpop.f32.mrb[0].mxu0
  %v2069 = vpop.f32.mrb[0].mxu0
  %v2070 = vadd.f32 0.0, %v2069
  %v2071 = vpop.f32.mrb[0].mxu0
  %2072 = vmatprep.mubr.bf16.mxu0 0
  %2073 = vmatmul.mubr.bf16.gmra.mrb[0].mxu0 %v1866
  %v2074 = vpop.f32.mrb[0].mxu0
  %v2075 = vadd.f32 0.0, %v2074
  %v2076 = vpop.f32.mrb[0].mxu0
  %v2077 = vpop.f32.mrb[0].mxu0
  %v2078 = vadd.f32 0.0, %v2077
  %v2079 = vpop.f32.mrb[0].mxu0
  %2080 = vdwg.mxu0
  %s2081 = scalar_lea.vmem %s2, 96
  %v2082 = vld [vmem:[%s2081] sm:$0xf]
  %v2083 = vld [vmem:[%s2081 + $0x4] sm:$0xf]
  %v2084 = vld [vmem:[%s2081 + $0x8] sm:$0xf]
  %v2085 = vld [vmem:[%s2081 + $0xc] sm:$0xf]
  %v2086 = vld [vmem:[%s2081 + $0x10] sm:$0xf]
  %v2087 = vld [vmem:[%s2081 + $0x14] sm:$0xf]
  %v2088 = vld [vmem:[%s2081 + $0x18] sm:$0xf]
  %v2089 = vld [vmem:[%s2081 + $0x1c] sm:$0xf]
  %v2098 = vunpack.c.l.b16 %v2082
  %v2099 = vunpack.c.l.b16 %v2083
  %v2100 = vunpack.c.l.b16 %v2084
  %v2101 = vunpack.c.l.b16 %v2085
  %v2102 = vunpack.c.l.b16 %v2086
  %v2103 = vunpack.c.l.b16 %v2087
  %v2104 = vunpack.c.l.b16 %v2088
  %v2105 = vunpack.c.l.b16 %v2089
  %v2106 = vpack.c.b16 %v2099, %v2098
  %v2107 = vpack.c.b16 %v2101, %v2100
  %v2108 = vpack.c.b16 %v2103, %v2102
  %v2109 = vpack.c.b16 %v2105, %v2104
  %2114 = vmatprep.subr.bf16.mxu0 0
  %2115 = vmatpush1.bf16.msra.mxu0 %v2106
  %2116 = vmatprep.subr.bf16.mxu0 0
  %2117 = vmatpush1.bf16.msra.mxu0 %v2107
  %2118 = vmatprep.subr.bf16.mxu0 0
  %2119 = vmatpush1.bf16.msra.mxu0 %v2108
  %2120 = vmatprep.subr.bf16.mxu0 0
  %2121 = vmatpush1.bf16.msra.mxu0 %v2109
  %2122 = vmatprep.subr.bf16.mxu0 0
  %2123 = vmatpush1.bf16.msra.mxu0 0
  %2124 = vmatprep.subr.bf16.mxu0 0
  %2125 = vmatpush1.bf16.msra.mxu0 0
  %2126 = vmatprep.subr.bf16.mxu0 0
  %2127 = vmatpush1.bf16.msra.mxu0 0
  %2128 = vmatprep.subr.bf16.mxu0 0
  %2129 = vmatpush1.bf16.msra.mxu0 0
  %2130 = vmatprep.subr.bf16.mxu0 0
  %2131 = vmatpush1.bf16.msra.mxu0 0
  %2132 = vmatprep.subr.bf16.mxu0 0
  %2133 = vmatpush1.bf16.msra.mxu0 0
  %2134 = vmatprep.subr.bf16.mxu0 0
  %2135 = vmatpush1.bf16.msra.mxu0 0
  %2136 = vmatprep.subr.bf16.mxu0 0
  %2137 = vmatpush1.bf16.msra.mxu0 0
  %2138 = vmatprep.subr.bf16.mxu0 0
  %2139 = vmatpush1.bf16.msra.mxu0 0
  %2140 = vmatprep.subr.bf16.mxu0 0
  %2141 = vmatpush1.bf16.msra.mxu0 0
  %2142 = vmatprep.subr.bf16.mxu0 0
  %2143 = vmatpush1.bf16.msra.mxu0 0
  %2144 = vmatprep.subr.bf16.mxu0 0
  %2145 = vmatpush1.bf16.msra.mxu0 0
  %2146 = vmatprep.mubr.bf16.mxu0 0
  %2147 = vmatmul.mubr.bf16.gmra.mrb[0].mxu0 %v1863
  %v2148 = vpop.f32.mrb[0].mxu0
  %v2149 = vadd.f32 0.0, %v2148
  %v2150 = vpop.f32.mrb[0].mxu0
  %v2151 = vpop.f32.mrb[0].mxu0
  %v2152 = vadd.f32 0.0, %v2151
  %v2153 = vpop.f32.mrb[0].mxu0
  %2154 = vmatprep.mubr.bf16.mxu0 0
  %2155 = vmatmul.mubr.bf16.gmra.mrb[0].mxu0 %v1866
  %v2156 = vpop.f32.mrb[0].mxu0
  %v2157 = vadd.f32 0.0, %v2156
  %v2158 = vpop.f32.mrb[0].mxu0
  %v2159 = vpop.f32.mrb[0].mxu0
  %v2160 = vadd.f32 0.0, %v2159
  %v2161 = vpop.f32.mrb[0].mxu0
  %2162 = vdwg.mxu0
  %s2163 = scalar_lea.vmem %s2, 128
  %v2164 = vld [vmem:[%s2163] sm:$0xf]
  %v2165 = vld [vmem:[%s2163 + $0x4] sm:$0xf]
  %v2166 = vld [vmem:[%s2163 + $0x8] sm:$0xf]
  %v2167 = vld [vmem:[%s2163 + $0xc] sm:$0xf]
  %v2168 = vld [vmem:[%s2163 + $0x10] sm:$0xf]
  %v2169 = vld [vmem:[%s2163 + $0x14] sm:$0xf]
  %v2170 = vld [vmem:[%s2163 + $0x18] sm:$0xf]
  %v2171 = vld [vmem:[%s2163 + $0x1c] sm:$0xf]
  %v2180 = vunpack.c.l.b16 %v2164
  %v2181 = vunpack.c.l.b16 %v2165
  %v2182 = vunpack.c.l.b16 %v2166
  %v2183 = vunpack.c.l.b16 %v2167
  %v2184 = vunpack.c.l.b16 %v2168
  %v2185 = vunpack.c.l.b16 %v2169
  %v2186 = vunpack.c.l.b16 %v2170
  %v2187 = vunpack.c.l.b16 %v2171
  %v2188 = vpack.c.b16 %v2181, %v2180
  %v2189 = vpack.c.b16 %v2183, %v2182
  %v2190 = vpack.c.b16 %v2185, %v2184
  %v2191 = vpack.c.b16 %v2187, %v2186
  %2196 = vmatprep.subr.bf16.mxu0 0
  %2197 = vmatpush1.bf16.msra.mxu0 %v2188
  %2198 = vmatprep.subr.bf16.mxu0 0
  %2199 = vmatpush1.bf16.msra.mxu0 %v2189
  %2200 = vmatprep.subr.bf16.mxu0 0
  %2201 = vmatpush1.bf16.msra.mxu0 %v2190
  %2202 = vmatprep.subr.bf16.mxu0 0
  %2203 = vmatpush1.bf16.msra.mxu0 %v2191
  %2204 = vmatprep.subr.bf16.mxu0 0
  %2205 = vmatpush1.bf16.msra.mxu0 0
  %2206 = vmatprep.subr.bf16.mxu0 0
  %2207 = vmatpush1.bf16.msra.mxu0 0
  %2208 = vmatprep.subr.bf16.mxu0 0
  %2209 = vmatpush1.bf16.msra.mxu0 0
  %2210 = vmatprep.subr.bf16.mxu0 0
  %2211 = vmatpush1.bf16.msra.mxu0 0
  %2212 = vmatprep.subr.bf16.mxu0 0
  %2213 = vmatpush1.bf16.msra.mxu0 0
  %2214 = vmatprep.subr.bf16.mxu0 0
  %2215 = vmatpush1.bf16.msra.mxu0 0
  %2216 = vmatprep.subr.bf16.mxu0 0
  %2217 = vmatpush1.bf16.msra.mxu0 0
  %2218 = vmatprep.subr.bf16.mxu0 0
  %2219 = vmatpush1.bf16.msra.mxu0 0
  %2220 = vmatprep.subr.bf16.mxu0 0
  %2221 = vmatpush1.bf16.msra.mxu0 0
  %2222 = vmatprep.subr.bf16.mxu0 0
  %2223 = vmatpush1.bf16.msra.mxu0 0
  %2224 = vmatprep.subr.bf16.mxu0 0
  %2225 = vmatpush1.bf16.msra.mxu0 0
  %2226 = vmatprep.subr.bf16.mxu0 0
  %2227 = vmatpush1.bf16.msra.mxu0 0
  %2228 = vmatprep.mubr.bf16.mxu0 0
  %2229 = vmatmul.mubr.bf16.gmra.mrb[0].mxu0 %v1863
  %v2230 = vpop.f32.mrb[0].mxu0
  %v2231 = vadd.f32 0.0, %v2230
  %v2232 = vpop.f32.mrb[0].mxu0
  %v2233 = vpop.f32.mrb[0].mxu0
  %v2234 = vadd.f32 0.0, %v2233
  %v2235 = vpop.f32.mrb[0].mxu0
  %2236 = vmatprep.mubr.bf16.mxu0 0
  %2237 = vmatmul.mubr.bf16.gmra.mrb[0].mxu0 %v1866
  %v2238 = vpop.f32.mrb[0].mxu0
  %v2239 = vadd.f32 0.0, %v2238
  %v2240 = vpop.f32.mrb[0].mxu0
  %v2241 = vpop.f32.mrb[0].mxu0
  %v2242 = vadd.f32 0.0, %v2241
  %v2243 = vpop.f32.mrb[0].mxu0
  %2244 = vdwg.mxu0
  %s2245 = scalar_lea.vmem %s2, 160
  %v2246 = vld [vmem:[%s2245] sm:$0xf]
  %v2247 = vld [vmem:[%s2245 + $0x4] sm:$0xf]
  %v2248 = vld [vmem:[%s2245 + $0x8] sm:$0xf]
  %v2249 = vld [vmem:[%s2245 + $0xc] sm:$0xf]
  %v2250 = vld [vmem:[%s2245 + $0x10] sm:$0xf]
  %v2251 = vld [vmem:[%s2245 + $0x14] sm:$0xf]
  %v2252 = vld [vmem:[%s2245 + $0x18] sm:$0xf]
  %v2253 = vld [vmem:[%s2245 + $0x1c] sm:$0xf]
  %v2262 = vunpack.c.l.b16 %v2246
  %v2263 = vunpack.c.l.b16 %v2247
  %v2264 = vunpack.c.l.b16 %v2248
  %v2265 = vunpack.c.l.b16 %v2249
  %v2266 = vunpack.c.l.b16 %v2250
  %v2267 = vunpack.c.l.b16 %v2251
  %v2268 = vunpack.c.l.b16 %v2252
  %v2269 = vunpack.c.l.b16 %v2253
  %v2270 = vpack.c.b16 %v2263, %v2262
  %v2271 = vpack.c.b16 %v2265, %v2264
  %v2272 = vpack.c.b16 %v2267, %v2266
  %v2273 = vpack.c.b16 %v2269, %v2268
  %2278 = vmatprep.subr.bf16.mxu0 0
  %2279 = vmatpush1.bf16.msra.mxu0 %v2270
  %2280 = vmatprep.subr.bf16.mxu0 0
  %2281 = vmatpush1.bf16.msra.mxu0 %v2271
  %2282 = vmatprep.subr.bf16.mxu0 0
  %2283 = vmatpush1.bf16.msra.mxu0 %v2272
  %2284 = vmatprep.subr.bf16.mxu0 0
  %2285 = vmatpush1.bf16.msra.mxu0 %v2273
  %2286 = vmatprep.subr.bf16.mxu0 0
  %2287 = vmatpush1.bf16.msra.mxu0 0
  %2288 = vmatprep.subr.bf16.mxu0 0
  %2289 = vmatpush1.bf16.msra.mxu0 0
  %2290 = vmatprep.subr.bf16.mxu0 0
  %2291 = vmatpush1.bf16.msra.mxu0 0
  %2292 = vmatprep.subr.bf16.mxu0 0
  %2293 = vmatpush1.bf16.msra.mxu0 0
  %2294 = vmatprep.subr.bf16.mxu0 0
  %2295 = vmatpush1.bf16.msra.mxu0 0
  %2296 = vmatprep.subr.bf16.mxu0 0
  %2297 = vmatpush1.bf16.msra.mxu0 0
  %2298 = vmatprep.subr.bf16.mxu0 0
  %2299 = vmatpush1.bf16.msra.mxu0 0
  %2300 = vmatprep.subr.bf16.mxu0 0
  %2301 = vmatpush1.bf16.msra.mxu0 0
  %2302 = vmatprep.subr.bf16.mxu0 0
  %2303 = vmatpush1.bf16.msra.mxu0 0
  %2304 = vmatprep.subr.bf16.mxu0 0
  %2305 = vmatpush1.bf16.msra.mxu0 0
  %2306 = vmatprep.subr.bf16.mxu0 0
  %2307 = vmatpush1.bf16.msra.mxu0 0
  %2308 = vmatprep.subr.bf16.mxu0 0
  %2309 = vmatpush1.bf16.msra.mxu0 0
  %2310 = vmatprep.mubr.bf16.mxu0 0
  %2311 = vmatmul.mubr.bf16.gmra.mrb[0].mxu0 %v1863
  %v2312 = vpop.f32.mrb[0].mxu0
  %v2313 = vadd.f32 0.0, %v2312
  %v2314 = vpop.f32.mrb[0].mxu0
  %v2315 = vpop.f32.mrb[0].mxu0
  %v2316 = vadd.f32 0.0, %v2315
  %v2317 = vpop.f32.mrb[0].mxu0
  %2318 = vmatprep.mubr.bf16.mxu0 0
  %2319 = vmatmul.mubr.bf16.gmra.mrb[0].mxu0 %v1866
  %v2320 = vpop.f32.mrb[0].mxu0
  %v2321 = vadd.f32 0.0, %v2320
  %v2322 = vpop.f32.mrb[0].mxu0
  %v2323 = vpop.f32.mrb[0].mxu0
  %v2324 = vadd.f32 0.0, %v2323
  %v2325 = vpop.f32.mrb[0].mxu0
  %2326 = vdwg.mxu0
  %s2327 = scalar_lea.vmem %s2, 192
  %v2328 = vld [vmem:[%s2327] sm:$0xf]
  %v2329 = vld [vmem:[%s2327 + $0x4] sm:$0xf]
  %v2330 = vld [vmem:[%s2327 + $0x8] sm:$0xf]
  %v2331 = vld [vmem:[%s2327 + $0xc] sm:$0xf]
  %v2332 = vld [vmem:[%s2327 + $0x10] sm:$0xf]
  %v2333 = vld [vmem:[%s2327 + $0x14] sm:$0xf]
  %v2334 = vld [vmem:[%s2327 + $0x18] sm:$0xf]
  %v2335 = vld [vmem:[%s2327 + $0x1c] sm:$0xf]
  %v2344 = vunpack.c.l.b16 %v2328
  %v2345 = vunpack.c.l.b16 %v2329
  %v2346 = vunpack.c.l.b16 %v2330
  %v2347 = vunpack.c.l.b16 %v2331
  %v2348 = vunpack.c.l.b16 %v2332
  %v2349 = vunpack.c.l.b16 %v2333
  %v2350 = vunpack.c.l.b16 %v2334
  %v2351 = vunpack.c.l.b16 %v2335
  %v2352 = vpack.c.b16 %v2345, %v2344
  %v2353 = vpack.c.b16 %v2347, %v2346
  %v2354 = vpack.c.b16 %v2349, %v2348
  %v2355 = vpack.c.b16 %v2351, %v2350
  %2360 = vmatprep.subr.bf16.mxu0 0
  %2361 = vmatpush1.bf16.msra.mxu0 %v2352
  %2362 = vmatprep.subr.bf16.mxu0 0
  %2363 = vmatpush1.bf16.msra.mxu0 %v2353
  %2364 = vmatprep.subr.bf16.mxu0 0
  %2365 = vmatpush1.bf16.msra.mxu0 %v2354
  %2366 = vmatprep.subr.bf16.mxu0 0
  %2367 = vmatpush1.bf16.msra.mxu0 %v2355
  %2368 = vmatprep.subr.bf16.mxu0 0
  %2369 = vmatpush1.bf16.msra.mxu0 0
  %2370 = vmatprep.subr.bf16.mxu0 0
  %2371 = vmatpush1.bf16.msra.mxu0 0
  %2372 = vmatprep.subr.bf16.mxu0 0
  %2373 = vmatpush1.bf16.msra.mxu0 0
  %2374 = vmatprep.subr.bf16.mxu0 0
  %2375 = vmatpush1.bf16.msra.mxu0 0
  %2376 = vmatprep.subr.bf16.mxu0 0
  %2377 = vmatpush1.bf16.msra.mxu0 0
  %2378 = vmatprep.subr.bf16.mxu0 0
  %2379 = vmatpush1.bf16.msra.mxu0 0
  %2380 = vmatprep.subr.bf16.mxu0 0
  %2381 = vmatpush1.bf16.msra.mxu0 0
  %2382 = vmatprep.subr.bf16.mxu0 0
  %2383 = vmatpush1.bf16.msra.mxu0 0
  %2384 = vmatprep.subr.bf16.mxu0 0
  %2385 = vmatpush1.bf16.msra.mxu0 0
  %2386 = vmatprep.subr.bf16.mxu0 0
  %2387 = vmatpush1.bf16.msra.mxu0 0
  %2388 = vmatprep.subr.bf16.mxu0 0
  %2389 = vmatpush1.bf16.msra.mxu0 0
  %2390 = vmatprep.subr.bf16.mxu0 0
  %2391 = vmatpush1.bf16.msra.mxu0 0
  %2392 = vmatprep.mubr.bf16.mxu0 0
  %2393 = vmatmul.mubr.bf16.gmra.mrb[0].mxu0 %v1863
  %v2394 = vpop.f32.mrb[0].mxu0
  %v2395 = vadd.f32 0.0, %v2394
  %v2396 = vpop.f32.mrb[0].mxu0
  %v2397 = vpop.f32.mrb[0].mxu0
  %v2398 = vadd.f32 0.0, %v2397
  %v2399 = vpop.f32.mrb[0].mxu0
  %2400 = vmatprep.mubr.bf16.mxu0 0
  %2401 = vmatmul.mubr.bf16.gmra.mrb[0].mxu0 %v1866
  %v2402 = vpop.f32.mrb[0].mxu0
  %v2403 = vadd.f32 0.0, %v2402
  %v2404 = vpop.f32.mrb[0].mxu0
  %v2405 = vpop.f32.mrb[0].mxu0
  %v2406 = vadd.f32 0.0, %v2405
  %v2407 = vpop.f32.mrb[0].mxu0
  %2408 = vdwg.mxu0
  %s2409 = scalar_lea.vmem %s2, 224
  %v2410 = vld [vmem:[%s2409] sm:$0xf]
  %v2411 = vld [vmem:[%s2409 + $0x4] sm:$0xf]
  %v2412 = vld [vmem:[%s2409 + $0x8] sm:$0xf]
  %v2413 = vld [vmem:[%s2409 + $0xc] sm:$0xf]
  %v2414 = vld [vmem:[%s2409 + $0x10] sm:$0xf]
  %v2415 = vld [vmem:[%s2409 + $0x14] sm:$0xf]
  %v2416 = vld [vmem:[%s2409 + $0x18] sm:$0xf]
  %v2417 = vld [vmem:[%s2409 + $0x1c] sm:$0xf]
  %v2426 = vunpack.c.l.b16 %v2410
  %v2427 = vunpack.c.l.b16 %v2411
  %v2428 = vunpack.c.l.b16 %v2412
  %v2429 = vunpack.c.l.b16 %v2413
  %v2430 = vunpack.c.l.b16 %v2414
  %v2431 = vunpack.c.l.b16 %v2415
  %v2432 = vunpack.c.l.b16 %v2416
  %v2433 = vunpack.c.l.b16 %v2417
  %v2434 = vpack.c.b16 %v2427, %v2426
  %v2435 = vpack.c.b16 %v2429, %v2428
  %v2436 = vpack.c.b16 %v2431, %v2430
  %v2437 = vpack.c.b16 %v2433, %v2432
  %2442 = vmatprep.subr.bf16.mxu0 0
  %2443 = vmatpush1.bf16.msra.mxu0 %v2434
  %2444 = vmatprep.subr.bf16.mxu0 0
  %2445 = vmatpush1.bf16.msra.mxu0 %v2435
  %2446 = vmatprep.subr.bf16.mxu0 0
  %2447 = vmatpush1.bf16.msra.mxu0 %v2436
  %2448 = vmatprep.subr.bf16.mxu0 0
  %2449 = vmatpush1.bf16.msra.mxu0 %v2437
  %2450 = vmatprep.subr.bf16.mxu0 0
  %2451 = vmatpush1.bf16.msra.mxu0 0
  %2452 = vmatprep.subr.bf16.mxu0 0
  %2453 = vmatpush1.bf16.msra.mxu0 0
  %2454 = vmatprep.subr.bf16.mxu0 0
  %2455 = vmatpush1.bf16.msra.mxu0 0
  %2456 = vmatprep.subr.bf16.mxu0 0
  %2457 = vmatpush1.bf16.msra.mxu0 0
  %2458 = vmatprep.subr.bf16.mxu0 0
  %2459 = vmatpush1.bf16.msra.mxu0 0
  %2460 = vmatprep.subr.bf16.mxu0 0
  %2461 = vmatpush1.bf16.msra.mxu0 0
  %2462 = vmatprep.subr.bf16.mxu0 0
  %2463 = vmatpush1.bf16.msra.mxu0 0
  %2464 = vmatprep.subr.bf16.mxu0 0
  %2465 = vmatpush1.bf16.msra.mxu0 0
  %2466 = vmatprep.subr.bf16.mxu0 0
  %2467 = vmatpush1.bf16.msra.mxu0 0
  %2468 = vmatprep.subr.bf16.mxu0 0
  %2469 = vmatpush1.bf16.msra.mxu0 0
  %2470 = vmatprep.subr.bf16.mxu0 0
  %2471 = vmatpush1.bf16.msra.mxu0 0
  %2472 = vmatprep.subr.bf16.mxu0 0
  %2473 = vmatpush1.bf16.msra.mxu0 0
  %2474 = vmatprep.mubr.bf16.mxu0 0
  %2475 = vmatmul.mubr.bf16.gmra.mrb[0].mxu0 %v1863
  %v2476 = vpop.f32.mrb[0].mxu0
  %v2477 = vadd.f32 0.0, %v2476
  %v2478 = vpop.f32.mrb[0].mxu0
  %v2479 = vpop.f32.mrb[0].mxu0
  %v2480 = vadd.f32 0.0, %v2479
  %v2481 = vpop.f32.mrb[0].mxu0
  %2482 = vmatprep.mubr.bf16.mxu0 0
  %2483 = vmatmul.mubr.bf16.gmra.mrb[0].mxu0 %v1866
  %v2484 = vpop.f32.mrb[0].mxu0
  %v2485 = vadd.f32 0.0, %v2484
  %v2486 = vpop.f32.mrb[0].mxu0
  %v2487 = vpop.f32.mrb[0].mxu0
  %v2488 = vadd.f32 0.0, %v2487
  %v2489 = vpop.f32.mrb[0].mxu0
  %2490 = vdwg.mxu0
  %s2491 = scalar_lea.vmem %s2, 256
  %v2492 = vld [vmem:[%s2491] sm:$0xf]
  %v2493 = vld [vmem:[%s2491 + $0x4] sm:$0xf]
  %v2494 = vld [vmem:[%s2491 + $0x8] sm:$0xf]
  %v2495 = vld [vmem:[%s2491 + $0xc] sm:$0xf]
  %v2496 = vld [vmem:[%s2491 + $0x10] sm:$0xf]
  %v2497 = vld [vmem:[%s2491 + $0x14] sm:$0xf]
  %v2498 = vld [vmem:[%s2491 + $0x18] sm:$0xf]
  %v2499 = vld [vmem:[%s2491 + $0x1c] sm:$0xf]
  %v2508 = vunpack.c.l.b16 %v2492
  %v2509 = vunpack.c.l.b16 %v2493
  %v2510 = vunpack.c.l.b16 %v2494
  %v2511 = vunpack.c.l.b16 %v2495
  %v2512 = vunpack.c.l.b16 %v2496
  %v2513 = vunpack.c.l.b16 %v2497
  %v2514 = vunpack.c.l.b16 %v2498
  %v2515 = vunpack.c.l.b16 %v2499
  %v2516 = vpack.c.b16 %v2509, %v2508
  %v2517 = vpack.c.b16 %v2511, %v2510
  %v2518 = vpack.c.b16 %v2513, %v2512
  %v2519 = vpack.c.b16 %v2515, %v2514
  %2524 = vmatprep.subr.bf16.mxu0 0
  %2525 = vmatpush1.bf16.msra.mxu0 %v2516
  %2526 = vmatprep.subr.bf16.mxu0 0
  %2527 = vmatpush1.bf16.msra.mxu0 %v2517
  %2528 = vmatprep.subr.bf16.mxu0 0
  %2529 = vmatpush1.bf16.msra.mxu0 %v2518
  %2530 = vmatprep.subr.bf16.mxu0 0
  %2531 = vmatpush1.bf16.msra.mxu0 %v2519
  %2532 = vmatprep.subr.bf16.mxu0 0
  %2533 = vmatpush1.bf16.msra.mxu0 0
  %2534 = vmatprep.subr.bf16.mxu0 0
  %2535 = vmatpush1.bf16.msra.mxu0 0
  %2536 = vmatprep.subr.bf16.mxu0 0
  %2537 = vmatpush1.bf16.msra.mxu0 0
  %2538 = vmatprep.subr.bf16.mxu0 0
  %2539 = vmatpush1.bf16.msra.mxu0 0
  %2540 = vmatprep.subr.bf16.mxu0 0
  %2541 = vmatpush1.bf16.msra.mxu0 0
  %2542 = vmatprep.subr.bf16.mxu0 0
  %2543 = vmatpush1.bf16.msra.mxu0 0
  %2544 = vmatprep.subr.bf16.mxu0 0
  %2545 = vmatpush1.bf16.msra.mxu0 0
  %2546 = vmatprep.subr.bf16.mxu0 0
  %2547 = vmatpush1.bf16.msra.mxu0 0
  %2548 = vmatprep.subr.bf16.mxu0 0
  %2549 = vmatpush1.bf16.msra.mxu0 0
  %2550 = vmatprep.subr.bf16.mxu0 0
  %2551 = vmatpush1.bf16.msra.mxu0 0
  %2552 = vmatprep.subr.bf16.mxu0 0
  %2553 = vmatpush1.bf16.msra.mxu0 0
  %2554 = vmatprep.subr.bf16.mxu0 0
  %2555 = vmatpush1.bf16.msra.mxu0 0
  %2556 = vmatprep.mubr.bf16.mxu0 0
  %2557 = vmatmul.mubr.bf16.gmra.mrb[0].mxu0 %v1863
  %v2558 = vpop.f32.mrb[0].mxu0
  %v2559 = vadd.f32 0.0, %v2558
  %v2560 = vpop.f32.mrb[0].mxu0
  %v2561 = vpop.f32.mrb[0].mxu0
  %v2562 = vadd.f32 0.0, %v2561
  %v2563 = vpop.f32.mrb[0].mxu0
  %2564 = vmatprep.mubr.bf16.mxu0 0
  %2565 = vmatmul.mubr.bf16.gmra.mrb[0].mxu0 %v1866
  %v2566 = vpop.f32.mrb[0].mxu0
  %v2567 = vadd.f32 0.0, %v2566
  %v2568 = vpop.f32.mrb[0].mxu0
  %v2569 = vpop.f32.mrb[0].mxu0
  %v2570 = vadd.f32 0.0, %v2569
  %v2571 = vpop.f32.mrb[0].mxu0
  %2572 = vdwg.mxu0
  %v2573 = vld [vmem:[%s9] sm:$0xff]
  %v2574 = vld [vmem:[%s9 + $0x8] sm:$0xff]
  %v2575 = vld [vmem:[%s9 + $0x10] sm:$0xff]
  %v2576 = vld [vmem:[%s9 + $0x18] sm:$0xff]
  %v2577 = vld [vmem:[%s9 + $0x20] sm:$0xff]
  %v2578 = vld [vmem:[%s9 + $0x28] sm:$0xff]
  %v2579 = vld [vmem:[%s9 + $0x30] sm:$0xff]
  %v2580 = vld [vmem:[%s9 + $0x38] sm:$0xff]
  %v2581 = vld [vmem:[%s9 + $0x40] sm:$0xff]
  %v2582 = vld [vmem:[%s9 + $0x48] sm:$0xff]
  %v2583 = vld [vmem:[%s9 + $0x50] sm:$0xff]
  %v2584 = vld [vmem:[%s9 + $0x58] sm:$0xff]
  %vm2585 = vcmask 261120
  %v2587 = vsel %vm2585, %v2575, 0
  %v2590 = vsel %vm2585, %v2578, 0
  %v2593 = vsel %vm2585, %v2581, 0
  %v2596 = vsel %vm2585, %v2584, 0
  %2598 = vmatprep.subr.mxu0 0.0
  %2599 = vmatpush1.msra.mxu0 %v1903
  %2600 = vmatprep.subr.mxu0 0.0
  %2601 = vmatpush1.msra.mxu0 %v1906
  %2602 = vmatprep.subr.mxu0 0.0
  %2603 = vmatpush1.msra.mxu0 %v1911
  %2604 = vmatprep.subr.mxu0 0.0
  %2605 = vmatpush1.msra.mxu0 %v1914
  %2606 = vmatprep.subr.mxu0 0.0
  %2607 = vmatpush1.msra.mxu0 %v1985
  %2608 = vmatprep.subr.mxu0 0.0
  %2609 = vmatpush1.msra.mxu0 %v1988
  %2610 = vmatprep.subr.mxu0 0.0
  %2611 = vmatpush1.msra.mxu0 %v1993
  %2612 = vmatprep.subr.mxu0 0.0
  %2613 = vmatpush1.msra.mxu0 %v1996
  %2614 = vmatprep.subr.mxu0 0.0
  %2615 = vmatpush1.msra.mxu0 %v2067
  %2616 = vmatprep.subr.mxu0 0.0
  %2617 = vmatpush1.msra.mxu0 %v2070
  %2618 = vmatprep.subr.mxu0 0.0
  %2619 = vmatpush1.msra.mxu0 %v2075
  %2620 = vmatprep.subr.mxu0 0.0
  %2621 = vmatpush1.msra.mxu0 %v2078
  %2622 = vmatprep.subr.mxu0 0.0
  %2623 = vmatpush1.msra.mxu0 %v2149
  %2624 = vmatprep.subr.mxu0 0.0
  %2625 = vmatpush1.msra.mxu0 %v2152
  %2626 = vmatprep.subr.mxu0 0.0
  %2627 = vmatpush1.msra.mxu0 %v2157
  %2628 = vmatprep.subr.mxu0 0.0
  %2629 = vmatpush1.msra.mxu0 %v2160
  %2630 = vmatprep.subr.mxu0 0.0
  %2631 = vmatpush1.msra.mxu0 %v2231
  %2632 = vmatprep.subr.mxu0 0.0
  %2633 = vmatpush1.msra.mxu0 %v2234
  %2634 = vmatprep.subr.mxu0 0.0
  %2635 = vmatpush1.msra.mxu0 %v2239
  %2636 = vmatprep.subr.mxu0 0.0
  %2637 = vmatpush1.msra.mxu0 %v2242
  %2638 = vmatprep.subr.mxu0 0.0
  %2639 = vmatpush1.msra.mxu0 %v2313
  %2640 = vmatprep.subr.mxu0 0.0
  %2641 = vmatpush1.msra.mxu0 %v2316
  %2642 = vmatprep.subr.mxu0 0.0
  %2643 = vmatpush1.msra.mxu0 %v2321
  %2644 = vmatprep.subr.mxu0 0.0
  %2645 = vmatpush1.msra.mxu0 %v2324
  %2646 = vmatprep.subr.mxu0 0.0
  %2647 = vmatpush1.msra.mxu0 %v2395
  %2648 = vmatprep.subr.mxu0 0.0
  %2649 = vmatpush1.msra.mxu0 %v2398
  %2650 = vmatprep.subr.mxu0 0.0
  %2651 = vmatpush1.msra.mxu0 %v2403
  %2652 = vmatprep.subr.mxu0 0.0
  %2653 = vmatpush1.msra.mxu0 %v2406
  %2654 = vmatprep.subr.mxu0 0.0
  %2655 = vmatpush1.msra.mxu0 %v2477
  %2656 = vmatprep.subr.mxu0 0.0
  %2657 = vmatpush1.msra.mxu0 %v2480
  %2658 = vmatprep.subr.mxu0 0.0
  %2659 = vmatpush1.msra.mxu0 %v2485
  %2660 = vmatprep.subr.mxu0 0.0
  %2661 = vmatpush1.msra.mxu0 %v2488
  %2662 = vmatprep.mubr.f32.mxu0 %v2574
  %2663 = vmatmul.mubr.f32.gmra.mrb[0].mxu0 %v2573
  %v2664 = vpop.f32.mrb[0].mxu0
  %v2665 = vadd.f32 0.0, %v2664
  %v2666 = vpop.f32.mrb[0].mxu0
  %2667 = vmatprep.mubr.f32.mxu0 %v2577
  %2668 = vmatmul.mubr.f32.gmra.mrb[0].mxu0 %v2576
  %v2669 = vpop.f32.mrb[0].mxu0
  %v2670 = vadd.f32 0.0, %v2669
  %v2671 = vpop.f32.mrb[0].mxu0
  %2672 = vmatprep.mubr.f32.mxu0 %v2580
  %2673 = vmatmul.mubr.f32.gmra.mrb[0].mxu0 %v2579
  %v2674 = vpop.f32.mrb[0].mxu0
  %v2675 = vadd.f32 0.0, %v2674
  %v2676 = vpop.f32.mrb[0].mxu0
  %2677 = vmatprep.mubr.f32.mxu0 %v2583
  %2678 = vmatmul.mubr.f32.gmra.mrb[0].mxu0 %v2582
  %v2679 = vpop.f32.mrb[0].mxu0
  %v2680 = vadd.f32 0.0, %v2679
  %v2681 = vpop.f32.mrb[0].mxu0
  %2682 = vdwg.mxu0
  %2683 = vmatprep.subr.mxu0 0.0
  %2684 = vmatpush1.msra.mxu0 %v2559
  %2685 = vmatprep.subr.mxu0 0.0
  %2686 = vmatpush1.msra.mxu0 %v2562
  %2687 = vmatprep.subr.mxu0 0.0
  %2688 = vmatpush1.msra.mxu0 %v2567
  %2689 = vmatprep.subr.mxu0 0.0
  %2690 = vmatpush1.msra.mxu0 %v2570
  %2691 = vmatprep.subr.mxu0 0.0
  %2692 = vmatpush1.msra.mxu0 0.0
  %2693 = vmatprep.subr.mxu0 0.0
  %2694 = vmatpush1.msra.mxu0 0.0
  %2695 = vmatprep.subr.mxu0 0.0
  %2696 = vmatpush1.msra.mxu0 0.0
  %2697 = vmatprep.subr.mxu0 0.0
  %2698 = vmatpush1.msra.mxu0 0.0
  %2699 = vmatprep.subr.mxu0 0.0
  %2700 = vmatpush1.msra.mxu0 0.0
  %2701 = vmatprep.subr.mxu0 0.0
  %2702 = vmatpush1.msra.mxu0 0.0
  %2703 = vmatprep.subr.mxu0 0.0
  %2704 = vmatpush1.msra.mxu0 0.0
  %2705 = vmatprep.subr.mxu0 0.0
  %2706 = vmatpush1.msra.mxu0 0.0
  %2707 = vmatprep.subr.mxu0 0.0
  %2708 = vmatpush1.msra.mxu0 0.0
  %2709 = vmatprep.subr.mxu0 0.0
  %2710 = vmatpush1.msra.mxu0 0.0
  %2711 = vmatprep.subr.mxu0 0.0
  %2712 = vmatpush1.msra.mxu0 0.0
  %2713 = vmatprep.subr.mxu0 0.0
  %2714 = vmatpush1.msra.mxu0 0.0
  %2715 = vmatprep.subr.mxu0 0.0
  %2716 = vmatpush1.msra.mxu0 0.0
  %2717 = vmatprep.subr.mxu0 0.0
  %2718 = vmatpush1.msra.mxu0 0.0
  %2719 = vmatprep.subr.mxu0 0.0
  %2720 = vmatpush1.msra.mxu0 0.0
  %2721 = vmatprep.subr.mxu0 0.0
  %2722 = vmatpush1.msra.mxu0 0.0
  %2723 = vmatprep.subr.mxu0 0.0
  %2724 = vmatpush1.msra.mxu0 0.0
  %2725 = vmatprep.subr.mxu0 0.0
  %2726 = vmatpush1.msra.mxu0 0.0
  %2727 = vmatprep.subr.mxu0 0.0
  %2728 = vmatpush1.msra.mxu0 0.0
  %2729 = vmatprep.subr.mxu0 0.0
  %2730 = vmatpush1.msra.mxu0 0.0
  %2731 = vmatprep.subr.mxu0 0.0
  %2732 = vmatpush1.msra.mxu0 0.0
  %2733 = vmatprep.subr.mxu0 0.0
  %2734 = vmatpush1.msra.mxu0 0.0
  %2735 = vmatprep.subr.mxu0 0.0
  %2736 = vmatpush1.msra.mxu0 0.0
  %2737 = vmatprep.subr.mxu0 0.0
  %2738 = vmatpush1.msra.mxu0 0.0
  %2739 = vmatprep.subr.mxu0 0.0
  %2740 = vmatpush1.msra.mxu0 0.0
  %2741 = vmatprep.subr.mxu0 0.0
  %2742 = vmatpush1.msra.mxu0 0.0
  %2743 = vmatprep.subr.mxu0 0.0
  %2744 = vmatpush1.msra.mxu0 0.0
  %2745 = vmatprep.subr.mxu0 0.0
  %2746 = vmatpush1.msra.mxu0 0.0
  %2747 = vmatprep.mubr.f32.mxu0 0.0
  %2748 = vmatmul.mubr.f32.gmra.mrb[0].mxu0 %v2587
  %v2749 = vpop.f32.mrb[0].mxu0
  %v2750 = vadd.f32 %v2665, %v2749
  %v2751 = vpop.f32.mrb[0].mxu0
  %2752 = vmatprep.mubr.f32.mxu0 0.0
  %2753 = vmatmul.mubr.f32.gmra.mrb[0].mxu0 %v2590
  %v2754 = vpop.f32.mrb[0].mxu0
  %v2755 = vadd.f32 %v2670, %v2754
  %v2756 = vpop.f32.mrb[0].mxu0
  %2757 = vmatprep.mubr.f32.mxu0 0.0
  %2758 = vmatmul.mubr.f32.gmra.mrb[0].mxu0 %v2593
  %v2759 = vpop.f32.mrb[0].mxu0
  %v2760 = vadd.f32 %v2675, %v2759
  %v2761 = vpop.f32.mrb[0].mxu0
  %2762 = vmatprep.mubr.f32.mxu0 0.0
  %2763 = vmatmul.mubr.f32.gmra.mrb[0].mxu0 %v2596
  %v2764 = vpop.f32.mrb[0].mxu0
  %v2765 = vadd.f32 %v2680, %v2764
  %v2766 = vpop.f32.mrb[0].mxu0
  %2767 = vdwg.mxu0
  %v2768 = vsel %vm1689, %v2750, 0.0
  %2769 = vadd.xlane.f32.xlu0 %v2768
  %v2770 = vpop.xlane.xlu0 %2769
  %v2771 = vsel %vm1689, %v2755, 0.0
  %2772 = vadd.xlane.f32.xlu0 %v2771
  %v2773 = vpop.xlane.xlu0 %2772
  %v2774 = vsel %vm1689, %v2760, 0.0
  %2775 = vadd.xlane.f32.xlu0 %v2774
  %v2776 = vpop.xlane.xlu0 %2775
  %v2777 = vsel %vm1689, %v2765, 0.0
  %2778 = vadd.xlane.f32.xlu0 %v2777
  %v2779 = vpop.xlane.xlu0 %2778
  %v2780 = vadd.f32 %v2770, %v2776
  %v2781 = vadd.f32 %v2773, %v2779
  %v2782 = vmul.f32 %v2750, %v2750
  %v2783 = vmul.f32 %v2755, %v2755
  %v2784 = vmul.f32 %v2760, %v2760
  %v2785 = vmul.f32 %v2765, %v2765
  %v2786 = vsel %vm1689, %v2782, 0.0
  %2787 = vadd.xlane.f32.xlu0 %v2786
  %v2788 = vpop.xlane.xlu0 %2787
  %v2789 = vsel %vm1689, %v2783, 0.0
  %2790 = vadd.xlane.f32.xlu0 %v2789
  %v2791 = vpop.xlane.xlu0 %2790
  %v2792 = vsel %vm1689, %v2784, 0.0
  %2793 = vadd.xlane.f32.xlu0 %v2792
  %v2794 = vpop.xlane.xlu0 %2793
  %v2795 = vsel %vm1689, %v2785, 0.0
  %2796 = vadd.xlane.f32.xlu0 %v2795
  %v2797 = vpop.xlane.xlu0 %2796
  %v2798 = vadd.f32 %v2788, %v2794
  %v2799 = vadd.f32 %v2791, %v2797
  %v2800 = vmul.f32 %v2780, 0.0078125
  %v2801 = vmul.f32 %v2781, 0.0078125
  %v2802 = vmul.f32 %v2798, 0.0078125
  %v2803 = vmul.f32 %v2799, 0.0078125
  %v2804 = vmul.f32 %v2800, %v2800
  %v2805 = vmul.f32 %v2801, %v2801
  %v2806 = vsub.f32 %v2802, %v2804
  %v2807 = vsub.f32 %v2803, %v2805
  %v2808 = vmax.f32 %v2806, 0.0
  %v2809 = vmax.f32 %v2807, 0.0
  %s2810 = scalar_lea.vmem %s18, 32
  %v2811 = vld [vmem:[%s2810] sm:$0xff]
  %v2812 = vld [vmem:[%s2810 + $0x8] sm:$0xff]
  %v2813 = vld [vmem:[%s2810 + $0x10] sm:$0xff]
  %v2814 = vld [vmem:[%s2810 + $0x18] sm:$0xff]
  %v2815 = vadd.f32 %v2808, 1e-05
  %v2816 = vadd.f32 %v2809, 1e-05
  %v2817 = vrsqrt.pop %v2815
  %v2818 = vrsqrt.pop %v2816
  %v2819 = vmul.f32 %v2811, %v2817
  %v2820 = vmul.f32 %v2812, %v2818
  %v2821 = vmul.f32 %v2813, %v2817
  %v2822 = vmul.f32 %v2814, %v2818
  %v2823 = vmul.f32 %v2800, %v2819
  %v2824 = vmul.f32 %v2801, %v2820
  %v2825 = vmul.f32 %v2800, %v2821
  %v2826 = vmul.f32 %v2801, %v2822
  %2831 = vrot.lane.b32.xlu0 %v2823, 1
  %v2832 = vpop.permute.xlu0 %2831
  %2833 = vrot.lane.b32.xlu0 %v2824, 1
  %v2834 = vpop.permute.xlu0 %2833
  %2835 = vrot.lane.b32.xlu0 %v2825, 1
  %v2836 = vpop.permute.xlu0 %2835
  %2837 = vrot.lane.b32.xlu0 %v2826, 1
  %v2838 = vpop.permute.xlu0 %2837
  %v2843 = vsub.f32 %v2811, %v2832
  %v2844 = vsub.f32 %v2812, %v2834
  %v2845 = vsub.f32 %v2813, %v2836
  %v2846 = vsub.f32 %v2814, %v2838
  %2848 = vset.pattern.permute.xlu0 0
  %2849 = vperm.xlu0 %2848, %v2819
  %v2850 = vpop.permute.xlu0 %2849
  %2853 = vset.pattern.permute.xlu0 0
  %2854 = vperm.xlu0 %2853, %v2820
  %v2855 = vpop.permute.xlu0 %2854
  %2858 = vset.pattern.permute.xlu0 0
  %2859 = vperm.xlu0 %2858, %v2821
  %v2860 = vpop.permute.xlu0 %2859
  %2863 = vset.pattern.permute.xlu0 0
  %2864 = vperm.xlu0 %2863, %v2822
  %v2865 = vpop.permute.xlu0 %2864
  %v2867 = vmul.f32 %v2750, %v2850
  %v2868 = vmul.f32 %v2755, %v2855
  %v2869 = vmul.f32 %v2760, %v2860
  %v2870 = vmul.f32 %v2765, %v2865
  %2872 = vset.pattern.permute.xlu0 1
  %2873 = vperm.xlu0 %2872, %v2843
  %v2874 = vpop.permute.xlu0 %2873
  %2877 = vset.pattern.permute.xlu0 1
  %2878 = vperm.xlu0 %2877, %v2844
  %v2879 = vpop.permute.xlu0 %2878
  %2882 = vset.pattern.permute.xlu0 1
  %2883 = vperm.xlu0 %2882, %v2845
  %v2884 = vpop.permute.xlu0 %2883
  %2887 = vset.pattern.permute.xlu0 1
  %2888 = vperm.xlu0 %2887, %v2846
  %v2889 = vpop.permute.xlu0 %2888
  %v2891 = vadd.f32 %v2867, %v2874
  %v2892 = vadd.f32 %v2868, %v2879
  %v2893 = vadd.f32 %v2869, %v2884
  %v2894 = vadd.f32 %v2870, %v2889
  %vm2895 = vcmp.ge.f32.partialorder %v2891, 0.0
  %vm2896 = vcmp.ge.f32.partialorder %v2892, 0.0
  %vm2897 = vcmp.ge.f32.partialorder %v2893, 0.0
  %vm2898 = vcmp.ge.f32.partialorder %v2894, 0.0
  %v2899 = vmul.f32 %v2891, 0.2
  %v2900 = vmul.f32 %v2892, 0.2
  %v2901 = vmul.f32 %v2893, 0.2
  %v2902 = vmul.f32 %v2894, 0.2
  %v2903 = vsel %vm2895, %v2891, %v2899
  %v2904 = vsel %vm2896, %v2892, %v2900
  %v2905 = vsel %vm2897, %v2893, %v2901
  %v2906 = vsel %vm2898, %v2894, %v2902
  %v2907 = vld [vmem:[%s10] sm:$0xff]
  %v2908 = vld [vmem:[%s10 + $0x8] sm:$0xff]
  %v2910 = vsel %vm2585, %v2907, 0
  %v2913 = vsel %vm2585, %v2908, 0
  %2915 = vmatprep.subr.mxu0 0.0
  %2916 = vmatpush1.msra.mxu0 %v2903
  %2917 = vmatprep.subr.mxu0 0.0
  %2918 = vmatpush1.msra.mxu0 %v2904
  %2919 = vmatprep.subr.mxu0 0.0
  %2920 = vmatpush1.msra.mxu0 %v2905
  %2921 = vmatprep.subr.mxu0 0.0
  %2922 = vmatpush1.msra.mxu0 %v2906
  %2923 = vmatprep.subr.mxu0 0.0
  %2924 = vmatpush1.msra.mxu0 0.0
  %2925 = vmatprep.subr.mxu0 0.0
  %2926 = vmatpush1.msra.mxu0 0.0
  %2927 = vmatprep.subr.mxu0 0.0
  %2928 = vmatpush1.msra.mxu0 0.0
  %2929 = vmatprep.subr.mxu0 0.0
  %2930 = vmatpush1.msra.mxu0 0.0
  %2931 = vmatprep.subr.mxu0 0.0
  %2932 = vmatpush1.msra.mxu0 0.0
  %2933 = vmatprep.subr.mxu0 0.0
  %2934 = vmatpush1.msra.mxu0 0.0
  %2935 = vmatprep.subr.mxu0 0.0
  %2936 = vmatpush1.msra.mxu0 0.0
  %2937 = vmatprep.subr.mxu0 0.0
  %2938 = vmatpush1.msra.mxu0 0.0
  %2939 = vmatprep.subr.mxu0 0.0
  %2940 = vmatpush1.msra.mxu0 0.0
  %2941 = vmatprep.subr.mxu0 0.0
  %2942 = vmatpush1.msra.mxu0 0.0
  %2943 = vmatprep.subr.mxu0 0.0
  %2944 = vmatpush1.msra.mxu0 0.0
  %2945 = vmatprep.subr.mxu0 0.0
  %2946 = vmatpush1.msra.mxu0 0.0
  %2947 = vmatprep.subr.mxu0 0.0
  %2948 = vmatpush1.msra.mxu0 0.0
  %2949 = vmatprep.subr.mxu0 0.0
  %2950 = vmatpush1.msra.mxu0 0.0
  %2951 = vmatprep.subr.mxu0 0.0
  %2952 = vmatpush1.msra.mxu0 0.0
  %2953 = vmatprep.subr.mxu0 0.0
  %2954 = vmatpush1.msra.mxu0 0.0
  %2955 = vmatprep.subr.mxu0 0.0
  %2956 = vmatpush1.msra.mxu0 0.0
  %2957 = vmatprep.subr.mxu0 0.0
  %2958 = vmatpush1.msra.mxu0 0.0
  %2959 = vmatprep.subr.mxu0 0.0
  %2960 = vmatpush1.msra.mxu0 0.0
  %2961 = vmatprep.subr.mxu0 0.0
  %2962 = vmatpush1.msra.mxu0 0.0
  %2963 = vmatprep.subr.mxu0 0.0
  %2964 = vmatpush1.msra.mxu0 0.0
  %2965 = vmatprep.subr.mxu0 0.0
  %2966 = vmatpush1.msra.mxu0 0.0
  %2967 = vmatprep.subr.mxu0 0.0
  %2968 = vmatpush1.msra.mxu0 0.0
  %2969 = vmatprep.subr.mxu0 0.0
  %2970 = vmatpush1.msra.mxu0 0.0
  %2971 = vmatprep.subr.mxu0 0.0
  %2972 = vmatpush1.msra.mxu0 0.0
  %2973 = vmatprep.subr.mxu0 0.0
  %2974 = vmatpush1.msra.mxu0 0.0
  %2975 = vmatprep.subr.mxu0 0.0
  %2976 = vmatpush1.msra.mxu0 0.0
  %2977 = vmatprep.subr.mxu0 0.0
  %2978 = vmatpush1.msra.mxu0 0.0
  %2979 = vmatprep.mubr.f32.mxu0 0.0
  %2980 = vmatmul.mubr.f32.gmra.mrb[0].mxu0 %v2910
  %v2981 = vpop.f32.mrb[0].mxu0
  %v2982 = vadd.f32 0.0, %v2981
  %v2983 = vpop.f32.mrb[0].mxu0
  %2984 = vmatprep.mubr.f32.mxu0 0.0
  %2985 = vmatmul.mubr.f32.gmra.mrb[0].mxu0 %v2913
  %v2986 = vpop.f32.mrb[0].mxu0
  %v2987 = vadd.f32 0.0, %v2986
  %v2988 = vpop.f32.mrb[0].mxu0
  %2989 = vdwg.mxu0
  %v2990 = vsel %vm1689, %v2982, 0.0
  %2991 = vadd.xlane.f32.xlu0 %v2990
  %v2992 = vpop.xlane.xlu0 %2991
  %v2993 = vsel %vm1689, %v2987, 0.0
  %2994 = vadd.xlane.f32.xlu0 %v2993
  %v2995 = vpop.xlane.xlu0 %2994
  %v2996 = vadd.f32 %v2992, %v2995
  %v2997 = vmul.f32 %v2982, %v2982
  %v2998 = vmul.f32 %v2987, %v2987
  %v2999 = vsel %vm1689, %v2997, 0.0
  %3000 = vadd.xlane.f32.xlu0 %v2999
  %v3001 = vpop.xlane.xlu0 %3000
  %v3002 = vsel %vm1689, %v2998, 0.0
  %3003 = vadd.xlane.f32.xlu0 %v3002
  %v3004 = vpop.xlane.xlu0 %3003
  %v3005 = vadd.f32 %v3001, %v3004
  %v3006 = vmul.f32 %v2996, 0.0078125
  %v3007 = vmul.f32 %v3005, 0.0078125
  %v3008 = vmul.f32 %v3006, %v3006
  %v3009 = vsub.f32 %v3007, %v3008
  %v3010 = vmax.f32 %v3009, 0.0
  %s3011 = scalar_lea.vmem %s18, 64
  %v3012 = vld [vmem:[%s3011] sm:$0xff]
  %v3013 = vld [vmem:[%s3011 + $0x8] sm:$0xff]
  %v3014 = vadd.f32 %v3010, 1e-05
  %v3015 = vrsqrt.pop %v3014
  %v3016 = vmul.f32 %v3012, %v3015
  %v3017 = vmul.f32 %v3013, %v3015
  %v3018 = vmul.f32 %v3006, %v3016
  %v3019 = vmul.f32 %v3006, %v3017
  %3022 = vrot.lane.b32.xlu0 %v3018, 1
  %v3023 = vpop.permute.xlu0 %3022
  %3024 = vrot.lane.b32.xlu0 %v3019, 1
  %v3025 = vpop.permute.xlu0 %3024
  %v3028 = vsub.f32 %v3012, %v3023
  %v3029 = vsub.f32 %v3013, %v3025
  %3031 = vset.pattern.permute.xlu0 0
  %3032 = vperm.xlu0 %3031, %v3016
  %v3033 = vpop.permute.xlu0 %3032
  %3036 = vset.pattern.permute.xlu0 0
  %3037 = vperm.xlu0 %3036, %v3017
  %v3038 = vpop.permute.xlu0 %3037
  %v3040 = vmul.f32 %v2982, %v3033
  %v3041 = vmul.f32 %v2987, %v3038
  %3043 = vset.pattern.permute.xlu0 1
  %3044 = vperm.xlu0 %3043, %v3028
  %v3045 = vpop.permute.xlu0 %3044
  %3048 = vset.pattern.permute.xlu0 1
  %3049 = vperm.xlu0 %3048, %v3029
  %v3050 = vpop.permute.xlu0 %3049
  %v3052 = vadd.f32 %v3040, %v3045
  %v3053 = vadd.f32 %v3041, %v3050
  %vm3054 = vcmp.ge.f32.partialorder %v3052, 0.0
  %vm3055 = vcmp.ge.f32.partialorder %v3053, 0.0
  %v3056 = vmul.f32 %v3052, 0.2
  %v3057 = vmul.f32 %v3053, 0.2
  %v3058 = vsel %vm3054, %v3052, %v3056
  %v3059 = vsel %vm3055, %v3053, %v3057
  %v3060 = vpack.c.bf16 %v2904, %v2903
  %v3061 = vpack.c.bf16 %v2906, %v2905
  %v3062 = vld [vmem:[%s3] sm:$0xf]
  %v3063 = vld [vmem:[%s3 + $0x4] sm:$0xf]
  %v3064 = vld [vmem:[%s3 + $0x8] sm:$0xf]
  %v3065 = vld [vmem:[%s3 + $0xc] sm:$0xf]
  %v3066 = vld [vmem:[%s3 + $0x10] sm:$0xf]
  %v3067 = vld [vmem:[%s3 + $0x14] sm:$0xf]
  %v3068 = vld [vmem:[%s3 + $0x18] sm:$0xf]
  %v3069 = vld [vmem:[%s3 + $0x1c] sm:$0xf]
  %v3078 = vunpack.c.l.b16 %v3062
  %v3079 = vunpack.c.l.b16 %v3063
  %v3080 = vunpack.c.l.b16 %v3064
  %v3081 = vunpack.c.l.b16 %v3065
  %v3082 = vunpack.c.l.b16 %v3066
  %v3083 = vunpack.c.l.b16 %v3067
  %v3084 = vunpack.c.l.b16 %v3068
  %v3085 = vunpack.c.l.b16 %v3069
  %v3086 = vpack.c.b16 %v3079, %v3078
  %v3087 = vpack.c.b16 %v3081, %v3080
  %v3088 = vpack.c.b16 %v3083, %v3082
  %v3089 = vpack.c.b16 %v3085, %v3084
  %v3095 = vsel %vm1689, %v3060, 0
  %v3098 = vsel %vm1689, %v3061, 0
  %3100 = vmatprep.subr.bf16.mxu0 0
  %3101 = vmatpush1.bf16.msra.mxu0 %v3086
  %3102 = vmatprep.subr.bf16.mxu0 0
  %3103 = vmatpush1.bf16.msra.mxu0 %v3087
  %3104 = vmatprep.subr.bf16.mxu0 0
  %3105 = vmatpush1.bf16.msra.mxu0 %v3088
  %3106 = vmatprep.subr.bf16.mxu0 0
  %3107 = vmatpush1.bf16.msra.mxu0 %v3089
  %3108 = vmatprep.subr.bf16.mxu0 0
  %3109 = vmatpush1.bf16.msra.mxu0 0
  %3110 = vmatprep.subr.bf16.mxu0 0
  %3111 = vmatpush1.bf16.msra.mxu0 0
  %3112 = vmatprep.subr.bf16.mxu0 0
  %3113 = vmatpush1.bf16.msra.mxu0 0
  %3114 = vmatprep.subr.bf16.mxu0 0
  %3115 = vmatpush1.bf16.msra.mxu0 0
  %3116 = vmatprep.subr.bf16.mxu0 0
  %3117 = vmatpush1.bf16.msra.mxu0 0
  %3118 = vmatprep.subr.bf16.mxu0 0
  %3119 = vmatpush1.bf16.msra.mxu0 0
  %3120 = vmatprep.subr.bf16.mxu0 0
  %3121 = vmatpush1.bf16.msra.mxu0 0
  %3122 = vmatprep.subr.bf16.mxu0 0
  %3123 = vmatpush1.bf16.msra.mxu0 0
  %3124 = vmatprep.subr.bf16.mxu0 0
  %3125 = vmatpush1.bf16.msra.mxu0 0
  %3126 = vmatprep.subr.bf16.mxu0 0
  %3127 = vmatpush1.bf16.msra.mxu0 0
  %3128 = vmatprep.subr.bf16.mxu0 0
  %3129 = vmatpush1.bf16.msra.mxu0 0
  %3130 = vmatprep.subr.bf16.mxu0 0
  %3131 = vmatpush1.bf16.msra.mxu0 0
  %3132 = vmatprep.mubr.bf16.mxu0 0
  %3133 = vmatmul.mubr.bf16.gmra.mrb[0].mxu0 %v3095
  %v3134 = vpop.f32.mrb[0].mxu0
  %v3135 = vadd.f32 0.0, %v3134
  %v3136 = vpop.f32.mrb[0].mxu0
  %v3137 = vpop.f32.mrb[0].mxu0
  %v3138 = vadd.f32 0.0, %v3137
  %v3139 = vpop.f32.mrb[0].mxu0
  %3140 = vmatprep.mubr.bf16.mxu0 0
  %3141 = vmatmul.mubr.bf16.gmra.mrb[0].mxu0 %v3098
  %v3142 = vpop.f32.mrb[0].mxu0
  %v3143 = vadd.f32 0.0, %v3142
  %v3144 = vpop.f32.mrb[0].mxu0
  %v3145 = vpop.f32.mrb[0].mxu0
  %v3146 = vadd.f32 0.0, %v3145
  %v3147 = vpop.f32.mrb[0].mxu0
  %3148 = vdwg.mxu0
  %s3149 = scalar_lea.vmem %s3, 32
  %v3150 = vld [vmem:[%s3149] sm:$0xf]
  %v3151 = vld [vmem:[%s3149 + $0x4] sm:$0xf]
  %v3152 = vld [vmem:[%s3149 + $0x8] sm:$0xf]
  %v3153 = vld [vmem:[%s3149 + $0xc] sm:$0xf]
  %v3154 = vld [vmem:[%s3149 + $0x10] sm:$0xf]
  %v3155 = vld [vmem:[%s3149 + $0x14] sm:$0xf]
  %v3156 = vld [vmem:[%s3149 + $0x18] sm:$0xf]
  %v3157 = vld [vmem:[%s3149 + $0x1c] sm:$0xf]
  %v3166 = vunpack.c.l.b16 %v3150
  %v3167 = vunpack.c.l.b16 %v3151
  %v3168 = vunpack.c.l.b16 %v3152
  %v3169 = vunpack.c.l.b16 %v3153
  %v3170 = vunpack.c.l.b16 %v3154
  %v3171 = vunpack.c.l.b16 %v3155
  %v3172 = vunpack.c.l.b16 %v3156
  %v3173 = vunpack.c.l.b16 %v3157
  %v3174 = vpack.c.b16 %v3167, %v3166
  %v3175 = vpack.c.b16 %v3169, %v3168
  %v3176 = vpack.c.b16 %v3171, %v3170
  %v3177 = vpack.c.b16 %v3173, %v3172
  %3182 = vmatprep.subr.bf16.mxu0 0
  %3183 = vmatpush1.bf16.msra.mxu0 %v3174
  %3184 = vmatprep.subr.bf16.mxu0 0
  %3185 = vmatpush1.bf16.msra.mxu0 %v3175
  %3186 = vmatprep.subr.bf16.mxu0 0
  %3187 = vmatpush1.bf16.msra.mxu0 %v3176
  %3188 = vmatprep.subr.bf16.mxu0 0
  %3189 = vmatpush1.bf16.msra.mxu0 %v3177
  %3190 = vmatprep.subr.bf16.mxu0 0
  %3191 = vmatpush1.bf16.msra.mxu0 0
  %3192 = vmatprep.subr.bf16.mxu0 0
  %3193 = vmatpush1.bf16.msra.mxu0 0
  %3194 = vmatprep.subr.bf16.mxu0 0
  %3195 = vmatpush1.bf16.msra.mxu0 0
  %3196 = vmatprep.subr.bf16.mxu0 0
  %3197 = vmatpush1.bf16.msra.mxu0 0
  %3198 = vmatprep.subr.bf16.mxu0 0
  %3199 = vmatpush1.bf16.msra.mxu0 0
  %3200 = vmatprep.subr.bf16.mxu0 0
  %3201 = vmatpush1.bf16.msra.mxu0 0
  %3202 = vmatprep.subr.bf16.mxu0 0
  %3203 = vmatpush1.bf16.msra.mxu0 0
  %3204 = vmatprep.subr.bf16.mxu0 0
  %3205 = vmatpush1.bf16.msra.mxu0 0
  %3206 = vmatprep.subr.bf16.mxu0 0
  %3207 = vmatpush1.bf16.msra.mxu0 0
  %3208 = vmatprep.subr.bf16.mxu0 0
  %3209 = vmatpush1.bf16.msra.mxu0 0
  %3210 = vmatprep.subr.bf16.mxu0 0
  %3211 = vmatpush1.bf16.msra.mxu0 0
  %3212 = vmatprep.subr.bf16.mxu0 0
  %3213 = vmatpush1.bf16.msra.mxu0 0
  %3214 = vmatprep.mubr.bf16.mxu0 0
  %3215 = vmatmul.mubr.bf16.gmra.mrb[0].mxu0 %v3095
  %v3216 = vpop.f32.mrb[0].mxu0
  %v3217 = vadd.f32 0.0, %v3216
  %v3218 = vpop.f32.mrb[0].mxu0
  %v3219 = vpop.f32.mrb[0].mxu0
  %v3220 = vadd.f32 0.0, %v3219
  %v3221 = vpop.f32.mrb[0].mxu0
  %3222 = vmatprep.mubr.bf16.mxu0 0
  %3223 = vmatmul.mubr.bf16.gmra.mrb[0].mxu0 %v3098
  %v3224 = vpop.f32.mrb[0].mxu0
  %v3225 = vadd.f32 0.0, %v3224
  %v3226 = vpop.f32.mrb[0].mxu0
  %v3227 = vpop.f32.mrb[0].mxu0
  %v3228 = vadd.f32 0.0, %v3227
  %v3229 = vpop.f32.mrb[0].mxu0
  %3230 = vdwg.mxu0
  %s3231 = scalar_lea.vmem %s3, 64
  %v3232 = vld [vmem:[%s3231] sm:$0xf]
  %v3233 = vld [vmem:[%s3231 + $0x4] sm:$0xf]
  %v3234 = vld [vmem:[%s3231 + $0x8] sm:$0xf]
  %v3235 = vld [vmem:[%s3231 + $0xc] sm:$0xf]
  %v3236 = vld [vmem:[%s3231 + $0x10] sm:$0xf]
  %v3237 = vld [vmem:[%s3231 + $0x14] sm:$0xf]
  %v3238 = vld [vmem:[%s3231 + $0x18] sm:$0xf]
  %v3239 = vld [vmem:[%s3231 + $0x1c] sm:$0xf]
  %v3248 = vunpack.c.l.b16 %v3232
  %v3249 = vunpack.c.l.b16 %v3233
  %v3250 = vunpack.c.l.b16 %v3234
  %v3251 = vunpack.c.l.b16 %v3235
  %v3252 = vunpack.c.l.b16 %v3236
  %v3253 = vunpack.c.l.b16 %v3237
  %v3254 = vunpack.c.l.b16 %v3238
  %v3255 = vunpack.c.l.b16 %v3239
  %v3256 = vpack.c.b16 %v3249, %v3248
  %v3257 = vpack.c.b16 %v3251, %v3250
  %v3258 = vpack.c.b16 %v3253, %v3252
  %v3259 = vpack.c.b16 %v3255, %v3254
  %3264 = vmatprep.subr.bf16.mxu0 0
  %3265 = vmatpush1.bf16.msra.mxu0 %v3256
  %3266 = vmatprep.subr.bf16.mxu0 0
  %3267 = vmatpush1.bf16.msra.mxu0 %v3257
  %3268 = vmatprep.subr.bf16.mxu0 0
  %3269 = vmatpush1.bf16.msra.mxu0 %v3258
  %3270 = vmatprep.subr.bf16.mxu0 0
  %3271 = vmatpush1.bf16.msra.mxu0 %v3259
  %3272 = vmatprep.subr.bf16.mxu0 0
  %3273 = vmatpush1.bf16.msra.mxu0 0
  %3274 = vmatprep.subr.bf16.mxu0 0
  %3275 = vmatpush1.bf16.msra.mxu0 0
  %3276 = vmatprep.subr.bf16.mxu0 0
  %3277 = vmatpush1.bf16.msra.mxu0 0
  %3278 = vmatprep.subr.bf16.mxu0 0
  %3279 = vmatpush1.bf16.msra.mxu0 0
  %3280 = vmatprep.subr.bf16.mxu0 0
  %3281 = vmatpush1.bf16.msra.mxu0 0
  %3282 = vmatprep.subr.bf16.mxu0 0
  %3283 = vmatpush1.bf16.msra.mxu0 0
  %3284 = vmatprep.subr.bf16.mxu0 0
  %3285 = vmatpush1.bf16.msra.mxu0 0
  %3286 = vmatprep.subr.bf16.mxu0 0
  %3287 = vmatpush1.bf16.msra.mxu0 0
  %3288 = vmatprep.subr.bf16.mxu0 0
  %3289 = vmatpush1.bf16.msra.mxu0 0
  %3290 = vmatprep.subr.bf16.mxu0 0
  %3291 = vmatpush1.bf16.msra.mxu0 0
  %3292 = vmatprep.subr.bf16.mxu0 0
  %3293 = vmatpush1.bf16.msra.mxu0 0
  %3294 = vmatprep.subr.bf16.mxu0 0
  %3295 = vmatpush1.bf16.msra.mxu0 0
  %3296 = vmatprep.mubr.bf16.mxu0 0
  %3297 = vmatmul.mubr.bf16.gmra.mrb[0].mxu0 %v3095
  %v3298 = vpop.f32.mrb[0].mxu0
  %v3299 = vadd.f32 0.0, %v3298
  %v3300 = vpop.f32.mrb[0].mxu0
  %v3301 = vpop.f32.mrb[0].mxu0
  %v3302 = vadd.f32 0.0, %v3301
  %v3303 = vpop.f32.mrb[0].mxu0
  %3304 = vmatprep.mubr.bf16.mxu0 0
  %3305 = vmatmul.mubr.bf16.gmra.mrb[0].mxu0 %v3098
  %v3306 = vpop.f32.mrb[0].mxu0
  %v3307 = vadd.f32 0.0, %v3306
  %v3308 = vpop.f32.mrb[0].mxu0
  %v3309 = vpop.f32.mrb[0].mxu0
  %v3310 = vadd.f32 0.0, %v3309
  %v3311 = vpop.f32.mrb[0].mxu0
  %3312 = vdwg.mxu0
  %s3313 = scalar_lea.vmem %s3, 96
  %v3314 = vld [vmem:[%s3313] sm:$0xf]
  %v3315 = vld [vmem:[%s3313 + $0x4] sm:$0xf]
  %v3316 = vld [vmem:[%s3313 + $0x8] sm:$0xf]
  %v3317 = vld [vmem:[%s3313 + $0xc] sm:$0xf]
  %v3318 = vld [vmem:[%s3313 + $0x10] sm:$0xf]
  %v3319 = vld [vmem:[%s3313 + $0x14] sm:$0xf]
  %v3320 = vld [vmem:[%s3313 + $0x18] sm:$0xf]
  %v3321 = vld [vmem:[%s3313 + $0x1c] sm:$0xf]
  %v3330 = vunpack.c.l.b16 %v3314
  %v3331 = vunpack.c.l.b16 %v3315
  %v3332 = vunpack.c.l.b16 %v3316
  %v3333 = vunpack.c.l.b16 %v3317
  %v3334 = vunpack.c.l.b16 %v3318
  %v3335 = vunpack.c.l.b16 %v3319
  %v3336 = vunpack.c.l.b16 %v3320
  %v3337 = vunpack.c.l.b16 %v3321
  %v3338 = vpack.c.b16 %v3331, %v3330
  %v3339 = vpack.c.b16 %v3333, %v3332
  %v3340 = vpack.c.b16 %v3335, %v3334
  %v3341 = vpack.c.b16 %v3337, %v3336
  %3346 = vmatprep.subr.bf16.mxu0 0
  %3347 = vmatpush1.bf16.msra.mxu0 %v3338
  %3348 = vmatprep.subr.bf16.mxu0 0
  %3349 = vmatpush1.bf16.msra.mxu0 %v3339
  %3350 = vmatprep.subr.bf16.mxu0 0
  %3351 = vmatpush1.bf16.msra.mxu0 %v3340
  %3352 = vmatprep.subr.bf16.mxu0 0
  %3353 = vmatpush1.bf16.msra.mxu0 %v3341
  %3354 = vmatprep.subr.bf16.mxu0 0
  %3355 = vmatpush1.bf16.msra.mxu0 0
  %3356 = vmatprep.subr.bf16.mxu0 0
  %3357 = vmatpush1.bf16.msra.mxu0 0
  %3358 = vmatprep.subr.bf16.mxu0 0
  %3359 = vmatpush1.bf16.msra.mxu0 0
  %3360 = vmatprep.subr.bf16.mxu0 0
  %3361 = vmatpush1.bf16.msra.mxu0 0
  %3362 = vmatprep.subr.bf16.mxu0 0
  %3363 = vmatpush1.bf16.msra.mxu0 0
  %3364 = vmatprep.subr.bf16.mxu0 0
  %3365 = vmatpush1.bf16.msra.mxu0 0
  %3366 = vmatprep.subr.bf16.mxu0 0
  %3367 = vmatpush1.bf16.msra.mxu0 0
  %3368 = vmatprep.subr.bf16.mxu0 0
  %3369 = vmatpush1.bf16.msra.mxu0 0
  %3370 = vmatprep.subr.bf16.mxu0 0
  %3371 = vmatpush1.bf16.msra.mxu0 0
  %3372 = vmatprep.subr.bf16.mxu0 0
  %3373 = vmatpush1.bf16.msra.mxu0 0
  %3374 = vmatprep.subr.bf16.mxu0 0
  %3375 = vmatpush1.bf16.msra.mxu0 0
  %3376 = vmatprep.subr.bf16.mxu0 0
  %3377 = vmatpush1.bf16.msra.mxu0 0
  %3378 = vmatprep.mubr.bf16.mxu0 0
  %3379 = vmatmul.mubr.bf16.gmra.mrb[0].mxu0 %v3095
  %v3380 = vpop.f32.mrb[0].mxu0
  %v3381 = vadd.f32 0.0, %v3380
  %v3382 = vpop.f32.mrb[0].mxu0
  %v3383 = vpop.f32.mrb[0].mxu0
  %v3384 = vadd.f32 0.0, %v3383
  %v3385 = vpop.f32.mrb[0].mxu0
  %3386 = vmatprep.mubr.bf16.mxu0 0
  %3387 = vmatmul.mubr.bf16.gmra.mrb[0].mxu0 %v3098
  %v3388 = vpop.f32.mrb[0].mxu0
  %v3389 = vadd.f32 0.0, %v3388
  %v3390 = vpop.f32.mrb[0].mxu0
  %v3391 = vpop.f32.mrb[0].mxu0
  %v3392 = vadd.f32 0.0, %v3391
  %v3393 = vpop.f32.mrb[0].mxu0
  %3394 = vdwg.mxu0
  %s3395 = scalar_lea.vmem %s3, 128
  %v3396 = vld [vmem:[%s3395] sm:$0xf]
  %v3397 = vld [vmem:[%s3395 + $0x4] sm:$0xf]
  %v3398 = vld [vmem:[%s3395 + $0x8] sm:$0xf]
  %v3399 = vld [vmem:[%s3395 + $0xc] sm:$0xf]
  %v3400 = vld [vmem:[%s3395 + $0x10] sm:$0xf]
  %v3401 = vld [vmem:[%s3395 + $0x14] sm:$0xf]
  %v3402 = vld [vmem:[%s3395 + $0x18] sm:$0xf]
  %v3403 = vld [vmem:[%s3395 + $0x1c] sm:$0xf]
  %v3412 = vunpack.c.l.b16 %v3396
  %v3413 = vunpack.c.l.b16 %v3397
  %v3414 = vunpack.c.l.b16 %v3398
  %v3415 = vunpack.c.l.b16 %v3399
  %v3416 = vunpack.c.l.b16 %v3400
  %v3417 = vunpack.c.l.b16 %v3401
  %v3418 = vunpack.c.l.b16 %v3402
  %v3419 = vunpack.c.l.b16 %v3403
  %v3420 = vpack.c.b16 %v3413, %v3412
  %v3421 = vpack.c.b16 %v3415, %v3414
  %v3422 = vpack.c.b16 %v3417, %v3416
  %v3423 = vpack.c.b16 %v3419, %v3418
  %3428 = vmatprep.subr.bf16.mxu0 0
  %3429 = vmatpush1.bf16.msra.mxu0 %v3420
  %3430 = vmatprep.subr.bf16.mxu0 0
  %3431 = vmatpush1.bf16.msra.mxu0 %v3421
  %3432 = vmatprep.subr.bf16.mxu0 0
  %3433 = vmatpush1.bf16.msra.mxu0 %v3422
  %3434 = vmatprep.subr.bf16.mxu0 0
  %3435 = vmatpush1.bf16.msra.mxu0 %v3423
  %3436 = vmatprep.subr.bf16.mxu0 0
  %3437 = vmatpush1.bf16.msra.mxu0 0
  %3438 = vmatprep.subr.bf16.mxu0 0
  %3439 = vmatpush1.bf16.msra.mxu0 0
  %3440 = vmatprep.subr.bf16.mxu0 0
  %3441 = vmatpush1.bf16.msra.mxu0 0
  %3442 = vmatprep.subr.bf16.mxu0 0
  %3443 = vmatpush1.bf16.msra.mxu0 0
  %3444 = vmatprep.subr.bf16.mxu0 0
  %3445 = vmatpush1.bf16.msra.mxu0 0
  %3446 = vmatprep.subr.bf16.mxu0 0
  %3447 = vmatpush1.bf16.msra.mxu0 0
  %3448 = vmatprep.subr.bf16.mxu0 0
  %3449 = vmatpush1.bf16.msra.mxu0 0
  %3450 = vmatprep.subr.bf16.mxu0 0
  %3451 = vmatpush1.bf16.msra.mxu0 0
  %3452 = vmatprep.subr.bf16.mxu0 0
  %3453 = vmatpush1.bf16.msra.mxu0 0
  %3454 = vmatprep.subr.bf16.mxu0 0
  %3455 = vmatpush1.bf16.msra.mxu0 0
  %3456 = vmatprep.subr.bf16.mxu0 0
  %3457 = vmatpush1.bf16.msra.mxu0 0
  %3458 = vmatprep.subr.bf16.mxu0 0
  %3459 = vmatpush1.bf16.msra.mxu0 0
  %3460 = vmatprep.mubr.bf16.mxu0 0
  %3461 = vmatmul.mubr.bf16.gmra.mrb[0].mxu0 %v3095
  %v3462 = vpop.f32.mrb[0].mxu0
  %v3463 = vadd.f32 0.0, %v3462
  %v3464 = vpop.f32.mrb[0].mxu0
  %v3465 = vpop.f32.mrb[0].mxu0
  %v3466 = vadd.f32 0.0, %v3465
  %v3467 = vpop.f32.mrb[0].mxu0
  %3468 = vmatprep.mubr.bf16.mxu0 0
  %3469 = vmatmul.mubr.bf16.gmra.mrb[0].mxu0 %v3098
  %v3470 = vpop.f32.mrb[0].mxu0
  %v3471 = vadd.f32 0.0, %v3470
  %v3472 = vpop.f32.mrb[0].mxu0
  %v3473 = vpop.f32.mrb[0].mxu0
  %v3474 = vadd.f32 0.0, %v3473
  %v3475 = vpop.f32.mrb[0].mxu0
  %3476 = vdwg.mxu0
  %s3477 = scalar_lea.vmem %s3, 160
  %v3478 = vld [vmem:[%s3477] sm:$0xf]
  %v3479 = vld [vmem:[%s3477 + $0x4] sm:$0xf]
  %v3480 = vld [vmem:[%s3477 + $0x8] sm:$0xf]
  %v3481 = vld [vmem:[%s3477 + $0xc] sm:$0xf]
  %v3482 = vld [vmem:[%s3477 + $0x10] sm:$0xf]
  %v3483 = vld [vmem:[%s3477 + $0x14] sm:$0xf]
  %v3484 = vld [vmem:[%s3477 + $0x18] sm:$0xf]
  %v3485 = vld [vmem:[%s3477 + $0x1c] sm:$0xf]
  %v3494 = vunpack.c.l.b16 %v3478
  %v3495 = vunpack.c.l.b16 %v3479
  %v3496 = vunpack.c.l.b16 %v3480
  %v3497 = vunpack.c.l.b16 %v3481
  %v3498 = vunpack.c.l.b16 %v3482
  %v3499 = vunpack.c.l.b16 %v3483
  %v3500 = vunpack.c.l.b16 %v3484
  %v3501 = vunpack.c.l.b16 %v3485
  %v3502 = vpack.c.b16 %v3495, %v3494
  %v3503 = vpack.c.b16 %v3497, %v3496
  %v3504 = vpack.c.b16 %v3499, %v3498
  %v3505 = vpack.c.b16 %v3501, %v3500
  %3510 = vmatprep.subr.bf16.mxu0 0
  %3511 = vmatpush1.bf16.msra.mxu0 %v3502
  %3512 = vmatprep.subr.bf16.mxu0 0
  %3513 = vmatpush1.bf16.msra.mxu0 %v3503
  %3514 = vmatprep.subr.bf16.mxu0 0
  %3515 = vmatpush1.bf16.msra.mxu0 %v3504
  %3516 = vmatprep.subr.bf16.mxu0 0
  %3517 = vmatpush1.bf16.msra.mxu0 %v3505
  %3518 = vmatprep.subr.bf16.mxu0 0
  %3519 = vmatpush1.bf16.msra.mxu0 0
  %3520 = vmatprep.subr.bf16.mxu0 0
  %3521 = vmatpush1.bf16.msra.mxu0 0
  %3522 = vmatprep.subr.bf16.mxu0 0
  %3523 = vmatpush1.bf16.msra.mxu0 0
  %3524 = vmatprep.subr.bf16.mxu0 0
  %3525 = vmatpush1.bf16.msra.mxu0 0
  %3526 = vmatprep.subr.bf16.mxu0 0
  %3527 = vmatpush1.bf16.msra.mxu0 0
  %3528 = vmatprep.subr.bf16.mxu0 0
  %3529 = vmatpush1.bf16.msra.mxu0 0
  %3530 = vmatprep.subr.bf16.mxu0 0
  %3531 = vmatpush1.bf16.msra.mxu0 0
  %3532 = vmatprep.subr.bf16.mxu0 0
  %3533 = vmatpush1.bf16.msra.mxu0 0
  %3534 = vmatprep.subr.bf16.mxu0 0
  %3535 = vmatpush1.bf16.msra.mxu0 0
  %3536 = vmatprep.subr.bf16.mxu0 0
  %3537 = vmatpush1.bf16.msra.mxu0 0
  %3538 = vmatprep.subr.bf16.mxu0 0
  %3539 = vmatpush1.bf16.msra.mxu0 0
  %3540 = vmatprep.subr.bf16.mxu0 0
  %3541 = vmatpush1.bf16.msra.mxu0 0
  %3542 = vmatprep.mubr.bf16.mxu0 0
  %3543 = vmatmul.mubr.bf16.gmra.mrb[0].mxu0 %v3095
  %v3544 = vpop.f32.mrb[0].mxu0
  %v3545 = vadd.f32 0.0, %v3544
  %v3546 = vpop.f32.mrb[0].mxu0
  %v3547 = vpop.f32.mrb[0].mxu0
  %v3548 = vadd.f32 0.0, %v3547
  %v3549 = vpop.f32.mrb[0].mxu0
  %3550 = vmatprep.mubr.bf16.mxu0 0
  %3551 = vmatmul.mubr.bf16.gmra.mrb[0].mxu0 %v3098
  %v3552 = vpop.f32.mrb[0].mxu0
  %v3553 = vadd.f32 0.0, %v3552
  %v3554 = vpop.f32.mrb[0].mxu0
  %v3555 = vpop.f32.mrb[0].mxu0
  %v3556 = vadd.f32 0.0, %v3555
  %v3557 = vpop.f32.mrb[0].mxu0
  %3558 = vdwg.mxu0
  %s3559 = scalar_lea.vmem %s3, 192
  %v3560 = vld [vmem:[%s3559] sm:$0xf]
  %v3561 = vld [vmem:[%s3559 + $0x4] sm:$0xf]
  %v3562 = vld [vmem:[%s3559 + $0x8] sm:$0xf]
  %v3563 = vld [vmem:[%s3559 + $0xc] sm:$0xf]
  %v3564 = vld [vmem:[%s3559 + $0x10] sm:$0xf]
  %v3565 = vld [vmem:[%s3559 + $0x14] sm:$0xf]
  %v3566 = vld [vmem:[%s3559 + $0x18] sm:$0xf]
  %v3567 = vld [vmem:[%s3559 + $0x1c] sm:$0xf]
  %v3576 = vunpack.c.l.b16 %v3560
  %v3577 = vunpack.c.l.b16 %v3561
  %v3578 = vunpack.c.l.b16 %v3562
  %v3579 = vunpack.c.l.b16 %v3563
  %v3580 = vunpack.c.l.b16 %v3564
  %v3581 = vunpack.c.l.b16 %v3565
  %v3582 = vunpack.c.l.b16 %v3566
  %v3583 = vunpack.c.l.b16 %v3567
  %v3584 = vpack.c.b16 %v3577, %v3576
  %v3585 = vpack.c.b16 %v3579, %v3578
  %v3586 = vpack.c.b16 %v3581, %v3580
  %v3587 = vpack.c.b16 %v3583, %v3582
  %3592 = vmatprep.subr.bf16.mxu0 0
  %3593 = vmatpush1.bf16.msra.mxu0 %v3584
  %3594 = vmatprep.subr.bf16.mxu0 0
  %3595 = vmatpush1.bf16.msra.mxu0 %v3585
  %3596 = vmatprep.subr.bf16.mxu0 0
  %3597 = vmatpush1.bf16.msra.mxu0 %v3586
  %3598 = vmatprep.subr.bf16.mxu0 0
  %3599 = vmatpush1.bf16.msra.mxu0 %v3587
  %3600 = vmatprep.subr.bf16.mxu0 0
  %3601 = vmatpush1.bf16.msra.mxu0 0
  %3602 = vmatprep.subr.bf16.mxu0 0
  %3603 = vmatpush1.bf16.msra.mxu0 0
  %3604 = vmatprep.subr.bf16.mxu0 0
  %3605 = vmatpush1.bf16.msra.mxu0 0
  %3606 = vmatprep.subr.bf16.mxu0 0
  %3607 = vmatpush1.bf16.msra.mxu0 0
  %3608 = vmatprep.subr.bf16.mxu0 0
  %3609 = vmatpush1.bf16.msra.mxu0 0
  %3610 = vmatprep.subr.bf16.mxu0 0
  %3611 = vmatpush1.bf16.msra.mxu0 0
  %3612 = vmatprep.subr.bf16.mxu0 0
  %3613 = vmatpush1.bf16.msra.mxu0 0
  %3614 = vmatprep.subr.bf16.mxu0 0
  %3615 = vmatpush1.bf16.msra.mxu0 0
  %3616 = vmatprep.subr.bf16.mxu0 0
  %3617 = vmatpush1.bf16.msra.mxu0 0
  %3618 = vmatprep.subr.bf16.mxu0 0
  %3619 = vmatpush1.bf16.msra.mxu0 0
  %3620 = vmatprep.subr.bf16.mxu0 0
  %3621 = vmatpush1.bf16.msra.mxu0 0
  %3622 = vmatprep.subr.bf16.mxu0 0
  %3623 = vmatpush1.bf16.msra.mxu0 0
  %3624 = vmatprep.mubr.bf16.mxu0 0
  %3625 = vmatmul.mubr.bf16.gmra.mrb[0].mxu0 %v3095
  %v3626 = vpop.f32.mrb[0].mxu0
  %v3627 = vadd.f32 0.0, %v3626
  %v3628 = vpop.f32.mrb[0].mxu0
  %v3629 = vpop.f32.mrb[0].mxu0
  %v3630 = vadd.f32 0.0, %v3629
  %v3631 = vpop.f32.mrb[0].mxu0
  %3632 = vmatprep.mubr.bf16.mxu0 0
  %3633 = vmatmul.mubr.bf16.gmra.mrb[0].mxu0 %v3098
  %v3634 = vpop.f32.mrb[0].mxu0
  %v3635 = vadd.f32 0.0, %v3634
  %v3636 = vpop.f32.mrb[0].mxu0
  %v3637 = vpop.f32.mrb[0].mxu0
  %v3638 = vadd.f32 0.0, %v3637
  %v3639 = vpop.f32.mrb[0].mxu0
  %3640 = vdwg.mxu0
  %s3641 = scalar_lea.vmem %s3, 224
  %v3642 = vld [vmem:[%s3641] sm:$0xf]
  %v3643 = vld [vmem:[%s3641 + $0x4] sm:$0xf]
  %v3644 = vld [vmem:[%s3641 + $0x8] sm:$0xf]
  %v3645 = vld [vmem:[%s3641 + $0xc] sm:$0xf]
  %v3646 = vld [vmem:[%s3641 + $0x10] sm:$0xf]
  %v3647 = vld [vmem:[%s3641 + $0x14] sm:$0xf]
  %v3648 = vld [vmem:[%s3641 + $0x18] sm:$0xf]
  %v3649 = vld [vmem:[%s3641 + $0x1c] sm:$0xf]
  %v3658 = vunpack.c.l.b16 %v3642
  %v3659 = vunpack.c.l.b16 %v3643
  %v3660 = vunpack.c.l.b16 %v3644
  %v3661 = vunpack.c.l.b16 %v3645
  %v3662 = vunpack.c.l.b16 %v3646
  %v3663 = vunpack.c.l.b16 %v3647
  %v3664 = vunpack.c.l.b16 %v3648
  %v3665 = vunpack.c.l.b16 %v3649
  %v3666 = vpack.c.b16 %v3659, %v3658
  %v3667 = vpack.c.b16 %v3661, %v3660
  %v3668 = vpack.c.b16 %v3663, %v3662
  %v3669 = vpack.c.b16 %v3665, %v3664
  %3674 = vmatprep.subr.bf16.mxu0 0
  %3675 = vmatpush1.bf16.msra.mxu0 %v3666
  %3676 = vmatprep.subr.bf16.mxu0 0
  %3677 = vmatpush1.bf16.msra.mxu0 %v3667
  %3678 = vmatprep.subr.bf16.mxu0 0
  %3679 = vmatpush1.bf16.msra.mxu0 %v3668
  %3680 = vmatprep.subr.bf16.mxu0 0
  %3681 = vmatpush1.bf16.msra.mxu0 %v3669
  %3682 = vmatprep.subr.bf16.mxu0 0
  %3683 = vmatpush1.bf16.msra.mxu0 0
  %3684 = vmatprep.subr.bf16.mxu0 0
  %3685 = vmatpush1.bf16.msra.mxu0 0
  %3686 = vmatprep.subr.bf16.mxu0 0
  %3687 = vmatpush1.bf16.msra.mxu0 0
  %3688 = vmatprep.subr.bf16.mxu0 0
  %3689 = vmatpush1.bf16.msra.mxu0 0
  %3690 = vmatprep.subr.bf16.mxu0 0
  %3691 = vmatpush1.bf16.msra.mxu0 0
  %3692 = vmatprep.subr.bf16.mxu0 0
  %3693 = vmatpush1.bf16.msra.mxu0 0
  %3694 = vmatprep.subr.bf16.mxu0 0
  %3695 = vmatpush1.bf16.msra.mxu0 0
  %3696 = vmatprep.subr.bf16.mxu0 0
  %3697 = vmatpush1.bf16.msra.mxu0 0
  %3698 = vmatprep.subr.bf16.mxu0 0
  %3699 = vmatpush1.bf16.msra.mxu0 0
  %3700 = vmatprep.subr.bf16.mxu0 0
  %3701 = vmatpush1.bf16.msra.mxu0 0
  %3702 = vmatprep.subr.bf16.mxu0 0
  %3703 = vmatpush1.bf16.msra.mxu0 0
  %3704 = vmatprep.subr.bf16.mxu0 0
  %3705 = vmatpush1.bf16.msra.mxu0 0
  %3706 = vmatprep.mubr.bf16.mxu0 0
  %3707 = vmatmul.mubr.bf16.gmra.mrb[0].mxu0 %v3095
  %v3708 = vpop.f32.mrb[0].mxu0
  %v3709 = vadd.f32 0.0, %v3708
  %v3710 = vpop.f32.mrb[0].mxu0
  %v3711 = vpop.f32.mrb[0].mxu0
  %v3712 = vadd.f32 0.0, %v3711
  %v3713 = vpop.f32.mrb[0].mxu0
  %3714 = vmatprep.mubr.bf16.mxu0 0
  %3715 = vmatmul.mubr.bf16.gmra.mrb[0].mxu0 %v3098
  %v3716 = vpop.f32.mrb[0].mxu0
  %v3717 = vadd.f32 0.0, %v3716
  %v3718 = vpop.f32.mrb[0].mxu0
  %v3719 = vpop.f32.mrb[0].mxu0
  %v3720 = vadd.f32 0.0, %v3719
  %v3721 = vpop.f32.mrb[0].mxu0
  %3722 = vdwg.mxu0
  %s3723 = scalar_lea.vmem %s3, 256
  %v3724 = vld [vmem:[%s3723] sm:$0xf]
  %v3725 = vld [vmem:[%s3723 + $0x4] sm:$0xf]
  %v3726 = vld [vmem:[%s3723 + $0x8] sm:$0xf]
  %v3727 = vld [vmem:[%s3723 + $0xc] sm:$0xf]
  %v3728 = vld [vmem:[%s3723 + $0x10] sm:$0xf]
  %v3729 = vld [vmem:[%s3723 + $0x14] sm:$0xf]
  %v3730 = vld [vmem:[%s3723 + $0x18] sm:$0xf]
  %v3731 = vld [vmem:[%s3723 + $0x1c] sm:$0xf]
  %v3740 = vunpack.c.l.b16 %v3724
  %v3741 = vunpack.c.l.b16 %v3725
  %v3742 = vunpack.c.l.b16 %v3726
  %v3743 = vunpack.c.l.b16 %v3727
  %v3744 = vunpack.c.l.b16 %v3728
  %v3745 = vunpack.c.l.b16 %v3729
  %v3746 = vunpack.c.l.b16 %v3730
  %v3747 = vunpack.c.l.b16 %v3731
  %v3748 = vpack.c.b16 %v3741, %v3740
  %v3749 = vpack.c.b16 %v3743, %v3742
  %v3750 = vpack.c.b16 %v3745, %v3744
  %v3751 = vpack.c.b16 %v3747, %v3746
  %3756 = vmatprep.subr.bf16.mxu0 0
  %3757 = vmatpush1.bf16.msra.mxu0 %v3748
  %3758 = vmatprep.subr.bf16.mxu0 0
  %3759 = vmatpush1.bf16.msra.mxu0 %v3749
  %3760 = vmatprep.subr.bf16.mxu0 0
  %3761 = vmatpush1.bf16.msra.mxu0 %v3750
  %3762 = vmatprep.subr.bf16.mxu0 0
  %3763 = vmatpush1.bf16.msra.mxu0 %v3751
  %3764 = vmatprep.subr.bf16.mxu0 0
  %3765 = vmatpush1.bf16.msra.mxu0 0
  %3766 = vmatprep.subr.bf16.mxu0 0
  %3767 = vmatpush1.bf16.msra.mxu0 0
  %3768 = vmatprep.subr.bf16.mxu0 0
  %3769 = vmatpush1.bf16.msra.mxu0 0
  %3770 = vmatprep.subr.bf16.mxu0 0
  %3771 = vmatpush1.bf16.msra.mxu0 0
  %3772 = vmatprep.subr.bf16.mxu0 0
  %3773 = vmatpush1.bf16.msra.mxu0 0
  %3774 = vmatprep.subr.bf16.mxu0 0
  %3775 = vmatpush1.bf16.msra.mxu0 0
  %3776 = vmatprep.subr.bf16.mxu0 0
  %3777 = vmatpush1.bf16.msra.mxu0 0
  %3778 = vmatprep.subr.bf16.mxu0 0
  %3779 = vmatpush1.bf16.msra.mxu0 0
  %3780 = vmatprep.subr.bf16.mxu0 0
  %3781 = vmatpush1.bf16.msra.mxu0 0
  %3782 = vmatprep.subr.bf16.mxu0 0
  %3783 = vmatpush1.bf16.msra.mxu0 0
  %3784 = vmatprep.subr.bf16.mxu0 0
  %3785 = vmatpush1.bf16.msra.mxu0 0
  %3786 = vmatprep.subr.bf16.mxu0 0
  %3787 = vmatpush1.bf16.msra.mxu0 0
  %3788 = vmatprep.mubr.bf16.mxu0 0
  %3789 = vmatmul.mubr.bf16.gmra.mrb[0].mxu0 %v3095
  %v3790 = vpop.f32.mrb[0].mxu0
  %v3791 = vadd.f32 0.0, %v3790
  %v3792 = vpop.f32.mrb[0].mxu0
  %v3793 = vpop.f32.mrb[0].mxu0
  %v3794 = vadd.f32 0.0, %v3793
  %v3795 = vpop.f32.mrb[0].mxu0
  %3796 = vmatprep.mubr.bf16.mxu0 0
  %3797 = vmatmul.mubr.bf16.gmra.mrb[0].mxu0 %v3098
  %v3798 = vpop.f32.mrb[0].mxu0
  %v3799 = vadd.f32 0.0, %v3798
  %v3800 = vpop.f32.mrb[0].mxu0
  %v3801 = vpop.f32.mrb[0].mxu0
  %v3802 = vadd.f32 0.0, %v3801
  %v3803 = vpop.f32.mrb[0].mxu0
  %3804 = vdwg.mxu0
  %v3805 = vld [vmem:[%s11] sm:$0xff]
  %v3806 = vld [vmem:[%s11 + $0x8] sm:$0xff]
  %v3807 = vld [vmem:[%s11 + $0x10] sm:$0xff]
  %v3808 = vld [vmem:[%s11 + $0x18] sm:$0xff]
  %v3809 = vld [vmem:[%s11 + $0x20] sm:$0xff]
  %v3810 = vld [vmem:[%s11 + $0x28] sm:$0xff]
  %v3811 = vld [vmem:[%s11 + $0x30] sm:$0xff]
  %v3812 = vld [vmem:[%s11 + $0x38] sm:$0xff]
  %v3813 = vld [vmem:[%s11 + $0x40] sm:$0xff]
  %v3814 = vld [vmem:[%s11 + $0x48] sm:$0xff]
  %v3815 = vld [vmem:[%s11 + $0x50] sm:$0xff]
  %v3816 = vld [vmem:[%s11 + $0x58] sm:$0xff]
  %v3818 = vsel %vm2585, %v3807, 0
  %v3821 = vsel %vm2585, %v3810, 0
  %v3824 = vsel %vm2585, %v3813, 0
  %v3827 = vsel %vm2585, %v3816, 0
  %3829 = vmatprep.subr.mxu0 0.0
  %3830 = vmatpush1.msra.mxu0 %v3135
  %3831 = vmatprep.subr.mxu0 0.0
  %3832 = vmatpush1.msra.mxu0 %v3138
  %3833 = vmatprep.subr.mxu0 0.0
  %3834 = vmatpush1.msra.mxu0 %v3143
  %3835 = vmatprep.subr.mxu0 0.0
  %3836 = vmatpush1.msra.mxu0 %v3146
  %3837 = vmatprep.subr.mxu0 0.0
  %3838 = vmatpush1.msra.mxu0 %v3217
  %3839 = vmatprep.subr.mxu0 0.0
  %3840 = vmatpush1.msra.mxu0 %v3220
  %3841 = vmatprep.subr.mxu0 0.0
  %3842 = vmatpush1.msra.mxu0 %v3225
  %3843 = vmatprep.subr.mxu0 0.0
  %3844 = vmatpush1.msra.mxu0 %v3228
  %3845 = vmatprep.subr.mxu0 0.0
  %3846 = vmatpush1.msra.mxu0 %v3299
  %3847 = vmatprep.subr.mxu0 0.0
  %3848 = vmatpush1.msra.mxu0 %v3302
  %3849 = vmatprep.subr.mxu0 0.0
  %3850 = vmatpush1.msra.mxu0 %v3307
  %3851 = vmatprep.subr.mxu0 0.0
  %3852 = vmatpush1.msra.mxu0 %v3310
  %3853 = vmatprep.subr.mxu0 0.0
  %3854 = vmatpush1.msra.mxu0 %v3381
  %3855 = vmatprep.subr.mxu0 0.0
  %3856 = vmatpush1.msra.mxu0 %v3384
  %3857 = vmatprep.subr.mxu0 0.0
  %3858 = vmatpush1.msra.mxu0 %v3389
  %3859 = vmatprep.subr.mxu0 0.0
  %3860 = vmatpush1.msra.mxu0 %v3392
  %3861 = vmatprep.subr.mxu0 0.0
  %3862 = vmatpush1.msra.mxu0 %v3463
  %3863 = vmatprep.subr.mxu0 0.0
  %3864 = vmatpush1.msra.mxu0 %v3466
  %3865 = vmatprep.subr.mxu0 0.0
  %3866 = vmatpush1.msra.mxu0 %v3471
  %3867 = vmatprep.subr.mxu0 0.0
  %3868 = vmatpush1.msra.mxu0 %v3474
  %3869 = vmatprep.subr.mxu0 0.0
  %3870 = vmatpush1.msra.mxu0 %v3545
  %3871 = vmatprep.subr.mxu0 0.0
  %3872 = vmatpush1.msra.mxu0 %v3548
  %3873 = vmatprep.subr.mxu0 0.0
  %3874 = vmatpush1.msra.mxu0 %v3553
  %3875 = vmatprep.subr.mxu0 0.0
  %3876 = vmatpush1.msra.mxu0 %v3556
  %3877 = vmatprep.subr.mxu0 0.0
  %3878 = vmatpush1.msra.mxu0 %v3627
  %3879 = vmatprep.subr.mxu0 0.0
  %3880 = vmatpush1.msra.mxu0 %v3630
  %3881 = vmatprep.subr.mxu0 0.0
  %3882 = vmatpush1.msra.mxu0 %v3635
  %3883 = vmatprep.subr.mxu0 0.0
  %3884 = vmatpush1.msra.mxu0 %v3638
  %3885 = vmatprep.subr.mxu0 0.0
  %3886 = vmatpush1.msra.mxu0 %v3709
  %3887 = vmatprep.subr.mxu0 0.0
  %3888 = vmatpush1.msra.mxu0 %v3712
  %3889 = vmatprep.subr.mxu0 0.0
  %3890 = vmatpush1.msra.mxu0 %v3717
  %3891 = vmatprep.subr.mxu0 0.0
  %3892 = vmatpush1.msra.mxu0 %v3720
  %3893 = vmatprep.mubr.f32.mxu0 %v3806
  %3894 = vmatmul.mubr.f32.gmra.mrb[0].mxu0 %v3805
  %v3895 = vpop.f32.mrb[0].mxu0
  %v3896 = vadd.f32 0.0, %v3895
  %v3897 = vpop.f32.mrb[0].mxu0
  %3898 = vmatprep.mubr.f32.mxu0 %v3809
  %3899 = vmatmul.mubr.f32.gmra.mrb[0].mxu0 %v3808
  %v3900 = vpop.f32.mrb[0].mxu0
  %v3901 = vadd.f32 0.0, %v3900
  %v3902 = vpop.f32.mrb[0].mxu0
  %3903 = vmatprep.mubr.f32.mxu0 %v3812
  %3904 = vmatmul.mubr.f32.gmra.mrb[0].mxu0 %v3811
  %v3905 = vpop.f32.mrb[0].mxu0
  %v3906 = vadd.f32 0.0, %v3905
  %v3907 = vpop.f32.mrb[0].mxu0
  %3908 = vmatprep.mubr.f32.mxu0 %v3815
  %3909 = vmatmul.mubr.f32.gmra.mrb[0].mxu0 %v3814
  %v3910 = vpop.f32.mrb[0].mxu0
  %v3911 = vadd.f32 0.0, %v3910
  %v3912 = vpop.f32.mrb[0].mxu0
  %3913 = vdwg.mxu0
  %3914 = vmatprep.subr.mxu0 0.0
  %3915 = vmatpush1.msra.mxu0 %v3791
  %3916 = vmatprep.subr.mxu0 0.0
  %3917 = vmatpush1.msra.mxu0 %v3794
  %3918 = vmatprep.subr.mxu0 0.0
  %3919 = vmatpush1.msra.mxu0 %v3799
  %3920 = vmatprep.subr.mxu0 0.0
  %3921 = vmatpush1.msra.mxu0 %v3802
  %3922 = vmatprep.subr.mxu0 0.0
  %3923 = vmatpush1.msra.mxu0 0.0
  %3924 = vmatprep.subr.mxu0 0.0
  %3925 = vmatpush1.msra.mxu0 0.0
  %3926 = vmatprep.subr.mxu0 0.0
  %3927 = vmatpush1.msra.mxu0 0.0
  %3928 = vmatprep.subr.mxu0 0.0
  %3929 = vmatpush1.msra.mxu0 0.0
  %3930 = vmatprep.subr.mxu0 0.0
  %3931 = vmatpush1.msra.mxu0 0.0
  %3932 = vmatprep.subr.mxu0 0.0
  %3933 = vmatpush1.msra.mxu0 0.0
  %3934 = vmatprep.subr.mxu0 0.0
  %3935 = vmatpush1.msra.mxu0 0.0
  %3936 = vmatprep.subr.mxu0 0.0
  %3937 = vmatpush1.msra.mxu0 0.0
  %3938 = vmatprep.subr.mxu0 0.0
  %3939 = vmatpush1.msra.mxu0 0.0
  %3940 = vmatprep.subr.mxu0 0.0
  %3941 = vmatpush1.msra.mxu0 0.0
  %3942 = vmatprep.subr.mxu0 0.0
  %3943 = vmatpush1.msra.mxu0 0.0
  %3944 = vmatprep.subr.mxu0 0.0
  %3945 = vmatpush1.msra.mxu0 0.0
  %3946 = vmatprep.subr.mxu0 0.0
  %3947 = vmatpush1.msra.mxu0 0.0
  %3948 = vmatprep.subr.mxu0 0.0
  %3949 = vmatpush1.msra.mxu0 0.0
  %3950 = vmatprep.subr.mxu0 0.0
  %3951 = vmatpush1.msra.mxu0 0.0
  %3952 = vmatprep.subr.mxu0 0.0
  %3953 = vmatpush1.msra.mxu0 0.0
  %3954 = vmatprep.subr.mxu0 0.0
  %3955 = vmatpush1.msra.mxu0 0.0
  %3956 = vmatprep.subr.mxu0 0.0
  %3957 = vmatpush1.msra.mxu0 0.0
  %3958 = vmatprep.subr.mxu0 0.0
  %3959 = vmatpush1.msra.mxu0 0.0
  %3960 = vmatprep.subr.mxu0 0.0
  %3961 = vmatpush1.msra.mxu0 0.0
  %3962 = vmatprep.subr.mxu0 0.0
  %3963 = vmatpush1.msra.mxu0 0.0
  %3964 = vmatprep.subr.mxu0 0.0
  %3965 = vmatpush1.msra.mxu0 0.0
  %3966 = vmatprep.subr.mxu0 0.0
  %3967 = vmatpush1.msra.mxu0 0.0
  %3968 = vmatprep.subr.mxu0 0.0
  %3969 = vmatpush1.msra.mxu0 0.0
  %3970 = vmatprep.subr.mxu0 0.0
  %3971 = vmatpush1.msra.mxu0 0.0
  %3972 = vmatprep.subr.mxu0 0.0
  %3973 = vmatpush1.msra.mxu0 0.0
  %3974 = vmatprep.subr.mxu0 0.0
  %3975 = vmatpush1.msra.mxu0 0.0
  %3976 = vmatprep.subr.mxu0 0.0
  %3977 = vmatpush1.msra.mxu0 0.0
  %3978 = vmatprep.mubr.f32.mxu0 0.0
  %3979 = vmatmul.mubr.f32.gmra.mrb[0].mxu0 %v3818
  %v3980 = vpop.f32.mrb[0].mxu0
  %v3981 = vadd.f32 %v3896, %v3980
  %v3982 = vpop.f32.mrb[0].mxu0
  %3983 = vmatprep.mubr.f32.mxu0 0.0
  %3984 = vmatmul.mubr.f32.gmra.mrb[0].mxu0 %v3821
  %v3985 = vpop.f32.mrb[0].mxu0
  %v3986 = vadd.f32 %v3901, %v3985
  %v3987 = vpop.f32.mrb[0].mxu0
  %3988 = vmatprep.mubr.f32.mxu0 0.0
  %3989 = vmatmul.mubr.f32.gmra.mrb[0].mxu0 %v3824
  %v3990 = vpop.f32.mrb[0].mxu0
  %v3991 = vadd.f32 %v3906, %v3990
  %v3992 = vpop.f32.mrb[0].mxu0
  %3993 = vmatprep.mubr.f32.mxu0 0.0
  %3994 = vmatmul.mubr.f32.gmra.mrb[0].mxu0 %v3827
  %v3995 = vpop.f32.mrb[0].mxu0
  %v3996 = vadd.f32 %v3911, %v3995
  %v3997 = vpop.f32.mrb[0].mxu0
  %3998 = vdwg.mxu0
  %vm3999 = vcmask 130048
  %v4000 = vsel %vm3999, %v3981, 0.0
  %4001 = vadd.xlane.f32.xlu0 %v4000
  %v4002 = vpop.xlane.xlu0 %4001
  %v4003 = vsel %vm3999, %v3986, 0.0
  %4004 = vadd.xlane.f32.xlu0 %v4003
  %v4005 = vpop.xlane.xlu0 %4004
  %v4006 = vsel %vm3999, %v3991, 0.0
  %4007 = vadd.xlane.f32.xlu0 %v4006
  %v4008 = vpop.xlane.xlu0 %4007
  %v4009 = vsel %vm3999, %v3996, 0.0
  %4010 = vadd.xlane.f32.xlu0 %v4009
  %v4011 = vpop.xlane.xlu0 %4010
  %v4012 = vadd.f32 %v4002, %v4008
  %v4013 = vadd.f32 %v4005, %v4011
  %v4014 = vmul.f32 %v3981, %v3981
  %v4015 = vmul.f32 %v3986, %v3986
  %v4016 = vmul.f32 %v3991, %v3991
  %v4017 = vmul.f32 %v3996, %v3996
  %v4018 = vsel %vm3999, %v4014, 0.0
  %4019 = vadd.xlane.f32.xlu0 %v4018
  %v4020 = vpop.xlane.xlu0 %4019
  %v4021 = vsel %vm3999, %v4015, 0.0
  %4022 = vadd.xlane.f32.xlu0 %v4021
  %v4023 = vpop.xlane.xlu0 %4022
  %v4024 = vsel %vm3999, %v4016, 0.0
  %4025 = vadd.xlane.f32.xlu0 %v4024
  %v4026 = vpop.xlane.xlu0 %4025
  %v4027 = vsel %vm3999, %v4017, 0.0
  %4028 = vadd.xlane.f32.xlu0 %v4027
  %v4029 = vpop.xlane.xlu0 %4028
  %v4030 = vadd.f32 %v4020, %v4026
  %v4031 = vadd.f32 %v4023, %v4029
  %v4032 = vmul.f32 %v4012, 0.03125
  %v4033 = vmul.f32 %v4013, 0.03125
  %v4034 = vmul.f32 %v4030, 0.03125
  %v4035 = vmul.f32 %v4031, 0.03125
  %v4036 = vmul.f32 %v4032, %v4032
  %v4037 = vmul.f32 %v4033, %v4033
  %v4038 = vsub.f32 %v4034, %v4036
  %v4039 = vsub.f32 %v4035, %v4037
  %v4040 = vmax.f32 %v4038, 0.0
  %v4041 = vmax.f32 %v4039, 0.0
  %s4042 = scalar_lea.vmem %s18, 96
  %v4043 = vld [vmem:[%s4042] sm:$0xff]
  %v4044 = vld [vmem:[%s4042 + $0x8] sm:$0xff]
  %v4045 = vld [vmem:[%s4042 + $0x10] sm:$0xff]
  %v4046 = vld [vmem:[%s4042 + $0x18] sm:$0xff]
  %v4047 = vadd.f32 %v4040, 1e-05
  %v4048 = vadd.f32 %v4041, 1e-05
  %v4049 = vrsqrt.pop %v4047
  %v4050 = vrsqrt.pop %v4048
  %v4051 = vmul.f32 %v4043, %v4049
  %v4052 = vmul.f32 %v4044, %v4050
  %v4053 = vmul.f32 %v4045, %v4049
  %v4054 = vmul.f32 %v4046, %v4050
  %v4055 = vmul.f32 %v4032, %v4051
  %v4056 = vmul.f32 %v4033, %v4052
  %v4057 = vmul.f32 %v4032, %v4053
  %v4058 = vmul.f32 %v4033, %v4054
  %4063 = vrot.lane.b32.xlu0 %v4055, 1
  %v4064 = vpop.permute.xlu0 %4063
  %4065 = vrot.lane.b32.xlu0 %v4056, 1
  %v4066 = vpop.permute.xlu0 %4065
  %4067 = vrot.lane.b32.xlu0 %v4057, 1
  %v4068 = vpop.permute.xlu0 %4067
  %4069 = vrot.lane.b32.xlu0 %v4058, 1
  %v4070 = vpop.permute.xlu0 %4069
  %v4075 = vsub.f32 %v4043, %v4064
  %v4076 = vsub.f32 %v4044, %v4066
  %v4077 = vsub.f32 %v4045, %v4068
  %v4078 = vsub.f32 %v4046, %v4070
  %4080 = vset.pattern.permute.xlu0 0
  %4081 = vperm.xlu0 %4080, %v4051
  %v4082 = vpop.permute.xlu0 %4081
  %4085 = vset.pattern.permute.xlu0 0
  %4086 = vperm.xlu0 %4085, %v4052
  %v4087 = vpop.permute.xlu0 %4086
  %4090 = vset.pattern.permute.xlu0 0
  %4091 = vperm.xlu0 %4090, %v4053
  %v4092 = vpop.permute.xlu0 %4091
  %4095 = vset.pattern.permute.xlu0 0
  %4096 = vperm.xlu0 %4095, %v4054
  %v4097 = vpop.permute.xlu0 %4096
  %v4099 = vmul.f32 %v3981, %v4082
  %v4100 = vmul.f32 %v3986, %v4087
  %v4101 = vmul.f32 %v3991, %v4092
  %v4102 = vmul.f32 %v3996, %v4097
  %4104 = vset.pattern.permute.xlu0 1
  %4105 = vperm.xlu0 %4104, %v4075
  %v4106 = vpop.permute.xlu0 %4105
  %4109 = vset.pattern.permute.xlu0 1
  %4110 = vperm.xlu0 %4109, %v4076
  %v4111 = vpop.permute.xlu0 %4110
  %4114 = vset.pattern.permute.xlu0 1
  %4115 = vperm.xlu0 %4114, %v4077
  %v4116 = vpop.permute.xlu0 %4115
  %4119 = vset.pattern.permute.xlu0 1
  %4120 = vperm.xlu0 %4119, %v4078
  %v4121 = vpop.permute.xlu0 %4120
  %v4123 = vadd.f32 %v4099, %v4106
  %v4124 = vadd.f32 %v4100, %v4111
  %v4125 = vadd.f32 %v4101, %v4116
  %v4126 = vadd.f32 %v4102, %v4121
  %vm4127 = vcmp.ge.f32.partialorder %v4123, 0.0
  %vm4128 = vcmp.ge.f32.partialorder %v4124, 0.0
  %vm4129 = vcmp.ge.f32.partialorder %v4125, 0.0
  %vm4130 = vcmp.ge.f32.partialorder %v4126, 0.0
  %v4131 = vmul.f32 %v4123, 0.2
  %v4132 = vmul.f32 %v4124, 0.2
  %v4133 = vmul.f32 %v4125, 0.2
  %v4134 = vmul.f32 %v4126, 0.2
  %v4135 = vsel %vm4127, %v4123, %v4131
  %v4136 = vsel %vm4128, %v4124, %v4132
  %v4137 = vsel %vm4129, %v4125, %v4133
  %v4138 = vsel %vm4130, %v4126, %v4134
  %v4139 = vpack.c.bf16 %v4136, %v4135
  %v4140 = vpack.c.bf16 %v4138, %v4137
  %v4141 = vld [vmem:[%s4] sm:$0xf]
  %v4142 = vld [vmem:[%s4 + $0x4] sm:$0xf]
  %v4145 = vunpack.c.l.b16 %v4141
  %v4146 = vunpack.c.l.b16 %v4142
  %v4147 = vpack.c.b16 %v4146, %v4145
  %v4150 = vsel %vm3999, %v4139, 0
  %v4153 = vsel %vm3999, %v4140, 0
  %4155 = vmatprep.subr.bf16.mxu0 0
  %4156 = vmatpush1.bf16.msra.mxu0 %v4147
  %4157 = vmatprep.subr.bf16.mxu0 0
  %4158 = vmatpush1.bf16.msra.mxu0 0
  %4159 = vmatprep.subr.bf16.mxu0 0
  %4160 = vmatpush1.bf16.msra.mxu0 0
  %4161 = vmatprep.subr.bf16.mxu0 0
  %4162 = vmatpush1.bf16.msra.mxu0 0
  %4163 = vmatprep.subr.bf16.mxu0 0
  %4164 = vmatpush1.bf16.msra.mxu0 0
  %4165 = vmatprep.subr.bf16.mxu0 0
  %4166 = vmatpush1.bf16.msra.mxu0 0
  %4167 = vmatprep.subr.bf16.mxu0 0
  %4168 = vmatpush1.bf16.msra.mxu0 0
  %4169 = vmatprep.subr.bf16.mxu0 0
  %4170 = vmatpush1.bf16.msra.mxu0 0
  %4171 = vmatprep.subr.bf16.mxu0 0
  %4172 = vmatpush1.bf16.msra.mxu0 0
  %4173 = vmatprep.subr.bf16.mxu0 0
  %4174 = vmatpush1.bf16.msra.mxu0 0
  %4175 = vmatprep.subr.bf16.mxu0 0
  %4176 = vmatpush1.bf16.msra.mxu0 0
  %4177 = vmatprep.subr.bf16.mxu0 0
  %4178 = vmatpush1.bf16.msra.mxu0 0
  %4179 = vmatprep.subr.bf16.mxu0 0
  %4180 = vmatpush1.bf16.msra.mxu0 0
  %4181 = vmatprep.subr.bf16.mxu0 0
  %4182 = vmatpush1.bf16.msra.mxu0 0
  %4183 = vmatprep.subr.bf16.mxu0 0
  %4184 = vmatpush1.bf16.msra.mxu0 0
  %4185 = vmatprep.subr.bf16.mxu0 0
  %4186 = vmatpush1.bf16.msra.mxu0 0
  %4187 = vmatprep.mubr.bf16.mxu0 0
  %4188 = vmatmul.mubr.bf16.gmra.mrb[0].mxu0 %v4150
  %v4189 = vpop.f32.mrb[0].mxu0
  %v4190 = vadd.f32 0.0, %v4189
  %v4191 = vpop.f32.mrb[0].mxu0
  %v4192 = vpop.f32.mrb[0].mxu0
  %v4193 = vadd.f32 0.0, %v4192
  %v4194 = vpop.f32.mrb[0].mxu0
  %4195 = vmatprep.mubr.bf16.mxu0 0
  %4196 = vmatmul.mubr.bf16.gmra.mrb[0].mxu0 %v4153
  %v4197 = vpop.f32.mrb[0].mxu0
  %v4198 = vadd.f32 0.0, %v4197
  %v4199 = vpop.f32.mrb[0].mxu0
  %v4200 = vpop.f32.mrb[0].mxu0
  %v4201 = vadd.f32 0.0, %v4200
  %v4202 = vpop.f32.mrb[0].mxu0
  %4203 = vdwg.mxu0
  %s4204 = scalar_lea.vmem %s4, 8
  %v4205 = vld [vmem:[%s4204] sm:$0xf]
  %v4206 = vld [vmem:[%s4204 + $0x4] sm:$0xf]
  %v4209 = vunpack.c.l.b16 %v4205
  %v4210 = vunpack.c.l.b16 %v4206
  %v4211 = vpack.c.b16 %v4210, %v4209
  %4213 = vmatprep.subr.bf16.mxu0 0
  %4214 = vmatpush1.bf16.msra.mxu0 %v4211
  %4215 = vmatprep.subr.bf16.mxu0 0
  %4216 = vmatpush1.bf16.msra.mxu0 0
  %4217 = vmatprep.subr.bf16.mxu0 0
  %4218 = vmatpush1.bf16.msra.mxu0 0
  %4219 = vmatprep.subr.bf16.mxu0 0
  %4220 = vmatpush1.bf16.msra.mxu0 0
  %4221 = vmatprep.subr.bf16.mxu0 0
  %4222 = vmatpush1.bf16.msra.mxu0 0
  %4223 = vmatprep.subr.bf16.mxu0 0
  %4224 = vmatpush1.bf16.msra.mxu0 0
  %4225 = vmatprep.subr.bf16.mxu0 0
  %4226 = vmatpush1.bf16.msra.mxu0 0
  %4227 = vmatprep.subr.bf16.mxu0 0
  %4228 = vmatpush1.bf16.msra.mxu0 0
  %4229 = vmatprep.subr.bf16.mxu0 0
  %4230 = vmatpush1.bf16.msra.mxu0 0
  %4231 = vmatprep.subr.bf16.mxu0 0
  %4232 = vmatpush1.bf16.msra.mxu0 0
  %4233 = vmatprep.subr.bf16.mxu0 0
  %4234 = vmatpush1.bf16.msra.mxu0 0
  %4235 = vmatprep.subr.bf16.mxu0 0
  %4236 = vmatpush1.bf16.msra.mxu0 0
  %4237 = vmatprep.subr.bf16.mxu0 0
  %4238 = vmatpush1.bf16.msra.mxu0 0
  %4239 = vmatprep.subr.bf16.mxu0 0
  %4240 = vmatpush1.bf16.msra.mxu0 0
  %4241 = vmatprep.subr.bf16.mxu0 0
  %4242 = vmatpush1.bf16.msra.mxu0 0
  %4243 = vmatprep.subr.bf16.mxu0 0
  %4244 = vmatpush1.bf16.msra.mxu0 0
  %4245 = vmatprep.mubr.bf16.mxu0 0
  %4246 = vmatmul.mubr.bf16.gmra.mrb[0].mxu0 %v4150
  %v4247 = vpop.f32.mrb[0].mxu0
  %v4248 = vadd.f32 0.0, %v4247
  %v4249 = vpop.f32.mrb[0].mxu0
  %v4250 = vpop.f32.mrb[0].mxu0
  %v4251 = vadd.f32 0.0, %v4250
  %v4252 = vpop.f32.mrb[0].mxu0
  %4253 = vmatprep.mubr.bf16.mxu0 0
  %4254 = vmatmul.mubr.bf16.gmra.mrb[0].mxu0 %v4153
  %v4255 = vpop.f32.mrb[0].mxu0
  %v4256 = vadd.f32 0.0, %v4255
  %v4257 = vpop.f32.mrb[0].mxu0
  %v4258 = vpop.f32.mrb[0].mxu0
  %v4259 = vadd.f32 0.0, %v4258
  %v4260 = vpop.f32.mrb[0].mxu0
  %4261 = vdwg.mxu0
  %s4262 = scalar_lea.vmem %s4, 16
  %v4263 = vld [vmem:[%s4262] sm:$0xf]
  %v4264 = vld [vmem:[%s4262 + $0x4] sm:$0xf]
  %v4267 = vunpack.c.l.b16 %v4263
  %v4268 = vunpack.c.l.b16 %v4264
  %v4269 = vpack.c.b16 %v4268, %v4267
  %4271 = vmatprep.subr.bf16.mxu0 0
  %4272 = vmatpush1.bf16.msra.mxu0 %v4269
  %4273 = vmatprep.subr.bf16.mxu0 0
  %4274 = vmatpush1.bf16.msra.mxu0 0
  %4275 = vmatprep.subr.bf16.mxu0 0
  %4276 = vmatpush1.bf16.msra.mxu0 0
  %4277 = vmatprep.subr.bf16.mxu0 0
  %4278 = vmatpush1.bf16.msra.mxu0 0
  %4279 = vmatprep.subr.bf16.mxu0 0
  %4280 = vmatpush1.bf16.msra.mxu0 0
  %4281 = vmatprep.subr.bf16.mxu0 0
  %4282 = vmatpush1.bf16.msra.mxu0 0
  %4283 = vmatprep.subr.bf16.mxu0 0
  %4284 = vmatpush1.bf16.msra.mxu0 0
  %4285 = vmatprep.subr.bf16.mxu0 0
  %4286 = vmatpush1.bf16.msra.mxu0 0
  %4287 = vmatprep.subr.bf16.mxu0 0
  %4288 = vmatpush1.bf16.msra.mxu0 0
  %4289 = vmatprep.subr.bf16.mxu0 0
  %4290 = vmatpush1.bf16.msra.mxu0 0
  %4291 = vmatprep.subr.bf16.mxu0 0
  %4292 = vmatpush1.bf16.msra.mxu0 0
  %4293 = vmatprep.subr.bf16.mxu0 0
  %4294 = vmatpush1.bf16.msra.mxu0 0
  %4295 = vmatprep.subr.bf16.mxu0 0
  %4296 = vmatpush1.bf16.msra.mxu0 0
  %4297 = vmatprep.subr.bf16.mxu0 0
  %4298 = vmatpush1.bf16.msra.mxu0 0
  %4299 = vmatprep.subr.bf16.mxu0 0
  %4300 = vmatpush1.bf16.msra.mxu0 0
  %4301 = vmatprep.subr.bf16.mxu0 0
  %4302 = vmatpush1.bf16.msra.mxu0 0
  %4303 = vmatprep.mubr.bf16.mxu0 0
  %4304 = vmatmul.mubr.bf16.gmra.mrb[0].mxu0 %v4150
  %v4305 = vpop.f32.mrb[0].mxu0
  %v4306 = vadd.f32 0.0, %v4305
  %v4307 = vpop.f32.mrb[0].mxu0
  %v4308 = vpop.f32.mrb[0].mxu0
  %v4309 = vadd.f32 0.0, %v4308
  %v4310 = vpop.f32.mrb[0].mxu0
  %4311 = vmatprep.mubr.bf16.mxu0 0
  %4312 = vmatmul.mubr.bf16.gmra.mrb[0].mxu0 %v4153
  %v4313 = vpop.f32.mrb[0].mxu0
  %v4314 = vadd.f32 0.0, %v4313
  %v4315 = vpop.f32.mrb[0].mxu0
  %v4316 = vpop.f32.mrb[0].mxu0
  %v4317 = vadd.f32 0.0, %v4316
  %v4318 = vpop.f32.mrb[0].mxu0
  %4319 = vdwg.mxu0
  %s4320 = scalar_lea.vmem %s4, 24
  %v4321 = vld [vmem:[%s4320] sm:$0xf]
  %v4322 = vld [vmem:[%s4320 + $0x4] sm:$0xf]
  %v4325 = vunpack.c.l.b16 %v4321
  %v4326 = vunpack.c.l.b16 %v4322
  %v4327 = vpack.c.b16 %v4326, %v4325
  %4329 = vmatprep.subr.bf16.mxu0 0
  %4330 = vmatpush1.bf16.msra.mxu0 %v4327
  %4331 = vmatprep.subr.bf16.mxu0 0
  %4332 = vmatpush1.bf16.msra.mxu0 0
  %4333 = vmatprep.subr.bf16.mxu0 0
  %4334 = vmatpush1.bf16.msra.mxu0 0
  %4335 = vmatprep.subr.bf16.mxu0 0
  %4336 = vmatpush1.bf16.msra.mxu0 0
  %4337 = vmatprep.subr.bf16.mxu0 0
  %4338 = vmatpush1.bf16.msra.mxu0 0
  %4339 = vmatprep.subr.bf16.mxu0 0
  %4340 = vmatpush1.bf16.msra.mxu0 0
  %4341 = vmatprep.subr.bf16.mxu0 0
  %4342 = vmatpush1.bf16.msra.mxu0 0
  %4343 = vmatprep.subr.bf16.mxu0 0
  %4344 = vmatpush1.bf16.msra.mxu0 0
  %4345 = vmatprep.subr.bf16.mxu0 0
  %4346 = vmatpush1.bf16.msra.mxu0 0
  %4347 = vmatprep.subr.bf16.mxu0 0
  %4348 = vmatpush1.bf16.msra.mxu0 0
  %4349 = vmatprep.subr.bf16.mxu0 0
  %4350 = vmatpush1.bf16.msra.mxu0 0
  %4351 = vmatprep.subr.bf16.mxu0 0
  %4352 = vmatpush1.bf16.msra.mxu0 0
  %4353 = vmatprep.subr.bf16.mxu0 0
  %4354 = vmatpush1.bf16.msra.mxu0 0
  %4355 = vmatprep.subr.bf16.mxu0 0
  %4356 = vmatpush1.bf16.msra.mxu0 0
  %4357 = vmatprep.subr.bf16.mxu0 0
  %4358 = vmatpush1.bf16.msra.mxu0 0
  %4359 = vmatprep.subr.bf16.mxu0 0
  %4360 = vmatpush1.bf16.msra.mxu0 0
  %4361 = vmatprep.mubr.bf16.mxu0 0
  %4362 = vmatmul.mubr.bf16.gmra.mrb[0].mxu0 %v4150
  %v4363 = vpop.f32.mrb[0].mxu0
  %v4364 = vadd.f32 0.0, %v4363
  %v4365 = vpop.f32.mrb[0].mxu0
  %v4366 = vpop.f32.mrb[0].mxu0
  %v4367 = vadd.f32 0.0, %v4366
  %v4368 = vpop.f32.mrb[0].mxu0
  %4369 = vmatprep.mubr.bf16.mxu0 0
  %4370 = vmatmul.mubr.bf16.gmra.mrb[0].mxu0 %v4153
  %v4371 = vpop.f32.mrb[0].mxu0
  %v4372 = vadd.f32 0.0, %v4371
  %v4373 = vpop.f32.mrb[0].mxu0
  %v4374 = vpop.f32.mrb[0].mxu0
  %v4375 = vadd.f32 0.0, %v4374
  %v4376 = vpop.f32.mrb[0].mxu0
  %4377 = vdwg.mxu0
  %s4378 = scalar_lea.vmem %s4, 32
  %v4379 = vld [vmem:[%s4378] sm:$0xf]
  %v4380 = vld [vmem:[%s4378 + $0x4] sm:$0xf]
  %v4383 = vunpack.c.l.b16 %v4379
  %v4384 = vunpack.c.l.b16 %v4380
  %v4385 = vpack.c.b16 %v4384, %v4383
  %4387 = vmatprep.subr.bf16.mxu0 0
  %4388 = vmatpush1.bf16.msra.mxu0 %v4385
  %4389 = vmatprep.subr.bf16.mxu0 0
  %4390 = vmatpush1.bf16.msra.mxu0 0
  %4391 = vmatprep.subr.bf16.mxu0 0
  %4392 = vmatpush1.bf16.msra.mxu0 0
  %4393 = vmatprep.subr.bf16.mxu0 0
  %4394 = vmatpush1.bf16.msra.mxu0 0
  %4395 = vmatprep.subr.bf16.mxu0 0
  %4396 = vmatpush1.bf16.msra.mxu0 0
  %4397 = vmatprep.subr.bf16.mxu0 0
  %4398 = vmatpush1.bf16.msra.mxu0 0
  %4399 = vmatprep.subr.bf16.mxu0 0
  %4400 = vmatpush1.bf16.msra.mxu0 0
  %4401 = vmatprep.subr.bf16.mxu0 0
  %4402 = vmatpush1.bf16.msra.mxu0 0
  %4403 = vmatprep.subr.bf16.mxu0 0
  %4404 = vmatpush1.bf16.msra.mxu0 0
  %4405 = vmatprep.subr.bf16.mxu0 0
  %4406 = vmatpush1.bf16.msra.mxu0 0
  %4407 = vmatprep.subr.bf16.mxu0 0
  %4408 = vmatpush1.bf16.msra.mxu0 0
  %4409 = vmatprep.subr.bf16.mxu0 0
  %4410 = vmatpush1.bf16.msra.mxu0 0
  %4411 = vmatprep.subr.bf16.mxu0 0
  %4412 = vmatpush1.bf16.msra.mxu0 0
  %4413 = vmatprep.subr.bf16.mxu0 0
  %4414 = vmatpush1.bf16.msra.mxu0 0
  %4415 = vmatprep.subr.bf16.mxu0 0
  %4416 = vmatpush1.bf16.msra.mxu0 0
  %4417 = vmatprep.subr.bf16.mxu0 0
  %4418 = vmatpush1.bf16.msra.mxu0 0
  %4419 = vmatprep.mubr.bf16.mxu0 0
  %4420 = vmatmul.mubr.bf16.gmra.mrb[0].mxu0 %v4150
  %v4421 = vpop.f32.mrb[0].mxu0
  %v4422 = vadd.f32 0.0, %v4421
  %v4423 = vpop.f32.mrb[0].mxu0
  %v4424 = vpop.f32.mrb[0].mxu0
  %v4425 = vadd.f32 0.0, %v4424
  %v4426 = vpop.f32.mrb[0].mxu0
  %4427 = vmatprep.mubr.bf16.mxu0 0
  %4428 = vmatmul.mubr.bf16.gmra.mrb[0].mxu0 %v4153
  %v4429 = vpop.f32.mrb[0].mxu0
  %v4430 = vadd.f32 0.0, %v4429
  %v4431 = vpop.f32.mrb[0].mxu0
  %v4432 = vpop.f32.mrb[0].mxu0
  %v4433 = vadd.f32 0.0, %v4432
  %v4434 = vpop.f32.mrb[0].mxu0
  %4435 = vdwg.mxu0
  %s4436 = scalar_lea.vmem %s4, 40
  %v4437 = vld [vmem:[%s4436] sm:$0xf]
  %v4438 = vld [vmem:[%s4436 + $0x4] sm:$0xf]
  %v4441 = vunpack.c.l.b16 %v4437
  %v4442 = vunpack.c.l.b16 %v4438
  %v4443 = vpack.c.b16 %v4442, %v4441
  %4445 = vmatprep.subr.bf16.mxu0 0
  %4446 = vmatpush1.bf16.msra.mxu0 %v4443
  %4447 = vmatprep.subr.bf16.mxu0 0
  %4448 = vmatpush1.bf16.msra.mxu0 0
  %4449 = vmatprep.subr.bf16.mxu0 0
  %4450 = vmatpush1.bf16.msra.mxu0 0
  %4451 = vmatprep.subr.bf16.mxu0 0
  %4452 = vmatpush1.bf16.msra.mxu0 0
  %4453 = vmatprep.subr.bf16.mxu0 0
  %4454 = vmatpush1.bf16.msra.mxu0 0
  %4455 = vmatprep.subr.bf16.mxu0 0
  %4456 = vmatpush1.bf16.msra.mxu0 0
  %4457 = vmatprep.subr.bf16.mxu0 0
  %4458 = vmatpush1.bf16.msra.mxu0 0
  %4459 = vmatprep.subr.bf16.mxu0 0
  %4460 = vmatpush1.bf16.msra.mxu0 0
  %4461 = vmatprep.subr.bf16.mxu0 0
  %4462 = vmatpush1.bf16.msra.mxu0 0
  %4463 = vmatprep.subr.bf16.mxu0 0
  %4464 = vmatpush1.bf16.msra.mxu0 0
  %4465 = vmatprep.subr.bf16.mxu0 0
  %4466 = vmatpush1.bf16.msra.mxu0 0
  %4467 = vmatprep.subr.bf16.mxu0 0
  %4468 = vmatpush1.bf16.msra.mxu0 0
  %4469 = vmatprep.subr.bf16.mxu0 0
  %4470 = vmatpush1.bf16.msra.mxu0 0
  %4471 = vmatprep.subr.bf16.mxu0 0
  %4472 = vmatpush1.bf16.msra.mxu0 0
  %4473 = vmatprep.subr.bf16.mxu0 0
  %4474 = vmatpush1.bf16.msra.mxu0 0
  %4475 = vmatprep.subr.bf16.mxu0 0
  %4476 = vmatpush1.bf16.msra.mxu0 0
  %4477 = vmatprep.mubr.bf16.mxu0 0
  %4478 = vmatmul.mubr.bf16.gmra.mrb[0].mxu0 %v4150
  %v4479 = vpop.f32.mrb[0].mxu0
  %v4480 = vadd.f32 0.0, %v4479
  %v4481 = vpop.f32.mrb[0].mxu0
  %v4482 = vpop.f32.mrb[0].mxu0
  %v4483 = vadd.f32 0.0, %v4482
  %v4484 = vpop.f32.mrb[0].mxu0
  %4485 = vmatprep.mubr.bf16.mxu0 0
  %4486 = vmatmul.mubr.bf16.gmra.mrb[0].mxu0 %v4153
  %v4487 = vpop.f32.mrb[0].mxu0
  %v4488 = vadd.f32 0.0, %v4487
  %v4489 = vpop.f32.mrb[0].mxu0
  %v4490 = vpop.f32.mrb[0].mxu0
  %v4491 = vadd.f32 0.0, %v4490
  %v4492 = vpop.f32.mrb[0].mxu0
  %4493 = vdwg.mxu0
  %s4494 = scalar_lea.vmem %s4, 48
  %v4495 = vld [vmem:[%s4494] sm:$0xf]
  %v4496 = vld [vmem:[%s4494 + $0x4] sm:$0xf]
  %v4499 = vunpack.c.l.b16 %v4495
  %v4500 = vunpack.c.l.b16 %v4496
  %v4501 = vpack.c.b16 %v4500, %v4499
  %4503 = vmatprep.subr.bf16.mxu0 0
  %4504 = vmatpush1.bf16.msra.mxu0 %v4501
  %4505 = vmatprep.subr.bf16.mxu0 0
  %4506 = vmatpush1.bf16.msra.mxu0 0
  %4507 = vmatprep.subr.bf16.mxu0 0
  %4508 = vmatpush1.bf16.msra.mxu0 0
  %4509 = vmatprep.subr.bf16.mxu0 0
  %4510 = vmatpush1.bf16.msra.mxu0 0
  %4511 = vmatprep.subr.bf16.mxu0 0
  %4512 = vmatpush1.bf16.msra.mxu0 0
  %4513 = vmatprep.subr.bf16.mxu0 0
  %4514 = vmatpush1.bf16.msra.mxu0 0
  %4515 = vmatprep.subr.bf16.mxu0 0
  %4516 = vmatpush1.bf16.msra.mxu0 0
  %4517 = vmatprep.subr.bf16.mxu0 0
  %4518 = vmatpush1.bf16.msra.mxu0 0
  %4519 = vmatprep.subr.bf16.mxu0 0
  %4520 = vmatpush1.bf16.msra.mxu0 0
  %4521 = vmatprep.subr.bf16.mxu0 0
  %4522 = vmatpush1.bf16.msra.mxu0 0
  %4523 = vmatprep.subr.bf16.mxu0 0
  %4524 = vmatpush1.bf16.msra.mxu0 0
  %4525 = vmatprep.subr.bf16.mxu0 0
  %4526 = vmatpush1.bf16.msra.mxu0 0
  %4527 = vmatprep.subr.bf16.mxu0 0
  %4528 = vmatpush1.bf16.msra.mxu0 0
  %4529 = vmatprep.subr.bf16.mxu0 0
  %4530 = vmatpush1.bf16.msra.mxu0 0
  %4531 = vmatprep.subr.bf16.mxu0 0
  %4532 = vmatpush1.bf16.msra.mxu0 0
  %4533 = vmatprep.subr.bf16.mxu0 0
  %4534 = vmatpush1.bf16.msra.mxu0 0
  %4535 = vmatprep.mubr.bf16.mxu0 0
  %4536 = vmatmul.mubr.bf16.gmra.mrb[0].mxu0 %v4150
  %v4537 = vpop.f32.mrb[0].mxu0
  %v4538 = vadd.f32 0.0, %v4537
  %v4539 = vpop.f32.mrb[0].mxu0
  %v4540 = vpop.f32.mrb[0].mxu0
  %v4541 = vadd.f32 0.0, %v4540
  %v4542 = vpop.f32.mrb[0].mxu0
  %4543 = vmatprep.mubr.bf16.mxu0 0
  %4544 = vmatmul.mubr.bf16.gmra.mrb[0].mxu0 %v4153
  %v4545 = vpop.f32.mrb[0].mxu0
  %v4546 = vadd.f32 0.0, %v4545
  %v4547 = vpop.f32.mrb[0].mxu0
  %v4548 = vpop.f32.mrb[0].mxu0
  %v4549 = vadd.f32 0.0, %v4548
  %v4550 = vpop.f32.mrb[0].mxu0
  %4551 = vdwg.mxu0
  %s4552 = scalar_lea.vmem %s4, 56
  %v4553 = vld [vmem:[%s4552] sm:$0xf]
  %v4554 = vld [vmem:[%s4552 + $0x4] sm:$0xf]
  %v4557 = vunpack.c.l.b16 %v4553
  %v4558 = vunpack.c.l.b16 %v4554
  %v4559 = vpack.c.b16 %v4558, %v4557
  %4561 = vmatprep.subr.bf16.mxu0 0
  %4562 = vmatpush1.bf16.msra.mxu0 %v4559
  %4563 = vmatprep.subr.bf16.mxu0 0
  %4564 = vmatpush1.bf16.msra.mxu0 0
  %4565 = vmatprep.subr.bf16.mxu0 0
  %4566 = vmatpush1.bf16.msra.mxu0 0
  %4567 = vmatprep.subr.bf16.mxu0 0
  %4568 = vmatpush1.bf16.msra.mxu0 0
  %4569 = vmatprep.subr.bf16.mxu0 0
  %4570 = vmatpush1.bf16.msra.mxu0 0
  %4571 = vmatprep.subr.bf16.mxu0 0
  %4572 = vmatpush1.bf16.msra.mxu0 0
  %4573 = vmatprep.subr.bf16.mxu0 0
  %4574 = vmatpush1.bf16.msra.mxu0 0
  %4575 = vmatprep.subr.bf16.mxu0 0
  %4576 = vmatpush1.bf16.msra.mxu0 0
  %4577 = vmatprep.subr.bf16.mxu0 0
  %4578 = vmatpush1.bf16.msra.mxu0 0
  %4579 = vmatprep.subr.bf16.mxu0 0
  %4580 = vmatpush1.bf16.msra.mxu0 0
  %4581 = vmatprep.subr.bf16.mxu0 0
  %4582 = vmatpush1.bf16.msra.mxu0 0
  %4583 = vmatprep.subr.bf16.mxu0 0
  %4584 = vmatpush1.bf16.msra.mxu0 0
  %4585 = vmatprep.subr.bf16.mxu0 0
  %4586 = vmatpush1.bf16.msra.mxu0 0
  %4587 = vmatprep.subr.bf16.mxu0 0
  %4588 = vmatpush1.bf16.msra.mxu0 0
  %4589 = vmatprep.subr.bf16.mxu0 0
  %4590 = vmatpush1.bf16.msra.mxu0 0
  %4591 = vmatprep.subr.bf16.mxu0 0
  %4592 = vmatpush1.bf16.msra.mxu0 0
  %4593 = vmatprep.mubr.bf16.mxu0 0
  %4594 = vmatmul.mubr.bf16.gmra.mrb[0].mxu0 %v4150
  %v4595 = vpop.f32.mrb[0].mxu0
  %v4596 = vadd.f32 0.0, %v4595
  %v4597 = vpop.f32.mrb[0].mxu0
  %v4598 = vpop.f32.mrb[0].mxu0
  %v4599 = vadd.f32 0.0, %v4598
  %v4600 = vpop.f32.mrb[0].mxu0
  %4601 = vmatprep.mubr.bf16.mxu0 0
  %4602 = vmatmul.mubr.bf16.gmra.mrb[0].mxu0 %v4153
  %v4603 = vpop.f32.mrb[0].mxu0
  %v4604 = vadd.f32 0.0, %v4603
  %v4605 = vpop.f32.mrb[0].mxu0
  %v4606 = vpop.f32.mrb[0].mxu0
  %v4607 = vadd.f32 0.0, %v4606
  %v4608 = vpop.f32.mrb[0].mxu0
  %4609 = vdwg.mxu0
  %s4610 = scalar_lea.vmem %s4, 64
  %v4611 = vld [vmem:[%s4610] sm:$0xf]
  %v4612 = vld [vmem:[%s4610 + $0x4] sm:$0xf]
  %v4615 = vunpack.c.l.b16 %v4611
  %v4616 = vunpack.c.l.b16 %v4612
  %v4617 = vpack.c.b16 %v4616, %v4615
  %4619 = vmatprep.subr.bf16.mxu0 0
  %4620 = vmatpush1.bf16.msra.mxu0 %v4617
  %4621 = vmatprep.subr.bf16.mxu0 0
  %4622 = vmatpush1.bf16.msra.mxu0 0
  %4623 = vmatprep.subr.bf16.mxu0 0
  %4624 = vmatpush1.bf16.msra.mxu0 0
  %4625 = vmatprep.subr.bf16.mxu0 0
  %4626 = vmatpush1.bf16.msra.mxu0 0
  %4627 = vmatprep.subr.bf16.mxu0 0
  %4628 = vmatpush1.bf16.msra.mxu0 0
  %4629 = vmatprep.subr.bf16.mxu0 0
  %4630 = vmatpush1.bf16.msra.mxu0 0
  %4631 = vmatprep.subr.bf16.mxu0 0
  %4632 = vmatpush1.bf16.msra.mxu0 0
  %4633 = vmatprep.subr.bf16.mxu0 0
  %4634 = vmatpush1.bf16.msra.mxu0 0
  %4635 = vmatprep.subr.bf16.mxu0 0
  %4636 = vmatpush1.bf16.msra.mxu0 0
  %4637 = vmatprep.subr.bf16.mxu0 0
  %4638 = vmatpush1.bf16.msra.mxu0 0
  %4639 = vmatprep.subr.bf16.mxu0 0
  %4640 = vmatpush1.bf16.msra.mxu0 0
  %4641 = vmatprep.subr.bf16.mxu0 0
  %4642 = vmatpush1.bf16.msra.mxu0 0
  %4643 = vmatprep.subr.bf16.mxu0 0
  %4644 = vmatpush1.bf16.msra.mxu0 0
  %4645 = vmatprep.subr.bf16.mxu0 0
  %4646 = vmatpush1.bf16.msra.mxu0 0
  %4647 = vmatprep.subr.bf16.mxu0 0
  %4648 = vmatpush1.bf16.msra.mxu0 0
  %4649 = vmatprep.subr.bf16.mxu0 0
  %4650 = vmatpush1.bf16.msra.mxu0 0
  %4651 = vmatprep.mubr.bf16.mxu0 0
  %4652 = vmatmul.mubr.bf16.gmra.mrb[0].mxu0 %v4150
  %v4653 = vpop.f32.mrb[0].mxu0
  %v4654 = vadd.f32 0.0, %v4653
  %v4655 = vpop.f32.mrb[0].mxu0
  %v4656 = vpop.f32.mrb[0].mxu0
  %v4657 = vadd.f32 0.0, %v4656
  %v4658 = vpop.f32.mrb[0].mxu0
  %4659 = vmatprep.mubr.bf16.mxu0 0
  %4660 = vmatmul.mubr.bf16.gmra.mrb[0].mxu0 %v4153
  %v4661 = vpop.f32.mrb[0].mxu0
  %v4662 = vadd.f32 0.0, %v4661
  %v4663 = vpop.f32.mrb[0].mxu0
  %v4664 = vpop.f32.mrb[0].mxu0
  %v4665 = vadd.f32 0.0, %v4664
  %v4666 = vpop.f32.mrb[0].mxu0
  %4667 = vdwg.mxu0
  %v4668 = vld [vmem:[%s12] sm:$0xff]
  %v4669 = vld [vmem:[%s12 + $0x8] sm:$0xff]
  %v4670 = vld [vmem:[%s12 + $0x10] sm:$0xff]
  %v4671 = vld [vmem:[%s12 + $0x18] sm:$0xff]
  %v4672 = vld [vmem:[%s12 + $0x20] sm:$0xff]
  %v4673 = vld [vmem:[%s12 + $0x28] sm:$0xff]
  %v4674 = vld [vmem:[%s12 + $0x30] sm:$0xff]
  %v4675 = vld [vmem:[%s12 + $0x38] sm:$0xff]
  %v4676 = vld [vmem:[%s12 + $0x40] sm:$0xff]
  %v4677 = vld [vmem:[%s12 + $0x48] sm:$0xff]
  %v4678 = vld [vmem:[%s12 + $0x50] sm:$0xff]
  %v4679 = vld [vmem:[%s12 + $0x58] sm:$0xff]
  %v4681 = vsel %vm2585, %v4670, 0
  %v4684 = vsel %vm2585, %v4673, 0
  %v4687 = vsel %vm2585, %v4676, 0
  %v4690 = vsel %vm2585, %v4679, 0
  %4692 = vmatprep.subr.mxu0 0.0
  %4693 = vmatpush1.msra.mxu0 %v4190
  %4694 = vmatprep.subr.mxu0 0.0
  %4695 = vmatpush1.msra.mxu0 %v4193
  %4696 = vmatprep.subr.mxu0 0.0
  %4697 = vmatpush1.msra.mxu0 %v4198
  %4698 = vmatprep.subr.mxu0 0.0
  %4699 = vmatpush1.msra.mxu0 %v4201
  %4700 = vmatprep.subr.mxu0 0.0
  %4701 = vmatpush1.msra.mxu0 %v4248
  %4702 = vmatprep.subr.mxu0 0.0
  %4703 = vmatpush1.msra.mxu0 %v4251
  %4704 = vmatprep.subr.mxu0 0.0
  %4705 = vmatpush1.msra.mxu0 %v4256
  %4706 = vmatprep.subr.mxu0 0.0
  %4707 = vmatpush1.msra.mxu0 %v4259
  %4708 = vmatprep.subr.mxu0 0.0
  %4709 = vmatpush1.msra.mxu0 %v4306
  %4710 = vmatprep.subr.mxu0 0.0
  %4711 = vmatpush1.msra.mxu0 %v4309
  %4712 = vmatprep.subr.mxu0 0.0
  %4713 = vmatpush1.msra.mxu0 %v4314
  %4714 = vmatprep.subr.mxu0 0.0
  %4715 = vmatpush1.msra.mxu0 %v4317
  %4716 = vmatprep.subr.mxu0 0.0
  %4717 = vmatpush1.msra.mxu0 %v4364
  %4718 = vmatprep.subr.mxu0 0.0
  %4719 = vmatpush1.msra.mxu0 %v4367
  %4720 = vmatprep.subr.mxu0 0.0
  %4721 = vmatpush1.msra.mxu0 %v4372
  %4722 = vmatprep.subr.mxu0 0.0
  %4723 = vmatpush1.msra.mxu0 %v4375
  %4724 = vmatprep.subr.mxu0 0.0
  %4725 = vmatpush1.msra.mxu0 %v4422
  %4726 = vmatprep.subr.mxu0 0.0
  %4727 = vmatpush1.msra.mxu0 %v4425
  %4728 = vmatprep.subr.mxu0 0.0
  %4729 = vmatpush1.msra.mxu0 %v4430
  %4730 = vmatprep.subr.mxu0 0.0
  %4731 = vmatpush1.msra.mxu0 %v4433
  %4732 = vmatprep.subr.mxu0 0.0
  %4733 = vmatpush1.msra.mxu0 %v4480
  %4734 = vmatprep.subr.mxu0 0.0
  %4735 = vmatpush1.msra.mxu0 %v4483
  %4736 = vmatprep.subr.mxu0 0.0
  %4737 = vmatpush1.msra.mxu0 %v4488
  %4738 = vmatprep.subr.mxu0 0.0
  %4739 = vmatpush1.msra.mxu0 %v4491
  %4740 = vmatprep.subr.mxu0 0.0
  %4741 = vmatpush1.msra.mxu0 %v4538
  %4742 = vmatprep.subr.mxu0 0.0
  %4743 = vmatpush1.msra.mxu0 %v4541
  %4744 = vmatprep.subr.mxu0 0.0
  %4745 = vmatpush1.msra.mxu0 %v4546
  %4746 = vmatprep.subr.mxu0 0.0
  %4747 = vmatpush1.msra.mxu0 %v4549
  %4748 = vmatprep.subr.mxu0 0.0
  %4749 = vmatpush1.msra.mxu0 %v4596
  %4750 = vmatprep.subr.mxu0 0.0
  %4751 = vmatpush1.msra.mxu0 %v4599
  %4752 = vmatprep.subr.mxu0 0.0
  %4753 = vmatpush1.msra.mxu0 %v4604
  %4754 = vmatprep.subr.mxu0 0.0
  %4755 = vmatpush1.msra.mxu0 %v4607
  %4756 = vmatprep.mubr.f32.mxu0 %v4669
  %4757 = vmatmul.mubr.f32.gmra.mrb[0].mxu0 %v4668
  %v4758 = vpop.f32.mrb[0].mxu0
  %v4759 = vadd.f32 0.0, %v4758
  %v4760 = vpop.f32.mrb[0].mxu0
  %4761 = vmatprep.mubr.f32.mxu0 %v4672
  %4762 = vmatmul.mubr.f32.gmra.mrb[0].mxu0 %v4671
  %v4763 = vpop.f32.mrb[0].mxu0
  %v4764 = vadd.f32 0.0, %v4763
  %v4765 = vpop.f32.mrb[0].mxu0
  %4766 = vmatprep.mubr.f32.mxu0 %v4675
  %4767 = vmatmul.mubr.f32.gmra.mrb[0].mxu0 %v4674
  %v4768 = vpop.f32.mrb[0].mxu0
  %v4769 = vadd.f32 0.0, %v4768
  %v4770 = vpop.f32.mrb[0].mxu0
  %4771 = vmatprep.mubr.f32.mxu0 %v4678
  %4772 = vmatmul.mubr.f32.gmra.mrb[0].mxu0 %v4677
  %v4773 = vpop.f32.mrb[0].mxu0
  %v4774 = vadd.f32 0.0, %v4773
  %v4775 = vpop.f32.mrb[0].mxu0
  %4776 = vdwg.mxu0
  %4777 = vmatprep.subr.mxu0 0.0
  %4778 = vmatpush1.msra.mxu0 %v4654
  %4779 = vmatprep.subr.mxu0 0.0
  %4780 = vmatpush1.msra.mxu0 %v4657
  %4781 = vmatprep.subr.mxu0 0.0
  %4782 = vmatpush1.msra.mxu0 %v4662
  %4783 = vmatprep.subr.mxu0 0.0
  %4784 = vmatpush1.msra.mxu0 %v4665
  %4785 = vmatprep.subr.mxu0 0.0
  %4786 = vmatpush1.msra.mxu0 0.0
  %4787 = vmatprep.subr.mxu0 0.0
  %4788 = vmatpush1.msra.mxu0 0.0
  %4789 = vmatprep.subr.mxu0 0.0
  %4790 = vmatpush1.msra.mxu0 0.0
  %4791 = vmatprep.subr.mxu0 0.0
  %4792 = vmatpush1.msra.mxu0 0.0
  %4793 = vmatprep.subr.mxu0 0.0
  %4794 = vmatpush1.msra.mxu0 0.0
  %4795 = vmatprep.subr.mxu0 0.0
  %4796 = vmatpush1.msra.mxu0 0.0
  %4797 = vmatprep.subr.mxu0 0.0
  %4798 = vmatpush1.msra.mxu0 0.0
  %4799 = vmatprep.subr.mxu0 0.0
  %4800 = vmatpush1.msra.mxu0 0.0
  %4801 = vmatprep.subr.mxu0 0.0
  %4802 = vmatpush1.msra.mxu0 0.0
  %4803 = vmatprep.subr.mxu0 0.0
  %4804 = vmatpush1.msra.mxu0 0.0
  %4805 = vmatprep.subr.mxu0 0.0
  %4806 = vmatpush1.msra.mxu0 0.0
  %4807 = vmatprep.subr.mxu0 0.0
  %4808 = vmatpush1.msra.mxu0 0.0
  %4809 = vmatprep.subr.mxu0 0.0
  %4810 = vmatpush1.msra.mxu0 0.0
  %4811 = vmatprep.subr.mxu0 0.0
  %4812 = vmatpush1.msra.mxu0 0.0
  %4813 = vmatprep.subr.mxu0 0.0
  %4814 = vmatpush1.msra.mxu0 0.0
  %4815 = vmatprep.subr.mxu0 0.0
  %4816 = vmatpush1.msra.mxu0 0.0
  %4817 = vmatprep.subr.mxu0 0.0
  %4818 = vmatpush1.msra.mxu0 0.0
  %4819 = vmatprep.subr.mxu0 0.0
  %4820 = vmatpush1.msra.mxu0 0.0
  %4821 = vmatprep.subr.mxu0 0.0
  %4822 = vmatpush1.msra.mxu0 0.0
  %4823 = vmatprep.subr.mxu0 0.0
  %4824 = vmatpush1.msra.mxu0 0.0
  %4825 = vmatprep.subr.mxu0 0.0
  %4826 = vmatpush1.msra.mxu0 0.0
  %4827 = vmatprep.subr.mxu0 0.0
  %4828 = vmatpush1.msra.mxu0 0.0
  %4829 = vmatprep.subr.mxu0 0.0
  %4830 = vmatpush1.msra.mxu0 0.0
  %4831 = vmatprep.subr.mxu0 0.0
  %4832 = vmatpush1.msra.mxu0 0.0
  %4833 = vmatprep.subr.mxu0 0.0
  %4834 = vmatpush1.msra.mxu0 0.0
  %4835 = vmatprep.subr.mxu0 0.0
  %4836 = vmatpush1.msra.mxu0 0.0
  %4837 = vmatprep.subr.mxu0 0.0
  %4838 = vmatpush1.msra.mxu0 0.0
  %4839 = vmatprep.subr.mxu0 0.0
  %4840 = vmatpush1.msra.mxu0 0.0
  %4841 = vmatprep.mubr.f32.mxu0 0.0
  %4842 = vmatmul.mubr.f32.gmra.mrb[0].mxu0 %v4681
  %v4843 = vpop.f32.mrb[0].mxu0
  %v4844 = vadd.f32 %v4759, %v4843
  %v4845 = vpop.f32.mrb[0].mxu0
  %4846 = vmatprep.mubr.f32.mxu0 0.0
  %4847 = vmatmul.mubr.f32.gmra.mrb[0].mxu0 %v4684
  %v4848 = vpop.f32.mrb[0].mxu0
  %v4849 = vadd.f32 %v4764, %v4848
  %v4850 = vpop.f32.mrb[0].mxu0
  %4851 = vmatprep.mubr.f32.mxu0 0.0
  %4852 = vmatmul.mubr.f32.gmra.mrb[0].mxu0 %v4687
  %v4853 = vpop.f32.mrb[0].mxu0
  %v4854 = vadd.f32 %v4769, %v4853
  %v4855 = vpop.f32.mrb[0].mxu0
  %4856 = vmatprep.mubr.f32.mxu0 0.0
  %4857 = vmatmul.mubr.f32.gmra.mrb[0].mxu0 %v4690
  %v4858 = vpop.f32.mrb[0].mxu0
  %v4859 = vadd.f32 %v4774, %v4858
  %v4860 = vpop.f32.mrb[0].mxu0
  %4861 = vdwg.mxu0
  %v4862 = vsel %vm3999, %v4844, 0.0
  %4863 = vadd.xlane.f32.xlu0 %v4862
  %v4864 = vpop.xlane.xlu0 %4863
  %v4865 = vsel %vm3999, %v4849, 0.0
  %4866 = vadd.xlane.f32.xlu0 %v4865
  %v4867 = vpop.xlane.xlu0 %4866
  %v4868 = vsel %vm3999, %v4854, 0.0
  %4869 = vadd.xlane.f32.xlu0 %v4868
  %v4870 = vpop.xlane.xlu0 %4869
  %v4871 = vsel %vm3999, %v4859, 0.0
  %4872 = vadd.xlane.f32.xlu0 %v4871
  %v4873 = vpop.xlane.xlu0 %4872
  %v4874 = vadd.f32 %v4864, %v4870
  %v4875 = vadd.f32 %v4867, %v4873
  %v4876 = vmul.f32 %v4844, %v4844
  %v4877 = vmul.f32 %v4849, %v4849
  %v4878 = vmul.f32 %v4854, %v4854
  %v4879 = vmul.f32 %v4859, %v4859
  %v4880 = vsel %vm3999, %v4876, 0.0
  %4881 = vadd.xlane.f32.xlu0 %v4880
  %v4882 = vpop.xlane.xlu0 %4881
  %v4883 = vsel %vm3999, %v4877, 0.0
  %4884 = vadd.xlane.f32.xlu0 %v4883
  %v4885 = vpop.xlane.xlu0 %4884
  %v4886 = vsel %vm3999, %v4878, 0.0
  %4887 = vadd.xlane.f32.xlu0 %v4886
  %v4888 = vpop.xlane.xlu0 %4887
  %v4889 = vsel %vm3999, %v4879, 0.0
  %4890 = vadd.xlane.f32.xlu0 %v4889
  %v4891 = vpop.xlane.xlu0 %4890
  %v4892 = vadd.f32 %v4882, %v4888
  %v4893 = vadd.f32 %v4885, %v4891
  %v4894 = vmul.f32 %v4874, 0.03125
  %v4895 = vmul.f32 %v4875, 0.03125
  %v4896 = vmul.f32 %v4892, 0.03125
  %v4897 = vmul.f32 %v4893, 0.03125
  %v4898 = vmul.f32 %v4894, %v4894
  %v4899 = vmul.f32 %v4895, %v4895
  %v4900 = vsub.f32 %v4896, %v4898
  %v4901 = vsub.f32 %v4897, %v4899
  %v4902 = vmax.f32 %v4900, 0.0
  %v4903 = vmax.f32 %v4901, 0.0
  %s4904 = scalar_lea.vmem %s18, 128
  %v4905 = vld [vmem:[%s4904] sm:$0xff]
  %v4906 = vld [vmem:[%s4904 + $0x8] sm:$0xff]
  %v4907 = vld [vmem:[%s4904 + $0x10] sm:$0xff]
  %v4908 = vld [vmem:[%s4904 + $0x18] sm:$0xff]
  %v4909 = vadd.f32 %v4902, 1e-05
  %v4910 = vadd.f32 %v4903, 1e-05
  %v4911 = vrsqrt.pop %v4909
  %v4912 = vrsqrt.pop %v4910
  %v4913 = vmul.f32 %v4905, %v4911
  %v4914 = vmul.f32 %v4906, %v4912
  %v4915 = vmul.f32 %v4907, %v4911
  %v4916 = vmul.f32 %v4908, %v4912
  %v4917 = vmul.f32 %v4894, %v4913
  %v4918 = vmul.f32 %v4895, %v4914
  %v4919 = vmul.f32 %v4894, %v4915
  %v4920 = vmul.f32 %v4895, %v4916
  %4925 = vrot.lane.b32.xlu0 %v4917, 1
  %v4926 = vpop.permute.xlu0 %4925
  %4927 = vrot.lane.b32.xlu0 %v4918, 1
  %v4928 = vpop.permute.xlu0 %4927
  %4929 = vrot.lane.b32.xlu0 %v4919, 1
  %v4930 = vpop.permute.xlu0 %4929
  %4931 = vrot.lane.b32.xlu0 %v4920, 1
  %v4932 = vpop.permute.xlu0 %4931
  %v4937 = vsub.f32 %v4905, %v4926
  %v4938 = vsub.f32 %v4906, %v4928
  %v4939 = vsub.f32 %v4907, %v4930
  %v4940 = vsub.f32 %v4908, %v4932
  %4942 = vset.pattern.permute.xlu0 0
  %4943 = vperm.xlu0 %4942, %v4913
  %v4944 = vpop.permute.xlu0 %4943
  %4947 = vset.pattern.permute.xlu0 0
  %4948 = vperm.xlu0 %4947, %v4914
  %v4949 = vpop.permute.xlu0 %4948
  %4952 = vset.pattern.permute.xlu0 0
  %4953 = vperm.xlu0 %4952, %v4915
  %v4954 = vpop.permute.xlu0 %4953
  %4957 = vset.pattern.permute.xlu0 0
  %4958 = vperm.xlu0 %4957, %v4916
  %v4959 = vpop.permute.xlu0 %4958
  %v4961 = vmul.f32 %v4844, %v4944
  %v4962 = vmul.f32 %v4849, %v4949
  %v4963 = vmul.f32 %v4854, %v4954
  %v4964 = vmul.f32 %v4859, %v4959
  %4966 = vset.pattern.permute.xlu0 1
  %4967 = vperm.xlu0 %4966, %v4937
  %v4968 = vpop.permute.xlu0 %4967
  %4971 = vset.pattern.permute.xlu0 1
  %4972 = vperm.xlu0 %4971, %v4938
  %v4973 = vpop.permute.xlu0 %4972
  %4976 = vset.pattern.permute.xlu0 1
  %4977 = vperm.xlu0 %4976, %v4939
  %v4978 = vpop.permute.xlu0 %4977
  %4981 = vset.pattern.permute.xlu0 1
  %4982 = vperm.xlu0 %4981, %v4940
  %v4983 = vpop.permute.xlu0 %4982
  %v4985 = vadd.f32 %v4961, %v4968
  %v4986 = vadd.f32 %v4962, %v4973
  %v4987 = vadd.f32 %v4963, %v4978
  %v4988 = vadd.f32 %v4964, %v4983
  %vm4989 = vcmp.ge.f32.partialorder %v4985, 0.0
  %vm4990 = vcmp.ge.f32.partialorder %v4986, 0.0
  %vm4991 = vcmp.ge.f32.partialorder %v4987, 0.0
  %vm4992 = vcmp.ge.f32.partialorder %v4988, 0.0
  %v4993 = vmul.f32 %v4985, 0.2
  %v4994 = vmul.f32 %v4986, 0.2
  %v4995 = vmul.f32 %v4987, 0.2
  %v4996 = vmul.f32 %v4988, 0.2
  %v4997 = vsel %vm4989, %v4985, %v4993
  %v4998 = vsel %vm4990, %v4986, %v4994
  %v4999 = vsel %vm4991, %v4987, %v4995
  %v5000 = vsel %vm4992, %v4988, %v4996
  %v5001 = vpack.c.bf16 %v4998, %v4997
  %v5002 = vpack.c.bf16 %v5000, %v4999
  %v5003 = vld [vmem:[%s6] sm:$0xf]
  %v5004 = vld [vmem:[%s6 + $0x4] sm:$0xf]
  %v5007 = vunpack.c.l.b16 %v5003
  %v5008 = vunpack.c.l.b16 %v5004
  %v5009 = vpack.c.b16 %v5008, %v5007
  %v5012 = vsel %vm3999, %v5001, 0
  %v5015 = vsel %vm3999, %v5002, 0
  %5017 = vmatprep.subr.bf16.mxu0 0
  %5018 = vmatpush1.bf16.msra.mxu0 %v5009
  %5019 = vmatprep.subr.bf16.mxu0 0
  %5020 = vmatpush1.bf16.msra.mxu0 0
  %5021 = vmatprep.subr.bf16.mxu0 0
  %5022 = vmatpush1.bf16.msra.mxu0 0
  %5023 = vmatprep.subr.bf16.mxu0 0
  %5024 = vmatpush1.bf16.msra.mxu0 0
  %5025 = vmatprep.subr.bf16.mxu0 0
  %5026 = vmatpush1.bf16.msra.mxu0 0
  %5027 = vmatprep.subr.bf16.mxu0 0
  %5028 = vmatpush1.bf16.msra.mxu0 0
  %5029 = vmatprep.subr.bf16.mxu0 0
  %5030 = vmatpush1.bf16.msra.mxu0 0
  %5031 = vmatprep.subr.bf16.mxu0 0
  %5032 = vmatpush1.bf16.msra.mxu0 0
  %5033 = vmatprep.subr.bf16.mxu0 0
  %5034 = vmatpush1.bf16.msra.mxu0 0
  %5035 = vmatprep.subr.bf16.mxu0 0
  %5036 = vmatpush1.bf16.msra.mxu0 0
  %5037 = vmatprep.subr.bf16.mxu0 0
  %5038 = vmatpush1.bf16.msra.mxu0 0
  %5039 = vmatprep.subr.bf16.mxu0 0
  %5040 = vmatpush1.bf16.msra.mxu0 0
  %5041 = vmatprep.subr.bf16.mxu0 0
  %5042 = vmatpush1.bf16.msra.mxu0 0
  %5043 = vmatprep.subr.bf16.mxu0 0
  %5044 = vmatpush1.bf16.msra.mxu0 0
  %5045 = vmatprep.subr.bf16.mxu0 0
  %5046 = vmatpush1.bf16.msra.mxu0 0
  %5047 = vmatprep.subr.bf16.mxu0 0
  %5048 = vmatpush1.bf16.msra.mxu0 0
  %5049 = vmatprep.mubr.bf16.mxu0 0
  %5050 = vmatmul.mubr.bf16.gmra.mrb[0].mxu0 %v5012
  %v5051 = vpop.f32.mrb[0].mxu0
  %v5052 = vadd.f32 0.0, %v5051
  %v5053 = vpop.f32.mrb[0].mxu0
  %v5054 = vpop.f32.mrb[0].mxu0
  %v5055 = vadd.f32 0.0, %v5054
  %v5056 = vpop.f32.mrb[0].mxu0
  %5057 = vmatprep.mubr.bf16.mxu0 0
  %5058 = vmatmul.mubr.bf16.gmra.mrb[0].mxu0 %v5015
  %v5059 = vpop.f32.mrb[0].mxu0
  %v5060 = vadd.f32 0.0, %v5059
  %v5061 = vpop.f32.mrb[0].mxu0
  %v5062 = vpop.f32.mrb[0].mxu0
  %v5063 = vadd.f32 0.0, %v5062
  %v5064 = vpop.f32.mrb[0].mxu0
  %5065 = vdwg.mxu0
  %v5066 = vsel %vm1689, %v3058, 0.0
  %5067 = vadd.xlane.f32.xlu0 %v5066
  %v5068 = vpop.xlane.xlu0 %5067
  %v5069 = vsel %vm1689, %v3059, 0.0
  %5070 = vadd.xlane.f32.xlu0 %v5069
  %v5071 = vpop.xlane.xlu0 %5070
  %v5072 = vadd.f32 %v5068, %v5071
  %v5073 = vmul.f32 %v3058, %v3058
  %v5074 = vmul.f32 %v3059, %v3059
  %v5075 = vsel %vm1689, %v5073, 0.0
  %5076 = vadd.xlane.f32.xlu0 %v5075
  %v5077 = vpop.xlane.xlu0 %5076
  %v5078 = vsel %vm1689, %v5074, 0.0
  %5079 = vadd.xlane.f32.xlu0 %v5078
  %v5080 = vpop.xlane.xlu0 %5079
  %v5081 = vadd.f32 %v5077, %v5080
  %v5082 = vmul.f32 %v5072, 0.0078125
  %v5083 = vmul.f32 %v5081, 0.0078125
  %v5084 = vmul.f32 %v5082, %v5082
  %v5085 = vsub.f32 %v5083, %v5084
  %v5086 = vmax.f32 %v5085, 0.0
  %s5087 = scalar_lea.vmem %s18, 160
  %v5088 = vld [vmem:[%s5087] sm:$0xff]
  %v5089 = vld [vmem:[%s5087 + $0x8] sm:$0xff]
  %v5090 = vadd.f32 %v5086, 1e-05
  %v5091 = vrsqrt.pop %v5090
  %v5092 = vmul.f32 %v5088, %v5091
  %v5093 = vmul.f32 %v5089, %v5091
  %v5094 = vmul.f32 %v5082, %v5092
  %v5095 = vmul.f32 %v5082, %v5093
  %5098 = vrot.lane.b32.xlu0 %v5094, 1
  %v5099 = vpop.permute.xlu0 %5098
  %5100 = vrot.lane.b32.xlu0 %v5095, 1
  %v5101 = vpop.permute.xlu0 %5100
  %v5104 = vsub.f32 %v5088, %v5099
  %v5105 = vsub.f32 %v5089, %v5101
  %5107 = vset.pattern.permute.xlu0 0
  %5108 = vperm.xlu0 %5107, %v5092
  %v5109 = vpop.permute.xlu0 %5108
  %5112 = vset.pattern.permute.xlu0 0
  %5113 = vperm.xlu0 %5112, %v5093
  %v5114 = vpop.permute.xlu0 %5113
  %v5116 = vmul.f32 %v3058, %v5109
  %v5117 = vmul.f32 %v3059, %v5114
  %5119 = vset.pattern.permute.xlu0 1
  %5120 = vperm.xlu0 %5119, %v5104
  %v5121 = vpop.permute.xlu0 %5120
  %5124 = vset.pattern.permute.xlu0 1
  %5125 = vperm.xlu0 %5124, %v5105
  %v5126 = vpop.permute.xlu0 %5125
  %v5128 = vadd.f32 %v5116, %v5121
  %v5129 = vadd.f32 %v5117, %v5126
  %v5130 = vsel %vm1689, %v5052, 0.0
  %5131 = vadd.xlane.f32.xlu0 %v5130
  %v5132 = vpop.xlane.xlu0 %5131
  %v5133 = vsel %vm1689, %v5055, 0.0
  %5134 = vadd.xlane.f32.xlu0 %v5133
  %v5135 = vpop.xlane.xlu0 %5134
  %v5136 = vsel %vm1689, %v5060, 0.0
  %5137 = vadd.xlane.f32.xlu0 %v5136
  %v5138 = vpop.xlane.xlu0 %5137
  %v5139 = vsel %vm1689, %v5063, 0.0
  %5140 = vadd.xlane.f32.xlu0 %v5139
  %v5141 = vpop.xlane.xlu0 %5140
  %v5142 = vadd.f32 %v5132, %v5138
  %v5143 = vadd.f32 %v5135, %v5141
  %v5144 = vmul.f32 %v5052, %v5052
  %v5145 = vmul.f32 %v5055, %v5055
  %v5146 = vmul.f32 %v5060, %v5060
  %v5147 = vmul.f32 %v5063, %v5063
  %v5148 = vsel %vm1689, %v5144, 0.0
  %5149 = vadd.xlane.f32.xlu0 %v5148
  %v5150 = vpop.xlane.xlu0 %5149
  %v5151 = vsel %vm1689, %v5145, 0.0
  %5152 = vadd.xlane.f32.xlu0 %v5151
  %v5153 = vpop.xlane.xlu0 %5152
  %v5154 = vsel %vm1689, %v5146, 0.0
  %5155 = vadd.xlane.f32.xlu0 %v5154
  %v5156 = vpop.xlane.xlu0 %5155
  %v5157 = vsel %vm1689, %v5147, 0.0
  %5158 = vadd.xlane.f32.xlu0 %v5157
  %v5159 = vpop.xlane.xlu0 %5158
  %v5160 = vadd.f32 %v5150, %v5156
  %v5161 = vadd.f32 %v5153, %v5159
  %v5162 = vmul.f32 %v5142, 0.0078125
  %v5163 = vmul.f32 %v5143, 0.0078125
  %v5164 = vmul.f32 %v5160, 0.0078125
  %v5165 = vmul.f32 %v5161, 0.0078125
  %v5166 = vmul.f32 %v5162, %v5162
  %v5167 = vmul.f32 %v5163, %v5163
  %v5168 = vsub.f32 %v5164, %v5166
  %v5169 = vsub.f32 %v5165, %v5167
  %v5170 = vmax.f32 %v5168, 0.0
  %v5171 = vmax.f32 %v5169, 0.0
  %s5172 = scalar_lea.vmem %s18, 192
  %v5173 = vld [vmem:[%s5172] sm:$0xff]
  %v5174 = vld [vmem:[%s5172 + $0x8] sm:$0xff]
  %v5175 = vld [vmem:[%s5172 + $0x10] sm:$0xff]
  %v5176 = vld [vmem:[%s5172 + $0x18] sm:$0xff]
  %v5177 = vadd.f32 %v5170, 1e-05
  %v5178 = vadd.f32 %v5171, 1e-05
  %v5179 = vrsqrt.pop %v5177
  %v5180 = vrsqrt.pop %v5178
  %v5181 = vmul.f32 %v5173, %v5179
  %v5182 = vmul.f32 %v5174, %v5180
  %v5183 = vmul.f32 %v5175, %v5179
  %v5184 = vmul.f32 %v5176, %v5180
  %v5185 = vmul.f32 %v5162, %v5181
  %v5186 = vmul.f32 %v5163, %v5182
  %v5187 = vmul.f32 %v5162, %v5183
  %v5188 = vmul.f32 %v5163, %v5184
  %5193 = vrot.lane.b32.xlu0 %v5185, 1
  %v5194 = vpop.permute.xlu0 %5193
  %5195 = vrot.lane.b32.xlu0 %v5186, 1
  %v5196 = vpop.permute.xlu0 %5195
  %5197 = vrot.lane.b32.xlu0 %v5187, 1
  %v5198 = vpop.permute.xlu0 %5197
  %5199 = vrot.lane.b32.xlu0 %v5188, 1
  %v5200 = vpop.permute.xlu0 %5199
  %v5205 = vsub.f32 %v5173, %v5194
  %v5206 = vsub.f32 %v5174, %v5196
  %v5207 = vsub.f32 %v5175, %v5198
  %v5208 = vsub.f32 %v5176, %v5200
  %5210 = vset.pattern.permute.xlu0 0
  %5211 = vperm.xlu0 %5210, %v5181
  %v5212 = vpop.permute.xlu0 %5211
  %5215 = vset.pattern.permute.xlu0 0
  %5216 = vperm.xlu0 %5215, %v5182
  %v5217 = vpop.permute.xlu0 %5216
  %5220 = vset.pattern.permute.xlu0 0
  %5221 = vperm.xlu0 %5220, %v5183
  %v5222 = vpop.permute.xlu0 %5221
  %5225 = vset.pattern.permute.xlu0 0
  %5226 = vperm.xlu0 %5225, %v5184
  %v5227 = vpop.permute.xlu0 %5226
  %v5229 = vmul.f32 %v5052, %v5212
  %v5230 = vmul.f32 %v5055, %v5217
  %v5231 = vmul.f32 %v5060, %v5222
  %v5232 = vmul.f32 %v5063, %v5227
  %5234 = vset.pattern.permute.xlu0 1
  %5235 = vperm.xlu0 %5234, %v5205
  %v5236 = vpop.permute.xlu0 %5235
  %5239 = vset.pattern.permute.xlu0 1
  %5240 = vperm.xlu0 %5239, %v5206
  %v5241 = vpop.permute.xlu0 %5240
  %5244 = vset.pattern.permute.xlu0 1
  %5245 = vperm.xlu0 %5244, %v5207
  %v5246 = vpop.permute.xlu0 %5245
  %5249 = vset.pattern.permute.xlu0 1
  %5250 = vperm.xlu0 %5249, %v5208
  %v5251 = vpop.permute.xlu0 %5250
  %v5253 = vadd.f32 %v5229, %v5236
  %v5254 = vadd.f32 %v5230, %v5241
  %v5255 = vadd.f32 %v5231, %v5246
  %v5256 = vadd.f32 %v5232, %v5251
  %v5257 = vpack.c.bf16 %v5129, %v5128
  %v5258 = vpack.c.bf16 %v5254, %v5253
  %v5259 = vpack.c.bf16 %v5256, %v5255
  %v5261 = vsel %vm1689, %v5257, 0
  %v5264 = vsel %vm1689, %v5258, 0
  %v5267 = vsel %vm1689, %v5259, 0
  %5269 = vmatprep.subr.bf16.mxu0 0
  %5270 = vmatpush1.bf16.msra.mxu0 %v1854
  %5271 = vmatprep.subr.bf16.mxu0 0
  %5272 = vmatpush1.bf16.msra.mxu0 %v1855
  %5273 = vmatprep.subr.bf16.mxu0 0
  %5274 = vmatpush1.bf16.msra.mxu0 %v1856
  %5275 = vmatprep.subr.bf16.mxu0 0
  %5276 = vmatpush1.bf16.msra.mxu0 %v1857
  %5277 = vmatprep.subr.bf16.mxu0 0
  %5278 = vmatpush1.bf16.msra.mxu0 0
  %5279 = vmatprep.subr.bf16.mxu0 0
  %5280 = vmatpush1.bf16.msra.mxu0 0
  %5281 = vmatprep.subr.bf16.mxu0 0
  %5282 = vmatpush1.bf16.msra.mxu0 0
  %5283 = vmatprep.subr.bf16.mxu0 0
  %5284 = vmatpush1.bf16.msra.mxu0 0
  %5285 = vmatprep.subr.bf16.mxu0 0
  %5286 = vmatpush1.bf16.msra.mxu0 0
  %5287 = vmatprep.subr.bf16.mxu0 0
  %5288 = vmatpush1.bf16.msra.mxu0 0
  %5289 = vmatprep.subr.bf16.mxu0 0
  %5290 = vmatpush1.bf16.msra.mxu0 0
  %5291 = vmatprep.subr.bf16.mxu0 0
  %5292 = vmatpush1.bf16.msra.mxu0 0
  %5293 = vmatprep.subr.bf16.mxu0 0
  %5294 = vmatpush1.bf16.msra.mxu0 0
  %5295 = vmatprep.subr.bf16.mxu0 0
  %5296 = vmatpush1.bf16.msra.mxu0 0
  %5297 = vmatprep.subr.bf16.mxu0 0
  %5298 = vmatpush1.bf16.msra.mxu0 0
  %5299 = vmatprep.subr.bf16.mxu0 0
  %5300 = vmatpush1.bf16.msra.mxu0 0
  %5301 = vmatprep.mubr.bf16.mxu0 0
  %5302 = vmatmul.mubr.bf16.gmra.mrb[0].mxu0 %v5261
  %v5303 = vpop.f32.mrb[0].mxu0
  %v5304 = vadd.f32 0.0, %v5303
  %v5305 = vpop.f32.mrb[0].mxu0
  %v5306 = vpop.f32.mrb[0].mxu0
  %v5307 = vadd.f32 0.0, %v5306
  %v5308 = vpop.f32.mrb[0].mxu0
  %5309 = vmatprep.mubr.bf16.mxu0 0
  %5310 = vmatmul.mubr.bf16.gmra.mrb[0].mxu0 %v5264
  %v5311 = vpop.f32.mrb[0].mxu0
  %v5312 = vadd.f32 0.0, %v5311
  %v5313 = vpop.f32.mrb[0].mxu0
  %v5314 = vpop.f32.mrb[0].mxu0
  %v5315 = vadd.f32 0.0, %v5314
  %v5316 = vpop.f32.mrb[0].mxu0
  %5317 = vmatprep.mubr.bf16.mxu0 0
  %5318 = vmatmul.mubr.bf16.gmra.mrb[0].mxu0 %v5267
  %v5319 = vpop.f32.mrb[0].mxu0
  %v5320 = vadd.f32 0.0, %v5319
  %v5321 = vpop.f32.mrb[0].mxu0
  %v5322 = vpop.f32.mrb[0].mxu0
  %v5323 = vadd.f32 0.0, %v5322
  %v5324 = vpop.f32.mrb[0].mxu0
  %5325 = vdwg.mxu0
  %5326 = vmatprep.subr.bf16.mxu0 0
  %5327 = vmatpush1.bf16.msra.mxu0 %v1942
  %5328 = vmatprep.subr.bf16.mxu0 0
  %5329 = vmatpush1.bf16.msra.mxu0 %v1943
  %5330 = vmatprep.subr.bf16.mxu0 0
  %5331 = vmatpush1.bf16.msra.mxu0 %v1944
  %5332 = vmatprep.subr.bf16.mxu0 0
  %5333 = vmatpush1.bf16.msra.mxu0 %v1945
  %5334 = vmatprep.subr.bf16.mxu0 0
  %5335 = vmatpush1.bf16.msra.mxu0 0
  %5336 = vmatprep.subr.bf16.mxu0 0
  %5337 = vmatpush1.bf16.msra.mxu0 0
  %5338 = vmatprep.subr.bf16.mxu0 0
  %5339 = vmatpush1.bf16.msra.mxu0 0
  %5340 = vmatprep.subr.bf16.mxu0 0
  %5341 = vmatpush1.bf16.msra.mxu0 0
  %5342 = vmatprep.subr.bf16.mxu0 0
  %5343 = vmatpush1.bf16.msra.mxu0 0
  %5344 = vmatprep.subr.bf16.mxu0 0
  %5345 = vmatpush1.bf16.msra.mxu0 0
  %5346 = vmatprep.subr.bf16.mxu0 0
  %5347 = vmatpush1.bf16.msra.mxu0 0
  %5348 = vmatprep.subr.bf16.mxu0 0
  %5349 = vmatpush1.bf16.msra.mxu0 0
  %5350 = vmatprep.subr.bf16.mxu0 0
  %5351 = vmatpush1.bf16.msra.mxu0 0
  %5352 = vmatprep.subr.bf16.mxu0 0
  %5353 = vmatpush1.bf16.msra.mxu0 0
  %5354 = vmatprep.subr.bf16.mxu0 0
  %5355 = vmatpush1.bf16.msra.mxu0 0
  %5356 = vmatprep.subr.bf16.mxu0 0
  %5357 = vmatpush1.bf16.msra.mxu0 0
  %5358 = vmatprep.mubr.bf16.mxu0 0
  %5359 = vmatmul.mubr.bf16.gmra.mrb[0].mxu0 %v5261
  %v5360 = vpop.f32.mrb[0].mxu0
  %v5361 = vadd.f32 0.0, %v5360
  %v5362 = vpop.f32.mrb[0].mxu0
  %v5363 = vpop.f32.mrb[0].mxu0
  %v5364 = vadd.f32 0.0, %v5363
  %v5365 = vpop.f32.mrb[0].mxu0
  %5366 = vmatprep.mubr.bf16.mxu0 0
  %5367 = vmatmul.mubr.bf16.gmra.mrb[0].mxu0 %v5264
  %v5368 = vpop.f32.mrb[0].mxu0
  %v5369 = vadd.f32 0.0, %v5368
  %v5370 = vpop.f32.mrb[0].mxu0
  %v5371 = vpop.f32.mrb[0].mxu0
  %v5372 = vadd.f32 0.0, %v5371
  %v5373 = vpop.f32.mrb[0].mxu0
  %5374 = vmatprep.mubr.bf16.mxu0 0
  %5375 = vmatmul.mubr.bf16.gmra.mrb[0].mxu0 %v5267
  %v5376 = vpop.f32.mrb[0].mxu0
  %v5377 = vadd.f32 0.0, %v5376
  %v5378 = vpop.f32.mrb[0].mxu0
  %v5379 = vpop.f32.mrb[0].mxu0
  %v5380 = vadd.f32 0.0, %v5379
  %v5381 = vpop.f32.mrb[0].mxu0
  %5382 = vdwg.mxu0
  %5383 = vmatprep.subr.bf16.mxu0 0
  %5384 = vmatpush1.bf16.msra.mxu0 %v2024
  %5385 = vmatprep.subr.bf16.mxu0 0
  %5386 = vmatpush1.bf16.msra.mxu0 %v2025
  %5387 = vmatprep.subr.bf16.mxu0 0
  %5388 = vmatpush1.bf16.msra.mxu0 %v2026
  %5389 = vmatprep.subr.bf16.mxu0 0
  %5390 = vmatpush1.bf16.msra.mxu0 %v2027
  %5391 = vmatprep.subr.bf16.mxu0 0
  %5392 = vmatpush1.bf16.msra.mxu0 0
  %5393 = vmatprep.subr.bf16.mxu0 0
  %5394 = vmatpush1.bf16.msra.mxu0 0
  %5395 = vmatprep.subr.bf16.mxu0 0
  %5396 = vmatpush1.bf16.msra.mxu0 0
  %5397 = vmatprep.subr.bf16.mxu0 0
  %5398 = vmatpush1.bf16.msra.mxu0 0
  %5399 = vmatprep.subr.bf16.mxu0 0
  %5400 = vmatpush1.bf16.msra.mxu0 0
  %5401 = vmatprep.subr.bf16.mxu0 0
  %5402 = vmatpush1.bf16.msra.mxu0 0
  %5403 = vmatprep.subr.bf16.mxu0 0
  %5404 = vmatpush1.bf16.msra.mxu0 0
  %5405 = vmatprep.subr.bf16.mxu0 0
  %5406 = vmatpush1.bf16.msra.mxu0 0
  %5407 = vmatprep.subr.bf16.mxu0 0
  %5408 = vmatpush1.bf16.msra.mxu0 0
  %5409 = vmatprep.subr.bf16.mxu0 0
  %5410 = vmatpush1.bf16.msra.mxu0 0
  %5411 = vmatprep.subr.bf16.mxu0 0
  %5412 = vmatpush1.bf16.msra.mxu0 0
  %5413 = vmatprep.subr.bf16.mxu0 0
  %5414 = vmatpush1.bf16.msra.mxu0 0
  %5415 = vmatprep.mubr.bf16.mxu0 0
  %5416 = vmatmul.mubr.bf16.gmra.mrb[0].mxu0 %v5261
  %v5417 = vpop.f32.mrb[0].mxu0
  %v5418 = vadd.f32 0.0, %v5417
  %v5419 = vpop.f32.mrb[0].mxu0
  %v5420 = vpop.f32.mrb[0].mxu0
  %v5421 = vadd.f32 0.0, %v5420
  %v5422 = vpop.f32.mrb[0].mxu0
  %5423 = vmatprep.mubr.bf16.mxu0 0
  %5424 = vmatmul.mubr.bf16.gmra.mrb[0].mxu0 %v5264
  %v5425 = vpop.f32.mrb[0].mxu0
  %v5426 = vadd.f32 0.0, %v5425
  %v5427 = vpop.f32.mrb[0].mxu0
  %v5428 = vpop.f32.mrb[0].mxu0
  %v5429 = vadd.f32 0.0, %v5428
  %v5430 = vpop.f32.mrb[0].mxu0
  %5431 = vmatprep.mubr.bf16.mxu0 0
  %5432 = vmatmul.mubr.bf16.gmra.mrb[0].mxu0 %v5267
  %v5433 = vpop.f32.mrb[0].mxu0
  %v5434 = vadd.f32 0.0, %v5433
  %v5435 = vpop.f32.mrb[0].mxu0
  %v5436 = vpop.f32.mrb[0].mxu0
  %v5437 = vadd.f32 0.0, %v5436
  %v5438 = vpop.f32.mrb[0].mxu0
  %5439 = vdwg.mxu0
  %5440 = vmatprep.subr.bf16.mxu0 0
  %5441 = vmatpush1.bf16.msra.mxu0 %v2106
  %5442 = vmatprep.subr.bf16.mxu0 0
  %5443 = vmatpush1.bf16.msra.mxu0 %v2107
  %5444 = vmatprep.subr.bf16.mxu0 0
  %5445 = vmatpush1.bf16.msra.mxu0 %v2108
  %5446 = vmatprep.subr.bf16.mxu0 0
  %5447 = vmatpush1.bf16.msra.mxu0 %v2109
  %5448 = vmatprep.subr.bf16.mxu0 0
  %5449 = vmatpush1.bf16.msra.mxu0 0
  %5450 = vmatprep.subr.bf16.mxu0 0
  %5451 = vmatpush1.bf16.msra.mxu0 0
  %5452 = vmatprep.subr.bf16.mxu0 0
  %5453 = vmatpush1.bf16.msra.mxu0 0
  %5454 = vmatprep.subr.bf16.mxu0 0
  %5455 = vmatpush1.bf16.msra.mxu0 0
  %5456 = vmatprep.subr.bf16.mxu0 0
  %5457 = vmatpush1.bf16.msra.mxu0 0
  %5458 = vmatprep.subr.bf16.mxu0 0
  %5459 = vmatpush1.bf16.msra.mxu0 0
  %5460 = vmatprep.subr.bf16.mxu0 0
  %5461 = vmatpush1.bf16.msra.mxu0 0
  %5462 = vmatprep.subr.bf16.mxu0 0
  %5463 = vmatpush1.bf16.msra.mxu0 0
  %5464 = vmatprep.subr.bf16.mxu0 0
  %5465 = vmatpush1.bf16.msra.mxu0 0
  %5466 = vmatprep.subr.bf16.mxu0 0
  %5467 = vmatpush1.bf16.msra.mxu0 0
  %5468 = vmatprep.subr.bf16.mxu0 0
  %5469 = vmatpush1.bf16.msra.mxu0 0
  %5470 = vmatprep.subr.bf16.mxu0 0
  %5471 = vmatpush1.bf16.msra.mxu0 0
  %5472 = vmatprep.mubr.bf16.mxu0 0
  %5473 = vmatmul.mubr.bf16.gmra.mrb[0].mxu0 %v5261
  %v5474 = vpop.f32.mrb[0].mxu0
  %v5475 = vadd.f32 0.0, %v5474
  %v5476 = vpop.f32.mrb[0].mxu0
  %v5477 = vpop.f32.mrb[0].mxu0
  %v5478 = vadd.f32 0.0, %v5477
  %v5479 = vpop.f32.mrb[0].mxu0
  %5480 = vmatprep.mubr.bf16.mxu0 0
  %5481 = vmatmul.mubr.bf16.gmra.mrb[0].mxu0 %v5264
  %v5482 = vpop.f32.mrb[0].mxu0
  %v5483 = vadd.f32 0.0, %v5482
  %v5484 = vpop.f32.mrb[0].mxu0
  %v5485 = vpop.f32.mrb[0].mxu0
  %v5486 = vadd.f32 0.0, %v5485
  %v5487 = vpop.f32.mrb[0].mxu0
  %5488 = vmatprep.mubr.bf16.mxu0 0
  %5489 = vmatmul.mubr.bf16.gmra.mrb[0].mxu0 %v5267
  %v5490 = vpop.f32.mrb[0].mxu0
  %v5491 = vadd.f32 0.0, %v5490
  %v5492 = vpop.f32.mrb[0].mxu0
  %v5493 = vpop.f32.mrb[0].mxu0
  %v5494 = vadd.f32 0.0, %v5493
  %v5495 = vpop.f32.mrb[0].mxu0
  %5496 = vdwg.mxu0
  %5497 = vmatprep.subr.bf16.mxu0 0
  %5498 = vmatpush1.bf16.msra.mxu0 %v2188
  %5499 = vmatprep.subr.bf16.mxu0 0
  %5500 = vmatpush1.bf16.msra.mxu0 %v2189
  %5501 = vmatprep.subr.bf16.mxu0 0
  %5502 = vmatpush1.bf16.msra.mxu0 %v2190
  %5503 = vmatprep.subr.bf16.mxu0 0
  %5504 = vmatpush1.bf16.msra.mxu0 %v2191
  %5505 = vmatprep.subr.bf16.mxu0 0
  %5506 = vmatpush1.bf16.msra.mxu0 0
  %5507 = vmatprep.subr.bf16.mxu0 0
  %5508 = vmatpush1.bf16.msra.mxu0 0
  %5509 = vmatprep.subr.bf16.mxu0 0
  %5510 = vmatpush1.bf16.msra.mxu0 0
  %5511 = vmatprep.subr.bf16.mxu0 0
  %5512 = vmatpush1.bf16.msra.mxu0 0
  %5513 = vmatprep.subr.bf16.mxu0 0
  %5514 = vmatpush1.bf16.msra.mxu0 0
  %5515 = vmatprep.subr.bf16.mxu0 0
  %5516 = vmatpush1.bf16.msra.mxu0 0
  %5517 = vmatprep.subr.bf16.mxu0 0
  %5518 = vmatpush1.bf16.msra.mxu0 0
  %5519 = vmatprep.subr.bf16.mxu0 0
  %5520 = vmatpush1.bf16.msra.mxu0 0
  %5521 = vmatprep.subr.bf16.mxu0 0
  %5522 = vmatpush1.bf16.msra.mxu0 0
  %5523 = vmatprep.subr.bf16.mxu0 0
  %5524 = vmatpush1.bf16.msra.mxu0 0
  %5525 = vmatprep.subr.bf16.mxu0 0
  %5526 = vmatpush1.bf16.msra.mxu0 0
  %5527 = vmatprep.subr.bf16.mxu0 0
  %5528 = vmatpush1.bf16.msra.mxu0 0
  %5529 = vmatprep.mubr.bf16.mxu0 0
  %5530 = vmatmul.mubr.bf16.gmra.mrb[0].mxu0 %v5261
  %v5531 = vpop.f32.mrb[0].mxu0
  %v5532 = vadd.f32 0.0, %v5531
  %v5533 = vpop.f32.mrb[0].mxu0
  %v5534 = vpop.f32.mrb[0].mxu0
  %v5535 = vadd.f32 0.0, %v5534
  %v5536 = vpop.f32.mrb[0].mxu0
  %5537 = vmatprep.mubr.bf16.mxu0 0
  %5538 = vmatmul.mubr.bf16.gmra.mrb[0].mxu0 %v5264
  %v5539 = vpop.f32.mrb[0].mxu0
  %v5540 = vadd.f32 0.0, %v5539
  %v5541 = vpop.f32.mrb[0].mxu0
  %v5542 = vpop.f32.mrb[0].mxu0
  %v5543 = vadd.f32 0.0, %v5542
  %v5544 = vpop.f32.mrb[0].mxu0
  %5545 = vmatprep.mubr.bf16.mxu0 0
  %5546 = vmatmul.mubr.bf16.gmra.mrb[0].mxu0 %v5267
  %v5547 = vpop.f32.mrb[0].mxu0
  %v5548 = vadd.f32 0.0, %v5547
  %v5549 = vpop.f32.mrb[0].mxu0
  %v5550 = vpop.f32.mrb[0].mxu0
  %v5551 = vadd.f32 0.0, %v5550
  %v5552 = vpop.f32.mrb[0].mxu0
  %5553 = vdwg.mxu0
  %5554 = vmatprep.subr.bf16.mxu0 0
  %5555 = vmatpush1.bf16.msra.mxu0 %v2270
  %5556 = vmatprep.subr.bf16.mxu0 0
  %5557 = vmatpush1.bf16.msra.mxu0 %v2271
  %5558 = vmatprep.subr.bf16.mxu0 0
  %5559 = vmatpush1.bf16.msra.mxu0 %v2272
  %5560 = vmatprep.subr.bf16.mxu0 0
  %5561 = vmatpush1.bf16.msra.mxu0 %v2273
  %5562 = vmatprep.subr.bf16.mxu0 0
  %5563 = vmatpush1.bf16.msra.mxu0 0
  %5564 = vmatprep.subr.bf16.mxu0 0
  %5565 = vmatpush1.bf16.msra.mxu0 0
  %5566 = vmatprep.subr.bf16.mxu0 0
  %5567 = vmatpush1.bf16.msra.mxu0 0
  %5568 = vmatprep.subr.bf16.mxu0 0
  %5569 = vmatpush1.bf16.msra.mxu0 0
  %5570 = vmatprep.subr.bf16.mxu0 0
  %5571 = vmatpush1.bf16.msra.mxu0 0
  %5572 = vmatprep.subr.bf16.mxu0 0
  %5573 = vmatpush1.bf16.msra.mxu0 0
  %5574 = vmatprep.subr.bf16.mxu0 0
  %5575 = vmatpush1.bf16.msra.mxu0 0
  %5576 = vmatprep.subr.bf16.mxu0 0
  %5577 = vmatpush1.bf16.msra.mxu0 0
  %5578 = vmatprep.subr.bf16.mxu0 0
  %5579 = vmatpush1.bf16.msra.mxu0 0
  %5580 = vmatprep.subr.bf16.mxu0 0
  %5581 = vmatpush1.bf16.msra.mxu0 0
  %5582 = vmatprep.subr.bf16.mxu0 0
  %5583 = vmatpush1.bf16.msra.mxu0 0
  %5584 = vmatprep.subr.bf16.mxu0 0
  %5585 = vmatpush1.bf16.msra.mxu0 0
  %5586 = vmatprep.mubr.bf16.mxu0 0
  %5587 = vmatmul.mubr.bf16.gmra.mrb[0].mxu0 %v5261
  %v5588 = vpop.f32.mrb[0].mxu0
  %v5589 = vadd.f32 0.0, %v5588
  %v5590 = vpop.f32.mrb[0].mxu0
  %v5591 = vpop.f32.mrb[0].mxu0
  %v5592 = vadd.f32 0.0, %v5591
  %v5593 = vpop.f32.mrb[0].mxu0
  %5594 = vmatprep.mubr.bf16.mxu0 0
  %5595 = vmatmul.mubr.bf16.gmra.mrb[0].mxu0 %v5264
  %v5596 = vpop.f32.mrb[0].mxu0
  %v5597 = vadd.f32 0.0, %v5596
  %v5598 = vpop.f32.mrb[0].mxu0
  %v5599 = vpop.f32.mrb[0].mxu0
  %v5600 = vadd.f32 0.0, %v5599
  %v5601 = vpop.f32.mrb[0].mxu0
  %5602 = vmatprep.mubr.bf16.mxu0 0
  %5603 = vmatmul.mubr.bf16.gmra.mrb[0].mxu0 %v5267
  %v5604 = vpop.f32.mrb[0].mxu0
  %v5605 = vadd.f32 0.0, %v5604
  %v5606 = vpop.f32.mrb[0].mxu0
  %v5607 = vpop.f32.mrb[0].mxu0
  %v5608 = vadd.f32 0.0, %v5607
  %v5609 = vpop.f32.mrb[0].mxu0
  %5610 = vdwg.mxu0
  %5611 = vmatprep.subr.bf16.mxu0 0
  %5612 = vmatpush1.bf16.msra.mxu0 %v2352
  %5613 = vmatprep.subr.bf16.mxu0 0
  %5614 = vmatpush1.bf16.msra.mxu0 %v2353
  %5615 = vmatprep.subr.bf16.mxu0 0
  %5616 = vmatpush1.bf16.msra.mxu0 %v2354
  %5617 = vmatprep.subr.bf16.mxu0 0
  %5618 = vmatpush1.bf16.msra.mxu0 %v2355
  %5619 = vmatprep.subr.bf16.mxu0 0
  %5620 = vmatpush1.bf16.msra.mxu0 0
  %5621 = vmatprep.subr.bf16.mxu0 0
  %5622 = vmatpush1.bf16.msra.mxu0 0
  %5623 = vmatprep.subr.bf16.mxu0 0
  %5624 = vmatpush1.bf16.msra.mxu0 0
  %5625 = vmatprep.subr.bf16.mxu0 0
  %5626 = vmatpush1.bf16.msra.mxu0 0
  %5627 = vmatprep.subr.bf16.mxu0 0
  %5628 = vmatpush1.bf16.msra.mxu0 0
  %5629 = vmatprep.subr.bf16.mxu0 0
  %5630 = vmatpush1.bf16.msra.mxu0 0
  %5631 = vmatprep.subr.bf16.mxu0 0
  %5632 = vmatpush1.bf16.msra.mxu0 0
  %5633 = vmatprep.subr.bf16.mxu0 0
  %5634 = vmatpush1.bf16.msra.mxu0 0
  %5635 = vmatprep.subr.bf16.mxu0 0
  %5636 = vmatpush1.bf16.msra.mxu0 0
  %5637 = vmatprep.subr.bf16.mxu0 0
  %5638 = vmatpush1.bf16.msra.mxu0 0
  %5639 = vmatprep.subr.bf16.mxu0 0
  %5640 = vmatpush1.bf16.msra.mxu0 0
  %5641 = vmatprep.subr.bf16.mxu0 0
  %5642 = vmatpush1.bf16.msra.mxu0 0
  %5643 = vmatprep.mubr.bf16.mxu0 0
  %5644 = vmatmul.mubr.bf16.gmra.mrb[0].mxu0 %v5261
  %v5645 = vpop.f32.mrb[0].mxu0
  %v5646 = vadd.f32 0.0, %v5645
  %v5647 = vpop.f32.mrb[0].mxu0
  %v5648 = vpop.f32.mrb[0].mxu0
  %v5649 = vadd.f32 0.0, %v5648
  %v5650 = vpop.f32.mrb[0].mxu0
  %5651 = vmatprep.mubr.bf16.mxu0 0
  %5652 = vmatmul.mubr.bf16.gmra.mrb[0].mxu0 %v5264
  %v5653 = vpop.f32.mrb[0].mxu0
  %v5654 = vadd.f32 0.0, %v5653
  %v5655 = vpop.f32.mrb[0].mxu0
  %v5656 = vpop.f32.mrb[0].mxu0
  %v5657 = vadd.f32 0.0, %v5656
  %v5658 = vpop.f32.mrb[0].mxu0
  %5659 = vmatprep.mubr.bf16.mxu0 0
  %5660 = vmatmul.mubr.bf16.gmra.mrb[0].mxu0 %v5267
  %v5661 = vpop.f32.mrb[0].mxu0
  %v5662 = vadd.f32 0.0, %v5661
  %v5663 = vpop.f32.mrb[0].mxu0
  %v5664 = vpop.f32.mrb[0].mxu0
  %v5665 = vadd.f32 0.0, %v5664
  %v5666 = vpop.f32.mrb[0].mxu0
  %5667 = vdwg.mxu0
  %5668 = vmatprep.subr.bf16.mxu0 0
  %5669 = vmatpush1.bf16.msra.mxu0 %v2434
  %5670 = vmatprep.subr.bf16.mxu0 0
  %5671 = vmatpush1.bf16.msra.mxu0 %v2435
  %5672 = vmatprep.subr.bf16.mxu0 0
  %5673 = vmatpush1.bf16.msra.mxu0 %v2436
  %5674 = vmatprep.subr.bf16.mxu0 0
  %5675 = vmatpush1.bf16.msra.mxu0 %v2437
  %5676 = vmatprep.subr.bf16.mxu0 0
  %5677 = vmatpush1.bf16.msra.mxu0 0
  %5678 = vmatprep.subr.bf16.mxu0 0
  %5679 = vmatpush1.bf16.msra.mxu0 0
  %5680 = vmatprep.subr.bf16.mxu0 0
  %5681 = vmatpush1.bf16.msra.mxu0 0
  %5682 = vmatprep.subr.bf16.mxu0 0
  %5683 = vmatpush1.bf16.msra.mxu0 0
  %5684 = vmatprep.subr.bf16.mxu0 0
  %5685 = vmatpush1.bf16.msra.mxu0 0
  %5686 = vmatprep.subr.bf16.mxu0 0
  %5687 = vmatpush1.bf16.msra.mxu0 0
  %5688 = vmatprep.subr.bf16.mxu0 0
  %5689 = vmatpush1.bf16.msra.mxu0 0
  %5690 = vmatprep.subr.bf16.mxu0 0
  %5691 = vmatpush1.bf16.msra.mxu0 0
  %5692 = vmatprep.subr.bf16.mxu0 0
  %5693 = vmatpush1.bf16.msra.mxu0 0
  %5694 = vmatprep.subr.bf16.mxu0 0
  %5695 = vmatpush1.bf16.msra.mxu0 0
  %5696 = vmatprep.subr.bf16.mxu0 0
  %5697 = vmatpush1.bf16.msra.mxu0 0
  %5698 = vmatprep.subr.bf16.mxu0 0
  %5699 = vmatpush1.bf16.msra.mxu0 0
  %5700 = vmatprep.mubr.bf16.mxu0 0
  %5701 = vmatmul.mubr.bf16.gmra.mrb[0].mxu0 %v5261
  %v5702 = vpop.f32.mrb[0].mxu0
  %v5703 = vadd.f32 0.0, %v5702
  %v5704 = vpop.f32.mrb[0].mxu0
  %v5705 = vpop.f32.mrb[0].mxu0
  %v5706 = vadd.f32 0.0, %v5705
  %v5707 = vpop.f32.mrb[0].mxu0
  %5708 = vmatprep.mubr.bf16.mxu0 0
  %5709 = vmatmul.mubr.bf16.gmra.mrb[0].mxu0 %v5264
  %v5710 = vpop.f32.mrb[0].mxu0
  %v5711 = vadd.f32 0.0, %v5710
  %v5712 = vpop.f32.mrb[0].mxu0
  %v5713 = vpop.f32.mrb[0].mxu0
  %v5714 = vadd.f32 0.0, %v5713
  %v5715 = vpop.f32.mrb[0].mxu0
  %5716 = vmatprep.mubr.bf16.mxu0 0
  %5717 = vmatmul.mubr.bf16.gmra.mrb[0].mxu0 %v5267
  %v5718 = vpop.f32.mrb[0].mxu0
  %v5719 = vadd.f32 0.0, %v5718
  %v5720 = vpop.f32.mrb[0].mxu0
  %v5721 = vpop.f32.mrb[0].mxu0
  %v5722 = vadd.f32 0.0, %v5721
  %v5723 = vpop.f32.mrb[0].mxu0
  %5724 = vdwg.mxu0
  %5725 = vmatprep.subr.bf16.mxu0 0
  %5726 = vmatpush1.bf16.msra.mxu0 %v2516
  %5727 = vmatprep.subr.bf16.mxu0 0
  %5728 = vmatpush1.bf16.msra.mxu0 %v2517
  %5729 = vmatprep.subr.bf16.mxu0 0
  %5730 = vmatpush1.bf16.msra.mxu0 %v2518
  %5731 = vmatprep.subr.bf16.mxu0 0
  %5732 = vmatpush1.bf16.msra.mxu0 %v2519
  %5733 = vmatprep.subr.bf16.mxu0 0
  %5734 = vmatpush1.bf16.msra.mxu0 0
  %5735 = vmatprep.subr.bf16.mxu0 0
  %5736 = vmatpush1.bf16.msra.mxu0 0
  %5737 = vmatprep.subr.bf16.mxu0 0
  %5738 = vmatpush1.bf16.msra.mxu0 0
  %5739 = vmatprep.subr.bf16.mxu0 0
  %5740 = vmatpush1.bf16.msra.mxu0 0
  %5741 = vmatprep.subr.bf16.mxu0 0
  %5742 = vmatpush1.bf16.msra.mxu0 0
  %5743 = vmatprep.subr.bf16.mxu0 0
  %5744 = vmatpush1.bf16.msra.mxu0 0
  %5745 = vmatprep.subr.bf16.mxu0 0
  %5746 = vmatpush1.bf16.msra.mxu0 0
  %5747 = vmatprep.subr.bf16.mxu0 0
  %5748 = vmatpush1.bf16.msra.mxu0 0
  %5749 = vmatprep.subr.bf16.mxu0 0
  %5750 = vmatpush1.bf16.msra.mxu0 0
  %5751 = vmatprep.subr.bf16.mxu0 0
  %5752 = vmatpush1.bf16.msra.mxu0 0
  %5753 = vmatprep.subr.bf16.mxu0 0
  %5754 = vmatpush1.bf16.msra.mxu0 0
  %5755 = vmatprep.subr.bf16.mxu0 0
  %5756 = vmatpush1.bf16.msra.mxu0 0
  %5757 = vmatprep.mubr.bf16.mxu0 0
  %5758 = vmatmul.mubr.bf16.gmra.mrb[0].mxu0 %v5261
  %v5759 = vpop.f32.mrb[0].mxu0
  %v5760 = vadd.f32 0.0, %v5759
  %v5761 = vpop.f32.mrb[0].mxu0
  %v5762 = vpop.f32.mrb[0].mxu0
  %v5763 = vadd.f32 0.0, %v5762
  %v5764 = vpop.f32.mrb[0].mxu0
  %5765 = vmatprep.mubr.bf16.mxu0 0
  %5766 = vmatmul.mubr.bf16.gmra.mrb[0].mxu0 %v5264
  %v5767 = vpop.f32.mrb[0].mxu0
  %v5768 = vadd.f32 0.0, %v5767
  %v5769 = vpop.f32.mrb[0].mxu0
  %v5770 = vpop.f32.mrb[0].mxu0
  %v5771 = vadd.f32 0.0, %v5770
  %v5772 = vpop.f32.mrb[0].mxu0
  %5773 = vmatprep.mubr.bf16.mxu0 0
  %5774 = vmatmul.mubr.bf16.gmra.mrb[0].mxu0 %v5267
  %v5775 = vpop.f32.mrb[0].mxu0
  %v5776 = vadd.f32 0.0, %v5775
  %v5777 = vpop.f32.mrb[0].mxu0
  %v5778 = vpop.f32.mrb[0].mxu0
  %v5779 = vadd.f32 0.0, %v5778
  %v5780 = vpop.f32.mrb[0].mxu0
  %5781 = vdwg.mxu0
  %v5782 = vld [vmem:[%s13] sm:$0xff]
  %v5783 = vld [vmem:[%s13 + $0x8] sm:$0xff]
  %v5784 = vld [vmem:[%s13 + $0x10] sm:$0xff]
  %v5785 = vld [vmem:[%s13 + $0x18] sm:$0xff]
  %v5786 = vld [vmem:[%s13 + $0x20] sm:$0xff]
  %v5787 = vld [vmem:[%s13 + $0x28] sm:$0xff]
  %v5788 = vld [vmem:[%s13 + $0x30] sm:$0xff]
  %v5789 = vld [vmem:[%s13 + $0x38] sm:$0xff]
  %v5790 = vld [vmem:[%s13 + $0x40] sm:$0xff]
  %v5791 = vld [vmem:[%s13 + $0x48] sm:$0xff]
  %v5792 = vld [vmem:[%s13 + $0x50] sm:$0xff]
  %v5793 = vld [vmem:[%s13 + $0x58] sm:$0xff]
  %v5794 = vld [vmem:[%s13 + $0x60] sm:$0xff]
  %v5795 = vld [vmem:[%s13 + $0x68] sm:$0xff]
  %v5796 = vld [vmem:[%s13 + $0x70] sm:$0xff]
  %v5797 = vld [vmem:[%s13 + $0x78] sm:$0xff]
  %vm5798 = vcmask 392192
  %v5800 = vsel %vm5798, %v5785, 0
  %v5803 = vsel %vm5798, %v5789, 0
  %v5806 = vsel %vm5798, %v5793, 0
  %v5809 = vsel %vm5798, %v5797, 0
  %5811 = vmatprep.subr.mxu0 0.0
  %5812 = vmatpush1.msra.mxu0 %v5304
  %5813 = vmatprep.subr.mxu0 0.0
  %5814 = vmatpush1.msra.mxu0 %v5307
  %5815 = vmatprep.subr.mxu0 0.0
  %5816 = vmatpush1.msra.mxu0 %v5312
  %5817 = vmatprep.subr.mxu0 0.0
  %5818 = vmatpush1.msra.mxu0 %v5315
  %5819 = vmatprep.subr.mxu0 0.0
  %5820 = vmatpush1.msra.mxu0 %v5320
  %5821 = vmatprep.subr.mxu0 0.0
  %5822 = vmatpush1.msra.mxu0 %v5323
  %5823 = vmatprep.subr.mxu0 0.0
  %5824 = vmatpush1.msra.mxu0 %v5361
  %5825 = vmatprep.subr.mxu0 0.0
  %5826 = vmatpush1.msra.mxu0 %v5364
  %5827 = vmatprep.subr.mxu0 0.0
  %5828 = vmatpush1.msra.mxu0 %v5369
  %5829 = vmatprep.subr.mxu0 0.0
  %5830 = vmatpush1.msra.mxu0 %v5372
  %5831 = vmatprep.subr.mxu0 0.0
  %5832 = vmatpush1.msra.mxu0 %v5377
  %5833 = vmatprep.subr.mxu0 0.0
  %5834 = vmatpush1.msra.mxu0 %v5380
  %5835 = vmatprep.subr.mxu0 0.0
  %5836 = vmatpush1.msra.mxu0 %v5418
  %5837 = vmatprep.subr.mxu0 0.0
  %5838 = vmatpush1.msra.mxu0 %v5421
  %5839 = vmatprep.subr.mxu0 0.0
  %5840 = vmatpush1.msra.mxu0 %v5426
  %5841 = vmatprep.subr.mxu0 0.0
  %5842 = vmatpush1.msra.mxu0 %v5429
  %5843 = vmatprep.subr.mxu0 0.0
  %5844 = vmatpush1.msra.mxu0 %v5434
  %5845 = vmatprep.subr.mxu0 0.0
  %5846 = vmatpush1.msra.mxu0 %v5437
  %5847 = vmatprep.subr.mxu0 0.0
  %5848 = vmatpush1.msra.mxu0 %v5475
  %5849 = vmatprep.subr.mxu0 0.0
  %5850 = vmatpush1.msra.mxu0 %v5478
  %5851 = vmatprep.subr.mxu0 0.0
  %5852 = vmatpush1.msra.mxu0 %v5483
  %5853 = vmatprep.subr.mxu0 0.0
  %5854 = vmatpush1.msra.mxu0 %v5486
  %5855 = vmatprep.subr.mxu0 0.0
  %5856 = vmatpush1.msra.mxu0 %v5491
  %5857 = vmatprep.subr.mxu0 0.0
  %5858 = vmatpush1.msra.mxu0 %v5494
  %5859 = vmatprep.subr.mxu0 0.0
  %5860 = vmatpush1.msra.mxu0 %v5532
  %5861 = vmatprep.subr.mxu0 0.0
  %5862 = vmatpush1.msra.mxu0 %v5535
  %5863 = vmatprep.subr.mxu0 0.0
  %5864 = vmatpush1.msra.mxu0 %v5540
  %5865 = vmatprep.subr.mxu0 0.0
  %5866 = vmatpush1.msra.mxu0 %v5543
  %5867 = vmatprep.subr.mxu0 0.0
  %5868 = vmatpush1.msra.mxu0 %v5548
  %5869 = vmatprep.subr.mxu0 0.0
  %5870 = vmatpush1.msra.mxu0 %v5551
  %5871 = vmatprep.subr.mxu0 0.0
  %5872 = vmatpush1.msra.mxu0 %v5589
  %5873 = vmatprep.subr.mxu0 0.0
  %5874 = vmatpush1.msra.mxu0 %v5592
  %5875 = vmatprep.mubr.f32.mxu0 %v5783
  %5876 = vmatmul.mubr.f32.gmra.mrb[0].mxu0 %v5782
  %v5877 = vpop.f32.mrb[0].mxu0
  %v5878 = vadd.f32 0.0, %v5877
  %v5879 = vpop.f32.mrb[0].mxu0
  %5880 = vmatprep.mubr.f32.mxu0 %v5787
  %5881 = vmatmul.mubr.f32.gmra.mrb[0].mxu0 %v5786
  %v5882 = vpop.f32.mrb[0].mxu0
  %v5883 = vadd.f32 0.0, %v5882
  %v5884 = vpop.f32.mrb[0].mxu0
  %5885 = vmatprep.mubr.f32.mxu0 %v5791
  %5886 = vmatmul.mubr.f32.gmra.mrb[0].mxu0 %v5790
  %v5887 = vpop.f32.mrb[0].mxu0
  %v5888 = vadd.f32 0.0, %v5887
  %v5889 = vpop.f32.mrb[0].mxu0
  %5890 = vmatprep.mubr.f32.mxu0 %v5795
  %5891 = vmatmul.mubr.f32.gmra.mrb[0].mxu0 %v5794
  %v5892 = vpop.f32.mrb[0].mxu0
  %v5893 = vadd.f32 0.0, %v5892
  %v5894 = vpop.f32.mrb[0].mxu0
  %5895 = vdwg.mxu0
  %5896 = vmatprep.subr.mxu0 0.0
  %5897 = vmatpush1.msra.mxu0 %v5597
  %5898 = vmatprep.subr.mxu0 0.0
  %5899 = vmatpush1.msra.mxu0 %v5600
  %5900 = vmatprep.subr.mxu0 0.0
  %5901 = vmatpush1.msra.mxu0 %v5605
  %5902 = vmatprep.subr.mxu0 0.0
  %5903 = vmatpush1.msra.mxu0 %v5608
  %5904 = vmatprep.subr.mxu0 0.0
  %5905 = vmatpush1.msra.mxu0 %v5646
  %5906 = vmatprep.subr.mxu0 0.0
  %5907 = vmatpush1.msra.mxu0 %v5649
  %5908 = vmatprep.subr.mxu0 0.0
  %5909 = vmatpush1.msra.mxu0 %v5654
  %5910 = vmatprep.subr.mxu0 0.0
  %5911 = vmatpush1.msra.mxu0 %v5657
  %5912 = vmatprep.subr.mxu0 0.0
  %5913 = vmatpush1.msra.mxu0 %v5662
  %5914 = vmatprep.subr.mxu0 0.0
  %5915 = vmatpush1.msra.mxu0 %v5665
  %5916 = vmatprep.subr.mxu0 0.0
  %5917 = vmatpush1.msra.mxu0 %v5703
  %5918 = vmatprep.subr.mxu0 0.0
  %5919 = vmatpush1.msra.mxu0 %v5706
  %5920 = vmatprep.subr.mxu0 0.0
  %5921 = vmatpush1.msra.mxu0 %v5711
  %5922 = vmatprep.subr.mxu0 0.0
  %5923 = vmatpush1.msra.mxu0 %v5714
  %5924 = vmatprep.subr.mxu0 0.0
  %5925 = vmatpush1.msra.mxu0 %v5719
  %5926 = vmatprep.subr.mxu0 0.0
  %5927 = vmatpush1.msra.mxu0 %v5722
  %5928 = vmatprep.subr.mxu0 0.0
  %5929 = vmatpush1.msra.mxu0 %v5760
  %5930 = vmatprep.subr.mxu0 0.0
  %5931 = vmatpush1.msra.mxu0 %v5763
  %5932 = vmatprep.subr.mxu0 0.0
  %5933 = vmatpush1.msra.mxu0 %v5768
  %5934 = vmatprep.subr.mxu0 0.0
  %5935 = vmatpush1.msra.mxu0 %v5771
  %5936 = vmatprep.subr.mxu0 0.0
  %5937 = vmatpush1.msra.mxu0 %v5776
  %5938 = vmatprep.subr.mxu0 0.0
  %5939 = vmatpush1.msra.mxu0 %v5779
  %5940 = vmatprep.subr.mxu0 0.0
  %5941 = vmatpush1.msra.mxu0 0.0
  %5942 = vmatprep.subr.mxu0 0.0
  %5943 = vmatpush1.msra.mxu0 0.0
  %5944 = vmatprep.subr.mxu0 0.0
  %5945 = vmatpush1.msra.mxu0 0.0
  %5946 = vmatprep.subr.mxu0 0.0
  %5947 = vmatpush1.msra.mxu0 0.0
  %5948 = vmatprep.subr.mxu0 0.0
  %5949 = vmatpush1.msra.mxu0 0.0
  %5950 = vmatprep.subr.mxu0 0.0
  %5951 = vmatpush1.msra.mxu0 0.0
  %5952 = vmatprep.subr.mxu0 0.0
  %5953 = vmatpush1.msra.mxu0 0.0
  %5954 = vmatprep.subr.mxu0 0.0
  %5955 = vmatpush1.msra.mxu0 0.0
  %5956 = vmatprep.subr.mxu0 0.0
  %5957 = vmatpush1.msra.mxu0 0.0
  %5958 = vmatprep.subr.mxu0 0.0
  %5959 = vmatpush1.msra.mxu0 0.0
  %5960 = vmatprep.mubr.f32.mxu0 %v5800
  %5961 = vmatmul.mubr.f32.gmra.mrb[0].mxu0 %v5784
  %v5962 = vpop.f32.mrb[0].mxu0
  %v5963 = vadd.f32 %v5878, %v5962
  %v5964 = vpop.f32.mrb[0].mxu0
  %5965 = vmatprep.mubr.f32.mxu0 %v5803
  %5966 = vmatmul.mubr.f32.gmra.mrb[0].mxu0 %v5788
  %v5967 = vpop.f32.mrb[0].mxu0
  %v5968 = vadd.f32 %v5883, %v5967
  %v5969 = vpop.f32.mrb[0].mxu0
  %5970 = vmatprep.mubr.f32.mxu0 %v5806
  %5971 = vmatmul.mubr.f32.gmra.mrb[0].mxu0 %v5792
  %v5972 = vpop.f32.mrb[0].mxu0
  %v5973 = vadd.f32 %v5888, %v5972
  %v5974 = vpop.f32.mrb[0].mxu0
  %5975 = vmatprep.mubr.f32.mxu0 %v5809
  %5976 = vmatmul.mubr.f32.gmra.mrb[0].mxu0 %v5796
  %v5977 = vpop.f32.mrb[0].mxu0
  %v5978 = vadd.f32 %v5893, %v5977
  %v5979 = vpop.f32.mrb[0].mxu0
  %5980 = vdwg.mxu0
  %v5981 = vsel %vm1689, %v5963, 0.0
  %5982 = vadd.xlane.f32.xlu0 %v5981
  %v5983 = vpop.xlane.xlu0 %5982
  %v5984 = vsel %vm1689, %v5968, 0.0
  %5985 = vadd.xlane.f32.xlu0 %v5984
  %v5986 = vpop.xlane.xlu0 %5985
  %v5987 = vsel %vm1689, %v5973, 0.0
  %5988 = vadd.xlane.f32.xlu0 %v5987
  %v5989 = vpop.xlane.xlu0 %5988
  %v5990 = vsel %vm1689, %v5978, 0.0
  %5991 = vadd.xlane.f32.xlu0 %v5990
  %v5992 = vpop.xlane.xlu0 %5991
  %v5993 = vadd.f32 %v5983, %v5989
  %v5994 = vadd.f32 %v5986, %v5992
  %v5995 = vmul.f32 %v5963, %v5963
  %v5996 = vmul.f32 %v5968, %v5968
  %v5997 = vmul.f32 %v5973, %v5973
  %v5998 = vmul.f32 %v5978, %v5978
  %v5999 = vsel %vm1689, %v5995, 0.0
  %6000 = vadd.xlane.f32.xlu0 %v5999
  %v6001 = vpop.xlane.xlu0 %6000
  %v6002 = vsel %vm1689, %v5996, 0.0
  %6003 = vadd.xlane.f32.xlu0 %v6002
  %v6004 = vpop.xlane.xlu0 %6003
  %v6005 = vsel %vm1689, %v5997, 0.0
  %6006 = vadd.xlane.f32.xlu0 %v6005
  %v6007 = vpop.xlane.xlu0 %6006
  %v6008 = vsel %vm1689, %v5998, 0.0
  %6009 = vadd.xlane.f32.xlu0 %v6008
  %v6010 = vpop.xlane.xlu0 %6009
  %v6011 = vadd.f32 %v6001, %v6007
  %v6012 = vadd.f32 %v6004, %v6010
  %v6013 = vmul.f32 %v5993, 0.0078125
  %v6014 = vmul.f32 %v5994, 0.0078125
  %v6015 = vmul.f32 %v6011, 0.0078125
  %v6016 = vmul.f32 %v6012, 0.0078125
  %v6017 = vmul.f32 %v6013, %v6013
  %v6018 = vmul.f32 %v6014, %v6014
  %v6019 = vsub.f32 %v6015, %v6017
  %v6020 = vsub.f32 %v6016, %v6018
  %v6021 = vmax.f32 %v6019, 0.0
  %v6022 = vmax.f32 %v6020, 0.0
  %s6023 = scalar_lea.vmem %s18, 224
  %v6024 = vld [vmem:[%s6023] sm:$0xff]
  %v6025 = vld [vmem:[%s6023 + $0x8] sm:$0xff]
  %v6026 = vld [vmem:[%s6023 + $0x10] sm:$0xff]
  %v6027 = vld [vmem:[%s6023 + $0x18] sm:$0xff]
  %v6028 = vadd.f32 %v6021, 1e-05
  %v6029 = vadd.f32 %v6022, 1e-05
  %v6030 = vrsqrt.pop %v6028
  %v6031 = vrsqrt.pop %v6029
  %v6032 = vmul.f32 %v6024, %v6030
  %v6033 = vmul.f32 %v6025, %v6031
  %v6034 = vmul.f32 %v6026, %v6030
  %v6035 = vmul.f32 %v6027, %v6031
  %v6036 = vmul.f32 %v6013, %v6032
  %v6037 = vmul.f32 %v6014, %v6033
  %v6038 = vmul.f32 %v6013, %v6034
  %v6039 = vmul.f32 %v6014, %v6035
  %6044 = vrot.lane.b32.xlu0 %v6036, 1
  %v6045 = vpop.permute.xlu0 %6044
  %6046 = vrot.lane.b32.xlu0 %v6037, 1
  %v6047 = vpop.permute.xlu0 %6046
  %6048 = vrot.lane.b32.xlu0 %v6038, 1
  %v6049 = vpop.permute.xlu0 %6048
  %6050 = vrot.lane.b32.xlu0 %v6039, 1
  %v6051 = vpop.permute.xlu0 %6050
  %v6056 = vsub.f32 %v6024, %v6045
  %v6057 = vsub.f32 %v6025, %v6047
  %v6058 = vsub.f32 %v6026, %v6049
  %v6059 = vsub.f32 %v6027, %v6051
  %6061 = vset.pattern.permute.xlu0 0
  %6062 = vperm.xlu0 %6061, %v6032
  %v6063 = vpop.permute.xlu0 %6062
  %6066 = vset.pattern.permute.xlu0 0
  %6067 = vperm.xlu0 %6066, %v6033
  %v6068 = vpop.permute.xlu0 %6067
  %6071 = vset.pattern.permute.xlu0 0
  %6072 = vperm.xlu0 %6071, %v6034
  %v6073 = vpop.permute.xlu0 %6072
  %6076 = vset.pattern.permute.xlu0 0
  %6077 = vperm.xlu0 %6076, %v6035
  %v6078 = vpop.permute.xlu0 %6077
  %v6080 = vmul.f32 %v5963, %v6063
  %v6081 = vmul.f32 %v5968, %v6068
  %v6082 = vmul.f32 %v5973, %v6073
  %v6083 = vmul.f32 %v5978, %v6078
  %6085 = vset.pattern.permute.xlu0 1
  %6086 = vperm.xlu0 %6085, %v6056
  %v6087 = vpop.permute.xlu0 %6086
  %6090 = vset.pattern.permute.xlu0 1
  %6091 = vperm.xlu0 %6090, %v6057
  %v6092 = vpop.permute.xlu0 %6091
  %6095 = vset.pattern.permute.xlu0 1
  %6096 = vperm.xlu0 %6095, %v6058
  %v6097 = vpop.permute.xlu0 %6096
  %6100 = vset.pattern.permute.xlu0 1
  %6101 = vperm.xlu0 %6100, %v6059
  %v6102 = vpop.permute.xlu0 %6101
  %v6104 = vadd.f32 %v6080, %v6087
  %v6105 = vadd.f32 %v6081, %v6092
  %v6106 = vadd.f32 %v6082, %v6097
  %v6107 = vadd.f32 %v6083, %v6102
  %vm6108 = vcmp.ge.f32.partialorder %v6104, 0.0
  %vm6109 = vcmp.ge.f32.partialorder %v6105, 0.0
  %vm6110 = vcmp.ge.f32.partialorder %v6106, 0.0
  %vm6111 = vcmp.ge.f32.partialorder %v6107, 0.0
  %v6112 = vmul.f32 %v6104, 0.2
  %v6113 = vmul.f32 %v6105, 0.2
  %v6114 = vmul.f32 %v6106, 0.2
  %v6115 = vmul.f32 %v6107, 0.2
  %v6116 = vsel %vm6108, %v6104, %v6112
  %v6117 = vsel %vm6109, %v6105, %v6113
  %v6118 = vsel %vm6110, %v6106, %v6114
  %v6119 = vsel %vm6111, %v6107, %v6115
  %v6120 = vld [vmem:[%s14] sm:$0xff]
  %v6121 = vld [vmem:[%s14 + $0x8] sm:$0xff]
  %v6122 = vld [vmem:[%s14 + $0x10] sm:$0xff]
  %v6123 = vld [vmem:[%s14 + $0x18] sm:$0xff]
  %v6125 = vsel %vm2585, %v6120, 0
  %v6128 = vsel %vm2585, %v6121, 0
  %v6131 = vsel %vm2585, %v6122, 0
  %v6134 = vsel %vm2585, %v6123, 0
  %6136 = vmatprep.subr.mxu0 0.0
  %6137 = vmatpush1.msra.mxu0 %v6116
  %6138 = vmatprep.subr.mxu0 0.0
  %6139 = vmatpush1.msra.mxu0 %v6117
  %6140 = vmatprep.subr.mxu0 0.0
  %6141 = vmatpush1.msra.mxu0 %v6118
  %6142 = vmatprep.subr.mxu0 0.0
  %6143 = vmatpush1.msra.mxu0 %v6119
  %6144 = vmatprep.subr.mxu0 0.0
  %6145 = vmatpush1.msra.mxu0 0.0
  %6146 = vmatprep.subr.mxu0 0.0
  %6147 = vmatpush1.msra.mxu0 0.0
  %6148 = vmatprep.subr.mxu0 0.0
  %6149 = vmatpush1.msra.mxu0 0.0
  %6150 = vmatprep.subr.mxu0 0.0
  %6151 = vmatpush1.msra.mxu0 0.0
  %6152 = vmatprep.subr.mxu0 0.0
  %6153 = vmatpush1.msra.mxu0 0.0
  %6154 = vmatprep.subr.mxu0 0.0
  %6155 = vmatpush1.msra.mxu0 0.0
  %6156 = vmatprep.subr.mxu0 0.0
  %6157 = vmatpush1.msra.mxu0 0.0
  %6158 = vmatprep.subr.mxu0 0.0
  %6159 = vmatpush1.msra.mxu0 0.0
  %6160 = vmatprep.subr.mxu0 0.0
  %6161 = vmatpush1.msra.mxu0 0.0
  %6162 = vmatprep.subr.mxu0 0.0
  %6163 = vmatpush1.msra.mxu0 0.0
  %6164 = vmatprep.subr.mxu0 0.0
  %6165 = vmatpush1.msra.mxu0 0.0
  %6166 = vmatprep.subr.mxu0 0.0
  %6167 = vmatpush1.msra.mxu0 0.0
  %6168 = vmatprep.subr.mxu0 0.0
  %6169 = vmatpush1.msra.mxu0 0.0
  %6170 = vmatprep.subr.mxu0 0.0
  %6171 = vmatpush1.msra.mxu0 0.0
  %6172 = vmatprep.subr.mxu0 0.0
  %6173 = vmatpush1.msra.mxu0 0.0
  %6174 = vmatprep.subr.mxu0 0.0
  %6175 = vmatpush1.msra.mxu0 0.0
  %6176 = vmatprep.subr.mxu0 0.0
  %6177 = vmatpush1.msra.mxu0 0.0
  %6178 = vmatprep.subr.mxu0 0.0
  %6179 = vmatpush1.msra.mxu0 0.0
  %6180 = vmatprep.subr.mxu0 0.0
  %6181 = vmatpush1.msra.mxu0 0.0
  %6182 = vmatprep.subr.mxu0 0.0
  %6183 = vmatpush1.msra.mxu0 0.0
  %6184 = vmatprep.subr.mxu0 0.0
  %6185 = vmatpush1.msra.mxu0 0.0
  %6186 = vmatprep.subr.mxu0 0.0
  %6187 = vmatpush1.msra.mxu0 0.0
  %6188 = vmatprep.subr.mxu0 0.0
  %6189 = vmatpush1.msra.mxu0 0.0
  %6190 = vmatprep.subr.mxu0 0.0
  %6191 = vmatpush1.msra.mxu0 0.0
  %6192 = vmatprep.subr.mxu0 0.0
  %6193 = vmatpush1.msra.mxu0 0.0
  %6194 = vmatprep.subr.mxu0 0.0
  %6195 = vmatpush1.msra.mxu0 0.0
  %6196 = vmatprep.subr.mxu0 0.0
  %6197 = vmatpush1.msra.mxu0 0.0
  %6198 = vmatprep.subr.mxu0 0.0
  %6199 = vmatpush1.msra.mxu0 0.0
  %6200 = vmatprep.mubr.f32.mxu0 0.0
  %6201 = vmatmul.mubr.f32.gmra.mrb[0].mxu0 %v6125
  %v6202 = vpop.f32.mrb[0].mxu0
  %v6203 = vadd.f32 0.0, %v6202
  %v6204 = vpop.f32.mrb[0].mxu0
  %6205 = vmatprep.mubr.f32.mxu0 0.0
  %6206 = vmatmul.mubr.f32.gmra.mrb[0].mxu0 %v6128
  %v6207 = vpop.f32.mrb[0].mxu0
  %v6208 = vadd.f32 0.0, %v6207
  %v6209 = vpop.f32.mrb[0].mxu0
  %6210 = vmatprep.mubr.f32.mxu0 0.0
  %6211 = vmatmul.mubr.f32.gmra.mrb[0].mxu0 %v6131
  %v6212 = vpop.f32.mrb[0].mxu0
  %v6213 = vadd.f32 0.0, %v6212
  %v6214 = vpop.f32.mrb[0].mxu0
  %6215 = vmatprep.mubr.f32.mxu0 0.0
  %6216 = vmatmul.mubr.f32.gmra.mrb[0].mxu0 %v6134
  %v6217 = vpop.f32.mrb[0].mxu0
  %v6218 = vadd.f32 0.0, %v6217
  %v6219 = vpop.f32.mrb[0].mxu0
  %6220 = vdwg.mxu0
  %v6221 = vsel %vm1689, %v6203, 0.0
  %6222 = vadd.xlane.f32.xlu0 %v6221
  %v6223 = vpop.xlane.xlu0 %6222
  %v6224 = vsel %vm1689, %v6208, 0.0
  %6225 = vadd.xlane.f32.xlu0 %v6224
  %v6226 = vpop.xlane.xlu0 %6225
  %v6227 = vsel %vm1689, %v6213, 0.0
  %6228 = vadd.xlane.f32.xlu0 %v6227
  %v6229 = vpop.xlane.xlu0 %6228
  %v6230 = vsel %vm1689, %v6218, 0.0
  %6231 = vadd.xlane.f32.xlu0 %v6230
  %v6232 = vpop.xlane.xlu0 %6231
  %v6233 = vadd.f32 %v6223, %v6229
  %v6234 = vadd.f32 %v6226, %v6232
  %v6235 = vmul.f32 %v6203, %v6203
  %v6236 = vmul.f32 %v6208, %v6208
  %v6237 = vmul.f32 %v6213, %v6213
  %v6238 = vmul.f32 %v6218, %v6218
  %v6239 = vsel %vm1689, %v6235, 0.0
  %6240 = vadd.xlane.f32.xlu0 %v6239
  %v6241 = vpop.xlane.xlu0 %6240
  %v6242 = vsel %vm1689, %v6236, 0.0
  %6243 = vadd.xlane.f32.xlu0 %v6242
  %v6244 = vpop.xlane.xlu0 %6243
  %v6245 = vsel %vm1689, %v6237, 0.0
  %6246 = vadd.xlane.f32.xlu0 %v6245
  %v6247 = vpop.xlane.xlu0 %6246
  %v6248 = vsel %vm1689, %v6238, 0.0
  %6249 = vadd.xlane.f32.xlu0 %v6248
  %v6250 = vpop.xlane.xlu0 %6249
  %v6251 = vadd.f32 %v6241, %v6247
  %v6252 = vadd.f32 %v6244, %v6250
  %v6253 = vmul.f32 %v6233, 0.0078125
  %v6254 = vmul.f32 %v6234, 0.0078125
  %v6255 = vmul.f32 %v6251, 0.0078125
  %v6256 = vmul.f32 %v6252, 0.0078125
  %v6257 = vmul.f32 %v6253, %v6253
  %v6258 = vmul.f32 %v6254, %v6254
  %v6259 = vsub.f32 %v6255, %v6257
  %v6260 = vsub.f32 %v6256, %v6258
  %v6261 = vmax.f32 %v6259, 0.0
  %v6262 = vmax.f32 %v6260, 0.0
  %s6263 = scalar_lea.vmem %s18, 256
  %v6264 = vld [vmem:[%s6263] sm:$0xff]
  %v6265 = vld [vmem:[%s6263 + $0x8] sm:$0xff]
  %v6266 = vld [vmem:[%s6263 + $0x10] sm:$0xff]
  %v6267 = vld [vmem:[%s6263 + $0x18] sm:$0xff]
  %v6268 = vadd.f32 %v6261, 1e-05
  %v6269 = vadd.f32 %v6262, 1e-05
  %v6270 = vrsqrt.pop %v6268
  %v6271 = vrsqrt.pop %v6269
  %v6272 = vmul.f32 %v6264, %v6270
  %v6273 = vmul.f32 %v6265, %v6271
  %v6274 = vmul.f32 %v6266, %v6270
  %v6275 = vmul.f32 %v6267, %v6271
  %v6276 = vmul.f32 %v6253, %v6272
  %v6277 = vmul.f32 %v6254, %v6273
  %v6278 = vmul.f32 %v6253, %v6274
  %v6279 = vmul.f32 %v6254, %v6275
  %6284 = vrot.lane.b32.xlu0 %v6276, 1
  %v6285 = vpop.permute.xlu0 %6284
  %6286 = vrot.lane.b32.xlu0 %v6277, 1
  %v6287 = vpop.permute.xlu0 %6286
  %6288 = vrot.lane.b32.xlu0 %v6278, 1
  %v6289 = vpop.permute.xlu0 %6288
  %6290 = vrot.lane.b32.xlu0 %v6279, 1
  %v6291 = vpop.permute.xlu0 %6290
  %v6296 = vsub.f32 %v6264, %v6285
  %v6297 = vsub.f32 %v6265, %v6287
  %v6298 = vsub.f32 %v6266, %v6289
  %v6299 = vsub.f32 %v6267, %v6291
  %6301 = vset.pattern.permute.xlu0 0
  %6302 = vperm.xlu0 %6301, %v6272
  %v6303 = vpop.permute.xlu0 %6302
  %6306 = vset.pattern.permute.xlu0 0
  %6307 = vperm.xlu0 %6306, %v6273
  %v6308 = vpop.permute.xlu0 %6307
  %6311 = vset.pattern.permute.xlu0 0
  %6312 = vperm.xlu0 %6311, %v6274
  %v6313 = vpop.permute.xlu0 %6312
  %6316 = vset.pattern.permute.xlu0 0
  %6317 = vperm.xlu0 %6316, %v6275
  %v6318 = vpop.permute.xlu0 %6317
  %v6320 = vmul.f32 %v6203, %v6303
  %v6321 = vmul.f32 %v6208, %v6308
  %v6322 = vmul.f32 %v6213, %v6313
  %v6323 = vmul.f32 %v6218, %v6318
  %6325 = vset.pattern.permute.xlu0 1
  %6326 = vperm.xlu0 %6325, %v6296
  %v6327 = vpop.permute.xlu0 %6326
  %6330 = vset.pattern.permute.xlu0 1
  %6331 = vperm.xlu0 %6330, %v6297
  %v6332 = vpop.permute.xlu0 %6331
  %6335 = vset.pattern.permute.xlu0 1
  %6336 = vperm.xlu0 %6335, %v6298
  %v6337 = vpop.permute.xlu0 %6336
  %6340 = vset.pattern.permute.xlu0 1
  %6341 = vperm.xlu0 %6340, %v6299
  %v6342 = vpop.permute.xlu0 %6341
  %v6344 = vadd.f32 %v6320, %v6327
  %v6345 = vadd.f32 %v6321, %v6332
  %v6346 = vadd.f32 %v6322, %v6337
  %v6347 = vadd.f32 %v6323, %v6342
  %vm6348 = vcmp.ge.f32.partialorder %v6344, 0.0
  %vm6349 = vcmp.ge.f32.partialorder %v6345, 0.0
  %vm6350 = vcmp.ge.f32.partialorder %v6346, 0.0
  %vm6351 = vcmp.ge.f32.partialorder %v6347, 0.0
  %v6352 = vmul.f32 %v6344, 0.2
  %v6353 = vmul.f32 %v6345, 0.2
  %v6354 = vmul.f32 %v6346, 0.2
  %v6355 = vmul.f32 %v6347, 0.2
  %v6356 = vsel %vm6348, %v6344, %v6352
  %v6357 = vsel %vm6349, %v6345, %v6353
  %v6358 = vsel %vm6350, %v6346, %v6354
  %v6359 = vsel %vm6351, %v6347, %v6355
  %v6360 = vpack.c.bf16 %v6357, %v6356
  %v6361 = vpack.c.bf16 %v6359, %v6358
  %v6362 = vld [vmem:[%s7] sm:$0xff]
  %v6363 = vld [vmem:[%s7 + $0x8] sm:$0xff]
  %v6364 = vld [vmem:[%s7 + $0x10] sm:$0xff]
  %v6365 = vld [vmem:[%s7 + $0x18] sm:$0xff]
  %v6366 = vld [vmem:[%s7 + $0x20] sm:$0xff]
  %v6367 = vld [vmem:[%s7 + $0x28] sm:$0xff]
  %v6368 = vld [vmem:[%s7 + $0x30] sm:$0xff]
  %v6369 = vld [vmem:[%s7 + $0x38] sm:$0xff]
  %v6378 = vunpack.c.l.b16 %v6362
  %v6379 = vunpack.c.h.b16 %v6362
  %v6380 = vunpack.c.l.b16 %v6363
  %v6381 = vunpack.c.h.b16 %v6363
  %v6382 = vunpack.c.l.b16 %v6364
  %v6383 = vunpack.c.h.b16 %v6364
  %v6384 = vunpack.c.l.b16 %v6365
  %v6385 = vunpack.c.h.b16 %v6365
  %v6386 = vunpack.c.l.b16 %v6366
  %v6387 = vunpack.c.h.b16 %v6366
  %v6388 = vunpack.c.l.b16 %v6367
  %v6389 = vunpack.c.h.b16 %v6367
  %v6390 = vunpack.c.l.b16 %v6368
  %v6391 = vunpack.c.h.b16 %v6368
  %v6392 = vunpack.c.l.b16 %v6369
  %v6393 = vunpack.c.h.b16 %v6369
  %v6394 = vpack.c.b16 %v6380, %v6378
  %v6395 = vpack.c.b16 %v6381, %v6379
  %v6396 = vpack.c.b16 %v6384, %v6382
  %v6397 = vpack.c.b16 %v6385, %v6383
  %v6398 = vpack.c.b16 %v6388, %v6386
  %v6399 = vpack.c.b16 %v6389, %v6387
  %v6400 = vpack.c.b16 %v6392, %v6390
  %v6401 = vpack.c.b16 %v6393, %v6391
  %v6411 = vsel %vm1689, %v6360, 0
  %v6414 = vsel %vm1689, %v6361, 0
  %6416 = vmatprep.subr.bf16.mxu0 %v6395
  %6417 = vmatpush1.bf16.msra.mxu0 %v6394
  %6418 = vmatprep.subr.bf16.mxu0 %v6397
  %6419 = vmatpush1.bf16.msra.mxu0 %v6396
  %6420 = vmatprep.subr.bf16.mxu0 %v6399
  %6421 = vmatpush1.bf16.msra.mxu0 %v6398
  %6422 = vmatprep.subr.bf16.mxu0 %v6401
  %6423 = vmatpush1.bf16.msra.mxu0 %v6400
  %6424 = vmatprep.subr.bf16.mxu0 0
  %6425 = vmatpush1.bf16.msra.mxu0 0
  %6426 = vmatprep.subr.bf16.mxu0 0
  %6427 = vmatpush1.bf16.msra.mxu0 0
  %6428 = vmatprep.subr.bf16.mxu0 0
  %6429 = vmatpush1.bf16.msra.mxu0 0
  %6430 = vmatprep.subr.bf16.mxu0 0
  %6431 = vmatpush1.bf16.msra.mxu0 0
  %6432 = vmatprep.subr.bf16.mxu0 0
  %6433 = vmatpush1.bf16.msra.mxu0 0
  %6434 = vmatprep.subr.bf16.mxu0 0
  %6435 = vmatpush1.bf16.msra.mxu0 0
  %6436 = vmatprep.subr.bf16.mxu0 0
  %6437 = vmatpush1.bf16.msra.mxu0 0
  %6438 = vmatprep.subr.bf16.mxu0 0
  %6439 = vmatpush1.bf16.msra.mxu0 0
  %6440 = vmatprep.subr.bf16.mxu0 0
  %6441 = vmatpush1.bf16.msra.mxu0 0
  %6442 = vmatprep.subr.bf16.mxu0 0
  %6443 = vmatpush1.bf16.msra.mxu0 0
  %6444 = vmatprep.subr.bf16.mxu0 0
  %6445 = vmatpush1.bf16.msra.mxu0 0
  %6446 = vmatprep.subr.bf16.mxu0 0
  %6447 = vmatpush1.bf16.msra.mxu0 0
  %6448 = vmatprep.mubr.bf16.mxu0 0
  %6449 = vmatmul.mubr.bf16.gmra.mrb[0].mxu0 %v6411
  %v6450 = vpop.f32.mrb[0].mxu0
  %v6451 = vadd.f32 0.0, %v6450
  %v6452 = vpop.f32.mrb[0].mxu0
  %v6453 = vadd.f32 0.0, %v6452
  %v6454 = vpop.f32.mrb[0].mxu0
  %v6455 = vadd.f32 0.0, %v6454
  %v6456 = vpop.f32.mrb[0].mxu0
  %v6457 = vadd.f32 0.0, %v6456
  %6458 = vmatprep.mubr.bf16.mxu0 0
  %6459 = vmatmul.mubr.bf16.gmra.mrb[0].mxu0 %v6414
  %v6460 = vpop.f32.mrb[0].mxu0
  %v6461 = vadd.f32 0.0, %v6460
  %v6462 = vpop.f32.mrb[0].mxu0
  %v6463 = vadd.f32 0.0, %v6462
  %v6464 = vpop.f32.mrb[0].mxu0
  %v6465 = vadd.f32 0.0, %v6464
  %v6466 = vpop.f32.mrb[0].mxu0
  %v6467 = vadd.f32 0.0, %v6466
  %6468 = vdwg.mxu0
  %v6469 = vadd.f32 %v6451, %v6453
  %6470 = vadd.xlane.f32.xlu0 %v6469
  %v6471 = vpop.xlane.xlu0 %6470
  %v6472 = vadd.f32 %v6455, %v6457
  %6473 = vadd.xlane.f32.xlu0 %v6472
  %v6474 = vpop.xlane.xlu0 %6473
  %v6475 = vadd.f32 %v6461, %v6463
  %6476 = vadd.xlane.f32.xlu0 %v6475
  %v6477 = vpop.xlane.xlu0 %6476
  %v6478 = vadd.f32 %v6465, %v6467
  %6479 = vadd.xlane.f32.xlu0 %v6478
  %v6480 = vpop.xlane.xlu0 %6479
  %v6481 = vadd.f32 %v6471, %v6477
  %v6482 = vadd.f32 %v6474, %v6480
  %v6483 = vmul.f32 %v6451, %v6451
  %v6484 = vmul.f32 %v6453, %v6453
  %v6485 = vmul.f32 %v6455, %v6455
  %v6486 = vmul.f32 %v6457, %v6457
  %v6487 = vmul.f32 %v6461, %v6461
  %v6488 = vmul.f32 %v6463, %v6463
  %v6489 = vmul.f32 %v6465, %v6465
  %v6490 = vmul.f32 %v6467, %v6467
  %v6491 = vadd.f32 %v6483, %v6484
  %6492 = vadd.xlane.f32.xlu0 %v6491
  %v6493 = vpop.xlane.xlu0 %6492
  %v6494 = vadd.f32 %v6485, %v6486
  %6495 = vadd.xlane.f32.xlu0 %v6494
  %v6496 = vpop.xlane.xlu0 %6495
  %v6497 = vadd.f32 %v6487, %v6488
  %6498 = vadd.xlane.f32.xlu0 %v6497
  %v6499 = vpop.xlane.xlu0 %6498
  %v6500 = vadd.f32 %v6489, %v6490
  %6501 = vadd.xlane.f32.xlu0 %v6500
  %v6502 = vpop.xlane.xlu0 %6501
  %v6503 = vadd.f32 %v6493, %v6499
  %v6504 = vadd.f32 %v6496, %v6502
  %v6505 = vmul.f32 %v6481, 0.001953125
  %v6506 = vmul.f32 %v6482, 0.001953125
  %v6507 = vmul.f32 %v6503, 0.001953125
  %v6508 = vmul.f32 %v6504, 0.001953125
  %v6509 = vmul.f32 %v6505, %v6505
  %v6510 = vmul.f32 %v6506, %v6506
  %v6511 = vsub.f32 %v6507, %v6509
  %v6512 = vsub.f32 %v6508, %v6510
  %v6513 = vmax.f32 %v6511, 0.0
  %v6514 = vmax.f32 %v6512, 0.0
  %s6515 = scalar_lea.vmem %s18, 288
  %v6516 = vld [vmem:[%s6515] sm:$0xff]
  %v6517 = vld [vmem:[%s6515 + $0x8] sm:$0xff]
  %v6518 = vld [vmem:[%s6515 + $0x10] sm:$0xff]
  %v6519 = vld [vmem:[%s6515 + $0x18] sm:$0xff]
  %v6520 = vadd.f32 %v6513, 1e-05
  %v6521 = vadd.f32 %v6514, 1e-05
  %v6522 = vrsqrt.pop %v6520
  %v6523 = vrsqrt.pop %v6521
  %v6524 = vmul.f32 %v6516, %v6522
  %v6525 = vmul.f32 %v6517, %v6523
  %v6526 = vmul.f32 %v6518, %v6522
  %v6527 = vmul.f32 %v6519, %v6523
  %v6528 = vmul.f32 %v6505, %v6524
  %v6529 = vmul.f32 %v6506, %v6525
  %v6530 = vmul.f32 %v6505, %v6526
  %v6531 = vmul.f32 %v6506, %v6527
  %6536 = vrot.lane.b32.xlu0 %v6528, 1
  %v6537 = vpop.permute.xlu0 %6536
  %6538 = vrot.lane.b32.xlu0 %v6529, 1
  %v6539 = vpop.permute.xlu0 %6538
  %6540 = vrot.lane.b32.xlu0 %v6530, 1
  %v6541 = vpop.permute.xlu0 %6540
  %6542 = vrot.lane.b32.xlu0 %v6531, 1
  %v6543 = vpop.permute.xlu0 %6542
  %v6548 = vsub.f32 %v6516, %v6537
  %v6549 = vsub.f32 %v6517, %v6539
  %v6550 = vsub.f32 %v6518, %v6541
  %v6551 = vsub.f32 %v6519, %v6543
  %6553 = vset.pattern.permute.xlu0 0
  %6554 = vperm.xlu0 %6553, %v6524
  %v6555 = vpop.permute.xlu0 %6554
  %6558 = vset.pattern.permute.xlu0 0
  %6559 = vperm.xlu0 %6558, %v6525
  %v6560 = vpop.permute.xlu0 %6559
  %6563 = vset.pattern.permute.xlu0 0
  %6564 = vperm.xlu0 %6563, %v6526
  %v6565 = vpop.permute.xlu0 %6564
  %6568 = vset.pattern.permute.xlu0 0
  %6569 = vperm.xlu0 %6568, %v6527
  %v6570 = vpop.permute.xlu0 %6569
  %v6572 = vmul.f32 %v6451, %v6555
  %v6573 = vmul.f32 %v6453, %v6555
  %v6574 = vmul.f32 %v6455, %v6560
  %v6575 = vmul.f32 %v6457, %v6560
  %v6576 = vmul.f32 %v6461, %v6565
  %v6577 = vmul.f32 %v6463, %v6565
  %v6578 = vmul.f32 %v6465, %v6570
  %v6579 = vmul.f32 %v6467, %v6570
  %6581 = vset.pattern.permute.xlu0 1
  %6582 = vperm.xlu0 %6581, %v6548
  %v6583 = vpop.permute.xlu0 %6582
  %6586 = vset.pattern.permute.xlu0 1
  %6587 = vperm.xlu0 %6586, %v6549
  %v6588 = vpop.permute.xlu0 %6587
  %6591 = vset.pattern.permute.xlu0 1
  %6592 = vperm.xlu0 %6591, %v6550
  %v6593 = vpop.permute.xlu0 %6592
  %6596 = vset.pattern.permute.xlu0 1
  %6597 = vperm.xlu0 %6596, %v6551
  %v6598 = vpop.permute.xlu0 %6597
  %v6600 = vadd.f32 %v6572, %v6583
  %v6601 = vadd.f32 %v6573, %v6583
  %v6602 = vadd.f32 %v6574, %v6588
  %v6603 = vadd.f32 %v6575, %v6588
  %v6604 = vadd.f32 %v6576, %v6593
  %v6605 = vadd.f32 %v6577, %v6593
  %v6606 = vadd.f32 %v6578, %v6598
  %v6607 = vadd.f32 %v6579, %v6598
  %v6608 = vpack.c.bf16 %v6602, %v6600
  %v6609 = vpack.c.bf16 %v6603, %v6601
  %v6610 = vpack.c.bf16 %v6606, %v6604
  %v6611 = vpack.c.bf16 %v6607, %v6605
  %v6612 = vld [vmem:[%s5] sm:$0xff]
  %v6613 = vld [vmem:[%s5 + $0x8] sm:$0xff]
  %v6614 = vld [vmem:[%s5 + $0x10] sm:$0xff]
  %v6615 = vld [vmem:[%s5 + $0x18] sm:$0xff]
  %v6616 = vld [vmem:[%s5 + $0x20] sm:$0xff]
  %v6617 = vld [vmem:[%s5 + $0x28] sm:$0xff]
  %v6618 = vld [vmem:[%s5 + $0x30] sm:$0xff]
  %v6619 = vld [vmem:[%s5 + $0x38] sm:$0xff]
  %v6620 = vld [vmem:[%s5 + $0x40] sm:$0xff]
  %v6621 = vld [vmem:[%s5 + $0x48] sm:$0xff]
  %v6622 = vld [vmem:[%s5 + $0x50] sm:$0xff]
  %v6623 = vld [vmem:[%s5 + $0x58] sm:$0xff]
  %v6624 = vld [vmem:[%s5 + $0x60] sm:$0xff]
  %v6625 = vld [vmem:[%s5 + $0x68] sm:$0xff]
  %v6626 = vld [vmem:[%s5 + $0x70] sm:$0xff]
  %v6627 = vld [vmem:[%s5 + $0x78] sm:$0xff]
  %v6628 = vld [vmem:[%s5 + $0x80] sm:$0xff]
  %v6629 = vld [vmem:[%s5 + $0x88] sm:$0xff]
  %v6630 = vld [vmem:[%s5 + $0x90] sm:$0xff]
  %v6631 = vld [vmem:[%s5 + $0x98] sm:$0xff]
  %v6632 = vld [vmem:[%s5 + $0xa0] sm:$0xff]
  %v6633 = vld [vmem:[%s5 + $0xa8] sm:$0xff]
  %v6634 = vld [vmem:[%s5 + $0xb0] sm:$0xff]
  %v6635 = vld [vmem:[%s5 + $0xb8] sm:$0xff]
  %v6636 = vld [vmem:[%s5 + $0xc0] sm:$0xff]
  %v6637 = vld [vmem:[%s5 + $0xc8] sm:$0xff]
  %v6638 = vld [vmem:[%s5 + $0xd0] sm:$0xff]
  %v6639 = vld [vmem:[%s5 + $0xd8] sm:$0xff]
  %v6640 = vld [vmem:[%s5 + $0xe0] sm:$0xff]
  %v6641 = vld [vmem:[%s5 + $0xe8] sm:$0xff]
  %v6642 = vld [vmem:[%s5 + $0xf0] sm:$0xff]
  %v6643 = vld [vmem:[%s5 + $0xf8] sm:$0xff]
  %v6676 = vunpack.c.l.b16 %v6612
  %v6677 = vunpack.c.h.b16 %v6612
  %v6678 = vunpack.c.l.b16 %v6613
  %v6679 = vunpack.c.h.b16 %v6613
  %v6680 = vunpack.c.l.b16 %v6614
  %v6681 = vunpack.c.h.b16 %v6614
  %v6682 = vunpack.c.l.b16 %v6615
  %v6683 = vunpack.c.h.b16 %v6615
  %v6684 = vunpack.c.l.b16 %v6616
  %v6685 = vunpack.c.h.b16 %v6616
  %v6686 = vunpack.c.l.b16 %v6617
  %v6687 = vunpack.c.h.b16 %v6617
  %v6688 = vunpack.c.l.b16 %v6618
  %v6689 = vunpack.c.h.b16 %v6618
  %v6690 = vunpack.c.l.b16 %v6619
  %v6691 = vunpack.c.h.b16 %v6619
  %v6692 = vunpack.c.l.b16 %v6620
  %v6693 = vunpack.c.h.b16 %v6620
  %v6694 = vunpack.c.l.b16 %v6621
  %v6695 = vunpack.c.h.b16 %v6621
  %v6696 = vunpack.c.l.b16 %v6622
  %v6697 = vunpack.c.h.b16 %v6622
  %v6698 = vunpack.c.l.b16 %v6623
  %v6699 = vunpack.c.h.b16 %v6623
  %v6700 = vunpack.c.l.b16 %v6624
  %v6701 = vunpack.c.h.b16 %v6624
  %v6702 = vunpack.c.l.b16 %v6625
  %v6703 = vunpack.c.h.b16 %v6625
  %v6704 = vunpack.c.l.b16 %v6626
  %v6705 = vunpack.c.h.b16 %v6626
  %v6706 = vunpack.c.l.b16 %v6627
  %v6707 = vunpack.c.h.b16 %v6627
  %v6708 = vunpack.c.l.b16 %v6628
  %v6709 = vunpack.c.h.b16 %v6628
  %v6710 = vunpack.c.l.b16 %v6629
  %v6711 = vunpack.c.h.b16 %v6629
  %v6712 = vunpack.c.l.b16 %v6630
  %v6713 = vunpack.c.h.b16 %v6630
  %v6714 = vunpack.c.l.b16 %v6631
  %v6715 = vunpack.c.h.b16 %v6631
  %v6716 = vunpack.c.l.b16 %v6632
  %v6717 = vunpack.c.h.b16 %v6632
  %v6718 = vunpack.c.l.b16 %v6633
  %v6719 = vunpack.c.h.b16 %v6633
  %v6720 = vunpack.c.l.b16 %v6634
  %v6721 = vunpack.c.h.b16 %v6634
  %v6722 = vunpack.c.l.b16 %v6635
  %v6723 = vunpack.c.h.b16 %v6635
  %v6724 = vunpack.c.l.b16 %v6636
  %v6725 = vunpack.c.h.b16 %v6636
  %v6726 = vunpack.c.l.b16 %v6637
  %v6727 = vunpack.c.h.b16 %v6637
  %v6728 = vunpack.c.l.b16 %v6638
  %v6729 = vunpack.c.h.b16 %v6638
  %v6730 = vunpack.c.l.b16 %v6639
  %v6731 = vunpack.c.h.b16 %v6639
  %v6732 = vunpack.c.l.b16 %v6640
  %v6733 = vunpack.c.h.b16 %v6640
  %v6734 = vunpack.c.l.b16 %v6641
  %v6735 = vunpack.c.h.b16 %v6641
  %v6736 = vunpack.c.l.b16 %v6642
  %v6737 = vunpack.c.h.b16 %v6642
  %v6738 = vunpack.c.l.b16 %v6643
  %v6739 = vunpack.c.h.b16 %v6643
  %v6740 = vpack.c.b16 %v6678, %v6676
  %v6741 = vpack.c.b16 %v6679, %v6677
  %v6742 = vpack.c.b16 %v6682, %v6680
  %v6743 = vpack.c.b16 %v6683, %v6681
  %v6744 = vpack.c.b16 %v6686, %v6684
  %v6745 = vpack.c.b16 %v6687, %v6685
  %v6746 = vpack.c.b16 %v6690, %v6688
  %v6747 = vpack.c.b16 %v6691, %v6689
  %v6748 = vpack.c.b16 %v6694, %v6692
  %v6749 = vpack.c.b16 %v6695, %v6693
  %v6750 = vpack.c.b16 %v6698, %v6696
  %v6751 = vpack.c.b16 %v6699, %v6697
  %v6752 = vpack.c.b16 %v6702, %v6700
  %v6753 = vpack.c.b16 %v6703, %v6701
  %v6754 = vpack.c.b16 %v6706, %v6704
  %v6755 = vpack.c.b16 %v6707, %v6705
  %v6756 = vpack.c.b16 %v6710, %v6708
  %v6757 = vpack.c.b16 %v6711, %v6709
  %v6758 = vpack.c.b16 %v6714, %v6712
  %v6759 = vpack.c.b16 %v6715, %v6713
  %v6760 = vpack.c.b16 %v6718, %v6716
  %v6761 = vpack.c.b16 %v6719, %v6717
  %v6762 = vpack.c.b16 %v6722, %v6720
  %v6763 = vpack.c.b16 %v6723, %v6721
  %v6764 = vpack.c.b16 %v6726, %v6724
  %v6765 = vpack.c.b16 %v6727, %v6725
  %v6766 = vpack.c.b16 %v6730, %v6728
  %v6767 = vpack.c.b16 %v6731, %v6729
  %v6768 = vpack.c.b16 %v6734, %v6732
  %v6769 = vpack.c.b16 %v6735, %v6733
  %v6770 = vpack.c.b16 %v6738, %v6736
  %v6771 = vpack.c.b16 %v6739, %v6737
  %6804 = vmatprep.subr.bf16.mxu0 %v6741
  %6805 = vmatpush1.bf16.msra.mxu0 %v6740
  %6806 = vmatprep.subr.bf16.mxu0 %v6743
  %6807 = vmatpush1.bf16.msra.mxu0 %v6742
  %6808 = vmatprep.subr.bf16.mxu0 %v6745
  %6809 = vmatpush1.bf16.msra.mxu0 %v6744
  %6810 = vmatprep.subr.bf16.mxu0 %v6747
  %6811 = vmatpush1.bf16.msra.mxu0 %v6746
  %6812 = vmatprep.subr.bf16.mxu0 %v6749
  %6813 = vmatpush1.bf16.msra.mxu0 %v6748
  %6814 = vmatprep.subr.bf16.mxu0 %v6751
  %6815 = vmatpush1.bf16.msra.mxu0 %v6750
  %6816 = vmatprep.subr.bf16.mxu0 %v6753
  %6817 = vmatpush1.bf16.msra.mxu0 %v6752
  %6818 = vmatprep.subr.bf16.mxu0 %v6755
  %6819 = vmatpush1.bf16.msra.mxu0 %v6754
  %6820 = vmatprep.subr.bf16.mxu0 %v6757
  %6821 = vmatpush1.bf16.msra.mxu0 %v6756
  %6822 = vmatprep.subr.bf16.mxu0 %v6759
  %6823 = vmatpush1.bf16.msra.mxu0 %v6758
  %6824 = vmatprep.subr.bf16.mxu0 %v6761
  %6825 = vmatpush1.bf16.msra.mxu0 %v6760
  %6826 = vmatprep.subr.bf16.mxu0 %v6763
  %6827 = vmatpush1.bf16.msra.mxu0 %v6762
  %6828 = vmatprep.subr.bf16.mxu0 %v6765
  %6829 = vmatpush1.bf16.msra.mxu0 %v6764
  %6830 = vmatprep.subr.bf16.mxu0 %v6767
  %6831 = vmatpush1.bf16.msra.mxu0 %v6766
  %6832 = vmatprep.subr.bf16.mxu0 %v6769
  %6833 = vmatpush1.bf16.msra.mxu0 %v6768
  %6834 = vmatprep.subr.bf16.mxu0 %v6771
  %6835 = vmatpush1.bf16.msra.mxu0 %v6770
  %6836 = vmatprep.mubr.bf16.mxu0 %v6609
  %6837 = vmatmul.mubr.bf16.gmra.mrb[0].mxu0 %v6608
  %v6838 = vpop.f32.mrb[0].mxu0
  %v6839 = vadd.f32 0.0, %v6838
  %v6840 = vpop.f32.mrb[0].mxu0
  %v6841 = vadd.f32 0.0, %v6840
  %v6842 = vpop.f32.mrb[0].mxu0
  %v6843 = vadd.f32 0.0, %v6842
  %v6844 = vpop.f32.mrb[0].mxu0
  %v6845 = vadd.f32 0.0, %v6844
  %6846 = vmatprep.mubr.bf16.mxu0 %v6611
  %6847 = vmatmul.mubr.bf16.gmra.mrb[0].mxu0 %v6610
  %v6848 = vpop.f32.mrb[0].mxu0
  %v6849 = vadd.f32 0.0, %v6848
  %v6850 = vpop.f32.mrb[0].mxu0
  %v6851 = vadd.f32 0.0, %v6850
  %v6852 = vpop.f32.mrb[0].mxu0
  %v6853 = vadd.f32 0.0, %v6852
  %v6854 = vpop.f32.mrb[0].mxu0
  %v6855 = vadd.f32 0.0, %v6854
  %6856 = vdwg.mxu0
  %s6857 = scalar_lea.vmem %s5, 256
  %v6858 = vld [vmem:[%s6857] sm:$0xff]
  %v6859 = vld [vmem:[%s6857 + $0x8] sm:$0xff]
  %v6860 = vld [vmem:[%s6857 + $0x10] sm:$0xff]
  %v6861 = vld [vmem:[%s6857 + $0x18] sm:$0xff]
  %v6862 = vld [vmem:[%s6857 + $0x20] sm:$0xff]
  %v6863 = vld [vmem:[%s6857 + $0x28] sm:$0xff]
  %v6864 = vld [vmem:[%s6857 + $0x30] sm:$0xff]
  %v6865 = vld [vmem:[%s6857 + $0x38] sm:$0xff]
  %v6866 = vld [vmem:[%s6857 + $0x40] sm:$0xff]
  %v6867 = vld [vmem:[%s6857 + $0x48] sm:$0xff]
  %v6868 = vld [vmem:[%s6857 + $0x50] sm:$0xff]
  %v6869 = vld [vmem:[%s6857 + $0x58] sm:$0xff]
  %v6870 = vld [vmem:[%s6857 + $0x60] sm:$0xff]
  %v6871 = vld [vmem:[%s6857 + $0x68] sm:$0xff]
  %v6872 = vld [vmem:[%s6857 + $0x70] sm:$0xff]
  %v6873 = vld [vmem:[%s6857 + $0x78] sm:$0xff]
  %v6874 = vld [vmem:[%s6857 + $0x80] sm:$0xff]
  %v6875 = vld [vmem:[%s6857 + $0x88] sm:$0xff]
  %v6876 = vld [vmem:[%s6857 + $0x90] sm:$0xff]
  %v6877 = vld [vmem:[%s6857 + $0x98] sm:$0xff]
  %v6878 = vld [vmem:[%s6857 + $0xa0] sm:$0xff]
  %v6879 = vld [vmem:[%s6857 + $0xa8] sm:$0xff]
  %v6880 = vld [vmem:[%s6857 + $0xb0] sm:$0xff]
  %v6881 = vld [vmem:[%s6857 + $0xb8] sm:$0xff]
  %v6882 = vld [vmem:[%s6857 + $0xc0] sm:$0xff]
  %v6883 = vld [vmem:[%s6857 + $0xc8] sm:$0xff]
  %v6884 = vld [vmem:[%s6857 + $0xd0] sm:$0xff]
  %v6885 = vld [vmem:[%s6857 + $0xd8] sm:$0xff]
  %v6886 = vld [vmem:[%s6857 + $0xe0] sm:$0xff]
  %v6887 = vld [vmem:[%s6857 + $0xe8] sm:$0xff]
  %v6888 = vld [vmem:[%s6857 + $0xf0] sm:$0xff]
  %v6889 = vld [vmem:[%s6857 + $0xf8] sm:$0xff]
  %v6922 = vunpack.c.l.b16 %v6858
  %v6923 = vunpack.c.h.b16 %v6858
  %v6924 = vunpack.c.l.b16 %v6859
  %v6925 = vunpack.c.h.b16 %v6859
  %v6926 = vunpack.c.l.b16 %v6860
  %v6927 = vunpack.c.h.b16 %v6860
  %v6928 = vunpack.c.l.b16 %v6861
  %v6929 = vunpack.c.h.b16 %v6861
  %v6930 = vunpack.c.l.b16 %v6862
  %v6931 = vunpack.c.h.b16 %v6862
  %v6932 = vunpack.c.l.b16 %v6863
  %v6933 = vunpack.c.h.b16 %v6863
  %v6934 = vunpack.c.l.b16 %v6864
  %v6935 = vunpack.c.h.b16 %v6864
  %v6936 = vunpack.c.l.b16 %v6865
  %v6937 = vunpack.c.h.b16 %v6865
  %v6938 = vunpack.c.l.b16 %v6866
  %v6939 = vunpack.c.h.b16 %v6866
  %v6940 = vunpack.c.l.b16 %v6867
  %v6941 = vunpack.c.h.b16 %v6867
  %v6942 = vunpack.c.l.b16 %v6868
  %v6943 = vunpack.c.h.b16 %v6868
  %v6944 = vunpack.c.l.b16 %v6869
  %v6945 = vunpack.c.h.b16 %v6869
  %v6946 = vunpack.c.l.b16 %v6870
  %v6947 = vunpack.c.h.b16 %v6870
  %v6948 = vunpack.c.l.b16 %v6871
  %v6949 = vunpack.c.h.b16 %v6871
  %v6950 = vunpack.c.l.b16 %v6872
  %v6951 = vunpack.c.h.b16 %v6872
  %v6952 = vunpack.c.l.b16 %v6873
  %v6953 = vunpack.c.h.b16 %v6873
  %v6954 = vunpack.c.l.b16 %v6874
  %v6955 = vunpack.c.h.b16 %v6874
  %v6956 = vunpack.c.l.b16 %v6875
  %v6957 = vunpack.c.h.b16 %v6875
  %v6958 = vunpack.c.l.b16 %v6876
  %v6959 = vunpack.c.h.b16 %v6876
  %v6960 = vunpack.c.l.b16 %v6877
  %v6961 = vunpack.c.h.b16 %v6877
  %v6962 = vunpack.c.l.b16 %v6878
  %v6963 = vunpack.c.h.b16 %v6878
  %v6964 = vunpack.c.l.b16 %v6879
  %v6965 = vunpack.c.h.b16 %v6879
  %v6966 = vunpack.c.l.b16 %v6880
  %v6967 = vunpack.c.h.b16 %v6880
  %v6968 = vunpack.c.l.b16 %v6881
  %v6969 = vunpack.c.h.b16 %v6881
  %v6970 = vunpack.c.l.b16 %v6882
  %v6971 = vunpack.c.h.b16 %v6882
  %v6972 = vunpack.c.l.b16 %v6883
  %v6973 = vunpack.c.h.b16 %v6883
  %v6974 = vunpack.c.l.b16 %v6884
  %v6975 = vunpack.c.h.b16 %v6884
  %v6976 = vunpack.c.l.b16 %v6885
  %v6977 = vunpack.c.h.b16 %v6885
  %v6978 = vunpack.c.l.b16 %v6886
  %v6979 = vunpack.c.h.b16 %v6886
  %v6980 = vunpack.c.l.b16 %v6887
  %v6981 = vunpack.c.h.b16 %v6887
  %v6982 = vunpack.c.l.b16 %v6888
  %v6983 = vunpack.c.h.b16 %v6888
  %v6984 = vunpack.c.l.b16 %v6889
  %v6985 = vunpack.c.h.b16 %v6889
  %v6986 = vpack.c.b16 %v6924, %v6922
  %v6987 = vpack.c.b16 %v6925, %v6923
  %v6988 = vpack.c.b16 %v6928, %v6926
  %v6989 = vpack.c.b16 %v6929, %v6927
  %v6990 = vpack.c.b16 %v6932, %v6930
  %v6991 = vpack.c.b16 %v6933, %v6931
  %v6992 = vpack.c.b16 %v6936, %v6934
  %v6993 = vpack.c.b16 %v6937, %v6935
  %v6994 = vpack.c.b16 %v6940, %v6938
  %v6995 = vpack.c.b16 %v6941, %v6939
  %v6996 = vpack.c.b16 %v6944, %v6942
  %v6997 = vpack.c.b16 %v6945, %v6943
  %v6998 = vpack.c.b16 %v6948, %v6946
  %v6999 = vpack.c.b16 %v6949, %v6947
  %v7000 = vpack.c.b16 %v6952, %v6950
  %v7001 = vpack.c.b16 %v6953, %v6951
  %v7002 = vpack.c.b16 %v6956, %v6954
  %v7003 = vpack.c.b16 %v6957, %v6955
  %v7004 = vpack.c.b16 %v6960, %v6958
  %v7005 = vpack.c.b16 %v6961, %v6959
  %v7006 = vpack.c.b16 %v6964, %v6962
  %v7007 = vpack.c.b16 %v6965, %v6963
  %v7008 = vpack.c.b16 %v6968, %v6966
  %v7009 = vpack.c.b16 %v6969, %v6967
  %v7010 = vpack.c.b16 %v6972, %v6970
  %v7011 = vpack.c.b16 %v6973, %v6971
  %v7012 = vpack.c.b16 %v6976, %v6974
  %v7013 = vpack.c.b16 %v6977, %v6975
  %v7014 = vpack.c.b16 %v6980, %v6978
  %v7015 = vpack.c.b16 %v6981, %v6979
  %v7016 = vpack.c.b16 %v6984, %v6982
  %v7017 = vpack.c.b16 %v6985, %v6983
  %7050 = vmatprep.subr.bf16.mxu0 %v6987
  %7051 = vmatpush1.bf16.msra.mxu0 %v6986
  %7052 = vmatprep.subr.bf16.mxu0 %v6989
  %7053 = vmatpush1.bf16.msra.mxu0 %v6988
  %7054 = vmatprep.subr.bf16.mxu0 %v6991
  %7055 = vmatpush1.bf16.msra.mxu0 %v6990
  %7056 = vmatprep.subr.bf16.mxu0 %v6993
  %7057 = vmatpush1.bf16.msra.mxu0 %v6992
  %7058 = vmatprep.subr.bf16.mxu0 %v6995
  %7059 = vmatpush1.bf16.msra.mxu0 %v6994
  %7060 = vmatprep.subr.bf16.mxu0 %v6997
  %7061 = vmatpush1.bf16.msra.mxu0 %v6996
  %7062 = vmatprep.subr.bf16.mxu0 %v6999
  %7063 = vmatpush1.bf16.msra.mxu0 %v6998
  %7064 = vmatprep.subr.bf16.mxu0 %v7001
  %7065 = vmatpush1.bf16.msra.mxu0 %v7000
  %7066 = vmatprep.subr.bf16.mxu0 %v7003
  %7067 = vmatpush1.bf16.msra.mxu0 %v7002
  %7068 = vmatprep.subr.bf16.mxu0 %v7005
  %7069 = vmatpush1.bf16.msra.mxu0 %v7004
  %7070 = vmatprep.subr.bf16.mxu0 %v7007
  %7071 = vmatpush1.bf16.msra.mxu0 %v7006
  %7072 = vmatprep.subr.bf16.mxu0 %v7009
  %7073 = vmatpush1.bf16.msra.mxu0 %v7008
  %7074 = vmatprep.subr.bf16.mxu0 %v7011
  %7075 = vmatpush1.bf16.msra.mxu0 %v7010
  %7076 = vmatprep.subr.bf16.mxu0 %v7013
  %7077 = vmatpush1.bf16.msra.mxu0 %v7012
  %7078 = vmatprep.subr.bf16.mxu0 %v7015
  %7079 = vmatpush1.bf16.msra.mxu0 %v7014
  %7080 = vmatprep.subr.bf16.mxu0 %v7017
  %7081 = vmatpush1.bf16.msra.mxu0 %v7016
  %7082 = vmatprep.mubr.bf16.mxu0 %v6609
  %7083 = vmatmul.mubr.bf16.gmra.mrb[0].mxu0 %v6608
  %v7084 = vpop.f32.mrb[0].mxu0
  %v7085 = vadd.f32 0.0, %v7084
  %v7086 = vpop.f32.mrb[0].mxu0
  %v7087 = vadd.f32 0.0, %v7086
  %v7088 = vpop.f32.mrb[0].mxu0
  %v7089 = vadd.f32 0.0, %v7088
  %v7090 = vpop.f32.mrb[0].mxu0
  %v7091 = vadd.f32 0.0, %v7090
  %7092 = vmatprep.mubr.bf16.mxu0 %v6611
  %7093 = vmatmul.mubr.bf16.gmra.mrb[0].mxu0 %v6610
  %v7094 = vpop.f32.mrb[0].mxu0
  %v7095 = vadd.f32 0.0, %v7094
  %v7096 = vpop.f32.mrb[0].mxu0
  %v7097 = vadd.f32 0.0, %v7096
  %v7098 = vpop.f32.mrb[0].mxu0
  %v7099 = vadd.f32 0.0, %v7098
  %v7100 = vpop.f32.mrb[0].mxu0
  %v7101 = vadd.f32 0.0, %v7100
  %7102 = vdwg.mxu0
  %s7103 = scalar_lea.vmem %s5, 512
  %v7104 = vld [vmem:[%s7103] sm:$0xff]
  %v7105 = vld [vmem:[%s7103 + $0x8] sm:$0xff]
  %v7106 = vld [vmem:[%s7103 + $0x10] sm:$0xff]
  %v7107 = vld [vmem:[%s7103 + $0x18] sm:$0xff]
  %v7108 = vld [vmem:[%s7103 + $0x20] sm:$0xff]
  %v7109 = vld [vmem:[%s7103 + $0x28] sm:$0xff]
  %v7110 = vld [vmem:[%s7103 + $0x30] sm:$0xff]
  %v7111 = vld [vmem:[%s7103 + $0x38] sm:$0xff]
  %v7112 = vld [vmem:[%s7103 + $0x40] sm:$0xff]
  %v7113 = vld [vmem:[%s7103 + $0x48] sm:$0xff]
  %v7114 = vld [vmem:[%s7103 + $0x50] sm:$0xff]
  %v7115 = vld [vmem:[%s7103 + $0x58] sm:$0xff]
  %v7116 = vld [vmem:[%s7103 + $0x60] sm:$0xff]
  %v7117 = vld [vmem:[%s7103 + $0x68] sm:$0xff]
  %v7118 = vld [vmem:[%s7103 + $0x70] sm:$0xff]
  %v7119 = vld [vmem:[%s7103 + $0x78] sm:$0xff]
  %v7120 = vld [vmem:[%s7103 + $0x80] sm:$0xff]
  %v7121 = vld [vmem:[%s7103 + $0x88] sm:$0xff]
  %v7122 = vld [vmem:[%s7103 + $0x90] sm:$0xff]
  %v7123 = vld [vmem:[%s7103 + $0x98] sm:$0xff]
  %v7124 = vld [vmem:[%s7103 + $0xa0] sm:$0xff]
  %v7125 = vld [vmem:[%s7103 + $0xa8] sm:$0xff]
  %v7126 = vld [vmem:[%s7103 + $0xb0] sm:$0xff]
  %v7127 = vld [vmem:[%s7103 + $0xb8] sm:$0xff]
  %v7128 = vld [vmem:[%s7103 + $0xc0] sm:$0xff]
  %v7129 = vld [vmem:[%s7103 + $0xc8] sm:$0xff]
  %v7130 = vld [vmem:[%s7103 + $0xd0] sm:$0xff]
  %v7131 = vld [vmem:[%s7103 + $0xd8] sm:$0xff]
  %v7132 = vld [vmem:[%s7103 + $0xe0] sm:$0xff]
  %v7133 = vld [vmem:[%s7103 + $0xe8] sm:$0xff]
  %v7134 = vld [vmem:[%s7103 + $0xf0] sm:$0xff]
  %v7135 = vld [vmem:[%s7103 + $0xf8] sm:$0xff]
  %v7168 = vunpack.c.l.b16 %v7104
  %v7169 = vunpack.c.h.b16 %v7104
  %v7170 = vunpack.c.l.b16 %v7105
  %v7171 = vunpack.c.h.b16 %v7105
  %v7172 = vunpack.c.l.b16 %v7106
  %v7173 = vunpack.c.h.b16 %v7106
  %v7174 = vunpack.c.l.b16 %v7107
  %v7175 = vunpack.c.h.b16 %v7107
  %v7176 = vunpack.c.l.b16 %v7108
  %v7177 = vunpack.c.h.b16 %v7108
  %v7178 = vunpack.c.l.b16 %v7109
  %v7179 = vunpack.c.h.b16 %v7109
  %v7180 = vunpack.c.l.b16 %v7110
  %v7181 = vunpack.c.h.b16 %v7110
  %v7182 = vunpack.c.l.b16 %v7111
  %v7183 = vunpack.c.h.b16 %v7111
  %v7184 = vunpack.c.l.b16 %v7112
  %v7185 = vunpack.c.h.b16 %v7112
  %v7186 = vunpack.c.l.b16 %v7113
  %v7187 = vunpack.c.h.b16 %v7113
  %v7188 = vunpack.c.l.b16 %v7114
  %v7189 = vunpack.c.h.b16 %v7114
  %v7190 = vunpack.c.l.b16 %v7115
  %v7191 = vunpack.c.h.b16 %v7115
  %v7192 = vunpack.c.l.b16 %v7116
  %v7193 = vunpack.c.h.b16 %v7116
  %v7194 = vunpack.c.l.b16 %v7117
  %v7195 = vunpack.c.h.b16 %v7117
  %v7196 = vunpack.c.l.b16 %v7118
  %v7197 = vunpack.c.h.b16 %v7118
  %v7198 = vunpack.c.l.b16 %v7119
  %v7199 = vunpack.c.h.b16 %v7119
  %v7200 = vunpack.c.l.b16 %v7120
  %v7201 = vunpack.c.h.b16 %v7120
  %v7202 = vunpack.c.l.b16 %v7121
  %v7203 = vunpack.c.h.b16 %v7121
  %v7204 = vunpack.c.l.b16 %v7122
  %v7205 = vunpack.c.h.b16 %v7122
  %v7206 = vunpack.c.l.b16 %v7123
  %v7207 = vunpack.c.h.b16 %v7123
  %v7208 = vunpack.c.l.b16 %v7124
  %v7209 = vunpack.c.h.b16 %v7124
  %v7210 = vunpack.c.l.b16 %v7125
  %v7211 = vunpack.c.h.b16 %v7125
  %v7212 = vunpack.c.l.b16 %v7126
  %v7213 = vunpack.c.h.b16 %v7126
  %v7214 = vunpack.c.l.b16 %v7127
  %v7215 = vunpack.c.h.b16 %v7127
  %v7216 = vunpack.c.l.b16 %v7128
  %v7217 = vunpack.c.h.b16 %v7128
  %v7218 = vunpack.c.l.b16 %v7129
  %v7219 = vunpack.c.h.b16 %v7129
  %v7220 = vunpack.c.l.b16 %v7130
  %v7221 = vunpack.c.h.b16 %v7130
  %v7222 = vunpack.c.l.b16 %v7131
  %v7223 = vunpack.c.h.b16 %v7131
  %v7224 = vunpack.c.l.b16 %v7132
  %v7225 = vunpack.c.h.b16 %v7132
  %v7226 = vunpack.c.l.b16 %v7133
  %v7227 = vunpack.c.h.b16 %v7133
  %v7228 = vunpack.c.l.b16 %v7134
  %v7229 = vunpack.c.h.b16 %v7134
  %v7230 = vunpack.c.l.b16 %v7135
  %v7231 = vunpack.c.h.b16 %v7135
  %v7232 = vpack.c.b16 %v7170, %v7168
  %v7233 = vpack.c.b16 %v7171, %v7169
  %v7234 = vpack.c.b16 %v7174, %v7172
  %v7235 = vpack.c.b16 %v7175, %v7173
  %v7236 = vpack.c.b16 %v7178, %v7176
  %v7237 = vpack.c.b16 %v7179, %v7177
  %v7238 = vpack.c.b16 %v7182, %v7180
  %v7239 = vpack.c.b16 %v7183, %v7181
  %v7240 = vpack.c.b16 %v7186, %v7184
  %v7241 = vpack.c.b16 %v7187, %v7185
  %v7242 = vpack.c.b16 %v7190, %v7188
  %v7243 = vpack.c.b16 %v7191, %v7189
  %v7244 = vpack.c.b16 %v7194, %v7192
  %v7245 = vpack.c.b16 %v7195, %v7193
  %v7246 = vpack.c.b16 %v7198, %v7196
  %v7247 = vpack.c.b16 %v7199, %v7197
  %v7248 = vpack.c.b16 %v7202, %v7200
  %v7249 = vpack.c.b16 %v7203, %v7201
  %v7250 = vpack.c.b16 %v7206, %v7204
  %v7251 = vpack.c.b16 %v7207, %v7205
  %v7252 = vpack.c.b16 %v7210, %v7208
  %v7253 = vpack.c.b16 %v7211, %v7209
  %v7254 = vpack.c.b16 %v7214, %v7212
  %v7255 = vpack.c.b16 %v7215, %v7213
  %v7256 = vpack.c.b16 %v7218, %v7216
  %v7257 = vpack.c.b16 %v7219, %v7217
  %v7258 = vpack.c.b16 %v7222, %v7220
  %v7259 = vpack.c.b16 %v7223, %v7221
  %v7260 = vpack.c.b16 %v7226, %v7224
  %v7261 = vpack.c.b16 %v7227, %v7225
  %v7262 = vpack.c.b16 %v7230, %v7228
  %v7263 = vpack.c.b16 %v7231, %v7229
  %7296 = vmatprep.subr.bf16.mxu0 %v7233
  %7297 = vmatpush1.bf16.msra.mxu0 %v7232
  %7298 = vmatprep.subr.bf16.mxu0 %v7235
  %7299 = vmatpush1.bf16.msra.mxu0 %v7234
  %7300 = vmatprep.subr.bf16.mxu0 %v7237
  %7301 = vmatpush1.bf16.msra.mxu0 %v7236
  %7302 = vmatprep.subr.bf16.mxu0 %v7239
  %7303 = vmatpush1.bf16.msra.mxu0 %v7238
  %7304 = vmatprep.subr.bf16.mxu0 %v7241
  %7305 = vmatpush1.bf16.msra.mxu0 %v7240
  %7306 = vmatprep.subr.bf16.mxu0 %v7243
  %7307 = vmatpush1.bf16.msra.mxu0 %v7242
  %7308 = vmatprep.subr.bf16.mxu0 %v7245
  %7309 = vmatpush1.bf16.msra.mxu0 %v7244
  %7310 = vmatprep.subr.bf16.mxu0 %v7247
  %7311 = vmatpush1.bf16.msra.mxu0 %v7246
  %7312 = vmatprep.subr.bf16.mxu0 %v7249
  %7313 = vmatpush1.bf16.msra.mxu0 %v7248
  %7314 = vmatprep.subr.bf16.mxu0 %v7251
  %7315 = vmatpush1.bf16.msra.mxu0 %v7250
  %7316 = vmatprep.subr.bf16.mxu0 %v7253
  %7317 = vmatpush1.bf16.msra.mxu0 %v7252
  %7318 = vmatprep.subr.bf16.mxu0 %v7255
  %7319 = vmatpush1.bf16.msra.mxu0 %v7254
  %7320 = vmatprep.subr.bf16.mxu0 %v7257
  %7321 = vmatpush1.bf16.msra.mxu0 %v7256
  %7322 = vmatprep.subr.bf16.mxu0 %v7259
  %7323 = vmatpush1.bf16.msra.mxu0 %v7258
  %7324 = vmatprep.subr.bf16.mxu0 %v7261
  %7325 = vmatpush1.bf16.msra.mxu0 %v7260
  %7326 = vmatprep.subr.bf16.mxu0 %v7263
  %7327 = vmatpush1.bf16.msra.mxu0 %v7262
  %7328 = vmatprep.mubr.bf16.mxu0 %v6609
  %7329 = vmatmul.mubr.bf16.gmra.mrb[0].mxu0 %v6608
  %v7330 = vpop.f32.mrb[0].mxu0
  %v7331 = vadd.f32 0.0, %v7330
  %v7332 = vpop.f32.mrb[0].mxu0
  %v7333 = vadd.f32 0.0, %v7332
  %v7334 = vpop.f32.mrb[0].mxu0
  %v7335 = vadd.f32 0.0, %v7334
  %v7336 = vpop.f32.mrb[0].mxu0
  %v7337 = vadd.f32 0.0, %v7336
  %7338 = vmatprep.mubr.bf16.mxu0 %v6611
  %7339 = vmatmul.mubr.bf16.gmra.mrb[0].mxu0 %v6610
  %v7340 = vpop.f32.mrb[0].mxu0
  %v7341 = vadd.f32 0.0, %v7340
  %v7342 = vpop.f32.mrb[0].mxu0
  %v7343 = vadd.f32 0.0, %v7342
  %v7344 = vpop.f32.mrb[0].mxu0
  %v7345 = vadd.f32 0.0, %v7344
  %v7346 = vpop.f32.mrb[0].mxu0
  %v7347 = vadd.f32 0.0, %v7346
  %7348 = vdwg.mxu0
  %s7349 = scalar_lea.vmem %s5, 768
  %v7350 = vld [vmem:[%s7349] sm:$0xff]
  %v7351 = vld [vmem:[%s7349 + $0x8] sm:$0xff]
  %v7352 = vld [vmem:[%s7349 + $0x10] sm:$0xff]
  %v7353 = vld [vmem:[%s7349 + $0x18] sm:$0xff]
  %v7354 = vld [vmem:[%s7349 + $0x20] sm:$0xff]
  %v7355 = vld [vmem:[%s7349 + $0x28] sm:$0xff]
  %v7356 = vld [vmem:[%s7349 + $0x30] sm:$0xff]
  %v7357 = vld [vmem:[%s7349 + $0x38] sm:$0xff]
  %v7358 = vld [vmem:[%s7349 + $0x40] sm:$0xff]
  %v7359 = vld [vmem:[%s7349 + $0x48] sm:$0xff]
  %v7360 = vld [vmem:[%s7349 + $0x50] sm:$0xff]
  %v7361 = vld [vmem:[%s7349 + $0x58] sm:$0xff]
  %v7362 = vld [vmem:[%s7349 + $0x60] sm:$0xff]
  %v7363 = vld [vmem:[%s7349 + $0x68] sm:$0xff]
  %v7364 = vld [vmem:[%s7349 + $0x70] sm:$0xff]
  %v7365 = vld [vmem:[%s7349 + $0x78] sm:$0xff]
  %v7366 = vld [vmem:[%s7349 + $0x80] sm:$0xff]
  %v7367 = vld [vmem:[%s7349 + $0x88] sm:$0xff]
  %v7368 = vld [vmem:[%s7349 + $0x90] sm:$0xff]
  %v7369 = vld [vmem:[%s7349 + $0x98] sm:$0xff]
  %v7370 = vld [vmem:[%s7349 + $0xa0] sm:$0xff]
  %v7371 = vld [vmem:[%s7349 + $0xa8] sm:$0xff]
  %v7372 = vld [vmem:[%s7349 + $0xb0] sm:$0xff]
  %v7373 = vld [vmem:[%s7349 + $0xb8] sm:$0xff]
  %v7374 = vld [vmem:[%s7349 + $0xc0] sm:$0xff]
  %v7375 = vld [vmem:[%s7349 + $0xc8] sm:$0xff]
  %v7376 = vld [vmem:[%s7349 + $0xd0] sm:$0xff]
  %v7377 = vld [vmem:[%s7349 + $0xd8] sm:$0xff]
  %v7378 = vld [vmem:[%s7349 + $0xe0] sm:$0xff]
  %v7379 = vld [vmem:[%s7349 + $0xe8] sm:$0xff]
  %v7380 = vld [vmem:[%s7349 + $0xf0] sm:$0xff]
  %v7381 = vld [vmem:[%s7349 + $0xf8] sm:$0xff]
  %v7414 = vunpack.c.l.b16 %v7350
  %v7415 = vunpack.c.h.b16 %v7350
  %v7416 = vunpack.c.l.b16 %v7351
  %v7417 = vunpack.c.h.b16 %v7351
  %v7418 = vunpack.c.l.b16 %v7352
  %v7419 = vunpack.c.h.b16 %v7352
  %v7420 = vunpack.c.l.b16 %v7353
  %v7421 = vunpack.c.h.b16 %v7353
  %v7422 = vunpack.c.l.b16 %v7354
  %v7423 = vunpack.c.h.b16 %v7354
  %v7424 = vunpack.c.l.b16 %v7355
  %v7425 = vunpack.c.h.b16 %v7355
  %v7426 = vunpack.c.l.b16 %v7356
  %v7427 = vunpack.c.h.b16 %v7356
  %v7428 = vunpack.c.l.b16 %v7357
  %v7429 = vunpack.c.h.b16 %v7357
  %v7430 = vunpack.c.l.b16 %v7358
  %v7431 = vunpack.c.h.b16 %v7358
  %v7432 = vunpack.c.l.b16 %v7359
  %v7433 = vunpack.c.h.b16 %v7359
  %v7434 = vunpack.c.l.b16 %v7360
  %v7435 = vunpack.c.h.b16 %v7360
  %v7436 = vunpack.c.l.b16 %v7361
  %v7437 = vunpack.c.h.b16 %v7361
  %v7438 = vunpack.c.l.b16 %v7362
  %v7439 = vunpack.c.h.b16 %v7362
  %v7440 = vunpack.c.l.b16 %v7363
  %v7441 = vunpack.c.h.b16 %v7363
  %v7442 = vunpack.c.l.b16 %v7364
  %v7443 = vunpack.c.h.b16 %v7364
  %v7444 = vunpack.c.l.b16 %v7365
  %v7445 = vunpack.c.h.b16 %v7365
  %v7446 = vunpack.c.l.b16 %v7366
  %v7447 = vunpack.c.h.b16 %v7366
  %v7448 = vunpack.c.l.b16 %v7367
  %v7449 = vunpack.c.h.b16 %v7367
  %v7450 = vunpack.c.l.b16 %v7368
  %v7451 = vunpack.c.h.b16 %v7368
  %v7452 = vunpack.c.l.b16 %v7369
  %v7453 = vunpack.c.h.b16 %v7369
  %v7454 = vunpack.c.l.b16 %v7370
  %v7455 = vunpack.c.h.b16 %v7370
  %v7456 = vunpack.c.l.b16 %v7371
  %v7457 = vunpack.c.h.b16 %v7371
  %v7458 = vunpack.c.l.b16 %v7372
  %v7459 = vunpack.c.h.b16 %v7372
  %v7460 = vunpack.c.l.b16 %v7373
  %v7461 = vunpack.c.h.b16 %v7373
  %v7462 = vunpack.c.l.b16 %v7374
  %v7463 = vunpack.c.h.b16 %v7374
  %v7464 = vunpack.c.l.b16 %v7375
  %v7465 = vunpack.c.h.b16 %v7375
  %v7466 = vunpack.c.l.b16 %v7376
  %v7467 = vunpack.c.h.b16 %v7376
  %v7468 = vunpack.c.l.b16 %v7377
  %v7469 = vunpack.c.h.b16 %v7377
  %v7470 = vunpack.c.l.b16 %v7378
  %v7471 = vunpack.c.h.b16 %v7378
  %v7472 = vunpack.c.l.b16 %v7379
  %v7473 = vunpack.c.h.b16 %v7379
  %v7474 = vunpack.c.l.b16 %v7380
  %v7475 = vunpack.c.h.b16 %v7380
  %v7476 = vunpack.c.l.b16 %v7381
  %v7477 = vunpack.c.h.b16 %v7381
  %v7478 = vpack.c.b16 %v7416, %v7414
  %v7479 = vpack.c.b16 %v7417, %v7415
  %v7480 = vpack.c.b16 %v7420, %v7418
  %v7481 = vpack.c.b16 %v7421, %v7419
  %v7482 = vpack.c.b16 %v7424, %v7422
  %v7483 = vpack.c.b16 %v7425, %v7423
  %v7484 = vpack.c.b16 %v7428, %v7426
  %v7485 = vpack.c.b16 %v7429, %v7427
  %v7486 = vpack.c.b16 %v7432, %v7430
  %v7487 = vpack.c.b16 %v7433, %v7431
  %v7488 = vpack.c.b16 %v7436, %v7434
  %v7489 = vpack.c.b16 %v7437, %v7435
  %v7490 = vpack.c.b16 %v7440, %v7438
  %v7491 = vpack.c.b16 %v7441, %v7439
  %v7492 = vpack.c.b16 %v7444, %v7442
  %v7493 = vpack.c.b16 %v7445, %v7443
  %v7494 = vpack.c.b16 %v7448, %v7446
  %v7495 = vpack.c.b16 %v7449, %v7447
  %v7496 = vpack.c.b16 %v7452, %v7450
  %v7497 = vpack.c.b16 %v7453, %v7451
  %v7498 = vpack.c.b16 %v7456, %v7454
  %v7499 = vpack.c.b16 %v7457, %v7455
  %v7500 = vpack.c.b16 %v7460, %v7458
  %v7501 = vpack.c.b16 %v7461, %v7459
  %v7502 = vpack.c.b16 %v7464, %v7462
  %v7503 = vpack.c.b16 %v7465, %v7463
  %v7504 = vpack.c.b16 %v7468, %v7466
  %v7505 = vpack.c.b16 %v7469, %v7467
  %v7506 = vpack.c.b16 %v7472, %v7470
  %v7507 = vpack.c.b16 %v7473, %v7471
  %v7508 = vpack.c.b16 %v7476, %v7474
  %v7509 = vpack.c.b16 %v7477, %v7475
  %7542 = vmatprep.subr.bf16.mxu0 %v7479
  %7543 = vmatpush1.bf16.msra.mxu0 %v7478
  %7544 = vmatprep.subr.bf16.mxu0 %v7481
  %7545 = vmatpush1.bf16.msra.mxu0 %v7480
  %7546 = vmatprep.subr.bf16.mxu0 %v7483
  %7547 = vmatpush1.bf16.msra.mxu0 %v7482
  %7548 = vmatprep.subr.bf16.mxu0 %v7485
  %7549 = vmatpush1.bf16.msra.mxu0 %v7484
  %7550 = vmatprep.subr.bf16.mxu0 %v7487
  %7551 = vmatpush1.bf16.msra.mxu0 %v7486
  %7552 = vmatprep.subr.bf16.mxu0 %v7489
  %7553 = vmatpush1.bf16.msra.mxu0 %v7488
  %7554 = vmatprep.subr.bf16.mxu0 %v7491
  %7555 = vmatpush1.bf16.msra.mxu0 %v7490
  %7556 = vmatprep.subr.bf16.mxu0 %v7493
  %7557 = vmatpush1.bf16.msra.mxu0 %v7492
  %7558 = vmatprep.subr.bf16.mxu0 %v7495
  %7559 = vmatpush1.bf16.msra.mxu0 %v7494
  %7560 = vmatprep.subr.bf16.mxu0 %v7497
  %7561 = vmatpush1.bf16.msra.mxu0 %v7496
  %7562 = vmatprep.subr.bf16.mxu0 %v7499
  %7563 = vmatpush1.bf16.msra.mxu0 %v7498
  %7564 = vmatprep.subr.bf16.mxu0 %v7501
  %7565 = vmatpush1.bf16.msra.mxu0 %v7500
  %7566 = vmatprep.subr.bf16.mxu0 %v7503
  %7567 = vmatpush1.bf16.msra.mxu0 %v7502
  %7568 = vmatprep.subr.bf16.mxu0 %v7505
  %7569 = vmatpush1.bf16.msra.mxu0 %v7504
  %7570 = vmatprep.subr.bf16.mxu0 %v7507
  %7571 = vmatpush1.bf16.msra.mxu0 %v7506
  %7572 = vmatprep.subr.bf16.mxu0 %v7509
  %7573 = vmatpush1.bf16.msra.mxu0 %v7508
  %7574 = vmatprep.mubr.bf16.mxu0 %v6609
  %7575 = vmatmul.mubr.bf16.gmra.mrb[0].mxu0 %v6608
  %v7576 = vpop.f32.mrb[0].mxu0
  %v7577 = vadd.f32 0.0, %v7576
  %v7578 = vpop.f32.mrb[0].mxu0
  %v7579 = vadd.f32 0.0, %v7578
  %v7580 = vpop.f32.mrb[0].mxu0
  %v7581 = vadd.f32 0.0, %v7580
  %v7582 = vpop.f32.mrb[0].mxu0
  %v7583 = vadd.f32 0.0, %v7582
  %7584 = vmatprep.mubr.bf16.mxu0 %v6611
  %7585 = vmatmul.mubr.bf16.gmra.mrb[0].mxu0 %v6610
  %v7586 = vpop.f32.mrb[0].mxu0
  %v7587 = vadd.f32 0.0, %v7586
  %v7588 = vpop.f32.mrb[0].mxu0
  %v7589 = vadd.f32 0.0, %v7588
  %v7590 = vpop.f32.mrb[0].mxu0
  %v7591 = vadd.f32 0.0, %v7590
  %v7592 = vpop.f32.mrb[0].mxu0
  %v7593 = vadd.f32 0.0, %v7592
  %7594 = vdwg.mxu0
  %s7595 = scalar_lea.vmem %s5, 1024
  %v7596 = vld [vmem:[%s7595] sm:$0xff]
  %v7597 = vld [vmem:[%s7595 + $0x8] sm:$0xff]
  %v7598 = vld [vmem:[%s7595 + $0x10] sm:$0xff]
  %v7599 = vld [vmem:[%s7595 + $0x18] sm:$0xff]
  %v7600 = vld [vmem:[%s7595 + $0x20] sm:$0xff]
  %v7601 = vld [vmem:[%s7595 + $0x28] sm:$0xff]
  %v7602 = vld [vmem:[%s7595 + $0x30] sm:$0xff]
  %v7603 = vld [vmem:[%s7595 + $0x38] sm:$0xff]
  %v7604 = vld [vmem:[%s7595 + $0x40] sm:$0xff]
  %v7605 = vld [vmem:[%s7595 + $0x48] sm:$0xff]
  %v7606 = vld [vmem:[%s7595 + $0x50] sm:$0xff]
  %v7607 = vld [vmem:[%s7595 + $0x58] sm:$0xff]
  %v7608 = vld [vmem:[%s7595 + $0x60] sm:$0xff]
  %v7609 = vld [vmem:[%s7595 + $0x68] sm:$0xff]
  %v7610 = vld [vmem:[%s7595 + $0x70] sm:$0xff]
  %v7611 = vld [vmem:[%s7595 + $0x78] sm:$0xff]
  %v7612 = vld [vmem:[%s7595 + $0x80] sm:$0xff]
  %v7613 = vld [vmem:[%s7595 + $0x88] sm:$0xff]
  %v7614 = vld [vmem:[%s7595 + $0x90] sm:$0xff]
  %v7615 = vld [vmem:[%s7595 + $0x98] sm:$0xff]
  %v7616 = vld [vmem:[%s7595 + $0xa0] sm:$0xff]
  %v7617 = vld [vmem:[%s7595 + $0xa8] sm:$0xff]
  %v7618 = vld [vmem:[%s7595 + $0xb0] sm:$0xff]
  %v7619 = vld [vmem:[%s7595 + $0xb8] sm:$0xff]
  %v7620 = vld [vmem:[%s7595 + $0xc0] sm:$0xff]
  %v7621 = vld [vmem:[%s7595 + $0xc8] sm:$0xff]
  %v7622 = vld [vmem:[%s7595 + $0xd0] sm:$0xff]
  %v7623 = vld [vmem:[%s7595 + $0xd8] sm:$0xff]
  %v7624 = vld [vmem:[%s7595 + $0xe0] sm:$0xff]
  %v7625 = vld [vmem:[%s7595 + $0xe8] sm:$0xff]
  %v7626 = vld [vmem:[%s7595 + $0xf0] sm:$0xff]
  %v7627 = vld [vmem:[%s7595 + $0xf8] sm:$0xff]
  %v7660 = vunpack.c.l.b16 %v7596
  %v7661 = vunpack.c.h.b16 %v7596
  %v7662 = vunpack.c.l.b16 %v7597
  %v7663 = vunpack.c.h.b16 %v7597
  %v7664 = vunpack.c.l.b16 %v7598
  %v7665 = vunpack.c.h.b16 %v7598
  %v7666 = vunpack.c.l.b16 %v7599
  %v7667 = vunpack.c.h.b16 %v7599
  %v7668 = vunpack.c.l.b16 %v7600
  %v7669 = vunpack.c.h.b16 %v7600
  %v7670 = vunpack.c.l.b16 %v7601
  %v7671 = vunpack.c.h.b16 %v7601
  %v7672 = vunpack.c.l.b16 %v7602
  %v7673 = vunpack.c.h.b16 %v7602
  %v7674 = vunpack.c.l.b16 %v7603
  %v7675 = vunpack.c.h.b16 %v7603
  %v7676 = vunpack.c.l.b16 %v7604
  %v7677 = vunpack.c.h.b16 %v7604
  %v7678 = vunpack.c.l.b16 %v7605
  %v7679 = vunpack.c.h.b16 %v7605
  %v7680 = vunpack.c.l.b16 %v7606
  %v7681 = vunpack.c.h.b16 %v7606
  %v7682 = vunpack.c.l.b16 %v7607
  %v7683 = vunpack.c.h.b16 %v7607
  %v7684 = vunpack.c.l.b16 %v7608
  %v7685 = vunpack.c.h.b16 %v7608
  %v7686 = vunpack.c.l.b16 %v7609
  %v7687 = vunpack.c.h.b16 %v7609
  %v7688 = vunpack.c.l.b16 %v7610
  %v7689 = vunpack.c.h.b16 %v7610
  %v7690 = vunpack.c.l.b16 %v7611
  %v7691 = vunpack.c.h.b16 %v7611
  %v7692 = vunpack.c.l.b16 %v7612
  %v7693 = vunpack.c.h.b16 %v7612
  %v7694 = vunpack.c.l.b16 %v7613
  %v7695 = vunpack.c.h.b16 %v7613
  %v7696 = vunpack.c.l.b16 %v7614
  %v7697 = vunpack.c.h.b16 %v7614
  %v7698 = vunpack.c.l.b16 %v7615
  %v7699 = vunpack.c.h.b16 %v7615
  %v7700 = vunpack.c.l.b16 %v7616
  %v7701 = vunpack.c.h.b16 %v7616
  %v7702 = vunpack.c.l.b16 %v7617
  %v7703 = vunpack.c.h.b16 %v7617
  %v7704 = vunpack.c.l.b16 %v7618
  %v7705 = vunpack.c.h.b16 %v7618
  %v7706 = vunpack.c.l.b16 %v7619
  %v7707 = vunpack.c.h.b16 %v7619
  %v7708 = vunpack.c.l.b16 %v7620
  %v7709 = vunpack.c.h.b16 %v7620
  %v7710 = vunpack.c.l.b16 %v7621
  %v7711 = vunpack.c.h.b16 %v7621
  %v7712 = vunpack.c.l.b16 %v7622
  %v7713 = vunpack.c.h.b16 %v7622
  %v7714 = vunpack.c.l.b16 %v7623
  %v7715 = vunpack.c.h.b16 %v7623
  %v7716 = vunpack.c.l.b16 %v7624
  %v7717 = vunpack.c.h.b16 %v7624
  %v7718 = vunpack.c.l.b16 %v7625
  %v7719 = vunpack.c.h.b16 %v7625
  %v7720 = vunpack.c.l.b16 %v7626
  %v7721 = vunpack.c.h.b16 %v7626
  %v7722 = vunpack.c.l.b16 %v7627
  %v7723 = vunpack.c.h.b16 %v7627
  %v7724 = vpack.c.b16 %v7662, %v7660
  %v7725 = vpack.c.b16 %v7663, %v7661
  %v7726 = vpack.c.b16 %v7666, %v7664
  %v7727 = vpack.c.b16 %v7667, %v7665
  %v7728 = vpack.c.b16 %v7670, %v7668
  %v7729 = vpack.c.b16 %v7671, %v7669
  %v7730 = vpack.c.b16 %v7674, %v7672
  %v7731 = vpack.c.b16 %v7675, %v7673
  %v7732 = vpack.c.b16 %v7678, %v7676
  %v7733 = vpack.c.b16 %v7679, %v7677
  %v7734 = vpack.c.b16 %v7682, %v7680
  %v7735 = vpack.c.b16 %v7683, %v7681
  %v7736 = vpack.c.b16 %v7686, %v7684
  %v7737 = vpack.c.b16 %v7687, %v7685
  %v7738 = vpack.c.b16 %v7690, %v7688
  %v7739 = vpack.c.b16 %v7691, %v7689
  %v7740 = vpack.c.b16 %v7694, %v7692
  %v7741 = vpack.c.b16 %v7695, %v7693
  %v7742 = vpack.c.b16 %v7698, %v7696
  %v7743 = vpack.c.b16 %v7699, %v7697
  %v7744 = vpack.c.b16 %v7702, %v7700
  %v7745 = vpack.c.b16 %v7703, %v7701
  %v7746 = vpack.c.b16 %v7706, %v7704
  %v7747 = vpack.c.b16 %v7707, %v7705
  %v7748 = vpack.c.b16 %v7710, %v7708
  %v7749 = vpack.c.b16 %v7711, %v7709
  %v7750 = vpack.c.b16 %v7714, %v7712
  %v7751 = vpack.c.b16 %v7715, %v7713
  %v7752 = vpack.c.b16 %v7718, %v7716
  %v7753 = vpack.c.b16 %v7719, %v7717
  %v7754 = vpack.c.b16 %v7722, %v7720
  %v7755 = vpack.c.b16 %v7723, %v7721
  %7788 = vmatprep.subr.bf16.mxu0 %v7725
  %7789 = vmatpush1.bf16.msra.mxu0 %v7724
  %7790 = vmatprep.subr.bf16.mxu0 %v7727
  %7791 = vmatpush1.bf16.msra.mxu0 %v7726
  %7792 = vmatprep.subr.bf16.mxu0 %v7729
  %7793 = vmatpush1.bf16.msra.mxu0 %v7728
  %7794 = vmatprep.subr.bf16.mxu0 %v7731
  %7795 = vmatpush1.bf16.msra.mxu0 %v7730
  %7796 = vmatprep.subr.bf16.mxu0 %v7733
  %7797 = vmatpush1.bf16.msra.mxu0 %v7732
  %7798 = vmatprep.subr.bf16.mxu0 %v7735
  %7799 = vmatpush1.bf16.msra.mxu0 %v7734
  %7800 = vmatprep.subr.bf16.mxu0 %v7737
  %7801 = vmatpush1.bf16.msra.mxu0 %v7736
  %7802 = vmatprep.subr.bf16.mxu0 %v7739
  %7803 = vmatpush1.bf16.msra.mxu0 %v7738
  %7804 = vmatprep.subr.bf16.mxu0 %v7741
  %7805 = vmatpush1.bf16.msra.mxu0 %v7740
  %7806 = vmatprep.subr.bf16.mxu0 %v7743
  %7807 = vmatpush1.bf16.msra.mxu0 %v7742
  %7808 = vmatprep.subr.bf16.mxu0 %v7745
  %7809 = vmatpush1.bf16.msra.mxu0 %v7744
  %7810 = vmatprep.subr.bf16.mxu0 %v7747
  %7811 = vmatpush1.bf16.msra.mxu0 %v7746
  %7812 = vmatprep.subr.bf16.mxu0 %v7749
  %7813 = vmatpush1.bf16.msra.mxu0 %v7748
  %7814 = vmatprep.subr.bf16.mxu0 %v7751
  %7815 = vmatpush1.bf16.msra.mxu0 %v7750
  %7816 = vmatprep.subr.bf16.mxu0 %v7753
  %7817 = vmatpush1.bf16.msra.mxu0 %v7752
  %7818 = vmatprep.subr.bf16.mxu0 %v7755
  %7819 = vmatpush1.bf16.msra.mxu0 %v7754
  %7820 = vmatprep.mubr.bf16.mxu0 %v6609
  %7821 = vmatmul.mubr.bf16.gmra.mrb[0].mxu0 %v6608
  %v7822 = vpop.f32.mrb[0].mxu0
  %v7823 = vadd.f32 0.0, %v7822
  %v7824 = vpop.f32.mrb[0].mxu0
  %v7825 = vadd.f32 0.0, %v7824
  %v7826 = vpop.f32.mrb[0].mxu0
  %v7827 = vadd.f32 0.0, %v7826
  %v7828 = vpop.f32.mrb[0].mxu0
  %v7829 = vadd.f32 0.0, %v7828
  %7830 = vmatprep.mubr.bf16.mxu0 %v6611
  %7831 = vmatmul.mubr.bf16.gmra.mrb[0].mxu0 %v6610
  %v7832 = vpop.f32.mrb[0].mxu0
  %v7833 = vadd.f32 0.0, %v7832
  %v7834 = vpop.f32.mrb[0].mxu0
  %v7835 = vadd.f32 0.0, %v7834
  %v7836 = vpop.f32.mrb[0].mxu0
  %v7837 = vadd.f32 0.0, %v7836
  %v7838 = vpop.f32.mrb[0].mxu0
  %v7839 = vadd.f32 0.0, %v7838
  %7840 = vdwg.mxu0
  %s7841 = scalar_lea.vmem %s5, 1280
  %v7842 = vld [vmem:[%s7841] sm:$0xff]
  %v7843 = vld [vmem:[%s7841 + $0x8] sm:$0xff]
  %v7844 = vld [vmem:[%s7841 + $0x10] sm:$0xff]
  %v7845 = vld [vmem:[%s7841 + $0x18] sm:$0xff]
  %v7846 = vld [vmem:[%s7841 + $0x20] sm:$0xff]
  %v7847 = vld [vmem:[%s7841 + $0x28] sm:$0xff]
  %v7848 = vld [vmem:[%s7841 + $0x30] sm:$0xff]
  %v7849 = vld [vmem:[%s7841 + $0x38] sm:$0xff]
  %v7850 = vld [vmem:[%s7841 + $0x40] sm:$0xff]
  %v7851 = vld [vmem:[%s7841 + $0x48] sm:$0xff]
  %v7852 = vld [vmem:[%s7841 + $0x50] sm:$0xff]
  %v7853 = vld [vmem:[%s7841 + $0x58] sm:$0xff]
  %v7854 = vld [vmem:[%s7841 + $0x60] sm:$0xff]
  %v7855 = vld [vmem:[%s7841 + $0x68] sm:$0xff]
  %v7856 = vld [vmem:[%s7841 + $0x70] sm:$0xff]
  %v7857 = vld [vmem:[%s7841 + $0x78] sm:$0xff]
  %v7858 = vld [vmem:[%s7841 + $0x80] sm:$0xff]
  %v7859 = vld [vmem:[%s7841 + $0x88] sm:$0xff]
  %v7860 = vld [vmem:[%s7841 + $0x90] sm:$0xff]
  %v7861 = vld [vmem:[%s7841 + $0x98] sm:$0xff]
  %v7862 = vld [vmem:[%s7841 + $0xa0] sm:$0xff]
  %v7863 = vld [vmem:[%s7841 + $0xa8] sm:$0xff]
  %v7864 = vld [vmem:[%s7841 + $0xb0] sm:$0xff]
  %v7865 = vld [vmem:[%s7841 + $0xb8] sm:$0xff]
  %v7866 = vld [vmem:[%s7841 + $0xc0] sm:$0xff]
  %v7867 = vld [vmem:[%s7841 + $0xc8] sm:$0xff]
  %v7868 = vld [vmem:[%s7841 + $0xd0] sm:$0xff]
  %v7869 = vld [vmem:[%s7841 + $0xd8] sm:$0xff]
  %v7870 = vld [vmem:[%s7841 + $0xe0] sm:$0xff]
  %v7871 = vld [vmem:[%s7841 + $0xe8] sm:$0xff]
  %v7872 = vld [vmem:[%s7841 + $0xf0] sm:$0xff]
  %v7873 = vld [vmem:[%s7841 + $0xf8] sm:$0xff]
  %v7906 = vunpack.c.l.b16 %v7842
  %v7907 = vunpack.c.h.b16 %v7842
  %v7908 = vunpack.c.l.b16 %v7843
  %v7909 = vunpack.c.h.b16 %v7843
  %v7910 = vunpack.c.l.b16 %v7844
  %v7911 = vunpack.c.h.b16 %v7844
  %v7912 = vunpack.c.l.b16 %v7845
  %v7913 = vunpack.c.h.b16 %v7845
  %v7914 = vunpack.c.l.b16 %v7846
  %v7915 = vunpack.c.h.b16 %v7846
  %v7916 = vunpack.c.l.b16 %v7847
  %v7917 = vunpack.c.h.b16 %v7847
  %v7918 = vunpack.c.l.b16 %v7848
  %v7919 = vunpack.c.h.b16 %v7848
  %v7920 = vunpack.c.l.b16 %v7849
  %v7921 = vunpack.c.h.b16 %v7849
  %v7922 = vunpack.c.l.b16 %v7850
  %v7923 = vunpack.c.h.b16 %v7850
  %v7924 = vunpack.c.l.b16 %v7851
  %v7925 = vunpack.c.h.b16 %v7851
  %v7926 = vunpack.c.l.b16 %v7852
  %v7927 = vunpack.c.h.b16 %v7852
  %v7928 = vunpack.c.l.b16 %v7853
  %v7929 = vunpack.c.h.b16 %v7853
  %v7930 = vunpack.c.l.b16 %v7854
  %v7931 = vunpack.c.h.b16 %v7854
  %v7932 = vunpack.c.l.b16 %v7855
  %v7933 = vunpack.c.h.b16 %v7855
  %v7934 = vunpack.c.l.b16 %v7856
  %v7935 = vunpack.c.h.b16 %v7856
  %v7936 = vunpack.c.l.b16 %v7857
  %v7937 = vunpack.c.h.b16 %v7857
  %v7938 = vunpack.c.l.b16 %v7858
  %v7939 = vunpack.c.h.b16 %v7858
  %v7940 = vunpack.c.l.b16 %v7859
  %v7941 = vunpack.c.h.b16 %v7859
  %v7942 = vunpack.c.l.b16 %v7860
  %v7943 = vunpack.c.h.b16 %v7860
  %v7944 = vunpack.c.l.b16 %v7861
  %v7945 = vunpack.c.h.b16 %v7861
  %v7946 = vunpack.c.l.b16 %v7862
  %v7947 = vunpack.c.h.b16 %v7862
  %v7948 = vunpack.c.l.b16 %v7863
  %v7949 = vunpack.c.h.b16 %v7863
  %v7950 = vunpack.c.l.b16 %v7864
  %v7951 = vunpack.c.h.b16 %v7864
  %v7952 = vunpack.c.l.b16 %v7865
  %v7953 = vunpack.c.h.b16 %v7865
  %v7954 = vunpack.c.l.b16 %v7866
  %v7955 = vunpack.c.h.b16 %v7866
  %v7956 = vunpack.c.l.b16 %v7867
  %v7957 = vunpack.c.h.b16 %v7867
  %v7958 = vunpack.c.l.b16 %v7868
  %v7959 = vunpack.c.h.b16 %v7868
  %v7960 = vunpack.c.l.b16 %v7869
  %v7961 = vunpack.c.h.b16 %v7869
  %v7962 = vunpack.c.l.b16 %v7870
  %v7963 = vunpack.c.h.b16 %v7870
  %v7964 = vunpack.c.l.b16 %v7871
  %v7965 = vunpack.c.h.b16 %v7871
  %v7966 = vunpack.c.l.b16 %v7872
  %v7967 = vunpack.c.h.b16 %v7872
  %v7968 = vunpack.c.l.b16 %v7873
  %v7969 = vunpack.c.h.b16 %v7873
  %v7970 = vpack.c.b16 %v7908, %v7906
  %v7971 = vpack.c.b16 %v7909, %v7907
  %v7972 = vpack.c.b16 %v7912, %v7910
  %v7973 = vpack.c.b16 %v7913, %v7911
  %v7974 = vpack.c.b16 %v7916, %v7914
  %v7975 = vpack.c.b16 %v7917, %v7915
  %v7976 = vpack.c.b16 %v7920, %v7918
  %v7977 = vpack.c.b16 %v7921, %v7919
  %v7978 = vpack.c.b16 %v7924, %v7922
  %v7979 = vpack.c.b16 %v7925, %v7923
  %v7980 = vpack.c.b16 %v7928, %v7926
  %v7981 = vpack.c.b16 %v7929, %v7927
  %v7982 = vpack.c.b16 %v7932, %v7930
  %v7983 = vpack.c.b16 %v7933, %v7931
  %v7984 = vpack.c.b16 %v7936, %v7934
  %v7985 = vpack.c.b16 %v7937, %v7935
  %v7986 = vpack.c.b16 %v7940, %v7938
  %v7987 = vpack.c.b16 %v7941, %v7939
  %v7988 = vpack.c.b16 %v7944, %v7942
  %v7989 = vpack.c.b16 %v7945, %v7943
  %v7990 = vpack.c.b16 %v7948, %v7946
  %v7991 = vpack.c.b16 %v7949, %v7947
  %v7992 = vpack.c.b16 %v7952, %v7950
  %v7993 = vpack.c.b16 %v7953, %v7951
  %v7994 = vpack.c.b16 %v7956, %v7954
  %v7995 = vpack.c.b16 %v7957, %v7955
  %v7996 = vpack.c.b16 %v7960, %v7958
  %v7997 = vpack.c.b16 %v7961, %v7959
  %v7998 = vpack.c.b16 %v7964, %v7962
  %v7999 = vpack.c.b16 %v7965, %v7963
  %v8000 = vpack.c.b16 %v7968, %v7966
  %v8001 = vpack.c.b16 %v7969, %v7967
  %8034 = vmatprep.subr.bf16.mxu0 %v7971
  %8035 = vmatpush1.bf16.msra.mxu0 %v7970
  %8036 = vmatprep.subr.bf16.mxu0 %v7973
  %8037 = vmatpush1.bf16.msra.mxu0 %v7972
  %8038 = vmatprep.subr.bf16.mxu0 %v7975
  %8039 = vmatpush1.bf16.msra.mxu0 %v7974
  %8040 = vmatprep.subr.bf16.mxu0 %v7977
  %8041 = vmatpush1.bf16.msra.mxu0 %v7976
  %8042 = vmatprep.subr.bf16.mxu0 %v7979
  %8043 = vmatpush1.bf16.msra.mxu0 %v7978
  %8044 = vmatprep.subr.bf16.mxu0 %v7981
  %8045 = vmatpush1.bf16.msra.mxu0 %v7980
  %8046 = vmatprep.subr.bf16.mxu0 %v7983
  %8047 = vmatpush1.bf16.msra.mxu0 %v7982
  %8048 = vmatprep.subr.bf16.mxu0 %v7985
  %8049 = vmatpush1.bf16.msra.mxu0 %v7984
  %8050 = vmatprep.subr.bf16.mxu0 %v7987
  %8051 = vmatpush1.bf16.msra.mxu0 %v7986
  %8052 = vmatprep.subr.bf16.mxu0 %v7989
  %8053 = vmatpush1.bf16.msra.mxu0 %v7988
  %8054 = vmatprep.subr.bf16.mxu0 %v7991
  %8055 = vmatpush1.bf16.msra.mxu0 %v7990
  %8056 = vmatprep.subr.bf16.mxu0 %v7993
  %8057 = vmatpush1.bf16.msra.mxu0 %v7992
  %8058 = vmatprep.subr.bf16.mxu0 %v7995
  %8059 = vmatpush1.bf16.msra.mxu0 %v7994
  %8060 = vmatprep.subr.bf16.mxu0 %v7997
  %8061 = vmatpush1.bf16.msra.mxu0 %v7996
  %8062 = vmatprep.subr.bf16.mxu0 %v7999
  %8063 = vmatpush1.bf16.msra.mxu0 %v7998
  %8064 = vmatprep.subr.bf16.mxu0 %v8001
  %8065 = vmatpush1.bf16.msra.mxu0 %v8000
  %8066 = vmatprep.mubr.bf16.mxu0 %v6609
  %8067 = vmatmul.mubr.bf16.gmra.mrb[0].mxu0 %v6608
  %v8068 = vpop.f32.mrb[0].mxu0
  %v8069 = vadd.f32 0.0, %v8068
  %v8070 = vpop.f32.mrb[0].mxu0
  %v8071 = vadd.f32 0.0, %v8070
  %v8072 = vpop.f32.mrb[0].mxu0
  %v8073 = vadd.f32 0.0, %v8072
  %v8074 = vpop.f32.mrb[0].mxu0
  %v8075 = vadd.f32 0.0, %v8074
  %8076 = vmatprep.mubr.bf16.mxu0 %v6611
  %8077 = vmatmul.mubr.bf16.gmra.mrb[0].mxu0 %v6610
  %v8078 = vpop.f32.mrb[0].mxu0
  %v8079 = vadd.f32 0.0, %v8078
  %v8080 = vpop.f32.mrb[0].mxu0
  %v8081 = vadd.f32 0.0, %v8080
  %v8082 = vpop.f32.mrb[0].mxu0
  %v8083 = vadd.f32 0.0, %v8082
  %v8084 = vpop.f32.mrb[0].mxu0
  %v8085 = vadd.f32 0.0, %v8084
  %8086 = vdwg.mxu0
  %s8087 = scalar_lea.vmem %s5, 1536
  %v8088 = vld [vmem:[%s8087] sm:$0xff]
  %v8089 = vld [vmem:[%s8087 + $0x8] sm:$0xff]
  %v8090 = vld [vmem:[%s8087 + $0x10] sm:$0xff]
  %v8091 = vld [vmem:[%s8087 + $0x18] sm:$0xff]
  %v8092 = vld [vmem:[%s8087 + $0x20] sm:$0xff]
  %v8093 = vld [vmem:[%s8087 + $0x28] sm:$0xff]
  %v8094 = vld [vmem:[%s8087 + $0x30] sm:$0xff]
  %v8095 = vld [vmem:[%s8087 + $0x38] sm:$0xff]
  %v8096 = vld [vmem:[%s8087 + $0x40] sm:$0xff]
  %v8097 = vld [vmem:[%s8087 + $0x48] sm:$0xff]
  %v8098 = vld [vmem:[%s8087 + $0x50] sm:$0xff]
  %v8099 = vld [vmem:[%s8087 + $0x58] sm:$0xff]
  %v8100 = vld [vmem:[%s8087 + $0x60] sm:$0xff]
  %v8101 = vld [vmem:[%s8087 + $0x68] sm:$0xff]
  %v8102 = vld [vmem:[%s8087 + $0x70] sm:$0xff]
  %v8103 = vld [vmem:[%s8087 + $0x78] sm:$0xff]
  %v8104 = vld [vmem:[%s8087 + $0x80] sm:$0xff]
  %v8105 = vld [vmem:[%s8087 + $0x88] sm:$0xff]
  %v8106 = vld [vmem:[%s8087 + $0x90] sm:$0xff]
  %v8107 = vld [vmem:[%s8087 + $0x98] sm:$0xff]
  %v8108 = vld [vmem:[%s8087 + $0xa0] sm:$0xff]
  %v8109 = vld [vmem:[%s8087 + $0xa8] sm:$0xff]
  %v8110 = vld [vmem:[%s8087 + $0xb0] sm:$0xff]
  %v8111 = vld [vmem:[%s8087 + $0xb8] sm:$0xff]
  %v8112 = vld [vmem:[%s8087 + $0xc0] sm:$0xff]
  %v8113 = vld [vmem:[%s8087 + $0xc8] sm:$0xff]
  %v8114 = vld [vmem:[%s8087 + $0xd0] sm:$0xff]
  %v8115 = vld [vmem:[%s8087 + $0xd8] sm:$0xff]
  %v8116 = vld [vmem:[%s8087 + $0xe0] sm:$0xff]
  %v8117 = vld [vmem:[%s8087 + $0xe8] sm:$0xff]
  %v8118 = vld [vmem:[%s8087 + $0xf0] sm:$0xff]
  %v8119 = vld [vmem:[%s8087 + $0xf8] sm:$0xff]
  %v8152 = vunpack.c.l.b16 %v8088
  %v8153 = vunpack.c.h.b16 %v8088
  %v8154 = vunpack.c.l.b16 %v8089
  %v8155 = vunpack.c.h.b16 %v8089
  %v8156 = vunpack.c.l.b16 %v8090
  %v8157 = vunpack.c.h.b16 %v8090
  %v8158 = vunpack.c.l.b16 %v8091
  %v8159 = vunpack.c.h.b16 %v8091
  %v8160 = vunpack.c.l.b16 %v8092
  %v8161 = vunpack.c.h.b16 %v8092
  %v8162 = vunpack.c.l.b16 %v8093
  %v8163 = vunpack.c.h.b16 %v8093
  %v8164 = vunpack.c.l.b16 %v8094
  %v8165 = vunpack.c.h.b16 %v8094
  %v8166 = vunpack.c.l.b16 %v8095
  %v8167 = vunpack.c.h.b16 %v8095
  %v8168 = vunpack.c.l.b16 %v8096
  %v8169 = vunpack.c.h.b16 %v8096
  %v8170 = vunpack.c.l.b16 %v8097
  %v8171 = vunpack.c.h.b16 %v8097
  %v8172 = vunpack.c.l.b16 %v8098
  %v8173 = vunpack.c.h.b16 %v8098
  %v8174 = vunpack.c.l.b16 %v8099
  %v8175 = vunpack.c.h.b16 %v8099
  %v8176 = vunpack.c.l.b16 %v8100
  %v8177 = vunpack.c.h.b16 %v8100
  %v8178 = vunpack.c.l.b16 %v8101
  %v8179 = vunpack.c.h.b16 %v8101
  %v8180 = vunpack.c.l.b16 %v8102
  %v8181 = vunpack.c.h.b16 %v8102
  %v8182 = vunpack.c.l.b16 %v8103
  %v8183 = vunpack.c.h.b16 %v8103
  %v8184 = vunpack.c.l.b16 %v8104
  %v8185 = vunpack.c.h.b16 %v8104
  %v8186 = vunpack.c.l.b16 %v8105
  %v8187 = vunpack.c.h.b16 %v8105
  %v8188 = vunpack.c.l.b16 %v8106
  %v8189 = vunpack.c.h.b16 %v8106
  %v8190 = vunpack.c.l.b16 %v8107
  %v8191 = vunpack.c.h.b16 %v8107
  %v8192 = vunpack.c.l.b16 %v8108
  %v8193 = vunpack.c.h.b16 %v8108
  %v8194 = vunpack.c.l.b16 %v8109
  %v8195 = vunpack.c.h.b16 %v8109
  %v8196 = vunpack.c.l.b16 %v8110
  %v8197 = vunpack.c.h.b16 %v8110
  %v8198 = vunpack.c.l.b16 %v8111
  %v8199 = vunpack.c.h.b16 %v8111
  %v8200 = vunpack.c.l.b16 %v8112
  %v8201 = vunpack.c.h.b16 %v8112
  %v8202 = vunpack.c.l.b16 %v8113
  %v8203 = vunpack.c.h.b16 %v8113
  %v8204 = vunpack.c.l.b16 %v8114
  %v8205 = vunpack.c.h.b16 %v8114
  %v8206 = vunpack.c.l.b16 %v8115
  %v8207 = vunpack.c.h.b16 %v8115
  %v8208 = vunpack.c.l.b16 %v8116
  %v8209 = vunpack.c.h.b16 %v8116
  %v8210 = vunpack.c.l.b16 %v8117
  %v8211 = vunpack.c.h.b16 %v8117
  %v8212 = vunpack.c.l.b16 %v8118
  %v8213 = vunpack.c.h.b16 %v8118
  %v8214 = vunpack.c.l.b16 %v8119
  %v8215 = vunpack.c.h.b16 %v8119
  %v8216 = vpack.c.b16 %v8154, %v8152
  %v8217 = vpack.c.b16 %v8155, %v8153
  %v8218 = vpack.c.b16 %v8158, %v8156
  %v8219 = vpack.c.b16 %v8159, %v8157
  %v8220 = vpack.c.b16 %v8162, %v8160
  %v8221 = vpack.c.b16 %v8163, %v8161
  %v8222 = vpack.c.b16 %v8166, %v8164
  %v8223 = vpack.c.b16 %v8167, %v8165
  %v8224 = vpack.c.b16 %v8170, %v8168
  %v8225 = vpack.c.b16 %v8171, %v8169
  %v8226 = vpack.c.b16 %v8174, %v8172
  %v8227 = vpack.c.b16 %v8175, %v8173
  %v8228 = vpack.c.b16 %v8178, %v8176
  %v8229 = vpack.c.b16 %v8179, %v8177
  %v8230 = vpack.c.b16 %v8182, %v8180
  %v8231 = vpack.c.b16 %v8183, %v8181
  %v8232 = vpack.c.b16 %v8186, %v8184
  %v8233 = vpack.c.b16 %v8187, %v8185
  %v8234 = vpack.c.b16 %v8190, %v8188
  %v8235 = vpack.c.b16 %v8191, %v8189
  %v8236 = vpack.c.b16 %v8194, %v8192
  %v8237 = vpack.c.b16 %v8195, %v8193
  %v8238 = vpack.c.b16 %v8198, %v8196
  %v8239 = vpack.c.b16 %v8199, %v8197
  %v8240 = vpack.c.b16 %v8202, %v8200
  %v8241 = vpack.c.b16 %v8203, %v8201
  %v8242 = vpack.c.b16 %v8206, %v8204
  %v8243 = vpack.c.b16 %v8207, %v8205
  %v8244 = vpack.c.b16 %v8210, %v8208
  %v8245 = vpack.c.b16 %v8211, %v8209
  %v8246 = vpack.c.b16 %v8214, %v8212
  %v8247 = vpack.c.b16 %v8215, %v8213
  %8280 = vmatprep.subr.bf16.mxu0 %v8217
  %8281 = vmatpush1.bf16.msra.mxu0 %v8216
  %8282 = vmatprep.subr.bf16.mxu0 %v8219
  %8283 = vmatpush1.bf16.msra.mxu0 %v8218
  %8284 = vmatprep.subr.bf16.mxu0 %v8221
  %8285 = vmatpush1.bf16.msra.mxu0 %v8220
  %8286 = vmatprep.subr.bf16.mxu0 %v8223
  %8287 = vmatpush1.bf16.msra.mxu0 %v8222
  %8288 = vmatprep.subr.bf16.mxu0 %v8225
  %8289 = vmatpush1.bf16.msra.mxu0 %v8224
  %8290 = vmatprep.subr.bf16.mxu0 %v8227
  %8291 = vmatpush1.bf16.msra.mxu0 %v8226
  %8292 = vmatprep.subr.bf16.mxu0 %v8229
  %8293 = vmatpush1.bf16.msra.mxu0 %v8228
  %8294 = vmatprep.subr.bf16.mxu0 %v8231
  %8295 = vmatpush1.bf16.msra.mxu0 %v8230
  %8296 = vmatprep.subr.bf16.mxu0 %v8233
  %8297 = vmatpush1.bf16.msra.mxu0 %v8232
  %8298 = vmatprep.subr.bf16.mxu0 %v8235
  %8299 = vmatpush1.bf16.msra.mxu0 %v8234
  %8300 = vmatprep.subr.bf16.mxu0 %v8237
  %8301 = vmatpush1.bf16.msra.mxu0 %v8236
  %8302 = vmatprep.subr.bf16.mxu0 %v8239
  %8303 = vmatpush1.bf16.msra.mxu0 %v8238
  %8304 = vmatprep.subr.bf16.mxu0 %v8241
  %8305 = vmatpush1.bf16.msra.mxu0 %v8240
  %8306 = vmatprep.subr.bf16.mxu0 %v8243
  %8307 = vmatpush1.bf16.msra.mxu0 %v8242
  %8308 = vmatprep.subr.bf16.mxu0 %v8245
  %8309 = vmatpush1.bf16.msra.mxu0 %v8244
  %8310 = vmatprep.subr.bf16.mxu0 %v8247
  %8311 = vmatpush1.bf16.msra.mxu0 %v8246
  %8312 = vmatprep.mubr.bf16.mxu0 %v6609
  %8313 = vmatmul.mubr.bf16.gmra.mrb[0].mxu0 %v6608
  %v8314 = vpop.f32.mrb[0].mxu0
  %v8315 = vadd.f32 0.0, %v8314
  %v8316 = vpop.f32.mrb[0].mxu0
  %v8317 = vadd.f32 0.0, %v8316
  %v8318 = vpop.f32.mrb[0].mxu0
  %v8319 = vadd.f32 0.0, %v8318
  %v8320 = vpop.f32.mrb[0].mxu0
  %v8321 = vadd.f32 0.0, %v8320
  %8322 = vmatprep.mubr.bf16.mxu0 %v6611
  %8323 = vmatmul.mubr.bf16.gmra.mrb[0].mxu0 %v6610
  %v8324 = vpop.f32.mrb[0].mxu0
  %v8325 = vadd.f32 0.0, %v8324
  %v8326 = vpop.f32.mrb[0].mxu0
  %v8327 = vadd.f32 0.0, %v8326
  %v8328 = vpop.f32.mrb[0].mxu0
  %v8329 = vadd.f32 0.0, %v8328
  %v8330 = vpop.f32.mrb[0].mxu0
  %v8331 = vadd.f32 0.0, %v8330
  %8332 = vdwg.mxu0
  %s8333 = scalar_lea.vmem %s5, 1792
  %v8334 = vld [vmem:[%s8333] sm:$0xff]
  %v8335 = vld [vmem:[%s8333 + $0x8] sm:$0xff]
  %v8336 = vld [vmem:[%s8333 + $0x10] sm:$0xff]
  %v8337 = vld [vmem:[%s8333 + $0x18] sm:$0xff]
  %v8338 = vld [vmem:[%s8333 + $0x20] sm:$0xff]
  %v8339 = vld [vmem:[%s8333 + $0x28] sm:$0xff]
  %v8340 = vld [vmem:[%s8333 + $0x30] sm:$0xff]
  %v8341 = vld [vmem:[%s8333 + $0x38] sm:$0xff]
  %v8342 = vld [vmem:[%s8333 + $0x40] sm:$0xff]
  %v8343 = vld [vmem:[%s8333 + $0x48] sm:$0xff]
  %v8344 = vld [vmem:[%s8333 + $0x50] sm:$0xff]
  %v8345 = vld [vmem:[%s8333 + $0x58] sm:$0xff]
  %v8346 = vld [vmem:[%s8333 + $0x60] sm:$0xff]
  %v8347 = vld [vmem:[%s8333 + $0x68] sm:$0xff]
  %v8348 = vld [vmem:[%s8333 + $0x70] sm:$0xff]
  %v8349 = vld [vmem:[%s8333 + $0x78] sm:$0xff]
  %v8350 = vld [vmem:[%s8333 + $0x80] sm:$0xff]
  %v8351 = vld [vmem:[%s8333 + $0x88] sm:$0xff]
  %v8352 = vld [vmem:[%s8333 + $0x90] sm:$0xff]
  %v8353 = vld [vmem:[%s8333 + $0x98] sm:$0xff]
  %v8354 = vld [vmem:[%s8333 + $0xa0] sm:$0xff]
  %v8355 = vld [vmem:[%s8333 + $0xa8] sm:$0xff]
  %v8356 = vld [vmem:[%s8333 + $0xb0] sm:$0xff]
  %v8357 = vld [vmem:[%s8333 + $0xb8] sm:$0xff]
  %v8358 = vld [vmem:[%s8333 + $0xc0] sm:$0xff]
  %v8359 = vld [vmem:[%s8333 + $0xc8] sm:$0xff]
  %v8360 = vld [vmem:[%s8333 + $0xd0] sm:$0xff]
  %v8361 = vld [vmem:[%s8333 + $0xd8] sm:$0xff]
  %v8362 = vld [vmem:[%s8333 + $0xe0] sm:$0xff]
  %v8363 = vld [vmem:[%s8333 + $0xe8] sm:$0xff]
  %v8364 = vld [vmem:[%s8333 + $0xf0] sm:$0xff]
  %v8365 = vld [vmem:[%s8333 + $0xf8] sm:$0xff]
  %v8398 = vunpack.c.l.b16 %v8334
  %v8399 = vunpack.c.h.b16 %v8334
  %v8400 = vunpack.c.l.b16 %v8335
  %v8401 = vunpack.c.h.b16 %v8335
  %v8402 = vunpack.c.l.b16 %v8336
  %v8403 = vunpack.c.h.b16 %v8336
  %v8404 = vunpack.c.l.b16 %v8337
  %v8405 = vunpack.c.h.b16 %v8337
  %v8406 = vunpack.c.l.b16 %v8338
  %v8407 = vunpack.c.h.b16 %v8338
  %v8408 = vunpack.c.l.b16 %v8339
  %v8409 = vunpack.c.h.b16 %v8339
  %v8410 = vunpack.c.l.b16 %v8340
  %v8411 = vunpack.c.h.b16 %v8340
  %v8412 = vunpack.c.l.b16 %v8341
  %v8413 = vunpack.c.h.b16 %v8341
  %v8414 = vunpack.c.l.b16 %v8342
  %v8415 = vunpack.c.h.b16 %v8342
  %v8416 = vunpack.c.l.b16 %v8343
  %v8417 = vunpack.c.h.b16 %v8343
  %v8418 = vunpack.c.l.b16 %v8344
  %v8419 = vunpack.c.h.b16 %v8344
  %v8420 = vunpack.c.l.b16 %v8345
  %v8421 = vunpack.c.h.b16 %v8345
  %v8422 = vunpack.c.l.b16 %v8346
  %v8423 = vunpack.c.h.b16 %v8346
  %v8424 = vunpack.c.l.b16 %v8347
  %v8425 = vunpack.c.h.b16 %v8347
  %v8426 = vunpack.c.l.b16 %v8348
  %v8427 = vunpack.c.h.b16 %v8348
  %v8428 = vunpack.c.l.b16 %v8349
  %v8429 = vunpack.c.h.b16 %v8349
  %v8430 = vunpack.c.l.b16 %v8350
  %v8431 = vunpack.c.h.b16 %v8350
  %v8432 = vunpack.c.l.b16 %v8351
  %v8433 = vunpack.c.h.b16 %v8351
  %v8434 = vunpack.c.l.b16 %v8352
  %v8435 = vunpack.c.h.b16 %v8352
  %v8436 = vunpack.c.l.b16 %v8353
  %v8437 = vunpack.c.h.b16 %v8353
  %v8438 = vunpack.c.l.b16 %v8354
  %v8439 = vunpack.c.h.b16 %v8354
  %v8440 = vunpack.c.l.b16 %v8355
  %v8441 = vunpack.c.h.b16 %v8355
  %v8442 = vunpack.c.l.b16 %v8356
  %v8443 = vunpack.c.h.b16 %v8356
  %v8444 = vunpack.c.l.b16 %v8357
  %v8445 = vunpack.c.h.b16 %v8357
  %v8446 = vunpack.c.l.b16 %v8358
  %v8447 = vunpack.c.h.b16 %v8358
  %v8448 = vunpack.c.l.b16 %v8359
  %v8449 = vunpack.c.h.b16 %v8359
  %v8450 = vunpack.c.l.b16 %v8360
  %v8451 = vunpack.c.h.b16 %v8360
  %v8452 = vunpack.c.l.b16 %v8361
  %v8453 = vunpack.c.h.b16 %v8361
  %v8454 = vunpack.c.l.b16 %v8362
  %v8455 = vunpack.c.h.b16 %v8362
  %v8456 = vunpack.c.l.b16 %v8363
  %v8457 = vunpack.c.h.b16 %v8363
  %v8458 = vunpack.c.l.b16 %v8364
  %v8459 = vunpack.c.h.b16 %v8364
  %v8460 = vunpack.c.l.b16 %v8365
  %v8461 = vunpack.c.h.b16 %v8365
  %v8462 = vpack.c.b16 %v8400, %v8398
  %v8463 = vpack.c.b16 %v8401, %v8399
  %v8464 = vpack.c.b16 %v8404, %v8402
  %v8465 = vpack.c.b16 %v8405, %v8403
  %v8466 = vpack.c.b16 %v8408, %v8406
  %v8467 = vpack.c.b16 %v8409, %v8407
  %v8468 = vpack.c.b16 %v8412, %v8410
  %v8469 = vpack.c.b16 %v8413, %v8411
  %v8470 = vpack.c.b16 %v8416, %v8414
  %v8471 = vpack.c.b16 %v8417, %v8415
  %v8472 = vpack.c.b16 %v8420, %v8418
  %v8473 = vpack.c.b16 %v8421, %v8419
  %v8474 = vpack.c.b16 %v8424, %v8422
  %v8475 = vpack.c.b16 %v8425, %v8423
  %v8476 = vpack.c.b16 %v8428, %v8426
  %v8477 = vpack.c.b16 %v8429, %v8427
  %v8478 = vpack.c.b16 %v8432, %v8430
  %v8479 = vpack.c.b16 %v8433, %v8431
  %v8480 = vpack.c.b16 %v8436, %v8434
  %v8481 = vpack.c.b16 %v8437, %v8435
  %v8482 = vpack.c.b16 %v8440, %v8438
  %v8483 = vpack.c.b16 %v8441, %v8439
  %v8484 = vpack.c.b16 %v8444, %v8442
  %v8485 = vpack.c.b16 %v8445, %v8443
  %v8486 = vpack.c.b16 %v8448, %v8446
  %v8487 = vpack.c.b16 %v8449, %v8447
  %v8488 = vpack.c.b16 %v8452, %v8450
  %v8489 = vpack.c.b16 %v8453, %v8451
  %v8490 = vpack.c.b16 %v8456, %v8454
  %v8491 = vpack.c.b16 %v8457, %v8455
  %v8492 = vpack.c.b16 %v8460, %v8458
  %v8493 = vpack.c.b16 %v8461, %v8459
  %8526 = vmatprep.subr.bf16.mxu0 %v8463
  %8527 = vmatpush1.bf16.msra.mxu0 %v8462
  %8528 = vmatprep.subr.bf16.mxu0 %v8465
  %8529 = vmatpush1.bf16.msra.mxu0 %v8464
  %8530 = vmatprep.subr.bf16.mxu0 %v8467
  %8531 = vmatpush1.bf16.msra.mxu0 %v8466
  %8532 = vmatprep.subr.bf16.mxu0 %v8469
  %8533 = vmatpush1.bf16.msra.mxu0 %v8468
  %8534 = vmatprep.subr.bf16.mxu0 %v8471
  %8535 = vmatpush1.bf16.msra.mxu0 %v8470
  %8536 = vmatprep.subr.bf16.mxu0 %v8473
  %8537 = vmatpush1.bf16.msra.mxu0 %v8472
  %8538 = vmatprep.subr.bf16.mxu0 %v8475
  %8539 = vmatpush1.bf16.msra.mxu0 %v8474
  %8540 = vmatprep.subr.bf16.mxu0 %v8477
  %8541 = vmatpush1.bf16.msra.mxu0 %v8476
  %8542 = vmatprep.subr.bf16.mxu0 %v8479
  %8543 = vmatpush1.bf16.msra.mxu0 %v8478
  %8544 = vmatprep.subr.bf16.mxu0 %v8481
  %8545 = vmatpush1.bf16.msra.mxu0 %v8480
  %8546 = vmatprep.subr.bf16.mxu0 %v8483
  %8547 = vmatpush1.bf16.msra.mxu0 %v8482
  %8548 = vmatprep.subr.bf16.mxu0 %v8485
  %8549 = vmatpush1.bf16.msra.mxu0 %v8484
  %8550 = vmatprep.subr.bf16.mxu0 %v8487
  %8551 = vmatpush1.bf16.msra.mxu0 %v8486
  %8552 = vmatprep.subr.bf16.mxu0 %v8489
  %8553 = vmatpush1.bf16.msra.mxu0 %v8488
  %8554 = vmatprep.subr.bf16.mxu0 %v8491
  %8555 = vmatpush1.bf16.msra.mxu0 %v8490
  %8556 = vmatprep.subr.bf16.mxu0 %v8493
  %8557 = vmatpush1.bf16.msra.mxu0 %v8492
  %8558 = vmatprep.mubr.bf16.mxu0 %v6609
  %8559 = vmatmul.mubr.bf16.gmra.mrb[0].mxu0 %v6608
  %v8560 = vpop.f32.mrb[0].mxu0
  %v8561 = vadd.f32 0.0, %v8560
  %v8562 = vpop.f32.mrb[0].mxu0
  %v8563 = vadd.f32 0.0, %v8562
  %v8564 = vpop.f32.mrb[0].mxu0
  %v8565 = vadd.f32 0.0, %v8564
  %v8566 = vpop.f32.mrb[0].mxu0
  %v8567 = vadd.f32 0.0, %v8566
  %8568 = vmatprep.mubr.bf16.mxu0 %v6611
  %8569 = vmatmul.mubr.bf16.gmra.mrb[0].mxu0 %v6610
  %v8570 = vpop.f32.mrb[0].mxu0
  %v8571 = vadd.f32 0.0, %v8570
  %v8572 = vpop.f32.mrb[0].mxu0
  %v8573 = vadd.f32 0.0, %v8572
  %v8574 = vpop.f32.mrb[0].mxu0
  %v8575 = vadd.f32 0.0, %v8574
  %v8576 = vpop.f32.mrb[0].mxu0
  %v8577 = vadd.f32 0.0, %v8576
  %8578 = vdwg.mxu0
  %s8579 = scalar_lea.vmem %s5, 2048
  %v8580 = vld [vmem:[%s8579] sm:$0xff]
  %v8581 = vld [vmem:[%s8579 + $0x8] sm:$0xff]
  %v8582 = vld [vmem:[%s8579 + $0x10] sm:$0xff]
  %v8583 = vld [vmem:[%s8579 + $0x18] sm:$0xff]
  %v8584 = vld [vmem:[%s8579 + $0x20] sm:$0xff]
  %v8585 = vld [vmem:[%s8579 + $0x28] sm:$0xff]
  %v8586 = vld [vmem:[%s8579 + $0x30] sm:$0xff]
  %v8587 = vld [vmem:[%s8579 + $0x38] sm:$0xff]
  %v8588 = vld [vmem:[%s8579 + $0x40] sm:$0xff]
  %v8589 = vld [vmem:[%s8579 + $0x48] sm:$0xff]
  %v8590 = vld [vmem:[%s8579 + $0x50] sm:$0xff]
  %v8591 = vld [vmem:[%s8579 + $0x58] sm:$0xff]
  %v8592 = vld [vmem:[%s8579 + $0x60] sm:$0xff]
  %v8593 = vld [vmem:[%s8579 + $0x68] sm:$0xff]
  %v8594 = vld [vmem:[%s8579 + $0x70] sm:$0xff]
  %v8595 = vld [vmem:[%s8579 + $0x78] sm:$0xff]
  %v8596 = vld [vmem:[%s8579 + $0x80] sm:$0xff]
  %v8597 = vld [vmem:[%s8579 + $0x88] sm:$0xff]
  %v8598 = vld [vmem:[%s8579 + $0x90] sm:$0xff]
  %v8599 = vld [vmem:[%s8579 + $0x98] sm:$0xff]
  %v8600 = vld [vmem:[%s8579 + $0xa0] sm:$0xff]
  %v8601 = vld [vmem:[%s8579 + $0xa8] sm:$0xff]
  %v8602 = vld [vmem:[%s8579 + $0xb0] sm:$0xff]
  %v8603 = vld [vmem:[%s8579 + $0xb8] sm:$0xff]
  %v8604 = vld [vmem:[%s8579 + $0xc0] sm:$0xff]
  %v8605 = vld [vmem:[%s8579 + $0xc8] sm:$0xff]
  %v8606 = vld [vmem:[%s8579 + $0xd0] sm:$0xff]
  %v8607 = vld [vmem:[%s8579 + $0xd8] sm:$0xff]
  %v8608 = vld [vmem:[%s8579 + $0xe0] sm:$0xff]
  %v8609 = vld [vmem:[%s8579 + $0xe8] sm:$0xff]
  %v8610 = vld [vmem:[%s8579 + $0xf0] sm:$0xff]
  %v8611 = vld [vmem:[%s8579 + $0xf8] sm:$0xff]
  %v8644 = vunpack.c.l.b16 %v8580
  %v8645 = vunpack.c.h.b16 %v8580
  %v8646 = vunpack.c.l.b16 %v8581
  %v8647 = vunpack.c.h.b16 %v8581
  %v8648 = vunpack.c.l.b16 %v8582
  %v8649 = vunpack.c.h.b16 %v8582
  %v8650 = vunpack.c.l.b16 %v8583
  %v8651 = vunpack.c.h.b16 %v8583
  %v8652 = vunpack.c.l.b16 %v8584
  %v8653 = vunpack.c.h.b16 %v8584
  %v8654 = vunpack.c.l.b16 %v8585
  %v8655 = vunpack.c.h.b16 %v8585
  %v8656 = vunpack.c.l.b16 %v8586
  %v8657 = vunpack.c.h.b16 %v8586
  %v8658 = vunpack.c.l.b16 %v8587
  %v8659 = vunpack.c.h.b16 %v8587
  %v8660 = vunpack.c.l.b16 %v8588
  %v8661 = vunpack.c.h.b16 %v8588
  %v8662 = vunpack.c.l.b16 %v8589
  %v8663 = vunpack.c.h.b16 %v8589
  %v8664 = vunpack.c.l.b16 %v8590
  %v8665 = vunpack.c.h.b16 %v8590
  %v8666 = vunpack.c.l.b16 %v8591
  %v8667 = vunpack.c.h.b16 %v8591
  %v8668 = vunpack.c.l.b16 %v8592
  %v8669 = vunpack.c.h.b16 %v8592
  %v8670 = vunpack.c.l.b16 %v8593
  %v8671 = vunpack.c.h.b16 %v8593
  %v8672 = vunpack.c.l.b16 %v8594
  %v8673 = vunpack.c.h.b16 %v8594
  %v8674 = vunpack.c.l.b16 %v8595
  %v8675 = vunpack.c.h.b16 %v8595
  %v8676 = vunpack.c.l.b16 %v8596
  %v8677 = vunpack.c.h.b16 %v8596
  %v8678 = vunpack.c.l.b16 %v8597
  %v8679 = vunpack.c.h.b16 %v8597
  %v8680 = vunpack.c.l.b16 %v8598
  %v8681 = vunpack.c.h.b16 %v8598
  %v8682 = vunpack.c.l.b16 %v8599
  %v8683 = vunpack.c.h.b16 %v8599
  %v8684 = vunpack.c.l.b16 %v8600
  %v8685 = vunpack.c.h.b16 %v8600
  %v8686 = vunpack.c.l.b16 %v8601
  %v8687 = vunpack.c.h.b16 %v8601
  %v8688 = vunpack.c.l.b16 %v8602
  %v8689 = vunpack.c.h.b16 %v8602
  %v8690 = vunpack.c.l.b16 %v8603
  %v8691 = vunpack.c.h.b16 %v8603
  %v8692 = vunpack.c.l.b16 %v8604
  %v8693 = vunpack.c.h.b16 %v8604
  %v8694 = vunpack.c.l.b16 %v8605
  %v8695 = vunpack.c.h.b16 %v8605
  %v8696 = vunpack.c.l.b16 %v8606
  %v8697 = vunpack.c.h.b16 %v8606
  %v8698 = vunpack.c.l.b16 %v8607
  %v8699 = vunpack.c.h.b16 %v8607
  %v8700 = vunpack.c.l.b16 %v8608
  %v8701 = vunpack.c.h.b16 %v8608
  %v8702 = vunpack.c.l.b16 %v8609
  %v8703 = vunpack.c.h.b16 %v8609
  %v8704 = vunpack.c.l.b16 %v8610
  %v8705 = vunpack.c.h.b16 %v8610
  %v8706 = vunpack.c.l.b16 %v8611
  %v8707 = vunpack.c.h.b16 %v8611
  %v8708 = vpack.c.b16 %v8646, %v8644
  %v8709 = vpack.c.b16 %v8647, %v8645
  %v8710 = vpack.c.b16 %v8650, %v8648
  %v8711 = vpack.c.b16 %v8651, %v8649
  %v8712 = vpack.c.b16 %v8654, %v8652
  %v8713 = vpack.c.b16 %v8655, %v8653
  %v8714 = vpack.c.b16 %v8658, %v8656
  %v8715 = vpack.c.b16 %v8659, %v8657
  %v8716 = vpack.c.b16 %v8662, %v8660
  %v8717 = vpack.c.b16 %v8663, %v8661
  %v8718 = vpack.c.b16 %v8666, %v8664
  %v8719 = vpack.c.b16 %v8667, %v8665
  %v8720 = vpack.c.b16 %v8670, %v8668
  %v8721 = vpack.c.b16 %v8671, %v8669
  %v8722 = vpack.c.b16 %v8674, %v8672
  %v8723 = vpack.c.b16 %v8675, %v8673
  %v8724 = vpack.c.b16 %v8678, %v8676
  %v8725 = vpack.c.b16 %v8679, %v8677
  %v8726 = vpack.c.b16 %v8682, %v8680
  %v8727 = vpack.c.b16 %v8683, %v8681
  %v8728 = vpack.c.b16 %v8686, %v8684
  %v8729 = vpack.c.b16 %v8687, %v8685
  %v8730 = vpack.c.b16 %v8690, %v8688
  %v8731 = vpack.c.b16 %v8691, %v8689
  %v8732 = vpack.c.b16 %v8694, %v8692
  %v8733 = vpack.c.b16 %v8695, %v8693
  %v8734 = vpack.c.b16 %v8698, %v8696
  %v8735 = vpack.c.b16 %v8699, %v8697
  %v8736 = vpack.c.b16 %v8702, %v8700
  %v8737 = vpack.c.b16 %v8703, %v8701
  %v8738 = vpack.c.b16 %v8706, %v8704
  %v8739 = vpack.c.b16 %v8707, %v8705
  %8772 = vmatprep.subr.bf16.mxu0 %v8709
  %8773 = vmatpush1.bf16.msra.mxu0 %v8708
  %8774 = vmatprep.subr.bf16.mxu0 %v8711
  %8775 = vmatpush1.bf16.msra.mxu0 %v8710
  %8776 = vmatprep.subr.bf16.mxu0 %v8713
  %8777 = vmatpush1.bf16.msra.mxu0 %v8712
  %8778 = vmatprep.subr.bf16.mxu0 %v8715
  %8779 = vmatpush1.bf16.msra.mxu0 %v8714
  %8780 = vmatprep.subr.bf16.mxu0 %v8717
  %8781 = vmatpush1.bf16.msra.mxu0 %v8716
  %8782 = vmatprep.subr.bf16.mxu0 %v8719
  %8783 = vmatpush1.bf16.msra.mxu0 %v8718
  %8784 = vmatprep.subr.bf16.mxu0 %v8721
  %8785 = vmatpush1.bf16.msra.mxu0 %v8720
  %8786 = vmatprep.subr.bf16.mxu0 %v8723
  %8787 = vmatpush1.bf16.msra.mxu0 %v8722
  %8788 = vmatprep.subr.bf16.mxu0 %v8725
  %8789 = vmatpush1.bf16.msra.mxu0 %v8724
  %8790 = vmatprep.subr.bf16.mxu0 %v8727
  %8791 = vmatpush1.bf16.msra.mxu0 %v8726
  %8792 = vmatprep.subr.bf16.mxu0 %v8729
  %8793 = vmatpush1.bf16.msra.mxu0 %v8728
  %8794 = vmatprep.subr.bf16.mxu0 %v8731
  %8795 = vmatpush1.bf16.msra.mxu0 %v8730
  %8796 = vmatprep.subr.bf16.mxu0 %v8733
  %8797 = vmatpush1.bf16.msra.mxu0 %v8732
  %8798 = vmatprep.subr.bf16.mxu0 %v8735
  %8799 = vmatpush1.bf16.msra.mxu0 %v8734
  %8800 = vmatprep.subr.bf16.mxu0 %v8737
  %8801 = vmatpush1.bf16.msra.mxu0 %v8736
  %8802 = vmatprep.subr.bf16.mxu0 %v8739
  %8803 = vmatpush1.bf16.msra.mxu0 %v8738
  %8804 = vmatprep.mubr.bf16.mxu0 %v6609
  %8805 = vmatmul.mubr.bf16.gmra.mrb[0].mxu0 %v6608
  %v8806 = vpop.f32.mrb[0].mxu0
  %v8807 = vadd.f32 0.0, %v8806
  %v8808 = vpop.f32.mrb[0].mxu0
  %v8809 = vadd.f32 0.0, %v8808
  %v8810 = vpop.f32.mrb[0].mxu0
  %v8811 = vadd.f32 0.0, %v8810
  %v8812 = vpop.f32.mrb[0].mxu0
  %v8813 = vadd.f32 0.0, %v8812
  %8814 = vmatprep.mubr.bf16.mxu0 %v6611
  %8815 = vmatmul.mubr.bf16.gmra.mrb[0].mxu0 %v6610
  %v8816 = vpop.f32.mrb[0].mxu0
  %v8817 = vadd.f32 0.0, %v8816
  %v8818 = vpop.f32.mrb[0].mxu0
  %v8819 = vadd.f32 0.0, %v8818
  %v8820 = vpop.f32.mrb[0].mxu0
  %v8821 = vadd.f32 0.0, %v8820
  %v8822 = vpop.f32.mrb[0].mxu0
  %v8823 = vadd.f32 0.0, %v8822
  %8824 = vdwg.mxu0
  %v8825 = vld [vmem:[%s15] sm:$0xff]
  %v8826 = vld [vmem:[%s15 + $0x8] sm:$0xff]
  %v8827 = vld [vmem:[%s15 + $0x10] sm:$0xff]
  %v8828 = vld [vmem:[%s15 + $0x18] sm:$0xff]
  %v8829 = vld [vmem:[%s15 + $0x20] sm:$0xff]
  %v8830 = vld [vmem:[%s15 + $0x28] sm:$0xff]
  %v8831 = vld [vmem:[%s15 + $0x30] sm:$0xff]
  %v8832 = vld [vmem:[%s15 + $0x38] sm:$0xff]
  %v8833 = vld [vmem:[%s15 + $0x40] sm:$0xff]
  %v8834 = vld [vmem:[%s15 + $0x48] sm:$0xff]
  %v8835 = vld [vmem:[%s15 + $0x50] sm:$0xff]
  %v8836 = vld [vmem:[%s15 + $0x58] sm:$0xff]
  %v8838 = vsel %vm2585, %v8827, 0
  %v8841 = vsel %vm2585, %v8830, 0
  %v8844 = vsel %vm2585, %v8833, 0
  %v8847 = vsel %vm2585, %v8836, 0
  %8849 = vmatprep.subr.mxu0 %v6841
  %8850 = vmatpush1.msra.mxu0 %v6839
  %8851 = vmatprep.subr.mxu0 %v6845
  %8852 = vmatpush1.msra.mxu0 %v6843
  %8853 = vmatprep.subr.mxu0 %v6851
  %8854 = vmatpush1.msra.mxu0 %v6849
  %8855 = vmatprep.subr.mxu0 %v6855
  %8856 = vmatpush1.msra.mxu0 %v6853
  %8857 = vmatprep.subr.mxu0 %v7087
  %8858 = vmatpush1.msra.mxu0 %v7085
  %8859 = vmatprep.subr.mxu0 %v7091
  %8860 = vmatpush1.msra.mxu0 %v7089
  %8861 = vmatprep.subr.mxu0 %v7097
  %8862 = vmatpush1.msra.mxu0 %v7095
  %8863 = vmatprep.subr.mxu0 %v7101
  %8864 = vmatpush1.msra.mxu0 %v7099
  %8865 = vmatprep.subr.mxu0 %v7333
  %8866 = vmatpush1.msra.mxu0 %v7331
  %8867 = vmatprep.subr.mxu0 %v7337
  %8868 = vmatpush1.msra.mxu0 %v7335
  %8869 = vmatprep.subr.mxu0 %v7343
  %8870 = vmatpush1.msra.mxu0 %v7341
  %8871 = vmatprep.subr.mxu0 %v7347
  %8872 = vmatpush1.msra.mxu0 %v7345
  %8873 = vmatprep.subr.mxu0 %v7579
  %8874 = vmatpush1.msra.mxu0 %v7577
  %8875 = vmatprep.subr.mxu0 %v7583
  %8876 = vmatpush1.msra.mxu0 %v7581
  %8877 = vmatprep.subr.mxu0 %v7589
  %8878 = vmatpush1.msra.mxu0 %v7587
  %8879 = vmatprep.subr.mxu0 %v7593
  %8880 = vmatpush1.msra.mxu0 %v7591
  %8881 = vmatprep.subr.mxu0 %v7825
  %8882 = vmatpush1.msra.mxu0 %v7823
  %8883 = vmatprep.subr.mxu0 %v7829
  %8884 = vmatpush1.msra.mxu0 %v7827
  %8885 = vmatprep.subr.mxu0 %v7835
  %8886 = vmatpush1.msra.mxu0 %v7833
  %8887 = vmatprep.subr.mxu0 %v7839
  %8888 = vmatpush1.msra.mxu0 %v7837
  %8889 = vmatprep.subr.mxu0 %v8071
  %8890 = vmatpush1.msra.mxu0 %v8069
  %8891 = vmatprep.subr.mxu0 %v8075
  %8892 = vmatpush1.msra.mxu0 %v8073
  %8893 = vmatprep.subr.mxu0 %v8081
  %8894 = vmatpush1.msra.mxu0 %v8079
  %8895 = vmatprep.subr.mxu0 %v8085
  %8896 = vmatpush1.msra.mxu0 %v8083
  %8897 = vmatprep.subr.mxu0 %v8317
  %8898 = vmatpush1.msra.mxu0 %v8315
  %8899 = vmatprep.subr.mxu0 %v8321
  %8900 = vmatpush1.msra.mxu0 %v8319
  %8901 = vmatprep.subr.mxu0 %v8327
  %8902 = vmatpush1.msra.mxu0 %v8325
  %8903 = vmatprep.subr.mxu0 %v8331
  %8904 = vmatpush1.msra.mxu0 %v8329
  %8905 = vmatprep.subr.mxu0 %v8563
  %8906 = vmatpush1.msra.mxu0 %v8561
  %8907 = vmatprep.subr.mxu0 %v8567
  %8908 = vmatpush1.msra.mxu0 %v8565
  %8909 = vmatprep.subr.mxu0 %v8573
  %8910 = vmatpush1.msra.mxu0 %v8571
  %8911 = vmatprep.subr.mxu0 %v8577
  %8912 = vmatpush1.msra.mxu0 %v8575
  %8913 = vmatprep.mubr.f32.mxu0 %v8826
  %8914 = vmatmul.mubr.f32.gmra.mrb[0].mxu0 %v8825
  %v8915 = vpop.f32.mrb[0].mxu0
  %v8916 = vadd.f32 0.0, %v8915
  %v8917 = vpop.f32.mrb[0].mxu0
  %v8918 = vadd.f32 0.0, %v8917
  %8919 = vmatprep.mubr.f32.mxu0 %v8829
  %8920 = vmatmul.mubr.f32.gmra.mrb[0].mxu0 %v8828
  %v8921 = vpop.f32.mrb[0].mxu0
  %v8922 = vadd.f32 0.0, %v8921
  %v8923 = vpop.f32.mrb[0].mxu0
  %v8924 = vadd.f32 0.0, %v8923
  %8925 = vmatprep.mubr.f32.mxu0 %v8832
  %8926 = vmatmul.mubr.f32.gmra.mrb[0].mxu0 %v8831
  %v8927 = vpop.f32.mrb[0].mxu0
  %v8928 = vadd.f32 0.0, %v8927
  %v8929 = vpop.f32.mrb[0].mxu0
  %v8930 = vadd.f32 0.0, %v8929
  %8931 = vmatprep.mubr.f32.mxu0 %v8835
  %8932 = vmatmul.mubr.f32.gmra.mrb[0].mxu0 %v8834
  %v8933 = vpop.f32.mrb[0].mxu0
  %v8934 = vadd.f32 0.0, %v8933
  %v8935 = vpop.f32.mrb[0].mxu0
  %v8936 = vadd.f32 0.0, %v8935
  %8937 = vdwg.mxu0
  %8938 = vmatprep.subr.mxu0 %v8809
  %8939 = vmatpush1.msra.mxu0 %v8807
  %8940 = vmatprep.subr.mxu0 %v8813
  %8941 = vmatpush1.msra.mxu0 %v8811
  %8942 = vmatprep.subr.mxu0 %v8819
  %8943 = vmatpush1.msra.mxu0 %v8817
  %8944 = vmatprep.subr.mxu0 %v8823
  %8945 = vmatpush1.msra.mxu0 %v8821
  %8946 = vmatprep.subr.mxu0 0.0
  %8947 = vmatpush1.msra.mxu0 0.0
  %8948 = vmatprep.subr.mxu0 0.0
  %8949 = vmatpush1.msra.mxu0 0.0
  %8950 = vmatprep.subr.mxu0 0.0
  %8951 = vmatpush1.msra.mxu0 0.0
  %8952 = vmatprep.subr.mxu0 0.0
  %8953 = vmatpush1.msra.mxu0 0.0
  %8954 = vmatprep.subr.mxu0 0.0
  %8955 = vmatpush1.msra.mxu0 0.0
  %8956 = vmatprep.subr.mxu0 0.0
  %8957 = vmatpush1.msra.mxu0 0.0
  %8958 = vmatprep.subr.mxu0 0.0
  %8959 = vmatpush1.msra.mxu0 0.0
  %8960 = vmatprep.subr.mxu0 0.0
  %8961 = vmatpush1.msra.mxu0 0.0
  %8962 = vmatprep.subr.mxu0 0.0
  %8963 = vmatpush1.msra.mxu0 0.0
  %8964 = vmatprep.subr.mxu0 0.0
  %8965 = vmatpush1.msra.mxu0 0.0
  %8966 = vmatprep.subr.mxu0 0.0
  %8967 = vmatpush1.msra.mxu0 0.0
  %8968 = vmatprep.subr.mxu0 0.0
  %8969 = vmatpush1.msra.mxu0 0.0
  %8970 = vmatprep.subr.mxu0 0.0
  %8971 = vmatpush1.msra.mxu0 0.0
  %8972 = vmatprep.subr.mxu0 0.0
  %8973 = vmatpush1.msra.mxu0 0.0
  %8974 = vmatprep.subr.mxu0 0.0
  %8975 = vmatpush1.msra.mxu0 0.0
  %8976 = vmatprep.subr.mxu0 0.0
  %8977 = vmatpush1.msra.mxu0 0.0
  %8978 = vmatprep.subr.mxu0 0.0
  %8979 = vmatpush1.msra.mxu0 0.0
  %8980 = vmatprep.subr.mxu0 0.0
  %8981 = vmatpush1.msra.mxu0 0.0
  %8982 = vmatprep.subr.mxu0 0.0
  %8983 = vmatpush1.msra.mxu0 0.0
  %8984 = vmatprep.subr.mxu0 0.0
  %8985 = vmatpush1.msra.mxu0 0.0
  %8986 = vmatprep.subr.mxu0 0.0
  %8987 = vmatpush1.msra.mxu0 0.0
  %8988 = vmatprep.subr.mxu0 0.0
  %8989 = vmatpush1.msra.mxu0 0.0
  %8990 = vmatprep.subr.mxu0 0.0
  %8991 = vmatpush1.msra.mxu0 0.0
  %8992 = vmatprep.subr.mxu0 0.0
  %8993 = vmatpush1.msra.mxu0 0.0
  %8994 = vmatprep.subr.mxu0 0.0
  %8995 = vmatpush1.msra.mxu0 0.0
  %8996 = vmatprep.subr.mxu0 0.0
  %8997 = vmatpush1.msra.mxu0 0.0
  %8998 = vmatprep.subr.mxu0 0.0
  %8999 = vmatpush1.msra.mxu0 0.0
  %9000 = vmatprep.subr.mxu0 0.0
  %9001 = vmatpush1.msra.mxu0 0.0
  %9002 = vmatprep.mubr.f32.mxu0 0.0
  %9003 = vmatmul.mubr.f32.gmra.mrb[0].mxu0 %v8838
  %v9004 = vpop.f32.mrb[0].mxu0
  %v9005 = vadd.f32 %v8916, %v9004
  %v9006 = vpop.f32.mrb[0].mxu0
  %v9007 = vadd.f32 %v8918, %v9006
  %9008 = vmatprep.mubr.f32.mxu0 0.0
  %9009 = vmatmul.mubr.f32.gmra.mrb[0].mxu0 %v8841
  %v9010 = vpop.f32.mrb[0].mxu0
  %v9011 = vadd.f32 %v8922, %v9010
  %v9012 = vpop.f32.mrb[0].mxu0
  %v9013 = vadd.f32 %v8924, %v9012
  %9014 = vmatprep.mubr.f32.mxu0 0.0
  %9015 = vmatmul.mubr.f32.gmra.mrb[0].mxu0 %v8844
  %v9016 = vpop.f32.mrb[0].mxu0
  %v9017 = vadd.f32 %v8928, %v9016
  %v9018 = vpop.f32.mrb[0].mxu0
  %v9019 = vadd.f32 %v8930, %v9018
  %9020 = vmatprep.mubr.f32.mxu0 0.0
  %9021 = vmatmul.mubr.f32.gmra.mrb[0].mxu0 %v8847
  %v9022 = vpop.f32.mrb[0].mxu0
  %v9023 = vadd.f32 %v8934, %v9022
  %v9024 = vpop.f32.mrb[0].mxu0
  %v9025 = vadd.f32 %v8936, %v9024
  %9026 = vdwg.mxu0
  %v9027 = vadd.f32 %v9005, %v9007
  %9028 = vadd.xlane.f32.xlu0 %v9027
  %v9029 = vpop.xlane.xlu0 %9028
  %v9030 = vadd.f32 %v9011, %v9013
  %9031 = vadd.xlane.f32.xlu0 %v9030
  %v9032 = vpop.xlane.xlu0 %9031
  %v9033 = vadd.f32 %v9017, %v9019
  %9034 = vadd.xlane.f32.xlu0 %v9033
  %v9035 = vpop.xlane.xlu0 %9034
  %v9036 = vadd.f32 %v9023, %v9025
  %9037 = vadd.xlane.f32.xlu0 %v9036
  %v9038 = vpop.xlane.xlu0 %9037
  %v9039 = vadd.f32 %v9029, %v9035
  %v9040 = vadd.f32 %v9032, %v9038
  %v9041 = vmul.f32 %v9005, %v9005
  %v9042 = vmul.f32 %v9007, %v9007
  %v9043 = vmul.f32 %v9011, %v9011
  %v9044 = vmul.f32 %v9013, %v9013
  %v9045 = vmul.f32 %v9017, %v9017
  %v9046 = vmul.f32 %v9019, %v9019
  %v9047 = vmul.f32 %v9023, %v9023
  %v9048 = vmul.f32 %v9025, %v9025
  %v9049 = vadd.f32 %v9041, %v9042
  %9050 = vadd.xlane.f32.xlu0 %v9049
  %v9051 = vpop.xlane.xlu0 %9050
  %v9052 = vadd.f32 %v9043, %v9044
  %9053 = vadd.xlane.f32.xlu0 %v9052
  %v9054 = vpop.xlane.xlu0 %9053
  %v9055 = vadd.f32 %v9045, %v9046
  %9056 = vadd.xlane.f32.xlu0 %v9055
  %v9057 = vpop.xlane.xlu0 %9056
  %v9058 = vadd.f32 %v9047, %v9048
  %9059 = vadd.xlane.f32.xlu0 %v9058
  %v9060 = vpop.xlane.xlu0 %9059
  %v9061 = vadd.f32 %v9051, %v9057
  %v9062 = vadd.f32 %v9054, %v9060
  %v9063 = vmul.f32 %v9039, 0.001953125
  %v9064 = vmul.f32 %v9040, 0.001953125
  %v9065 = vmul.f32 %v9061, 0.001953125
  %v9066 = vmul.f32 %v9062, 0.001953125
  %v9067 = vmul.f32 %v9063, %v9063
  %v9068 = vmul.f32 %v9064, %v9064
  %v9069 = vsub.f32 %v9065, %v9067
  %v9070 = vsub.f32 %v9066, %v9068
  %v9071 = vmax.f32 %v9069, 0.0
  %v9072 = vmax.f32 %v9070, 0.0
  %s9073 = scalar_lea.vmem %s18, 320
  %v9074 = vld [vmem:[%s9073] sm:$0xff]
  %v9075 = vld [vmem:[%s9073 + $0x8] sm:$0xff]
  %v9076 = vld [vmem:[%s9073 + $0x10] sm:$0xff]
  %v9077 = vld [vmem:[%s9073 + $0x18] sm:$0xff]
  %v9078 = vadd.f32 %v9071, 1e-05
  %v9079 = vadd.f32 %v9072, 1e-05
  %v9080 = vrsqrt.pop %v9078
  %v9081 = vrsqrt.pop %v9079
  %v9082 = vmul.f32 %v9074, %v9080
  %v9083 = vmul.f32 %v9075, %v9081
  %v9084 = vmul.f32 %v9076, %v9080
  %v9085 = vmul.f32 %v9077, %v9081
  %v9086 = vmul.f32 %v9063, %v9082
  %v9087 = vmul.f32 %v9064, %v9083
  %v9088 = vmul.f32 %v9063, %v9084
  %v9089 = vmul.f32 %v9064, %v9085
  %9094 = vrot.lane.b32.xlu0 %v9086, 1
  %v9095 = vpop.permute.xlu0 %9094
  %9096 = vrot.lane.b32.xlu0 %v9087, 1
  %v9097 = vpop.permute.xlu0 %9096
  %9098 = vrot.lane.b32.xlu0 %v9088, 1
  %v9099 = vpop.permute.xlu0 %9098
  %9100 = vrot.lane.b32.xlu0 %v9089, 1
  %v9101 = vpop.permute.xlu0 %9100
  %v9106 = vsub.f32 %v9074, %v9095
  %v9107 = vsub.f32 %v9075, %v9097
  %v9108 = vsub.f32 %v9076, %v9099
  %v9109 = vsub.f32 %v9077, %v9101
  %9111 = vset.pattern.permute.xlu0 0
  %9112 = vperm.xlu0 %9111, %v9082
  %v9113 = vpop.permute.xlu0 %9112
  %9116 = vset.pattern.permute.xlu0 0
  %9117 = vperm.xlu0 %9116, %v9083
  %v9118 = vpop.permute.xlu0 %9117
  %9121 = vset.pattern.permute.xlu0 0
  %9122 = vperm.xlu0 %9121, %v9084
  %v9123 = vpop.permute.xlu0 %9122
  %9126 = vset.pattern.permute.xlu0 0
  %9127 = vperm.xlu0 %9126, %v9085
  %v9128 = vpop.permute.xlu0 %9127
  %v9130 = vmul.f32 %v9005, %v9113
  %v9131 = vmul.f32 %v9007, %v9113
  %v9132 = vmul.f32 %v9011, %v9118
  %v9133 = vmul.f32 %v9013, %v9118
  %v9134 = vmul.f32 %v9017, %v9123
  %v9135 = vmul.f32 %v9019, %v9123
  %v9136 = vmul.f32 %v9023, %v9128
  %v9137 = vmul.f32 %v9025, %v9128
  %9139 = vset.pattern.permute.xlu0 1
  %9140 = vperm.xlu0 %9139, %v9106
  %v9141 = vpop.permute.xlu0 %9140
  %9144 = vset.pattern.permute.xlu0 1
  %9145 = vperm.xlu0 %9144, %v9107
  %v9146 = vpop.permute.xlu0 %9145
  %9149 = vset.pattern.permute.xlu0 1
  %9150 = vperm.xlu0 %9149, %v9108
  %v9151 = vpop.permute.xlu0 %9150
  %9154 = vset.pattern.permute.xlu0 1
  %9155 = vperm.xlu0 %9154, %v9109
  %v9156 = vpop.permute.xlu0 %9155
  %v9158 = vadd.f32 %v9130, %v9141
  %v9159 = vadd.f32 %v9131, %v9141
  %v9160 = vadd.f32 %v9132, %v9146
  %v9161 = vadd.f32 %v9133, %v9146
  %v9162 = vadd.f32 %v9134, %v9151
  %v9163 = vadd.f32 %v9135, %v9151
  %v9164 = vadd.f32 %v9136, %v9156
  %v9165 = vadd.f32 %v9137, %v9156
  %vm9166 = vcmp.ge.f32.partialorder %v9158, 0.0
  %vm9167 = vcmp.ge.f32.partialorder %v9159, 0.0
  %vm9168 = vcmp.ge.f32.partialorder %v9160, 0.0
  %vm9169 = vcmp.ge.f32.partialorder %v9161, 0.0
  %vm9170 = vcmp.ge.f32.partialorder %v9162, 0.0
  %vm9171 = vcmp.ge.f32.partialorder %v9163, 0.0
  %vm9172 = vcmp.ge.f32.partialorder %v9164, 0.0
  %vm9173 = vcmp.ge.f32.partialorder %v9165, 0.0
  %v9174 = vmul.f32 %v9158, 0.2
  %v9175 = vmul.f32 %v9159, 0.2
  %v9176 = vmul.f32 %v9160, 0.2
  %v9177 = vmul.f32 %v9161, 0.2
  %v9178 = vmul.f32 %v9162, 0.2
  %v9179 = vmul.f32 %v9163, 0.2
  %v9180 = vmul.f32 %v9164, 0.2
  %v9181 = vmul.f32 %v9165, 0.2
  %v9182 = vsel %vm9166, %v9158, %v9174
  %v9183 = vsel %vm9167, %v9159, %v9175
  %v9184 = vsel %vm9168, %v9160, %v9176
  %v9185 = vsel %vm9169, %v9161, %v9177
  %v9186 = vsel %vm9170, %v9162, %v9178
  %v9187 = vsel %vm9171, %v9163, %v9179
  %v9188 = vsel %vm9172, %v9164, %v9180
  %v9189 = vsel %vm9173, %v9165, %v9181
  %v9190 = vld [vmem:[%s16] sm:$0xff]
  %v9191 = vld [vmem:[%s16 + $0x8] sm:$0xff]
  %v9192 = vld [vmem:[%s16 + $0x10] sm:$0xff]
  %v9193 = vld [vmem:[%s16 + $0x18] sm:$0xff]
  %v9195 = vsel %vm2585, %v9190, 0
  %v9198 = vsel %vm2585, %v9191, 0
  %v9201 = vsel %vm2585, %v9192, 0
  %v9204 = vsel %vm2585, %v9193, 0
  %9206 = vmatprep.subr.mxu0 %v9183
  %9207 = vmatpush1.msra.mxu0 %v9182
  %9208 = vmatprep.subr.mxu0 %v9185
  %9209 = vmatpush1.msra.mxu0 %v9184
  %9210 = vmatprep.subr.mxu0 %v9187
  %9211 = vmatpush1.msra.mxu0 %v9186
  %9212 = vmatprep.subr.mxu0 %v9189
  %9213 = vmatpush1.msra.mxu0 %v9188
  %9214 = vmatprep.subr.mxu0 0.0
  %9215 = vmatpush1.msra.mxu0 0.0
  %9216 = vmatprep.subr.mxu0 0.0
  %9217 = vmatpush1.msra.mxu0 0.0
  %9218 = vmatprep.subr.mxu0 0.0
  %9219 = vmatpush1.msra.mxu0 0.0
  %9220 = vmatprep.subr.mxu0 0.0
  %9221 = vmatpush1.msra.mxu0 0.0
  %9222 = vmatprep.subr.mxu0 0.0
  %9223 = vmatpush1.msra.mxu0 0.0
  %9224 = vmatprep.subr.mxu0 0.0
  %9225 = vmatpush1.msra.mxu0 0.0
  %9226 = vmatprep.subr.mxu0 0.0
  %9227 = vmatpush1.msra.mxu0 0.0
  %9228 = vmatprep.subr.mxu0 0.0
  %9229 = vmatpush1.msra.mxu0 0.0
  %9230 = vmatprep.subr.mxu0 0.0
  %9231 = vmatpush1.msra.mxu0 0.0
  %9232 = vmatprep.subr.mxu0 0.0
  %9233 = vmatpush1.msra.mxu0 0.0
  %9234 = vmatprep.subr.mxu0 0.0
  %9235 = vmatpush1.msra.mxu0 0.0
  %9236 = vmatprep.subr.mxu0 0.0
  %9237 = vmatpush1.msra.mxu0 0.0
  %9238 = vmatprep.subr.mxu0 0.0
  %9239 = vmatpush1.msra.mxu0 0.0
  %9240 = vmatprep.subr.mxu0 0.0
  %9241 = vmatpush1.msra.mxu0 0.0
  %9242 = vmatprep.subr.mxu0 0.0
  %9243 = vmatpush1.msra.mxu0 0.0
  %9244 = vmatprep.subr.mxu0 0.0
  %9245 = vmatpush1.msra.mxu0 0.0
  %9246 = vmatprep.subr.mxu0 0.0
  %9247 = vmatpush1.msra.mxu0 0.0
  %9248 = vmatprep.subr.mxu0 0.0
  %9249 = vmatpush1.msra.mxu0 0.0
  %9250 = vmatprep.subr.mxu0 0.0
  %9251 = vmatpush1.msra.mxu0 0.0
  %9252 = vmatprep.subr.mxu0 0.0
  %9253 = vmatpush1.msra.mxu0 0.0
  %9254 = vmatprep.subr.mxu0 0.0
  %9255 = vmatpush1.msra.mxu0 0.0
  %9256 = vmatprep.subr.mxu0 0.0
  %9257 = vmatpush1.msra.mxu0 0.0
  %9258 = vmatprep.subr.mxu0 0.0
  %9259 = vmatpush1.msra.mxu0 0.0
  %9260 = vmatprep.subr.mxu0 0.0
  %9261 = vmatpush1.msra.mxu0 0.0
  %9262 = vmatprep.subr.mxu0 0.0
  %9263 = vmatpush1.msra.mxu0 0.0
  %9264 = vmatprep.subr.mxu0 0.0
  %9265 = vmatpush1.msra.mxu0 0.0
  %9266 = vmatprep.subr.mxu0 0.0
  %9267 = vmatpush1.msra.mxu0 0.0
  %9268 = vmatprep.subr.mxu0 0.0
  %9269 = vmatpush1.msra.mxu0 0.0
  %9270 = vmatprep.mubr.f32.mxu0 0.0
  %9271 = vmatmul.mubr.f32.gmra.mrb[0].mxu0 %v9195
  %v9272 = vpop.f32.mrb[0].mxu0
  %v9273 = vadd.f32 0.0, %v9272
  %v9274 = vpop.f32.mrb[0].mxu0
  %v9275 = vadd.f32 0.0, %v9274
  %9276 = vmatprep.mubr.f32.mxu0 0.0
  %9277 = vmatmul.mubr.f32.gmra.mrb[0].mxu0 %v9198
  %v9278 = vpop.f32.mrb[0].mxu0
  %v9279 = vadd.f32 0.0, %v9278
  %v9280 = vpop.f32.mrb[0].mxu0
  %v9281 = vadd.f32 0.0, %v9280
  %9282 = vmatprep.mubr.f32.mxu0 0.0
  %9283 = vmatmul.mubr.f32.gmra.mrb[0].mxu0 %v9201
  %v9284 = vpop.f32.mrb[0].mxu0
  %v9285 = vadd.f32 0.0, %v9284
  %v9286 = vpop.f32.mrb[0].mxu0
  %v9287 = vadd.f32 0.0, %v9286
  %9288 = vmatprep.mubr.f32.mxu0 0.0
  %9289 = vmatmul.mubr.f32.gmra.mrb[0].mxu0 %v9204
  %v9290 = vpop.f32.mrb[0].mxu0
  %v9291 = vadd.f32 0.0, %v9290
  %v9292 = vpop.f32.mrb[0].mxu0
  %v9293 = vadd.f32 0.0, %v9292
  %9294 = vdwg.mxu0
  %v9295 = vadd.f32 %v9273, %v9275
  %9296 = vadd.xlane.f32.xlu0 %v9295
  %v9297 = vpop.xlane.xlu0 %9296
  %v9298 = vadd.f32 %v9279, %v9281
  %9299 = vadd.xlane.f32.xlu0 %v9298
  %v9300 = vpop.xlane.xlu0 %9299
  %v9301 = vadd.f32 %v9285, %v9287
  %9302 = vadd.xlane.f32.xlu0 %v9301
  %v9303 = vpop.xlane.xlu0 %9302
  %v9304 = vadd.f32 %v9291, %v9293
  %9305 = vadd.xlane.f32.xlu0 %v9304
  %v9306 = vpop.xlane.xlu0 %9305
  %v9307 = vadd.f32 %v9297, %v9303
  %v9308 = vadd.f32 %v9300, %v9306
  %v9309 = vmul.f32 %v9273, %v9273
  %v9310 = vmul.f32 %v9275, %v9275
  %v9311 = vmul.f32 %v9279, %v9279
  %v9312 = vmul.f32 %v9281, %v9281
  %v9313 = vmul.f32 %v9285, %v9285
  %v9314 = vmul.f32 %v9287, %v9287
  %v9315 = vmul.f32 %v9291, %v9291
  %v9316 = vmul.f32 %v9293, %v9293
  %v9317 = vadd.f32 %v9309, %v9310
  %9318 = vadd.xlane.f32.xlu0 %v9317
  %v9319 = vpop.xlane.xlu0 %9318
  %v9320 = vadd.f32 %v9311, %v9312
  %9321 = vadd.xlane.f32.xlu0 %v9320
  %v9322 = vpop.xlane.xlu0 %9321
  %v9323 = vadd.f32 %v9313, %v9314
  %9324 = vadd.xlane.f32.xlu0 %v9323
  %v9325 = vpop.xlane.xlu0 %9324
  %v9326 = vadd.f32 %v9315, %v9316
  %9327 = vadd.xlane.f32.xlu0 %v9326
  %v9328 = vpop.xlane.xlu0 %9327
  %v9329 = vadd.f32 %v9319, %v9325
  %v9330 = vadd.f32 %v9322, %v9328
  %v9331 = vmul.f32 %v9307, 0.001953125
  %v9332 = vmul.f32 %v9308, 0.001953125
  %v9333 = vmul.f32 %v9329, 0.001953125
  %v9334 = vmul.f32 %v9330, 0.001953125
  %v9335 = vmul.f32 %v9331, %v9331
  %v9336 = vmul.f32 %v9332, %v9332
  %v9337 = vsub.f32 %v9333, %v9335
  %v9338 = vsub.f32 %v9334, %v9336
  %v9339 = vmax.f32 %v9337, 0.0
  %v9340 = vmax.f32 %v9338, 0.0
  %s9341 = scalar_lea.vmem %s18, 352
  %v9342 = vld [vmem:[%s9341] sm:$0xff]
  %v9343 = vld [vmem:[%s9341 + $0x8] sm:$0xff]
  %v9344 = vld [vmem:[%s9341 + $0x10] sm:$0xff]
  %v9345 = vld [vmem:[%s9341 + $0x18] sm:$0xff]
  %v9346 = vadd.f32 %v9339, 1e-05
  %v9347 = vadd.f32 %v9340, 1e-05
  %v9348 = vrsqrt.pop %v9346
  %v9349 = vrsqrt.pop %v9347
  %v9350 = vmul.f32 %v9342, %v9348
  %v9351 = vmul.f32 %v9343, %v9349
  %v9352 = vmul.f32 %v9344, %v9348
  %v9353 = vmul.f32 %v9345, %v9349
  %v9354 = vmul.f32 %v9331, %v9350
  %v9355 = vmul.f32 %v9332, %v9351
  %v9356 = vmul.f32 %v9331, %v9352
  %v9357 = vmul.f32 %v9332, %v9353
  %9362 = vrot.lane.b32.xlu0 %v9354, 1
  %v9363 = vpop.permute.xlu0 %9362
  %9364 = vrot.lane.b32.xlu0 %v9355, 1
  %v9365 = vpop.permute.xlu0 %9364
  %9366 = vrot.lane.b32.xlu0 %v9356, 1
  %v9367 = vpop.permute.xlu0 %9366
  %9368 = vrot.lane.b32.xlu0 %v9357, 1
  %v9369 = vpop.permute.xlu0 %9368
  %v9374 = vsub.f32 %v9342, %v9363
  %v9375 = vsub.f32 %v9343, %v9365
  %v9376 = vsub.f32 %v9344, %v9367
  %v9377 = vsub.f32 %v9345, %v9369
  %9379 = vset.pattern.permute.xlu0 0
  %9380 = vperm.xlu0 %9379, %v9350
  %v9381 = vpop.permute.xlu0 %9380
  %9384 = vset.pattern.permute.xlu0 0
  %9385 = vperm.xlu0 %9384, %v9351
  %v9386 = vpop.permute.xlu0 %9385
  %9389 = vset.pattern.permute.xlu0 0
  %9390 = vperm.xlu0 %9389, %v9352
  %v9391 = vpop.permute.xlu0 %9390
  %9394 = vset.pattern.permute.xlu0 0
  %9395 = vperm.xlu0 %9394, %v9353
  %v9396 = vpop.permute.xlu0 %9395
  %v9398 = vmul.f32 %v9273, %v9381
  %v9399 = vmul.f32 %v9275, %v9381
  %v9400 = vmul.f32 %v9279, %v9386
  %v9401 = vmul.f32 %v9281, %v9386
  %v9402 = vmul.f32 %v9285, %v9391
  %v9403 = vmul.f32 %v9287, %v9391
  %v9404 = vmul.f32 %v9291, %v9396
  %v9405 = vmul.f32 %v9293, %v9396
  %9407 = vset.pattern.permute.xlu0 1
  %9408 = vperm.xlu0 %9407, %v9374
  %v9409 = vpop.permute.xlu0 %9408
  %9412 = vset.pattern.permute.xlu0 1
  %9413 = vperm.xlu0 %9412, %v9375
  %v9414 = vpop.permute.xlu0 %9413
  %9417 = vset.pattern.permute.xlu0 1
  %9418 = vperm.xlu0 %9417, %v9376
  %v9419 = vpop.permute.xlu0 %9418
  %9422 = vset.pattern.permute.xlu0 1
  %9423 = vperm.xlu0 %9422, %v9377
  %v9424 = vpop.permute.xlu0 %9423
  %v9426 = vadd.f32 %v9398, %v9409
  %v9427 = vadd.f32 %v9399, %v9409
  %v9428 = vadd.f32 %v9400, %v9414
  %v9429 = vadd.f32 %v9401, %v9414
  %v9430 = vadd.f32 %v9402, %v9419
  %v9431 = vadd.f32 %v9403, %v9419
  %v9432 = vadd.f32 %v9404, %v9424
  %v9433 = vadd.f32 %v9405, %v9424
  %vm9434 = vcmp.ge.f32.partialorder %v9426, 0.0
  %vm9435 = vcmp.ge.f32.partialorder %v9427, 0.0
  %vm9436 = vcmp.ge.f32.partialorder %v9428, 0.0
  %vm9437 = vcmp.ge.f32.partialorder %v9429, 0.0
  %vm9438 = vcmp.ge.f32.partialorder %v9430, 0.0
  %vm9439 = vcmp.ge.f32.partialorder %v9431, 0.0
  %vm9440 = vcmp.ge.f32.partialorder %v9432, 0.0
  %vm9441 = vcmp.ge.f32.partialorder %v9433, 0.0
  %v9442 = vmul.f32 %v9426, 0.2
  %v9443 = vmul.f32 %v9427, 0.2
  %v9444 = vmul.f32 %v9428, 0.2
  %v9445 = vmul.f32 %v9429, 0.2
  %v9446 = vmul.f32 %v9430, 0.2
  %v9447 = vmul.f32 %v9431, 0.2
  %v9448 = vmul.f32 %v9432, 0.2
  %v9449 = vmul.f32 %v9433, 0.2
  %v9450 = vsel %vm9434, %v9426, %v9442
  %v9451 = vsel %vm9435, %v9427, %v9443
  %v9452 = vsel %vm9436, %v9428, %v9444
  %v9453 = vsel %vm9437, %v9429, %v9445
  %v9454 = vsel %vm9438, %v9430, %v9446
  %v9455 = vsel %vm9439, %v9431, %v9447
  %v9456 = vsel %vm9440, %v9432, %v9448
  %v9457 = vsel %vm9441, %v9433, %v9449
  %s9458 = scalar_lea.vmem %s18, 384
  %v9459 = vld [vmem:[%s9458] sm:$0xf]
  %v9460 = vld [vmem:[%s17] sm:$0xf]
  %9462 = vset.pattern.permute.xlu0 0
  %9463 = vperm.xlu0 %9462, %v9459
  %v9464 = vpop.permute.xlu0 %9463
  %v9467 = vsel %vm2585, %v9460, 0
  %9469 = vmatprep.subr.mxu0 %v9451
  %9470 = vmatpush1.msra.mxu0 %v9450
  %9471 = vmatprep.subr.mxu0 %v9453
  %9472 = vmatpush1.msra.mxu0 %v9452
  %9473 = vmatprep.subr.mxu0 %v9455
  %9474 = vmatpush1.msra.mxu0 %v9454
  %9475 = vmatprep.subr.mxu0 %v9457
  %9476 = vmatpush1.msra.mxu0 %v9456
  %9477 = vmatprep.subr.mxu0 0.0
  %9478 = vmatpush1.msra.mxu0 0.0
  %9479 = vmatprep.subr.mxu0 0.0
  %9480 = vmatpush1.msra.mxu0 0.0
  %9481 = vmatprep.subr.mxu0 0.0
  %9482 = vmatpush1.msra.mxu0 0.0
  %9483 = vmatprep.subr.mxu0 0.0
  %9484 = vmatpush1.msra.mxu0 0.0
  %9485 = vmatprep.subr.mxu0 0.0
  %9486 = vmatpush1.msra.mxu0 0.0
  %9487 = vmatprep.subr.mxu0 0.0
  %9488 = vmatpush1.msra.mxu0 0.0
  %9489 = vmatprep.subr.mxu0 0.0
  %9490 = vmatpush1.msra.mxu0 0.0
  %9491 = vmatprep.subr.mxu0 0.0
  %9492 = vmatpush1.msra.mxu0 0.0
  %9493 = vmatprep.subr.mxu0 0.0
  %9494 = vmatpush1.msra.mxu0 0.0
  %9495 = vmatprep.subr.mxu0 0.0
  %9496 = vmatpush1.msra.mxu0 0.0
  %9497 = vmatprep.subr.mxu0 0.0
  %9498 = vmatpush1.msra.mxu0 0.0
  %9499 = vmatprep.subr.mxu0 0.0
  %9500 = vmatpush1.msra.mxu0 0.0
  %9501 = vmatprep.subr.mxu0 0.0
  %9502 = vmatpush1.msra.mxu0 0.0
  %9503 = vmatprep.subr.mxu0 0.0
  %9504 = vmatpush1.msra.mxu0 0.0
  %9505 = vmatprep.subr.mxu0 0.0
  %9506 = vmatpush1.msra.mxu0 0.0
  %9507 = vmatprep.subr.mxu0 0.0
  %9508 = vmatpush1.msra.mxu0 0.0
  %9509 = vmatprep.subr.mxu0 0.0
  %9510 = vmatpush1.msra.mxu0 0.0
  %9511 = vmatprep.subr.mxu0 0.0
  %9512 = vmatpush1.msra.mxu0 0.0
  %9513 = vmatprep.subr.mxu0 0.0
  %9514 = vmatpush1.msra.mxu0 0.0
  %9515 = vmatprep.subr.mxu0 0.0
  %9516 = vmatpush1.msra.mxu0 0.0
  %9517 = vmatprep.subr.mxu0 0.0
  %9518 = vmatpush1.msra.mxu0 0.0
  %9519 = vmatprep.subr.mxu0 0.0
  %9520 = vmatpush1.msra.mxu0 0.0
  %9521 = vmatprep.subr.mxu0 0.0
  %9522 = vmatpush1.msra.mxu0 0.0
  %9523 = vmatprep.subr.mxu0 0.0
  %9524 = vmatpush1.msra.mxu0 0.0
  %9525 = vmatprep.subr.mxu0 0.0
  %9526 = vmatpush1.msra.mxu0 0.0
  %9527 = vmatprep.subr.mxu0 0.0
  %9528 = vmatpush1.msra.mxu0 0.0
  %9529 = vmatprep.subr.mxu0 0.0
  %9530 = vmatpush1.msra.mxu0 0.0
  %9531 = vmatprep.subr.mxu0 0.0
  %9532 = vmatpush1.msra.mxu0 0.0
  %9533 = vmatprep.mubr.f32.mxu0 0.0
  %9534 = vmatmul.mubr.f32.gmra.mrb[0].mxu0 %v9467
  %v9535 = vpop.f32.mrb[0].mxu0
  %v9536 = vadd.f32 %v9464, %v9535
  %v9537 = vpop.f32.mrb[0].mxu0
  %v9538 = vadd.f32 %v9464, %v9537
  %9539 = vdwg.mxu0
  %v9540 = vxor.u32 %v9536, 2147483648
  %v9541 = vxor.u32 %v9538, 2147483648
  %v9542 = vmul.f32 %v9540, 1.442695
  %v9543 = vpow.pop %v9542
  %v9544 = vmul.f32 %v9541, 1.442695
  %v9545 = vpow.pop %v9544
  %v9546 = vadd.f32 %v9543, 1.0
  %v9547 = vadd.f32 %v9545, 1.0
  %v9548 = vrcp.pop %v9546
  %v9549 = vmul.f32 1.0, %v9548
  %v9550 = vrcp.pop %v9547
  %v9551 = vmul.f32 1.0, %v9550
  %v9554 = vcombine.low %v9549, %v9551
  %9556 = vst [vmem:[%s19] sm:$0xff] %v9554
  // Predicated region
  $region78: #{uninet_forward.1} parent=0 // pred_check
    _
  $region79: #{uninet_forward.1} parent=0 // pred_check_branch
    %9558 = sbr.rel (0) target = $region81
  $region80: #{uninet_forward.1} parent=0 // pred_region
    _
  $region81: #{uninet_forward.1} parent=0 // pred_fallthru
    _
  // Predicated region
  $region82: #{uninet_forward.1} parent=0 // pred_check
    _
  $region83: #{uninet_forward.1} parent=0 // pred_check_branch
    %9560 = sbr.rel (0) target = $region85
  $region84: #{uninet_forward.1} parent=0 // pred_region
    _
  $region85: #{uninet_forward.1} parent=0 // pred_fallthru
    _

</llo_original>
